<compile_context>
chip_gen: v5e
topology: v5e:2x2
jax: 0.10.0
libtpu: 0.0.40
codegen_flags: <defaults>
</compile_context>

<pallas_src>
import functools

import jax
import jax.numpy as jnp
from jax import lax
from jax.experimental import pallas as pl
from jax.experimental.pallas import tpu as pltpu

D_IN = 128
D_HID = 512
EPS = 1e-6


def _fused_kernel(x_ref, w1_ref, b1_ref, w2_ref, b2_ref, o_ref, *, approx_gelu):
    # x_ref: (TM, 128) tile of tokens.
    x = x_ref[...]
    if x.dtype != jnp.float32:
        x = x.astype(jnp.float32)

    # --- LayerNorm over last dim (eps=1e-6).  The elementwise affine
    # (gamma/beta) has been folded into W1/b1 by the wrapper. ---
    mean = jnp.mean(x, axis=-1, keepdims=True)
    centered = x - mean
    var = jnp.mean(centered * centered, axis=-1, keepdims=True)
    xn = centered * lax.rsqrt(var + EPS)

    # --- Linear 128 -> 512 (MXU).  Operand dtype follows the weight dtype so
    # the wrapper can feed bf16 weights (default); accumulation stays f32. ---
    h = jnp.dot(xn.astype(w1_ref.dtype), w1_ref[...],
                preferred_element_type=jnp.float32) + b1_ref[...]

    if approx_gelu:
        # tanh-approx GELU: cubic on the VALU, tanh on the EUP slot (which is
        # otherwise idle), removing the ~18-op erf polynomial from the VALU.
        c = jnp.float32(0.7978845608028654)      # sqrt(2/pi)
        h = 0.5 * h * (1.0 + jnp.tanh(c * (h + 0.044715 * (h * h * h))))
    else:
        # Exact GELU (matches PyTorch GELU(approximate='none')).
        inv_sqrt2 = jnp.float32(0.7071067811865476)
        h = 0.5 * h * (1.0 + lax.erf(h * inv_sqrt2))

    # --- Linear 512 -> 128 ---
    out = jnp.dot(h.astype(w2_ref.dtype), w2_ref[...],
                  preferred_element_type=jnp.float32) + b2_ref[...]

    o_ref[...] = out.astype(o_ref.dtype)


def _pick_tile_m(rows, target=784):
    """Largest token tile <= target that is a sublane multiple (8) and exactly
    divides the row count (so no pad/slice is needed).  For the module's
    3136 tokens this returns 784 -> 4 grid steps (even split across v7x's two
    TensorCores, ~4-5 MB working set: inside every generation's scoped VMEM)."""
    cap = min(target, rows)
    cap -= cap % 8
    for t in range(cap, 7, -8):
        if rows % t == 0:
            return t
    # No clean divisor: fall back to a sublane-aligned tile and pad.
    return min(target, ((rows + 7) // 8) * 8)


@functools.partial(
    jax.jit, static_argnames=("tile_m", "use_bf16_matmul", "approx_gelu"))
def layernorm_mlp(x, gamma, beta, w1, b1, w2, b2, *, tile_m=None,
                  use_bf16_matmul=True, approx_gelu=True):
    """x: (B, H, W, C=128) channels-last. Returns same shape/dtype.

    Defaults are the fast path (bf16 MXU operands + tanh-approx GELU).  Use
    use_bf16_matmul=False, approx_gelu=False for closest parity with the
    f32 / exact-erf PyTorch module.
    """
    orig_shape = x.shape
    c = orig_shape[-1]
    assert c == D_IN
    x2d = x.reshape(-1, c)
    rows = x2d.shape[0]

    if tile_m is None:
        tile_m = _pick_tile_m(rows)

    # Fold the LayerNorm affine into the first linear (done once, in f32):
    #   (xn*g + b) @ W1 + b1  ==  xn @ (g[:,None]*W1) + (b @ W1 + b1)
    gamma_f = gamma.reshape(-1).astype(jnp.float32)
    beta_f = beta.reshape(-1).astype(jnp.float32)
    w1_f = w1.astype(jnp.float32)
    w1f = gamma_f[:, None] * w1_f                                   # (128, 512)
    b1f = beta_f[None, :] @ w1_f + b1.reshape(1, -1).astype(jnp.float32)  # (1, 512)
    w2c = w2.astype(jnp.float32)
    b2c = b2.reshape(1, -1).astype(jnp.float32)                     # (1, 128)

    if use_bf16_matmul:
        # bf16 MXU operands (native on v6e/v7x, also fine on v5e); biases,
        # LayerNorm and GELU math stay f32.
        w1f = w1f.astype(jnp.bfloat16)
        w2c = w2c.astype(jnp.bfloat16)

    # Padding only triggers when no divisor tile exists (never for 56*56*1).
    pad_rows = (-rows) % tile_m
    if pad_rows:
        x2d = jnp.pad(x2d, ((0, pad_rows), (0, 0)))
    rows_p = rows + pad_rows

    grid = (rows_p // tile_m,)

    kernel = functools.partial(_fused_kernel, approx_gelu=approx_gelu)

    weight_bytes = (w1f.size * w1f.dtype.itemsize +
                    w2c.size * w2c.dtype.itemsize +
                    b1f.size * 4 + b2c.size * 4)
    cost = pl.CostEstimate(
        flops=4 * rows_p * D_IN * D_HID,            # two (rows,128)x(128,512)-class matmuls
        transcendentals=rows_p * D_HID,             # one tanh/erf per hidden element
        bytes_accessed=2 * rows_p * D_IN * x.dtype.itemsize + weight_bytes,
    )

    out = pl.pallas_call(
        kernel,
        out_shape=jax.ShapeDtypeStruct((rows_p, D_IN), x.dtype),
        grid_spec=pltpu.PrefetchScalarGridSpec(
            num_scalar_prefetch=0,
            grid=grid,
            in_specs=[
                pl.BlockSpec((tile_m, D_IN), lambda i: (i, 0)),     # x tile
                pl.BlockSpec((D_IN, D_HID), lambda i: (0, 0)),      # W1 (folded)
                pl.BlockSpec((1, D_HID), lambda i: (0, 0)),         # b1 (folded)
                pl.BlockSpec((D_HID, D_IN), lambda i: (0, 0)),      # W2
                pl.BlockSpec((1, D_IN), lambda i: (0, 0)),          # b2
            ],
            out_specs=pl.BlockSpec((tile_m, D_IN), lambda i: (i, 0)),
        ),
        compiler_params=pltpu.CompilerParams(
            dimension_semantics=("parallel",),
            vmem_limit_bytes=32 * 1024 * 1024),
        cost_estimate=cost,
    )(x2d, w1f, b1f, w2c, b2c)

    if pad_rows:
        out = out[:rows]
    return out.reshape(orig_shape)


def _reference(x, gamma, beta, w1, b1, w2, b2):
    """Plain-JAX mirror of the PyTorch module (f32, exact-erf GELU)."""
    xf = x.astype(jnp.float32)
    mean = jnp.mean(xf, axis=-1, keepdims=True)
    var = jnp.mean((xf - mean) ** 2, axis=-1, keepdims=True)
    xn = (xf - mean) / jnp.sqrt(var + EPS) * gamma.reshape(-1) + beta.reshape(-1)
    h = xn @ w1 + b1.reshape(-1)
    h = 0.5 * h * (1.0 + lax.erf(h / jnp.sqrt(2.0)))
    return (h @ w2 + b2.reshape(-1)).astype(x.dtype)


if __name__ == "__main__":
    key = jax.random.PRNGKey(0)
    k_xs, k_xf, k_g, k_b, k_w1, k_b1, k_w2, k_b2 = jax.random.split(key, 8)

    # Parameters (non-trivial gamma/beta so the affine folding is exercised;
    # Linear weights stored as (in, out) for row-major matmul).
    gamma = 1.0 + 0.1 * jax.random.normal(k_g, (D_IN,), jnp.float32)
    beta = 0.1 * jax.random.normal(k_b, (D_IN,), jnp.float32)
    w1 = jax.random.normal(k_w1, (D_IN, D_HID), jnp.float32) * 0.05
    b1 = jax.random.normal(k_b1, (D_HID,), jnp.float32) * 0.05
    w2 = jax.random.normal(k_w2, (D_HID, D_IN), jnp.float32) * 0.05
    b2 = jax.random.normal(k_b2, (D_IN,), jnp.float32) * 0.05

    # 1) Small shape, parity path (f32 matmul operands + exact erf GELU).
    x_small = jax.random.normal(k_xs, (1, 16, 16, D_IN), dtype=jnp.float32)
    out_exact = jax.block_until_ready(
        layernorm_mlp(x_small, gamma, beta, w1, b1, w2, b2,
                      use_bf16_matmul=False, approx_gelu=False))
    ref_small = _reference(x_small, gamma, beta, w1, b1, w2, b2)
    assert out_exact.shape == x_small.shape
    assert jnp.allclose(out_exact, ref_small, atol=2e-3, rtol=2e-3), \
        "small-shape (exact path) mismatch vs reference"

    # 2) Small shape, default fast path (bf16 operands + tanh-approx GELU).
    out_fast_small = jax.block_until_ready(
        layernorm_mlp(x_small, gamma, beta, w1, b1, w2, b2))
    assert jnp.allclose(out_fast_small, ref_small, atol=2e-2, rtol=2e-2), \
        "small-shape (fast path) mismatch vs reference"

    # 3) The module's real shape [1, 56, 56, 128]: 3136 tokens -> tile_m=784,
    #    4 grid steps, no pad/slice.  Loose tolerance: bf16 MXU operands and
    #    tanh-approx GELU are intentional (documented) approximations.
    x_full = jax.random.normal(k_xf, (1, 56, 56, D_IN), dtype=jnp.float32)
    out_full = jax.block_until_ready(
        layernorm_mlp(x_full, gamma, beta, w1, b1, w2, b2))
    ref_full = _reference(x_full, gamma, beta, w1, b1, w2, b2)
    assert out_full.shape == x_full.shape
    assert jnp.allclose(out_full, ref_full, atol=2e-2, rtol=2e-2), \
        "full-shape (fast path) mismatch vs reference"

    print("KERNEL_OK")
</pallas_src>

<mosaic_0001>
module attributes {stable_mosaic.version = 11 : i64} {
  func.func @_fused_kernel(%arg0: i32, %arg1: memref<256x128xf32, #tpu.memory_space<vmem>>, %arg2: memref<128x512xf32, #tpu.memory_space<vmem>>, %arg3: memref<1x512xf32, #tpu.memory_space<vmem>>, %arg4: memref<512x128xf32, #tpu.memory_space<vmem>>, %arg5: memref<1x128xf32, #tpu.memory_space<vmem>>, %arg6: memref<256x128xf32, #tpu.memory_space<vmem>>) attributes {dimension_semantics = [#tpu.dimension_semantics<parallel>], iteration_bounds = array<i64: 1>, scalar_prefetch = 0 : i64, scratch_operands = 0 : i64, tpu.core_type = #tpu.core_type<tc>, window_params = [{transform_indices = @transform_0, window_bounds = array<i64: 256, 128>}, {pipeline_mode = #tpu.pipeline_mode<synchronous>, transform_indices = @transform_1, window_bounds = array<i64: 128, 512>}, {pipeline_mode = #tpu.pipeline_mode<synchronous>, transform_indices = @transform_2, window_bounds = array<i64: 1, 512>}, {pipeline_mode = #tpu.pipeline_mode<synchronous>, transform_indices = @transform_3, window_bounds = array<i64: 512, 128>}, {pipeline_mode = #tpu.pipeline_mode<synchronous>, transform_indices = @transform_4, window_bounds = array<i64: 1, 128>}, {transform_indices = @transform_5, window_bounds = array<i64: 256, 128>}]} {
    %c0 = arith.constant 0 : index
    %c0_0 = arith.constant 0 : index
    %0 = vector.load %arg1[%c0, %c0_0] : memref<256x128xf32, #tpu.memory_space<vmem>>, vector<256x128xf32>
    %cst = arith.constant dense<0.000000e+00> : vector<256xf32>
    %1 = vector.multi_reduction <add>, %0, %cst [1] : vector<256x128xf32> to vector<256xf32>
    %2 = vector.shape_cast %1 : vector<256xf32> to vector<256x1xf32>
    %cst_1 = arith.constant 1.280000e+02 : f32
    %3 = vector.broadcast %cst_1 : f32 to vector<256x1xf32>
    %4 = arith.divf %2, %3 : vector<256x1xf32>
    %5 = vector.broadcast %4 : vector<256x1xf32> to vector<256x128xf32>
    %6 = arith.subf %0, %5 : vector<256x128xf32>
    %7 = arith.mulf %6, %6 : vector<256x128xf32>
    %cst_2 = arith.constant dense<0.000000e+00> : vector<256xf32>
    %8 = vector.multi_reduction <add>, %7, %cst_2 [1] : vector<256x128xf32> to vector<256xf32>
    %9 = vector.shape_cast %8 : vector<256xf32> to vector<256x1xf32>
    %cst_3 = arith.constant 1.280000e+02 : f32
    %10 = vector.broadcast %cst_3 : f32 to vector<256x1xf32>
    %11 = arith.divf %9, %10 : vector<256x1xf32>
    %cst_4 = arith.constant 9.99999997E-7 : f32
    %12 = vector.broadcast %cst_4 : f32 to vector<256x1xf32>
    %13 = arith.addf %11, %12 : vector<256x1xf32>
    %14 = math.rsqrt %13 : vector<256x1xf32>
    %15 = vector.broadcast %14 : vector<256x1xf32> to vector<256x128xf32>
    %16 = arith.mulf %6, %15 : vector<256x128xf32>
    %c0_5 = arith.constant 0 : index
    %c0_6 = arith.constant 0 : index
    %17 = vector.load %arg2[%c0_5, %c0_6] : memref<128x512xf32, #tpu.memory_space<vmem>>, vector<128x512xf32>
    %cst_7 = arith.constant dense<0.000000e+00> : vector<256x512xf32>
    %18 = tpu.matmul %16, %17, %cst_7 {dimension_numbers = #tpu.dot_dimension_numbers<[1], [0], [0], [1], [0, 0, 1, 1], [], []>} : vector<256x128xf32>, vector<128x512xf32>, vector<256x512xf32> -> vector<256x512xf32>
    %c0_8 = arith.constant 0 : index
    %c0_9 = arith.constant 0 : index
    %19 = vector.load %arg3[%c0_8, %c0_9] : memref<1x512xf32, #tpu.memory_space<vmem>>, vector<1x512xf32>
    %20 = vector.broadcast %19 : vector<1x512xf32> to vector<256x512xf32>
    %21 = arith.addf %18, %20 : vector<256x512xf32>
    %cst_10 = arith.constant 5.000000e-01 : f32
    %22 = vector.broadcast %cst_10 : f32 to vector<256x512xf32>
    %23 = arith.mulf %22, %21 : vector<256x512xf32>
    %cst_11 = arith.constant 0.707106769 : f32
    %24 = vector.broadcast %cst_11 : f32 to vector<256x512xf32>
    %25 = arith.mulf %21, %24 : vector<256x512xf32>
    %26 = math.erf %25 : vector<256x512xf32>
    %cst_12 = arith.constant 1.000000e+00 : f32
    %27 = vector.broadcast %cst_12 : f32 to vector<256x512xf32>
    %28 = arith.addf %27, %26 : vector<256x512xf32>
    %29 = arith.mulf %23, %28 : vector<256x512xf32>
    %c0_13 = arith.constant 0 : index
    %c0_14 = arith.constant 0 : index
    %30 = vector.load %arg4[%c0_13, %c0_14] : memref<512x128xf32, #tpu.memory_space<vmem>>, vector<512x128xf32>
    %cst_15 = arith.constant dense<0.000000e+00> : vector<256x128xf32>
    %31 = tpu.matmul %29, %30, %cst_15 {dimension_numbers = #tpu.dot_dimension_numbers<[1], [0], [0], [1], [0, 0, 1, 1], [], []>} : vector<256x512xf32>, vector<512x128xf32>, vector<256x128xf32> -> vector<256x128xf32>
    %c0_16 = arith.constant 0 : index
    %c0_17 = arith.constant 0 : index
    %32 = vector.load %arg5[%c0_16, %c0_17] : memref<1x128xf32, #tpu.memory_space<vmem>>, vector<1x128xf32>
    %33 = vector.broadcast %32 : vector<1x128xf32> to vector<256x128xf32>
    %34 = arith.addf %31, %33 : vector<256x128xf32>
    %c0_18 = arith.constant 0 : index
    %c0_19 = arith.constant 0 : index
    %35 = vector.load %arg6[%c0_18, %c0_19] : memref<256x128xf32, #tpu.memory_space<vmem>>, vector<256x128xf32>
    tpu.vector_store %arg6[%c0_18, %c0_19], %34 {strides = array<i32>} : memref<256x128xf32, #tpu.memory_space<vmem>>, vector<256x128xf32>,
    return
  }
  func.func @transform_0(%arg0: i32) -> (i32, i32) {
    %c0_i32 = arith.constant 0 : i32
    %c0_i32_0 = arith.constant 0 : i32
    return %arg0, %c0_i32 : i32, i32
  }
  func.func @transform_1(%arg0: i32) -> (i32, i32) {
    %c0_i32 = arith.constant 0 : i32
    %c0_i32_0 = arith.constant 0 : i32
    %c0_i32_1 = arith.constant 0 : i32
    return %c0_i32, %c0_i32_0 : i32, i32
  }
  func.func @transform_2(%arg0: i32) -> (i32, i32) {
    %c0_i32 = arith.constant 0 : i32
    %c0_i32_0 = arith.constant 0 : i32
    %c0_i32_1 = arith.constant 0 : i32
    return %c0_i32, %c0_i32_0 : i32, i32
  }
  func.func @transform_3(%arg0: i32) -> (i32, i32) {
    %c0_i32 = arith.constant 0 : i32
    %c0_i32_0 = arith.constant 0 : i32
    %c0_i32_1 = arith.constant 0 : i32
    return %c0_i32, %c0_i32_0 : i32, i32
  }
  func.func @transform_4(%arg0: i32) -> (i32, i32) {
    %c0_i32 = arith.constant 0 : i32
    %c0_i32_0 = arith.constant 0 : i32
    %c0_i32_1 = arith.constant 0 : i32
    return %c0_i32, %c0_i32_0 : i32, i32
  }
  func.func @transform_5(%arg0: i32) -> (i32, i32) {
    %c0_i32 = arith.constant 0 : i32
    %c0_i32_0 = arith.constant 0 : i32
    return %arg0, %c0_i32 : i32, i32
  }
}

</mosaic_0001>

<llo_original>
// kernel: layernorm_mlp.1
$region0: #{layernorm_mlp.1}
  #allocation0 [shape = 'u32[]', space=smem, size = 0x4, offset = 0x4, fixed_abs, tag = 'smem constant byte address 0x4 - core index']
  #allocation1 [shape = 'u32[72,128]{1,0:T(1,128)}', space=vmem, size = 0x9000, scoped, tag = 'internal scratch']
  %s0 = inlined_call_operand.vmem [shape: f32[256,128], index: 0, kind: input, shape index: {}]
  %s1 = inlined_call_operand.vmem [shape: f32[128,512], index: 1, kind: input, shape index: {}]
  %s2 = inlined_call_operand.vmem [shape: f32[1,512], index: 2, kind: input, shape index: {}]
  %s3 = inlined_call_operand.vmem [shape: f32[512,128], index: 3, kind: input, shape index: {}]
  %s4 = inlined_call_operand.vmem [shape: f32[1,128], index: 4, kind: input, shape index: {}]
  %s5 = inlined_call_operand.hbm [shape: f32[256,128], index: 5, kind: output, shape index: {}]
  %s6 = sld [smem:[#allocation0]]
  $region30: #{layernorm_mlp.1} parent=0
    _
  %s8 = ssub.s32 1, %s6
  %s9 = scalar_select 0, %s8, %s6
  $region1: #{layernorm_mlp.1} parent=0
    #allocation2 [shape = 'u8[131072]{0}', space=vmem, size = 0x20000, scoped, tag = 'output window, operand 0, single buffered']
    #allocation3 [shape = 's32[1]{0}', space=sflag, size = 0x4, scoped, tag = 'scoped memory for layernorm_mlp.1']
    %10 = vsyncpa [#allocation3], 0
    // Predicated region
    $region2: #{layernorm_mlp.1} parent=1 // pred_check
      _
    $region3: #{layernorm_mlp.1} parent=1 // pred_check_branch
      %12 = sbr.rel (0) target = $region5
    $region4: #{layernorm_mlp.1} parent=1 // pred_region
      _
    $region5: #{layernorm_mlp.1} parent=1 // pred_fallthru
      _
    // Predicated region
    $region6: #{layernorm_mlp.1} parent=1 // pred_check
      _
    $region7: #{layernorm_mlp.1} parent=1 // pred_check_branch
      %14 = sbr.rel (0) target = $region9
    $region8: #{layernorm_mlp.1} parent=1 // pred_region
      _
    $region9: #{layernorm_mlp.1} parent=1 // pred_fallthru
      _
    // Predicated region
    $region10: #{layernorm_mlp.1} parent=1 // pred_check
      _
    $region11: #{layernorm_mlp.1} parent=1 // pred_check_branch
      %16 = sbr.rel (0) target = $region13
    $region12: #{layernorm_mlp.1} parent=1 // pred_region
      _
    $region13: #{layernorm_mlp.1} parent=1 // pred_fallthru
      _
    // Predicated region
    $region14: #{layernorm_mlp.1} parent=1 // pred_check
      _
    $region15: #{layernorm_mlp.1} parent=1 // pred_check_branch
      %18 = sbr.rel (0) target = $region17
    $region16: #{layernorm_mlp.1} parent=1 // pred_region
      _
    $region17: #{layernorm_mlp.1} parent=1 // pred_fallthru
      _
    // Predicated region
    $region18: #{layernorm_mlp.1} parent=1 // pred_check
      _
    $region19: #{layernorm_mlp.1} parent=1 // pred_check_branch
      %20 = sbr.rel (0) target = $region21
    $region20: #{layernorm_mlp.1} parent=1 // pred_region
      _
    $region21: #{layernorm_mlp.1} parent=1 // pred_fallthru
      _
    %v21 = vld [vmem:[%s0] sm:$0xff]
    %v22 = vld [vmem:[%s0 + $0x8] sm:$0xff]
    %v23 = vld [vmem:[%s0 + $0x10] sm:$0xff]
    %v24 = vld [vmem:[%s0 + $0x18] sm:$0xff]
    %v25 = vld [vmem:[%s0 + $0x20] sm:$0xff]
    %v26 = vld [vmem:[%s0 + $0x28] sm:$0xff]
    %v27 = vld [vmem:[%s0 + $0x30] sm:$0xff]
    %v28 = vld [vmem:[%s0 + $0x38] sm:$0xff]
    %v29 = vld [vmem:[%s0 + $0x40] sm:$0xff]
    %v30 = vld [vmem:[%s0 + $0x48] sm:$0xff]
    %v31 = vld [vmem:[%s0 + $0x50] sm:$0xff]
    %v32 = vld [vmem:[%s0 + $0x58] sm:$0xff]
    %v33 = vld [vmem:[%s0 + $0x60] sm:$0xff]
    %v34 = vld [vmem:[%s0 + $0x68] sm:$0xff]
    %v35 = vld [vmem:[%s0 + $0x70] sm:$0xff]
    %v36 = vld [vmem:[%s0 + $0x78] sm:$0xff]
    %v37 = vld [vmem:[%s0 + $0x80] sm:$0xff]
    %v38 = vld [vmem:[%s0 + $0x88] sm:$0xff]
    %v39 = vld [vmem:[%s0 + $0x90] sm:$0xff]
    %v40 = vld [vmem:[%s0 + $0x98] sm:$0xff]
    %v41 = vld [vmem:[%s0 + $0xa0] sm:$0xff]
    %v42 = vld [vmem:[%s0 + $0xa8] sm:$0xff]
    %v43 = vld [vmem:[%s0 + $0xb0] sm:$0xff]
    %v44 = vld [vmem:[%s0 + $0xb8] sm:$0xff]
    %v45 = vld [vmem:[%s0 + $0xc0] sm:$0xff]
    %v46 = vld [vmem:[%s0 + $0xc8] sm:$0xff]
    %v47 = vld [vmem:[%s0 + $0xd0] sm:$0xff]
    %v48 = vld [vmem:[%s0 + $0xd8] sm:$0xff]
    %v49 = vld [vmem:[%s0 + $0xe0] sm:$0xff]
    %v50 = vld [vmem:[%s0 + $0xe8] sm:$0xff]
    %v51 = vld [vmem:[%s0 + $0xf0] sm:$0xff]
    %v52 = vld [vmem:[%s0 + $0xf8] sm:$0xff]
    %53 = vadd.xlane.f32.xlu0 %v21
    %v54 = vpop.xlane.xlu0 %53
    %55 = vadd.xlane.f32.xlu0 %v22
    %v56 = vpop.xlane.xlu0 %55
    %57 = vadd.xlane.f32.xlu0 %v23
    %v58 = vpop.xlane.xlu0 %57
    %59 = vadd.xlane.f32.xlu0 %v24
    %v60 = vpop.xlane.xlu0 %59
    %61 = vadd.xlane.f32.xlu0 %v25
    %v62 = vpop.xlane.xlu0 %61
    %63 = vadd.xlane.f32.xlu0 %v26
    %v64 = vpop.xlane.xlu0 %63
    %65 = vadd.xlane.f32.xlu0 %v27
    %v66 = vpop.xlane.xlu0 %65
    %67 = vadd.xlane.f32.xlu0 %v28
    %v68 = vpop.xlane.xlu0 %67
    %69 = vadd.xlane.f32.xlu0 %v29
    %v70 = vpop.xlane.xlu0 %69
    %71 = vadd.xlane.f32.xlu0 %v30
    %v72 = vpop.xlane.xlu0 %71
    %73 = vadd.xlane.f32.xlu0 %v31
    %v74 = vpop.xlane.xlu0 %73
    %75 = vadd.xlane.f32.xlu0 %v32
    %v76 = vpop.xlane.xlu0 %75
    %77 = vadd.xlane.f32.xlu0 %v33
    %v78 = vpop.xlane.xlu0 %77
    %79 = vadd.xlane.f32.xlu0 %v34
    %v80 = vpop.xlane.xlu0 %79
    %81 = vadd.xlane.f32.xlu0 %v35
    %v82 = vpop.xlane.xlu0 %81
    %83 = vadd.xlane.f32.xlu0 %v36
    %v84 = vpop.xlane.xlu0 %83
    %85 = vadd.xlane.f32.xlu0 %v37
    %v86 = vpop.xlane.xlu0 %85
    %87 = vadd.xlane.f32.xlu0 %v38
    %v88 = vpop.xlane.xlu0 %87
    %89 = vadd.xlane.f32.xlu0 %v39
    %v90 = vpop.xlane.xlu0 %89
    %91 = vadd.xlane.f32.xlu0 %v40
    %v92 = vpop.xlane.xlu0 %91
    %93 = vadd.xlane.f32.xlu0 %v41
    %v94 = vpop.xlane.xlu0 %93
    %95 = vadd.xlane.f32.xlu0 %v42
    %v96 = vpop.xlane.xlu0 %95
    %97 = vadd.xlane.f32.xlu0 %v43
    %v98 = vpop.xlane.xlu0 %97
    %99 = vadd.xlane.f32.xlu0 %v44
    %v100 = vpop.xlane.xlu0 %99
    %101 = vadd.xlane.f32.xlu0 %v45
    %v102 = vpop.xlane.xlu0 %101
    %103 = vadd.xlane.f32.xlu0 %v46
    %v104 = vpop.xlane.xlu0 %103
    %105 = vadd.xlane.f32.xlu0 %v47
    %v106 = vpop.xlane.xlu0 %105
    %107 = vadd.xlane.f32.xlu0 %v48
    %v108 = vpop.xlane.xlu0 %107
    %109 = vadd.xlane.f32.xlu0 %v49
    %v110 = vpop.xlane.xlu0 %109
    %111 = vadd.xlane.f32.xlu0 %v50
    %v112 = vpop.xlane.xlu0 %111
    %113 = vadd.xlane.f32.xlu0 %v51
    %v114 = vpop.xlane.xlu0 %113
    %115 = vadd.xlane.f32.xlu0 %v52
    %v116 = vpop.xlane.xlu0 %115
    %v117 = vrcp.pop 128.0
    %v118 = vmul.f32 128.0, %v117
    %v119 = vsub.f32 1.0, %v118
    %v120 = vmul.f32 %v117, %v119
    %v121 = vadd.f32 %v117, %v120
    %vm122 = vweird.f32 %v117
    %v123 = vsel %vm122, %v117, %v121
    %v124 = vmul.f32 %v54, %v123
    %v125 = vmul.f32 %v56, %v123
    %v126 = vmul.f32 %v58, %v123
    %v127 = vmul.f32 %v60, %v123
    %v128 = vmul.f32 %v62, %v123
    %v129 = vmul.f32 %v64, %v123
    %v130 = vmul.f32 %v66, %v123
    %v131 = vmul.f32 %v68, %v123
    %v132 = vmul.f32 %v70, %v123
    %v133 = vmul.f32 %v72, %v123
    %v134 = vmul.f32 %v74, %v123
    %v135 = vmul.f32 %v76, %v123
    %v136 = vmul.f32 %v78, %v123
    %v137 = vmul.f32 %v80, %v123
    %v138 = vmul.f32 %v82, %v123
    %v139 = vmul.f32 %v84, %v123
    %v140 = vmul.f32 %v86, %v123
    %v141 = vmul.f32 %v88, %v123
    %v142 = vmul.f32 %v90, %v123
    %v143 = vmul.f32 %v92, %v123
    %v144 = vmul.f32 %v94, %v123
    %v145 = vmul.f32 %v96, %v123
    %v146 = vmul.f32 %v98, %v123
    %v147 = vmul.f32 %v100, %v123
    %v148 = vmul.f32 %v102, %v123
    %v149 = vmul.f32 %v104, %v123
    %v150 = vmul.f32 %v106, %v123
    %v151 = vmul.f32 %v108, %v123
    %v152 = vmul.f32 %v110, %v123
    %v153 = vmul.f32 %v112, %v123
    %v154 = vmul.f32 %v114, %v123
    %v155 = vmul.f32 %v116, %v123
    %v156 = vsub.f32 %v21, %v124
    %v157 = vsub.f32 %v22, %v125
    %v158 = vsub.f32 %v23, %v126
    %v159 = vsub.f32 %v24, %v127
    %v160 = vsub.f32 %v25, %v128
    %v161 = vsub.f32 %v26, %v129
    %v162 = vsub.f32 %v27, %v130
    %v163 = vsub.f32 %v28, %v131
    %v164 = vsub.f32 %v29, %v132
    %v165 = vsub.f32 %v30, %v133
    %v166 = vsub.f32 %v31, %v134
    %v167 = vsub.f32 %v32, %v135
    %v168 = vsub.f32 %v33, %v136
    %v169 = vsub.f32 %v34, %v137
    %v170 = vsub.f32 %v35, %v138
    %v171 = vsub.f32 %v36, %v139
    %v172 = vsub.f32 %v37, %v140
    %v173 = vsub.f32 %v38, %v141
    %v174 = vsub.f32 %v39, %v142
    %v175 = vsub.f32 %v40, %v143
    %v176 = vsub.f32 %v41, %v144
    %v177 = vsub.f32 %v42, %v145
    %v178 = vsub.f32 %v43, %v146
    %v179 = vsub.f32 %v44, %v147
    %v180 = vsub.f32 %v45, %v148
    %v181 = vsub.f32 %v46, %v149
    %v182 = vsub.f32 %v47, %v150
    %v183 = vsub.f32 %v48, %v151
    %v184 = vsub.f32 %v49, %v152
    %v185 = vsub.f32 %v50, %v153
    %v186 = vsub.f32 %v51, %v154
    %v187 = vsub.f32 %v52, %v155
    %v188 = vmul.f32 %v156, %v156
    %v189 = vmul.f32 %v157, %v157
    %v190 = vmul.f32 %v158, %v158
    %v191 = vmul.f32 %v159, %v159
    %v192 = vmul.f32 %v160, %v160
    %v193 = vmul.f32 %v161, %v161
    %v194 = vmul.f32 %v162, %v162
    %v195 = vmul.f32 %v163, %v163
    %v196 = vmul.f32 %v164, %v164
    %v197 = vmul.f32 %v165, %v165
    %v198 = vmul.f32 %v166, %v166
    %v199 = vmul.f32 %v167, %v167
    %v200 = vmul.f32 %v168, %v168
    %v201 = vmul.f32 %v169, %v169
    %v202 = vmul.f32 %v170, %v170
    %v203 = vmul.f32 %v171, %v171
    %v204 = vmul.f32 %v172, %v172
    %v205 = vmul.f32 %v173, %v173
    %v206 = vmul.f32 %v174, %v174
    %v207 = vmul.f32 %v175, %v175
    %v208 = vmul.f32 %v176, %v176
    %v209 = vmul.f32 %v177, %v177
    %v210 = vmul.f32 %v178, %v178
    %v211 = vmul.f32 %v179, %v179
    %v212 = vmul.f32 %v180, %v180
    %v213 = vmul.f32 %v181, %v181
    %v214 = vmul.f32 %v182, %v182
    %v215 = vmul.f32 %v183, %v183
    %v216 = vmul.f32 %v184, %v184
    %v217 = vmul.f32 %v185, %v185
    %v218 = vmul.f32 %v186, %v186
    %v219 = vmul.f32 %v187, %v187
    %220 = vadd.xlane.f32.xlu0 %v188
    %v221 = vpop.xlane.xlu0 %220
    %222 = vadd.xlane.f32.xlu0 %v189
    %v223 = vpop.xlane.xlu0 %222
    %224 = vadd.xlane.f32.xlu0 %v190
    %v225 = vpop.xlane.xlu0 %224
    %226 = vadd.xlane.f32.xlu0 %v191
    %v227 = vpop.xlane.xlu0 %226
    %228 = vadd.xlane.f32.xlu0 %v192
    %v229 = vpop.xlane.xlu0 %228
    %230 = vadd.xlane.f32.xlu0 %v193
    %v231 = vpop.xlane.xlu0 %230
    %232 = vadd.xlane.f32.xlu0 %v194
    %v233 = vpop.xlane.xlu0 %232
    %234 = vadd.xlane.f32.xlu0 %v195
    %v235 = vpop.xlane.xlu0 %234
    %236 = vadd.xlane.f32.xlu0 %v196
    %v237 = vpop.xlane.xlu0 %236
    %238 = vadd.xlane.f32.xlu0 %v197
    %v239 = vpop.xlane.xlu0 %238
    %240 = vadd.xlane.f32.xlu0 %v198
    %v241 = vpop.xlane.xlu0 %240
    %242 = vadd.xlane.f32.xlu0 %v199
    %v243 = vpop.xlane.xlu0 %242
    %244 = vadd.xlane.f32.xlu0 %v200
    %v245 = vpop.xlane.xlu0 %244
    %246 = vadd.xlane.f32.xlu0 %v201
    %v247 = vpop.xlane.xlu0 %246
    %248 = vadd.xlane.f32.xlu0 %v202
    %v249 = vpop.xlane.xlu0 %248
    %250 = vadd.xlane.f32.xlu0 %v203
    %v251 = vpop.xlane.xlu0 %250
    %252 = vadd.xlane.f32.xlu0 %v204
    %v253 = vpop.xlane.xlu0 %252
    %254 = vadd.xlane.f32.xlu0 %v205
    %v255 = vpop.xlane.xlu0 %254
    %256 = vadd.xlane.f32.xlu0 %v206
    %v257 = vpop.xlane.xlu0 %256
    %258 = vadd.xlane.f32.xlu0 %v207
    %v259 = vpop.xlane.xlu0 %258
    %260 = vadd.xlane.f32.xlu0 %v208
    %v261 = vpop.xlane.xlu0 %260
    %262 = vadd.xlane.f32.xlu0 %v209
    %v263 = vpop.xlane.xlu0 %262
    %264 = vadd.xlane.f32.xlu0 %v210
    %v265 = vpop.xlane.xlu0 %264
    %266 = vadd.xlane.f32.xlu0 %v211
    %v267 = vpop.xlane.xlu0 %266
    %268 = vadd.xlane.f32.xlu0 %v212
    %v269 = vpop.xlane.xlu0 %268
    %270 = vadd.xlane.f32.xlu0 %v213
    %v271 = vpop.xlane.xlu0 %270
    %272 = vadd.xlane.f32.xlu0 %v214
    %v273 = vpop.xlane.xlu0 %272
    %274 = vadd.xlane.f32.xlu0 %v215
    %v275 = vpop.xlane.xlu0 %274
    %276 = vadd.xlane.f32.xlu0 %v216
    %v277 = vpop.xlane.xlu0 %276
    %278 = vadd.xlane.f32.xlu0 %v217
    %v279 = vpop.xlane.xlu0 %278
    %280 = vadd.xlane.f32.xlu0 %v218
    %v281 = vpop.xlane.xlu0 %280
    %282 = vadd.xlane.f32.xlu0 %v219
    %v283 = vpop.xlane.xlu0 %282
    %v284 = vmul.f32 %v221, %v123
    %v285 = vmul.f32 %v223, %v123
    %v286 = vmul.f32 %v225, %v123
    %v287 = vmul.f32 %v227, %v123
    %v288 = vmul.f32 %v229, %v123
    %v289 = vmul.f32 %v231, %v123
    %v290 = vmul.f32 %v233, %v123
    %v291 = vmul.f32 %v235, %v123
    %v292 = vmul.f32 %v237, %v123
    %v293 = vmul.f32 %v239, %v123
    %v294 = vmul.f32 %v241, %v123
    %v295 = vmul.f32 %v243, %v123
    %v296 = vmul.f32 %v245, %v123
    %v297 = vmul.f32 %v247, %v123
    %v298 = vmul.f32 %v249, %v123
    %v299 = vmul.f32 %v251, %v123
    %v300 = vmul.f32 %v253, %v123
    %v301 = vmul.f32 %v255, %v123
    %v302 = vmul.f32 %v257, %v123
    %v303 = vmul.f32 %v259, %v123
    %v304 = vmul.f32 %v261, %v123
    %v305 = vmul.f32 %v263, %v123
    %v306 = vmul.f32 %v265, %v123
    %v307 = vmul.f32 %v267, %v123
    %v308 = vmul.f32 %v269, %v123
    %v309 = vmul.f32 %v271, %v123
    %v310 = vmul.f32 %v273, %v123
    %v311 = vmul.f32 %v275, %v123
    %v312 = vmul.f32 %v277, %v123
    %v313 = vmul.f32 %v279, %v123
    %v314 = vmul.f32 %v281, %v123
    %v315 = vmul.f32 %v283, %v123
    %v316 = vadd.f32 %v284, 1e-06
    %v317 = vadd.f32 %v285, 1e-06
    %v318 = vadd.f32 %v286, 1e-06
    %v319 = vadd.f32 %v287, 1e-06
    %v320 = vadd.f32 %v288, 1e-06
    %v321 = vadd.f32 %v289, 1e-06
    %v322 = vadd.f32 %v290, 1e-06
    %v323 = vadd.f32 %v291, 1e-06
    %v324 = vadd.f32 %v292, 1e-06
    %v325 = vadd.f32 %v293, 1e-06
    %v326 = vadd.f32 %v294, 1e-06
    %v327 = vadd.f32 %v295, 1e-06
    %v328 = vadd.f32 %v296, 1e-06
    %v329 = vadd.f32 %v297, 1e-06
    %v330 = vadd.f32 %v298, 1e-06
    %v331 = vadd.f32 %v299, 1e-06
    %v332 = vadd.f32 %v300, 1e-06
    %v333 = vadd.f32 %v301, 1e-06
    %v334 = vadd.f32 %v302, 1e-06
    %v335 = vadd.f32 %v303, 1e-06
    %v336 = vadd.f32 %v304, 1e-06
    %v337 = vadd.f32 %v305, 1e-06
    %v338 = vadd.f32 %v306, 1e-06
    %v339 = vadd.f32 %v307, 1e-06
    %v340 = vadd.f32 %v308, 1e-06
    %v341 = vadd.f32 %v309, 1e-06
    %v342 = vadd.f32 %v310, 1e-06
    %v343 = vadd.f32 %v311, 1e-06
    %v344 = vadd.f32 %v312, 1e-06
    %v345 = vadd.f32 %v313, 1e-06
    %v346 = vadd.f32 %v314, 1e-06
    %v347 = vadd.f32 %v315, 1e-06
    %v348 = vrsqrt.pop %v316
    %v349 = vmul.f32 %v348, %v316
    %v350 = vmul.f32 %v349, %v348
    %v351 = vmul.f32 0.5, %v350
    %v352 = vsub.f32 1.5, %v351
    %v353 = vmul.f32 %v348, %v352
    %vm354 = vweird.f32 %v316
    %vm355 = vweird.f32 %v348
    %vm356 = vmor %vm354, %vm355
    %v357 = vsel %vm356, %v348, %v353
    %v358 = vrsqrt.pop %v317
    %v359 = vmul.f32 %v358, %v317
    %v360 = vmul.f32 %v359, %v358
    %v361 = vmul.f32 0.5, %v360
    %v362 = vsub.f32 1.5, %v361
    %v363 = vmul.f32 %v358, %v362
    %vm364 = vweird.f32 %v317
    %vm365 = vweird.f32 %v358
    %vm366 = vmor %vm364, %vm365
    %v367 = vsel %vm366, %v358, %v363
    %v368 = vrsqrt.pop %v318
    %v369 = vmul.f32 %v368, %v318
    %v370 = vmul.f32 %v369, %v368
    %v371 = vmul.f32 0.5, %v370
    %v372 = vsub.f32 1.5, %v371
    %v373 = vmul.f32 %v368, %v372
    %vm374 = vweird.f32 %v318
    %vm375 = vweird.f32 %v368
    %vm376 = vmor %vm374, %vm375
    %v377 = vsel %vm376, %v368, %v373
    %v378 = vrsqrt.pop %v319
    %v379 = vmul.f32 %v378, %v319
    %v380 = vmul.f32 %v379, %v378
    %v381 = vmul.f32 0.5, %v380
    %v382 = vsub.f32 1.5, %v381
    %v383 = vmul.f32 %v378, %v382
    %vm384 = vweird.f32 %v319
    %vm385 = vweird.f32 %v378
    %vm386 = vmor %vm384, %vm385
    %v387 = vsel %vm386, %v378, %v383
    %v388 = vrsqrt.pop %v320
    %v389 = vmul.f32 %v388, %v320
    %v390 = vmul.f32 %v389, %v388
    %v391 = vmul.f32 0.5, %v390
    %v392 = vsub.f32 1.5, %v391
    %v393 = vmul.f32 %v388, %v392
    %vm394 = vweird.f32 %v320
    %vm395 = vweird.f32 %v388
    %vm396 = vmor %vm394, %vm395
    %v397 = vsel %vm396, %v388, %v393
    %v398 = vrsqrt.pop %v321
    %v399 = vmul.f32 %v398, %v321
    %v400 = vmul.f32 %v399, %v398
    %v401 = vmul.f32 0.5, %v400
    %v402 = vsub.f32 1.5, %v401
    %v403 = vmul.f32 %v398, %v402
    %vm404 = vweird.f32 %v321
    %vm405 = vweird.f32 %v398
    %vm406 = vmor %vm404, %vm405
    %v407 = vsel %vm406, %v398, %v403
    %v408 = vrsqrt.pop %v322
    %v409 = vmul.f32 %v408, %v322
    %v410 = vmul.f32 %v409, %v408
    %v411 = vmul.f32 0.5, %v410
    %v412 = vsub.f32 1.5, %v411
    %v413 = vmul.f32 %v408, %v412
    %vm414 = vweird.f32 %v322
    %vm415 = vweird.f32 %v408
    %vm416 = vmor %vm414, %vm415
    %v417 = vsel %vm416, %v408, %v413
    %v418 = vrsqrt.pop %v323
    %v419 = vmul.f32 %v418, %v323
    %v420 = vmul.f32 %v419, %v418
    %v421 = vmul.f32 0.5, %v420
    %v422 = vsub.f32 1.5, %v421
    %v423 = vmul.f32 %v418, %v422
    %vm424 = vweird.f32 %v323
    %vm425 = vweird.f32 %v418
    %vm426 = vmor %vm424, %vm425
    %v427 = vsel %vm426, %v418, %v423
    %v428 = vrsqrt.pop %v324
    %v429 = vmul.f32 %v428, %v324
    %v430 = vmul.f32 %v429, %v428
    %v431 = vmul.f32 0.5, %v430
    %v432 = vsub.f32 1.5, %v431
    %v433 = vmul.f32 %v428, %v432
    %vm434 = vweird.f32 %v324
    %vm435 = vweird.f32 %v428
    %vm436 = vmor %vm434, %vm435
    %v437 = vsel %vm436, %v428, %v433
    %v438 = vrsqrt.pop %v325
    %v439 = vmul.f32 %v438, %v325
    %v440 = vmul.f32 %v439, %v438
    %v441 = vmul.f32 0.5, %v440
    %v442 = vsub.f32 1.5, %v441
    %v443 = vmul.f32 %v438, %v442
    %vm444 = vweird.f32 %v325
    %vm445 = vweird.f32 %v438
    %vm446 = vmor %vm444, %vm445
    %v447 = vsel %vm446, %v438, %v443
    %v448 = vrsqrt.pop %v326
    %v449 = vmul.f32 %v448, %v326
    %v450 = vmul.f32 %v449, %v448
    %v451 = vmul.f32 0.5, %v450
    %v452 = vsub.f32 1.5, %v451
    %v453 = vmul.f32 %v448, %v452
    %vm454 = vweird.f32 %v326
    %vm455 = vweird.f32 %v448
    %vm456 = vmor %vm454, %vm455
    %v457 = vsel %vm456, %v448, %v453
    %v458 = vrsqrt.pop %v327
    %v459 = vmul.f32 %v458, %v327
    %v460 = vmul.f32 %v459, %v458
    %v461 = vmul.f32 0.5, %v460
    %v462 = vsub.f32 1.5, %v461
    %v463 = vmul.f32 %v458, %v462
    %vm464 = vweird.f32 %v327
    %vm465 = vweird.f32 %v458
    %vm466 = vmor %vm464, %vm465
    %v467 = vsel %vm466, %v458, %v463
    %v468 = vrsqrt.pop %v328
    %v469 = vmul.f32 %v468, %v328
    %v470 = vmul.f32 %v469, %v468
    %v471 = vmul.f32 0.5, %v470
    %v472 = vsub.f32 1.5, %v471
    %v473 = vmul.f32 %v468, %v472
    %vm474 = vweird.f32 %v328
    %vm475 = vweird.f32 %v468
    %vm476 = vmor %vm474, %vm475
    %v477 = vsel %vm476, %v468, %v473
    %v478 = vrsqrt.pop %v329
    %v479 = vmul.f32 %v478, %v329
    %v480 = vmul.f32 %v479, %v478
    %v481 = vmul.f32 0.5, %v480
    %v482 = vsub.f32 1.5, %v481
    %v483 = vmul.f32 %v478, %v482
    %vm484 = vweird.f32 %v329
    %vm485 = vweird.f32 %v478
    %vm486 = vmor %vm484, %vm485
    %v487 = vsel %vm486, %v478, %v483
    %v488 = vrsqrt.pop %v330
    %v489 = vmul.f32 %v488, %v330
    %v490 = vmul.f32 %v489, %v488
    %v491 = vmul.f32 0.5, %v490
    %v492 = vsub.f32 1.5, %v491
    %v493 = vmul.f32 %v488, %v492
    %vm494 = vweird.f32 %v330
    %vm495 = vweird.f32 %v488
    %vm496 = vmor %vm494, %vm495
    %v497 = vsel %vm496, %v488, %v493
    %v498 = vrsqrt.pop %v331
    %v499 = vmul.f32 %v498, %v331
    %v500 = vmul.f32 %v499, %v498
    %v501 = vmul.f32 0.5, %v500
    %v502 = vsub.f32 1.5, %v501
    %v503 = vmul.f32 %v498, %v502
    %vm504 = vweird.f32 %v331
    %vm505 = vweird.f32 %v498
    %vm506 = vmor %vm504, %vm505
    %v507 = vsel %vm506, %v498, %v503
    %v508 = vrsqrt.pop %v332
    %v509 = vmul.f32 %v508, %v332
    %v510 = vmul.f32 %v509, %v508
    %v511 = vmul.f32 0.5, %v510
    %v512 = vsub.f32 1.5, %v511
    %v513 = vmul.f32 %v508, %v512
    %vm514 = vweird.f32 %v332
    %vm515 = vweird.f32 %v508
    %vm516 = vmor %vm514, %vm515
    %v517 = vsel %vm516, %v508, %v513
    %v518 = vrsqrt.pop %v333
    %v519 = vmul.f32 %v518, %v333
    %v520 = vmul.f32 %v519, %v518
    %v521 = vmul.f32 0.5, %v520
    %v522 = vsub.f32 1.5, %v521
    %v523 = vmul.f32 %v518, %v522
    %vm524 = vweird.f32 %v333
    %vm525 = vweird.f32 %v518
    %vm526 = vmor %vm524, %vm525
    %v527 = vsel %vm526, %v518, %v523
    %v528 = vrsqrt.pop %v334
    %v529 = vmul.f32 %v528, %v334
    %v530 = vmul.f32 %v529, %v528
    %v531 = vmul.f32 0.5, %v530
    %v532 = vsub.f32 1.5, %v531
    %v533 = vmul.f32 %v528, %v532
    %vm534 = vweird.f32 %v334
    %vm535 = vweird.f32 %v528
    %vm536 = vmor %vm534, %vm535
    %v537 = vsel %vm536, %v528, %v533
    %v538 = vrsqrt.pop %v335
    %v539 = vmul.f32 %v538, %v335
    %v540 = vmul.f32 %v539, %v538
    %v541 = vmul.f32 0.5, %v540
    %v542 = vsub.f32 1.5, %v541
    %v543 = vmul.f32 %v538, %v542
    %vm544 = vweird.f32 %v335
    %vm545 = vweird.f32 %v538
    %vm546 = vmor %vm544, %vm545
    %v547 = vsel %vm546, %v538, %v543
    %v548 = vrsqrt.pop %v336
    %v549 = vmul.f32 %v548, %v336
    %v550 = vmul.f32 %v549, %v548
    %v551 = vmul.f32 0.5, %v550
    %v552 = vsub.f32 1.5, %v551
    %v553 = vmul.f32 %v548, %v552
    %vm554 = vweird.f32 %v336
    %vm555 = vweird.f32 %v548
    %vm556 = vmor %vm554, %vm555
    %v557 = vsel %vm556, %v548, %v553
    %v558 = vrsqrt.pop %v337
    %v559 = vmul.f32 %v558, %v337
    %v560 = vmul.f32 %v559, %v558
    %v561 = vmul.f32 0.5, %v560
    %v562 = vsub.f32 1.5, %v561
    %v563 = vmul.f32 %v558, %v562
    %vm564 = vweird.f32 %v337
    %vm565 = vweird.f32 %v558
    %vm566 = vmor %vm564, %vm565
    %v567 = vsel %vm566, %v558, %v563
    %v568 = vrsqrt.pop %v338
    %v569 = vmul.f32 %v568, %v338
    %v570 = vmul.f32 %v569, %v568
    %v571 = vmul.f32 0.5, %v570
    %v572 = vsub.f32 1.5, %v571
    %v573 = vmul.f32 %v568, %v572
    %vm574 = vweird.f32 %v338
    %vm575 = vweird.f32 %v568
    %vm576 = vmor %vm574, %vm575
    %v577 = vsel %vm576, %v568, %v573
    %v578 = vrsqrt.pop %v339
    %v579 = vmul.f32 %v578, %v339
    %v580 = vmul.f32 %v579, %v578
    %v581 = vmul.f32 0.5, %v580
    %v582 = vsub.f32 1.5, %v581
    %v583 = vmul.f32 %v578, %v582
    %vm584 = vweird.f32 %v339
    %vm585 = vweird.f32 %v578
    %vm586 = vmor %vm584, %vm585
    %v587 = vsel %vm586, %v578, %v583
    %v588 = vrsqrt.pop %v340
    %v589 = vmul.f32 %v588, %v340
    %v590 = vmul.f32 %v589, %v588
    %v591 = vmul.f32 0.5, %v590
    %v592 = vsub.f32 1.5, %v591
    %v593 = vmul.f32 %v588, %v592
    %vm594 = vweird.f32 %v340
    %vm595 = vweird.f32 %v588
    %vm596 = vmor %vm594, %vm595
    %v597 = vsel %vm596, %v588, %v593
    %v598 = vrsqrt.pop %v341
    %v599 = vmul.f32 %v598, %v341
    %v600 = vmul.f32 %v599, %v598
    %v601 = vmul.f32 0.5, %v600
    %v602 = vsub.f32 1.5, %v601
    %v603 = vmul.f32 %v598, %v602
    %vm604 = vweird.f32 %v341
    %vm605 = vweird.f32 %v598
    %vm606 = vmor %vm604, %vm605
    %v607 = vsel %vm606, %v598, %v603
    %v608 = vrsqrt.pop %v342
    %v609 = vmul.f32 %v608, %v342
    %v610 = vmul.f32 %v609, %v608
    %v611 = vmul.f32 0.5, %v610
    %v612 = vsub.f32 1.5, %v611
    %v613 = vmul.f32 %v608, %v612
    %vm614 = vweird.f32 %v342
    %vm615 = vweird.f32 %v608
    %vm616 = vmor %vm614, %vm615
    %v617 = vsel %vm616, %v608, %v613
    %v618 = vrsqrt.pop %v343
    %v619 = vmul.f32 %v618, %v343
    %v620 = vmul.f32 %v619, %v618
    %v621 = vmul.f32 0.5, %v620
    %v622 = vsub.f32 1.5, %v621
    %v623 = vmul.f32 %v618, %v622
    %vm624 = vweird.f32 %v343
    %vm625 = vweird.f32 %v618
    %vm626 = vmor %vm624, %vm625
    %v627 = vsel %vm626, %v618, %v623
    %v628 = vrsqrt.pop %v344
    %v629 = vmul.f32 %v628, %v344
    %v630 = vmul.f32 %v629, %v628
    %v631 = vmul.f32 0.5, %v630
    %v632 = vsub.f32 1.5, %v631
    %v633 = vmul.f32 %v628, %v632
    %vm634 = vweird.f32 %v344
    %vm635 = vweird.f32 %v628
    %vm636 = vmor %vm634, %vm635
    %v637 = vsel %vm636, %v628, %v633
    %v638 = vrsqrt.pop %v345
    %v639 = vmul.f32 %v638, %v345
    %v640 = vmul.f32 %v639, %v638
    %v641 = vmul.f32 0.5, %v640
    %v642 = vsub.f32 1.5, %v641
    %v643 = vmul.f32 %v638, %v642
    %vm644 = vweird.f32 %v345
    %vm645 = vweird.f32 %v638
    %vm646 = vmor %vm644, %vm645
    %v647 = vsel %vm646, %v638, %v643
    %v648 = vrsqrt.pop %v346
    %v649 = vmul.f32 %v648, %v346
    %v650 = vmul.f32 %v649, %v648
    %v651 = vmul.f32 0.5, %v650
    %v652 = vsub.f32 1.5, %v651
    %v653 = vmul.f32 %v648, %v652
    %vm654 = vweird.f32 %v346
    %vm655 = vweird.f32 %v648
    %vm656 = vmor %vm654, %vm655
    %v657 = vsel %vm656, %v648, %v653
    %v658 = vrsqrt.pop %v347
    %v659 = vmul.f32 %v658, %v347
    %v660 = vmul.f32 %v659, %v658
    %v661 = vmul.f32 0.5, %v660
    %v662 = vsub.f32 1.5, %v661
    %v663 = vmul.f32 %v658, %v662
    %vm664 = vweird.f32 %v347
    %vm665 = vweird.f32 %v658
    %vm666 = vmor %vm664, %vm665
    %v667 = vsel %vm666, %v658, %v663
    %v668 = vmul.f32 %v156, %v357
    %v669 = vmul.f32 %v157, %v367
    %v670 = vmul.f32 %v158, %v377
    %v671 = vmul.f32 %v159, %v387
    %v672 = vmul.f32 %v160, %v397
    %v673 = vmul.f32 %v161, %v407
    %v674 = vmul.f32 %v162, %v417
    %v675 = vmul.f32 %v163, %v427
    %v676 = vmul.f32 %v164, %v437
    %v677 = vmul.f32 %v165, %v447
    %v678 = vmul.f32 %v166, %v457
    %v679 = vmul.f32 %v167, %v467
    %v680 = vmul.f32 %v168, %v477
    %v681 = vmul.f32 %v169, %v487
    %v682 = vmul.f32 %v170, %v497
    %v683 = vmul.f32 %v171, %v507
    %v684 = vmul.f32 %v172, %v517
    %v685 = vmul.f32 %v173, %v527
    %v686 = vmul.f32 %v174, %v537
    %v687 = vmul.f32 %v175, %v547
    %v688 = vmul.f32 %v176, %v557
    %v689 = vmul.f32 %v177, %v567
    %v690 = vmul.f32 %v178, %v577
    %v691 = vmul.f32 %v179, %v587
    %v692 = vmul.f32 %v180, %v597
    %v693 = vmul.f32 %v181, %v607
    %v694 = vmul.f32 %v182, %v617
    %v695 = vmul.f32 %v183, %v627
    %v696 = vmul.f32 %v184, %v637
    %v697 = vmul.f32 %v185, %v647
    %v698 = vmul.f32 %v186, %v657
    %v699 = vmul.f32 %v187, %v667
    %v700 = vld [vmem:[%s1] sm:$0xff]
    %v701 = vld [vmem:[%s1 + $0x8] sm:$0xff]
    %v702 = vld [vmem:[%s1 + $0x10] sm:$0xff]
    %v703 = vld [vmem:[%s1 + $0x18] sm:$0xff]
    %v704 = vld [vmem:[%s1 + $0x20] sm:$0xff]
    %v705 = vld [vmem:[%s1 + $0x28] sm:$0xff]
    %v706 = vld [vmem:[%s1 + $0x30] sm:$0xff]
    %v707 = vld [vmem:[%s1 + $0x38] sm:$0xff]
    %v708 = vld [vmem:[%s1 + $0x40] sm:$0xff]
    %v709 = vld [vmem:[%s1 + $0x48] sm:$0xff]
    %v710 = vld [vmem:[%s1 + $0x50] sm:$0xff]
    %v711 = vld [vmem:[%s1 + $0x58] sm:$0xff]
    %v712 = vld [vmem:[%s1 + $0x60] sm:$0xff]
    %v713 = vld [vmem:[%s1 + $0x68] sm:$0xff]
    %v714 = vld [vmem:[%s1 + $0x70] sm:$0xff]
    %v715 = vld [vmem:[%s1 + $0x78] sm:$0xff]
    %v716 = vld [vmem:[%s1 + $0x80] sm:$0xff]
    %v717 = vld [vmem:[%s1 + $0x88] sm:$0xff]
    %v718 = vld [vmem:[%s1 + $0x90] sm:$0xff]
    %v719 = vld [vmem:[%s1 + $0x98] sm:$0xff]
    %v720 = vld [vmem:[%s1 + $0xa0] sm:$0xff]
    %v721 = vld [vmem:[%s1 + $0xa8] sm:$0xff]
    %v722 = vld [vmem:[%s1 + $0xb0] sm:$0xff]
    %v723 = vld [vmem:[%s1 + $0xb8] sm:$0xff]
    %v724 = vld [vmem:[%s1 + $0xc0] sm:$0xff]
    %v725 = vld [vmem:[%s1 + $0xc8] sm:$0xff]
    %v726 = vld [vmem:[%s1 + $0xd0] sm:$0xff]
    %v727 = vld [vmem:[%s1 + $0xd8] sm:$0xff]
    %v728 = vld [vmem:[%s1 + $0xe0] sm:$0xff]
    %v729 = vld [vmem:[%s1 + $0xe8] sm:$0xff]
    %v730 = vld [vmem:[%s1 + $0xf0] sm:$0xff]
    %v731 = vld [vmem:[%s1 + $0xf8] sm:$0xff]
    %v732 = vld [vmem:[%s1 + $0x100] sm:$0xff]
    %v733 = vld [vmem:[%s1 + $0x108] sm:$0xff]
    %v734 = vld [vmem:[%s1 + $0x110] sm:$0xff]
    %v735 = vld [vmem:[%s1 + $0x118] sm:$0xff]
    %v736 = vld [vmem:[%s1 + $0x120] sm:$0xff]
    %v737 = vld [vmem:[%s1 + $0x128] sm:$0xff]
    %v738 = vld [vmem:[%s1 + $0x130] sm:$0xff]
    %v739 = vld [vmem:[%s1 + $0x138] sm:$0xff]
    %v740 = vld [vmem:[%s1 + $0x140] sm:$0xff]
    %v741 = vld [vmem:[%s1 + $0x148] sm:$0xff]
    %v742 = vld [vmem:[%s1 + $0x150] sm:$0xff]
    %v743 = vld [vmem:[%s1 + $0x158] sm:$0xff]
    %v744 = vld [vmem:[%s1 + $0x160] sm:$0xff]
    %v745 = vld [vmem:[%s1 + $0x168] sm:$0xff]
    %v746 = vld [vmem:[%s1 + $0x170] sm:$0xff]
    %v747 = vld [vmem:[%s1 + $0x178] sm:$0xff]
    %v748 = vld [vmem:[%s1 + $0x180] sm:$0xff]
    %v749 = vld [vmem:[%s1 + $0x188] sm:$0xff]
    %v750 = vld [vmem:[%s1 + $0x190] sm:$0xff]
    %v751 = vld [vmem:[%s1 + $0x198] sm:$0xff]
    %v752 = vld [vmem:[%s1 + $0x1a0] sm:$0xff]
    %v753 = vld [vmem:[%s1 + $0x1a8] sm:$0xff]
    %v754 = vld [vmem:[%s1 + $0x1b0] sm:$0xff]
    %v755 = vld [vmem:[%s1 + $0x1b8] sm:$0xff]
    %v756 = vld [vmem:[%s1 + $0x1c0] sm:$0xff]
    %v757 = vld [vmem:[%s1 + $0x1c8] sm:$0xff]
    %v758 = vld [vmem:[%s1 + $0x1d0] sm:$0xff]
    %v759 = vld [vmem:[%s1 + $0x1d8] sm:$0xff]
    %v760 = vld [vmem:[%s1 + $0x1e0] sm:$0xff]
    %v761 = vld [vmem:[%s1 + $0x1e8] sm:$0xff]
    %v762 = vld [vmem:[%s1 + $0x1f0] sm:$0xff]
    %v763 = vld [vmem:[%s1 + $0x1f8] sm:$0xff]
    %v764 = vld [vmem:[%s2] sm:$0xf]
    %v766 = vperm.slane %v764, 0
    %v767 = vperm.slane %v764, 1
    %v768 = vperm.slane %v764, 2
    %v769 = vperm.slane %v764, 3
    %774 = vmatpush.msra.mxu0 %v760
    %775 = vmatpush.msra.mxu0 %v756
    %776 = vmatpush.msra.mxu0 %v752
    %777 = vmatpush.msra.mxu0 %v748
    %778 = vmatpush.msra.mxu0 %v744
    %779 = vmatpush.msra.mxu0 %v740
    %780 = vmatpush.msra.mxu0 %v736
    %781 = vmatpush.msra.mxu0 %v732
    %782 = vmatpush.msra.mxu0 %v728
    %783 = vmatpush.msra.mxu0 %v724
    %784 = vmatpush.msra.mxu0 %v720
    %785 = vmatpush.msra.mxu0 %v716
    %786 = vmatpush.msra.mxu0 %v712
    %787 = vmatpush.msra.mxu0 %v708
    %788 = vmatpush.msra.mxu0 %v704
    %789 = vmatpush.msra.mxu0 %v700
    %790 = vmatmul.f32.gmra.mxu0 %v668
    %v791 = vpop.f32.mrf.mxu0
    %v792 = vadd.f32 %v766, %v791
    %793 = vmatmul.f32.gmra.mxu0 %v669
    %v794 = vpop.f32.mrf.mxu0
    %v795 = vadd.f32 %v766, %v794
    %796 = vmatmul.f32.gmra.mxu0 %v670
    %v797 = vpop.f32.mrf.mxu0
    %v798 = vadd.f32 %v766, %v797
    %799 = vmatmul.f32.gmra.mxu0 %v671
    %v800 = vpop.f32.mrf.mxu0
    %v801 = vadd.f32 %v766, %v800
    %802 = vmatmul.f32.gmra.mxu0 %v672
    %v803 = vpop.f32.mrf.mxu0
    %v804 = vadd.f32 %v766, %v803
    %805 = vmatmul.f32.gmra.mxu0 %v673
    %v806 = vpop.f32.mrf.mxu0
    %v807 = vadd.f32 %v766, %v806
    %808 = vmatmul.f32.gmra.mxu0 %v674
    %v809 = vpop.f32.mrf.mxu0
    %v810 = vadd.f32 %v766, %v809
    %811 = vmatmul.f32.gmra.mxu0 %v675
    %v812 = vpop.f32.mrf.mxu0
    %v813 = vadd.f32 %v766, %v812
    %814 = vmatmul.f32.gmra.mxu0 %v676
    %v815 = vpop.f32.mrf.mxu0
    %v816 = vadd.f32 %v766, %v815
    %817 = vmatmul.f32.gmra.mxu0 %v677
    %v818 = vpop.f32.mrf.mxu0
    %v819 = vadd.f32 %v766, %v818
    %820 = vmatmul.f32.gmra.mxu0 %v678
    %v821 = vpop.f32.mrf.mxu0
    %v822 = vadd.f32 %v766, %v821
    %823 = vmatmul.f32.gmra.mxu0 %v679
    %v824 = vpop.f32.mrf.mxu0
    %v825 = vadd.f32 %v766, %v824
    %826 = vmatmul.f32.gmra.mxu0 %v680
    %v827 = vpop.f32.mrf.mxu0
    %v828 = vadd.f32 %v766, %v827
    %829 = vmatmul.f32.gmra.mxu0 %v681
    %v830 = vpop.f32.mrf.mxu0
    %v831 = vadd.f32 %v766, %v830
    %832 = vmatmul.f32.gmra.mxu0 %v682
    %v833 = vpop.f32.mrf.mxu0
    %v834 = vadd.f32 %v766, %v833
    %835 = vmatmul.f32.gmra.mxu0 %v683
    %v836 = vpop.f32.mrf.mxu0
    %v837 = vadd.f32 %v766, %v836
    %838 = vmatmul.f32.gmra.mxu0 %v684
    %v839 = vpop.f32.mrf.mxu0
    %v840 = vadd.f32 %v766, %v839
    %841 = vmatmul.f32.gmra.mxu0 %v685
    %v842 = vpop.f32.mrf.mxu0
    %v843 = vadd.f32 %v766, %v842
    %844 = vmatmul.f32.gmra.mxu0 %v686
    %v845 = vpop.f32.mrf.mxu0
    %v846 = vadd.f32 %v766, %v845
    %847 = vmatmul.f32.gmra.mxu0 %v687
    %v848 = vpop.f32.mrf.mxu0
    %v849 = vadd.f32 %v766, %v848
    %850 = vmatmul.f32.gmra.mxu0 %v688
    %v851 = vpop.f32.mrf.mxu0
    %v852 = vadd.f32 %v766, %v851
    %853 = vmatmul.f32.gmra.mxu0 %v689
    %v854 = vpop.f32.mrf.mxu0
    %v855 = vadd.f32 %v766, %v854
    %856 = vmatmul.f32.gmra.mxu0 %v690
    %v857 = vpop.f32.mrf.mxu0
    %v858 = vadd.f32 %v766, %v857
    %859 = vmatmul.f32.gmra.mxu0 %v691
    %v860 = vpop.f32.mrf.mxu0
    %v861 = vadd.f32 %v766, %v860
    %862 = vmatmul.f32.gmra.mxu0 %v692
    %v863 = vpop.f32.mrf.mxu0
    %v864 = vadd.f32 %v766, %v863
    %865 = vmatmul.f32.gmra.mxu0 %v693
    %v866 = vpop.f32.mrf.mxu0
    %v867 = vadd.f32 %v766, %v866
    %868 = vmatmul.f32.gmra.mxu0 %v694
    %v869 = vpop.f32.mrf.mxu0
    %v870 = vadd.f32 %v766, %v869
    %871 = vmatmul.f32.gmra.mxu0 %v695
    %v872 = vpop.f32.mrf.mxu0
    %v873 = vadd.f32 %v766, %v872
    %874 = vmatmul.f32.gmra.mxu0 %v696
    %v875 = vpop.f32.mrf.mxu0
    %v876 = vadd.f32 %v766, %v875
    %877 = vmatmul.f32.gmra.mxu0 %v697
    %v878 = vpop.f32.mrf.mxu0
    %v879 = vadd.f32 %v766, %v878
    %880 = vmatmul.f32.gmra.mxu0 %v698
    %v881 = vpop.f32.mrf.mxu0
    %v882 = vadd.f32 %v766, %v881
    %883 = vmatmul.f32.gmra.mxu0 %v699
    %v884 = vpop.f32.mrf.mxu0
    %v885 = vadd.f32 %v766, %v884
    %886 = vdwg.mxu0
    %887 = vmatpush.msra.mxu0 %v761
    %888 = vmatpush.msra.mxu0 %v757
    %889 = vmatpush.msra.mxu0 %v753
    %890 = vmatpush.msra.mxu0 %v749
    %891 = vmatpush.msra.mxu0 %v745
    %892 = vmatpush.msra.mxu0 %v741
    %893 = vmatpush.msra.mxu0 %v737
    %894 = vmatpush.msra.mxu0 %v733
    %895 = vmatpush.msra.mxu0 %v729
    %896 = vmatpush.msra.mxu0 %v725
    %897 = vmatpush.msra.mxu0 %v721
    %898 = vmatpush.msra.mxu0 %v717
    %899 = vmatpush.msra.mxu0 %v713
    %900 = vmatpush.msra.mxu0 %v709
    %901 = vmatpush.msra.mxu0 %v705
    %902 = vmatpush.msra.mxu0 %v701
    %903 = vmatmul.f32.gmra.mxu0 %v668
    %v904 = vpop.f32.mrf.mxu0
    %v905 = vadd.f32 %v767, %v904
    %906 = vmatmul.f32.gmra.mxu0 %v669
    %v907 = vpop.f32.mrf.mxu0
    %v908 = vadd.f32 %v767, %v907
    %909 = vmatmul.f32.gmra.mxu0 %v670
    %v910 = vpop.f32.mrf.mxu0
    %v911 = vadd.f32 %v767, %v910
    %912 = vmatmul.f32.gmra.mxu0 %v671
    %v913 = vpop.f32.mrf.mxu0
    %v914 = vadd.f32 %v767, %v913
    %915 = vmatmul.f32.gmra.mxu0 %v672
    %v916 = vpop.f32.mrf.mxu0
    %v917 = vadd.f32 %v767, %v916
    %918 = vmatmul.f32.gmra.mxu0 %v673
    %v919 = vpop.f32.mrf.mxu0
    %v920 = vadd.f32 %v767, %v919
    %921 = vmatmul.f32.gmra.mxu0 %v674
    %v922 = vpop.f32.mrf.mxu0
    %v923 = vadd.f32 %v767, %v922
    %924 = vmatmul.f32.gmra.mxu0 %v675
    %v925 = vpop.f32.mrf.mxu0
    %v926 = vadd.f32 %v767, %v925
    %927 = vmatmul.f32.gmra.mxu0 %v676
    %v928 = vpop.f32.mrf.mxu0
    %v929 = vadd.f32 %v767, %v928
    %930 = vmatmul.f32.gmra.mxu0 %v677
    %v931 = vpop.f32.mrf.mxu0
    %v932 = vadd.f32 %v767, %v931
    %933 = vmatmul.f32.gmra.mxu0 %v678
    %v934 = vpop.f32.mrf.mxu0
    %v935 = vadd.f32 %v767, %v934
    %936 = vmatmul.f32.gmra.mxu0 %v679
    %v937 = vpop.f32.mrf.mxu0
    %v938 = vadd.f32 %v767, %v937
    %939 = vmatmul.f32.gmra.mxu0 %v680
    %v940 = vpop.f32.mrf.mxu0
    %v941 = vadd.f32 %v767, %v940
    %942 = vmatmul.f32.gmra.mxu0 %v681
    %v943 = vpop.f32.mrf.mxu0
    %v944 = vadd.f32 %v767, %v943
    %945 = vmatmul.f32.gmra.mxu0 %v682
    %v946 = vpop.f32.mrf.mxu0
    %v947 = vadd.f32 %v767, %v946
    %948 = vmatmul.f32.gmra.mxu0 %v683
    %v949 = vpop.f32.mrf.mxu0
    %v950 = vadd.f32 %v767, %v949
    %951 = vmatmul.f32.gmra.mxu0 %v684
    %v952 = vpop.f32.mrf.mxu0
    %v953 = vadd.f32 %v767, %v952
    %954 = vmatmul.f32.gmra.mxu0 %v685
    %v955 = vpop.f32.mrf.mxu0
    %v956 = vadd.f32 %v767, %v955
    %957 = vmatmul.f32.gmra.mxu0 %v686
    %v958 = vpop.f32.mrf.mxu0
    %v959 = vadd.f32 %v767, %v958
    %960 = vmatmul.f32.gmra.mxu0 %v687
    %v961 = vpop.f32.mrf.mxu0
    %v962 = vadd.f32 %v767, %v961
    %963 = vmatmul.f32.gmra.mxu0 %v688
    %v964 = vpop.f32.mrf.mxu0
    %v965 = vadd.f32 %v767, %v964
    %966 = vmatmul.f32.gmra.mxu0 %v689
    %v967 = vpop.f32.mrf.mxu0
    %v968 = vadd.f32 %v767, %v967
    %969 = vmatmul.f32.gmra.mxu0 %v690
    %v970 = vpop.f32.mrf.mxu0
    %v971 = vadd.f32 %v767, %v970
    %972 = vmatmul.f32.gmra.mxu0 %v691
    %v973 = vpop.f32.mrf.mxu0
    %v974 = vadd.f32 %v767, %v973
    %975 = vmatmul.f32.gmra.mxu0 %v692
    %v976 = vpop.f32.mrf.mxu0
    %v977 = vadd.f32 %v767, %v976
    %978 = vmatmul.f32.gmra.mxu0 %v693
    %v979 = vpop.f32.mrf.mxu0
    %v980 = vadd.f32 %v767, %v979
    %981 = vmatmul.f32.gmra.mxu0 %v694
    %v982 = vpop.f32.mrf.mxu0
    %v983 = vadd.f32 %v767, %v982
    %984 = vmatmul.f32.gmra.mxu0 %v695
    %v985 = vpop.f32.mrf.mxu0
    %v986 = vadd.f32 %v767, %v985
    %987 = vmatmul.f32.gmra.mxu0 %v696
    %v988 = vpop.f32.mrf.mxu0
    %v989 = vadd.f32 %v767, %v988
    %990 = vmatmul.f32.gmra.mxu0 %v697
    %v991 = vpop.f32.mrf.mxu0
    %v992 = vadd.f32 %v767, %v991
    %993 = vmatmul.f32.gmra.mxu0 %v698
    %v994 = vpop.f32.mrf.mxu0
    %v995 = vadd.f32 %v767, %v994
    %996 = vmatmul.f32.gmra.mxu0 %v699
    %v997 = vpop.f32.mrf.mxu0
    %v998 = vadd.f32 %v767, %v997
    %999 = vdwg.mxu0
    %1000 = vmatpush.msra.mxu0 %v762
    %1001 = vmatpush.msra.mxu0 %v758
    %1002 = vmatpush.msra.mxu0 %v754
    %1003 = vmatpush.msra.mxu0 %v750
    %1004 = vmatpush.msra.mxu0 %v746
    %1005 = vmatpush.msra.mxu0 %v742
    %1006 = vmatpush.msra.mxu0 %v738
    %1007 = vmatpush.msra.mxu0 %v734
    %1008 = vmatpush.msra.mxu0 %v730
    %1009 = vmatpush.msra.mxu0 %v726
    %1010 = vmatpush.msra.mxu0 %v722
    %1011 = vmatpush.msra.mxu0 %v718
    %1012 = vmatpush.msra.mxu0 %v714
    %1013 = vmatpush.msra.mxu0 %v710
    %1014 = vmatpush.msra.mxu0 %v706
    %1015 = vmatpush.msra.mxu0 %v702
    %1016 = vmatmul.f32.gmra.mxu0 %v668
    %v1017 = vpop.f32.mrf.mxu0
    %v1018 = vadd.f32 %v768, %v1017
    %1019 = vmatmul.f32.gmra.mxu0 %v669
    %v1020 = vpop.f32.mrf.mxu0
    %v1021 = vadd.f32 %v768, %v1020
    %1022 = vmatmul.f32.gmra.mxu0 %v670
    %v1023 = vpop.f32.mrf.mxu0
    %v1024 = vadd.f32 %v768, %v1023
    %1025 = vmatmul.f32.gmra.mxu0 %v671
    %v1026 = vpop.f32.mrf.mxu0
    %v1027 = vadd.f32 %v768, %v1026
    %1028 = vmatmul.f32.gmra.mxu0 %v672
    %v1029 = vpop.f32.mrf.mxu0
    %v1030 = vadd.f32 %v768, %v1029
    %1031 = vmatmul.f32.gmra.mxu0 %v673
    %v1032 = vpop.f32.mrf.mxu0
    %v1033 = vadd.f32 %v768, %v1032
    %1034 = vmatmul.f32.gmra.mxu0 %v674
    %v1035 = vpop.f32.mrf.mxu0
    %v1036 = vadd.f32 %v768, %v1035
    %1037 = vmatmul.f32.gmra.mxu0 %v675
    %v1038 = vpop.f32.mrf.mxu0
    %v1039 = vadd.f32 %v768, %v1038
    %1040 = vmatmul.f32.gmra.mxu0 %v676
    %v1041 = vpop.f32.mrf.mxu0
    %v1042 = vadd.f32 %v768, %v1041
    %1043 = vmatmul.f32.gmra.mxu0 %v677
    %v1044 = vpop.f32.mrf.mxu0
    %v1045 = vadd.f32 %v768, %v1044
    %1046 = vmatmul.f32.gmra.mxu0 %v678
    %v1047 = vpop.f32.mrf.mxu0
    %v1048 = vadd.f32 %v768, %v1047
    %1049 = vmatmul.f32.gmra.mxu0 %v679
    %v1050 = vpop.f32.mrf.mxu0
    %v1051 = vadd.f32 %v768, %v1050
    %1052 = vmatmul.f32.gmra.mxu0 %v680
    %v1053 = vpop.f32.mrf.mxu0
    %v1054 = vadd.f32 %v768, %v1053
    %1055 = vmatmul.f32.gmra.mxu0 %v681
    %v1056 = vpop.f32.mrf.mxu0
    %v1057 = vadd.f32 %v768, %v1056
    %1058 = vmatmul.f32.gmra.mxu0 %v682
    %v1059 = vpop.f32.mrf.mxu0
    %v1060 = vadd.f32 %v768, %v1059
    %1061 = vmatmul.f32.gmra.mxu0 %v683
    %v1062 = vpop.f32.mrf.mxu0
    %v1063 = vadd.f32 %v768, %v1062
    %1064 = vmatmul.f32.gmra.mxu0 %v684
    %v1065 = vpop.f32.mrf.mxu0
    %v1066 = vadd.f32 %v768, %v1065
    %1067 = vmatmul.f32.gmra.mxu0 %v685
    %v1068 = vpop.f32.mrf.mxu0
    %v1069 = vadd.f32 %v768, %v1068
    %1070 = vmatmul.f32.gmra.mxu0 %v686
    %v1071 = vpop.f32.mrf.mxu0
    %v1072 = vadd.f32 %v768, %v1071
    %1073 = vmatmul.f32.gmra.mxu0 %v687
    %v1074 = vpop.f32.mrf.mxu0
    %v1075 = vadd.f32 %v768, %v1074
    %1076 = vmatmul.f32.gmra.mxu0 %v688
    %v1077 = vpop.f32.mrf.mxu0
    %v1078 = vadd.f32 %v768, %v1077
    %1079 = vmatmul.f32.gmra.mxu0 %v689
    %v1080 = vpop.f32.mrf.mxu0
    %v1081 = vadd.f32 %v768, %v1080
    %1082 = vmatmul.f32.gmra.mxu0 %v690
    %v1083 = vpop.f32.mrf.mxu0
    %v1084 = vadd.f32 %v768, %v1083
    %1085 = vmatmul.f32.gmra.mxu0 %v691
    %v1086 = vpop.f32.mrf.mxu0
    %v1087 = vadd.f32 %v768, %v1086
    %1088 = vmatmul.f32.gmra.mxu0 %v692
    %v1089 = vpop.f32.mrf.mxu0
    %v1090 = vadd.f32 %v768, %v1089
    %1091 = vmatmul.f32.gmra.mxu0 %v693
    %v1092 = vpop.f32.mrf.mxu0
    %v1093 = vadd.f32 %v768, %v1092
    %1094 = vmatmul.f32.gmra.mxu0 %v694
    %v1095 = vpop.f32.mrf.mxu0
    %v1096 = vadd.f32 %v768, %v1095
    %1097 = vmatmul.f32.gmra.mxu0 %v695
    %v1098 = vpop.f32.mrf.mxu0
    %v1099 = vadd.f32 %v768, %v1098
    %1100 = vmatmul.f32.gmra.mxu0 %v696
    %v1101 = vpop.f32.mrf.mxu0
    %v1102 = vadd.f32 %v768, %v1101
    %1103 = vmatmul.f32.gmra.mxu0 %v697
    %v1104 = vpop.f32.mrf.mxu0
    %v1105 = vadd.f32 %v768, %v1104
    %1106 = vmatmul.f32.gmra.mxu0 %v698
    %v1107 = vpop.f32.mrf.mxu0
    %v1108 = vadd.f32 %v768, %v1107
    %1109 = vmatmul.f32.gmra.mxu0 %v699
    %v1110 = vpop.f32.mrf.mxu0
    %v1111 = vadd.f32 %v768, %v1110
    %1112 = vdwg.mxu0
    %1113 = vmatpush.msra.mxu0 %v763
    %1114 = vmatpush.msra.mxu0 %v759
    %1115 = vmatpush.msra.mxu0 %v755
    %1116 = vmatpush.msra.mxu0 %v751
    %1117 = vmatpush.msra.mxu0 %v747
    %1118 = vmatpush.msra.mxu0 %v743
    %1119 = vmatpush.msra.mxu0 %v739
    %1120 = vmatpush.msra.mxu0 %v735
    %1121 = vmatpush.msra.mxu0 %v731
    %1122 = vmatpush.msra.mxu0 %v727
    %1123 = vmatpush.msra.mxu0 %v723
    %1124 = vmatpush.msra.mxu0 %v719
    %1125 = vmatpush.msra.mxu0 %v715
    %1126 = vmatpush.msra.mxu0 %v711
    %1127 = vmatpush.msra.mxu0 %v707
    %1128 = vmatpush.msra.mxu0 %v703
    %1129 = vmatmul.f32.gmra.mxu0 %v668
    %v1130 = vpop.f32.mrf.mxu0
    %v1131 = vadd.f32 %v769, %v1130
    %1132 = vmatmul.f32.gmra.mxu0 %v669
    %v1133 = vpop.f32.mrf.mxu0
    %v1134 = vadd.f32 %v769, %v1133
    %1135 = vmatmul.f32.gmra.mxu0 %v670
    %v1136 = vpop.f32.mrf.mxu0
    %v1137 = vadd.f32 %v769, %v1136
    %1138 = vmatmul.f32.gmra.mxu0 %v671
    %v1139 = vpop.f32.mrf.mxu0
    %v1140 = vadd.f32 %v769, %v1139
    %1141 = vmatmul.f32.gmra.mxu0 %v672
    %v1142 = vpop.f32.mrf.mxu0
    %v1143 = vadd.f32 %v769, %v1142
    %1144 = vmatmul.f32.gmra.mxu0 %v673
    %v1145 = vpop.f32.mrf.mxu0
    %v1146 = vadd.f32 %v769, %v1145
    %1147 = vmatmul.f32.gmra.mxu0 %v674
    %v1148 = vpop.f32.mrf.mxu0
    %v1149 = vadd.f32 %v769, %v1148
    %1150 = vmatmul.f32.gmra.mxu0 %v675
    %v1151 = vpop.f32.mrf.mxu0
    %v1152 = vadd.f32 %v769, %v1151
    %1153 = vmatmul.f32.gmra.mxu0 %v676
    %v1154 = vpop.f32.mrf.mxu0
    %v1155 = vadd.f32 %v769, %v1154
    %1156 = vmatmul.f32.gmra.mxu0 %v677
    %v1157 = vpop.f32.mrf.mxu0
    %v1158 = vadd.f32 %v769, %v1157
    %1159 = vmatmul.f32.gmra.mxu0 %v678
    %v1160 = vpop.f32.mrf.mxu0
    %v1161 = vadd.f32 %v769, %v1160
    %1162 = vmatmul.f32.gmra.mxu0 %v679
    %v1163 = vpop.f32.mrf.mxu0
    %v1164 = vadd.f32 %v769, %v1163
    %1165 = vmatmul.f32.gmra.mxu0 %v680
    %v1166 = vpop.f32.mrf.mxu0
    %v1167 = vadd.f32 %v769, %v1166
    %1168 = vmatmul.f32.gmra.mxu0 %v681
    %v1169 = vpop.f32.mrf.mxu0
    %v1170 = vadd.f32 %v769, %v1169
    %1171 = vmatmul.f32.gmra.mxu0 %v682
    %v1172 = vpop.f32.mrf.mxu0
    %v1173 = vadd.f32 %v769, %v1172
    %1174 = vmatmul.f32.gmra.mxu0 %v683
    %v1175 = vpop.f32.mrf.mxu0
    %v1176 = vadd.f32 %v769, %v1175
    %1177 = vmatmul.f32.gmra.mxu0 %v684
    %v1178 = vpop.f32.mrf.mxu0
    %v1179 = vadd.f32 %v769, %v1178
    %1180 = vmatmul.f32.gmra.mxu0 %v685
    %v1181 = vpop.f32.mrf.mxu0
    %v1182 = vadd.f32 %v769, %v1181
    %1183 = vmatmul.f32.gmra.mxu0 %v686
    %v1184 = vpop.f32.mrf.mxu0
    %v1185 = vadd.f32 %v769, %v1184
    %1186 = vmatmul.f32.gmra.mxu0 %v687
    %v1187 = vpop.f32.mrf.mxu0
    %v1188 = vadd.f32 %v769, %v1187
    %1189 = vmatmul.f32.gmra.mxu0 %v688
    %v1190 = vpop.f32.mrf.mxu0
    %v1191 = vadd.f32 %v769, %v1190
    %1192 = vmatmul.f32.gmra.mxu0 %v689
    %v1193 = vpop.f32.mrf.mxu0
    %v1194 = vadd.f32 %v769, %v1193
    %1195 = vmatmul.f32.gmra.mxu0 %v690
    %v1196 = vpop.f32.mrf.mxu0
    %v1197 = vadd.f32 %v769, %v1196
    %1198 = vmatmul.f32.gmra.mxu0 %v691
    %v1199 = vpop.f32.mrf.mxu0
    %v1200 = vadd.f32 %v769, %v1199
    %1201 = vmatmul.f32.gmra.mxu0 %v692
    %v1202 = vpop.f32.mrf.mxu0
    %v1203 = vadd.f32 %v769, %v1202
    %1204 = vmatmul.f32.gmra.mxu0 %v693
    %v1205 = vpop.f32.mrf.mxu0
    %v1206 = vadd.f32 %v769, %v1205
    %1207 = vmatmul.f32.gmra.mxu0 %v694
    %v1208 = vpop.f32.mrf.mxu0
    %v1209 = vadd.f32 %v769, %v1208
    %1210 = vmatmul.f32.gmra.mxu0 %v695
    %v1211 = vpop.f32.mrf.mxu0
    %v1212 = vadd.f32 %v769, %v1211
    %1213 = vmatmul.f32.gmra.mxu0 %v696
    %v1214 = vpop.f32.mrf.mxu0
    %v1215 = vadd.f32 %v769, %v1214
    %1216 = vmatmul.f32.gmra.mxu0 %v697
    %v1217 = vpop.f32.mrf.mxu0
    %v1218 = vadd.f32 %v769, %v1217
    %1219 = vmatmul.f32.gmra.mxu0 %v698
    %v1220 = vpop.f32.mrf.mxu0
    %v1221 = vadd.f32 %v769, %v1220
    %1222 = vmatmul.f32.gmra.mxu0 %v699
    %v1223 = vpop.f32.mrf.mxu0
    %v1224 = vadd.f32 %v769, %v1223
    %1225 = vdwg.mxu0
    %v1226 = vmul.f32 %v792, 0.5
    %v1227 = vmul.f32 %v905, 0.5
    %v1228 = vmul.f32 %v1018, 0.5
    %v1229 = vmul.f32 %v1131, 0.5
    %v1230 = vmul.f32 %v795, 0.5
    %v1231 = vmul.f32 %v908, 0.5
    %v1232 = vmul.f32 %v1021, 0.5
    %v1233 = vmul.f32 %v1134, 0.5
    %v1234 = vmul.f32 %v798, 0.5
    %v1235 = vmul.f32 %v911, 0.5
    %v1236 = vmul.f32 %v1024, 0.5
    %v1237 = vmul.f32 %v1137, 0.5
    %v1238 = vmul.f32 %v801, 0.5
    %v1239 = vmul.f32 %v914, 0.5
    %v1240 = vmul.f32 %v1027, 0.5
    %v1241 = vmul.f32 %v1140, 0.5
    %v1242 = vmul.f32 %v804, 0.5
    %v1243 = vmul.f32 %v917, 0.5
    %v1244 = vmul.f32 %v1030, 0.5
    %v1245 = vmul.f32 %v1143, 0.5
    %v1246 = vmul.f32 %v807, 0.5
    %v1247 = vmul.f32 %v920, 0.5
    %v1248 = vmul.f32 %v1033, 0.5
    %v1249 = vmul.f32 %v1146, 0.5
    %v1250 = vmul.f32 %v810, 0.5
    %v1251 = vmul.f32 %v923, 0.5
    %v1252 = vmul.f32 %v1036, 0.5
    %v1253 = vmul.f32 %v1149, 0.5
    %v1254 = vmul.f32 %v813, 0.5
    %v1255 = vmul.f32 %v926, 0.5
    %v1256 = vmul.f32 %v1039, 0.5
    %v1257 = vmul.f32 %v1152, 0.5
    %v1258 = vmul.f32 %v816, 0.5
    %v1259 = vmul.f32 %v929, 0.5
    %v1260 = vmul.f32 %v1042, 0.5
    %v1261 = vmul.f32 %v1155, 0.5
    %v1262 = vmul.f32 %v819, 0.5
    %v1263 = vmul.f32 %v932, 0.5
    %v1264 = vmul.f32 %v1045, 0.5
    %v1265 = vmul.f32 %v1158, 0.5
    %v1266 = vmul.f32 %v822, 0.5
    %v1267 = vmul.f32 %v935, 0.5
    %v1268 = vmul.f32 %v1048, 0.5
    %v1269 = vmul.f32 %v1161, 0.5
    %v1270 = vmul.f32 %v825, 0.5
    %v1271 = vmul.f32 %v938, 0.5
    %v1272 = vmul.f32 %v1051, 0.5
    %v1273 = vmul.f32 %v1164, 0.5
    %v1274 = vmul.f32 %v828, 0.5
    %v1275 = vmul.f32 %v941, 0.5
    %v1276 = vmul.f32 %v1054, 0.5
    %v1277 = vmul.f32 %v1167, 0.5
    %v1278 = vmul.f32 %v831, 0.5
    %v1279 = vmul.f32 %v944, 0.5
    %v1280 = vmul.f32 %v1057, 0.5
    %v1281 = vmul.f32 %v1170, 0.5
    %v1282 = vmul.f32 %v834, 0.5
    %v1283 = vmul.f32 %v947, 0.5
    %v1284 = vmul.f32 %v1060, 0.5
    %v1285 = vmul.f32 %v1173, 0.5
    %v1286 = vmul.f32 %v837, 0.5
    %v1287 = vmul.f32 %v950, 0.5
    %v1288 = vmul.f32 %v1063, 0.5
    %v1289 = vmul.f32 %v1176, 0.5
    %v1290 = vmul.f32 %v840, 0.5
    %v1291 = vmul.f32 %v953, 0.5
    %v1292 = vmul.f32 %v1066, 0.5
    %v1293 = vmul.f32 %v1179, 0.5
    %v1294 = vmul.f32 %v843, 0.5
    %v1295 = vmul.f32 %v956, 0.5
    %v1296 = vmul.f32 %v1069, 0.5
    %v1297 = vmul.f32 %v1182, 0.5
    %v1298 = vmul.f32 %v846, 0.5
    %v1299 = vmul.f32 %v959, 0.5
    %v1300 = vmul.f32 %v1072, 0.5
    %v1301 = vmul.f32 %v1185, 0.5
    %v1302 = vmul.f32 %v849, 0.5
    %v1303 = vmul.f32 %v962, 0.5
    %v1304 = vmul.f32 %v1075, 0.5
    %v1305 = vmul.f32 %v1188, 0.5
    %v1306 = vmul.f32 %v852, 0.5
    %v1307 = vmul.f32 %v965, 0.5
    %v1308 = vmul.f32 %v1078, 0.5
    %v1309 = vmul.f32 %v1191, 0.5
    %v1310 = vmul.f32 %v855, 0.5
    %v1311 = vmul.f32 %v968, 0.5
    %v1312 = vmul.f32 %v1081, 0.5
    %v1313 = vmul.f32 %v1194, 0.5
    %v1314 = vmul.f32 %v858, 0.5
    %v1315 = vmul.f32 %v971, 0.5
    %v1316 = vmul.f32 %v1084, 0.5
    %v1317 = vmul.f32 %v1197, 0.5
    %v1318 = vmul.f32 %v861, 0.5
    %v1319 = vmul.f32 %v974, 0.5
    %v1320 = vmul.f32 %v1087, 0.5
    %v1321 = vmul.f32 %v1200, 0.5
    %v1322 = vmul.f32 %v864, 0.5
    %v1323 = vmul.f32 %v977, 0.5
    %v1324 = vmul.f32 %v1090, 0.5
    %v1325 = vmul.f32 %v1203, 0.5
    %v1326 = vmul.f32 %v867, 0.5
    %v1327 = vmul.f32 %v980, 0.5
    %v1328 = vmul.f32 %v1093, 0.5
    %v1329 = vmul.f32 %v1206, 0.5
    %v1330 = vmul.f32 %v870, 0.5
    %v1331 = vmul.f32 %v983, 0.5
    %v1332 = vmul.f32 %v1096, 0.5
    %v1333 = vmul.f32 %v1209, 0.5
    %v1334 = vmul.f32 %v873, 0.5
    %v1335 = vmul.f32 %v986, 0.5
    %v1336 = vmul.f32 %v1099, 0.5
    %v1337 = vmul.f32 %v1212, 0.5
    %v1338 = vmul.f32 %v876, 0.5
    %v1339 = vmul.f32 %v989, 0.5
    %v1340 = vmul.f32 %v1102, 0.5
    %v1341 = vmul.f32 %v1215, 0.5
    %v1342 = vmul.f32 %v879, 0.5
    %v1343 = vmul.f32 %v992, 0.5
    %v1344 = vmul.f32 %v1105, 0.5
    %v1345 = vmul.f32 %v1218, 0.5
    %v1346 = vmul.f32 %v882, 0.5
    %v1347 = vmul.f32 %v995, 0.5
    %v1348 = vmul.f32 %v1108, 0.5
    %v1349 = vmul.f32 %v1221, 0.5
    %v1350 = vmul.f32 %v885, 0.5
    %v1351 = vmul.f32 %v998, 0.5
    %v1352 = vmul.f32 %v1111, 0.5
    %v1353 = vmul.f32 %v1224, 0.5
    %v1354 = vmul.f32 %v792, 0.70710677
    %v1355 = vmul.f32 %v905, 0.70710677
    %v1356 = vmul.f32 %v1018, 0.70710677
    %v1357 = vmul.f32 %v1131, 0.70710677
    %v1358 = vmul.f32 %v795, 0.70710677
    %v1359 = vmul.f32 %v908, 0.70710677
    %v1360 = vmul.f32 %v1021, 0.70710677
    %v1361 = vmul.f32 %v1134, 0.70710677
    %v1362 = vmul.f32 %v798, 0.70710677
    %v1363 = vmul.f32 %v911, 0.70710677
    %v1364 = vmul.f32 %v1024, 0.70710677
    %v1365 = vmul.f32 %v1137, 0.70710677
    %v1366 = vmul.f32 %v801, 0.70710677
    %v1367 = vmul.f32 %v914, 0.70710677
    %v1368 = vmul.f32 %v1027, 0.70710677
    %v1369 = vmul.f32 %v1140, 0.70710677
    %v1370 = vmul.f32 %v804, 0.70710677
    %v1371 = vmul.f32 %v917, 0.70710677
    %v1372 = vmul.f32 %v1030, 0.70710677
    %v1373 = vmul.f32 %v1143, 0.70710677
    %v1374 = vmul.f32 %v807, 0.70710677
    %v1375 = vmul.f32 %v920, 0.70710677
    %v1376 = vmul.f32 %v1033, 0.70710677
    %v1377 = vmul.f32 %v1146, 0.70710677
    %v1378 = vmul.f32 %v810, 0.70710677
    %v1379 = vmul.f32 %v923, 0.70710677
    %v1380 = vmul.f32 %v1036, 0.70710677
    %v1381 = vmul.f32 %v1149, 0.70710677
    %v1382 = vmul.f32 %v813, 0.70710677
    %v1383 = vmul.f32 %v926, 0.70710677
    %v1384 = vmul.f32 %v1039, 0.70710677
    %v1385 = vmul.f32 %v1152, 0.70710677
    %v1386 = vmul.f32 %v816, 0.70710677
    %v1387 = vmul.f32 %v929, 0.70710677
    %v1388 = vmul.f32 %v1042, 0.70710677
    %v1389 = vmul.f32 %v1155, 0.70710677
    %v1390 = vmul.f32 %v819, 0.70710677
    %v1391 = vmul.f32 %v932, 0.70710677
    %v1392 = vmul.f32 %v1045, 0.70710677
    %v1393 = vmul.f32 %v1158, 0.70710677
    %v1394 = vmul.f32 %v822, 0.70710677
    %v1395 = vmul.f32 %v935, 0.70710677
    %v1396 = vmul.f32 %v1048, 0.70710677
    %v1397 = vmul.f32 %v1161, 0.70710677
    %v1398 = vmul.f32 %v825, 0.70710677
    %v1399 = vmul.f32 %v938, 0.70710677
    %v1400 = vmul.f32 %v1051, 0.70710677
    %v1401 = vmul.f32 %v1164, 0.70710677
    %v1402 = vmul.f32 %v828, 0.70710677
    %v1403 = vmul.f32 %v941, 0.70710677
    %v1404 = vmul.f32 %v1054, 0.70710677
    %v1405 = vmul.f32 %v1167, 0.70710677
    %v1406 = vmul.f32 %v831, 0.70710677
    %v1407 = vmul.f32 %v944, 0.70710677
    %v1408 = vmul.f32 %v1057, 0.70710677
    %v1409 = vmul.f32 %v1170, 0.70710677
    %v1410 = vmul.f32 %v834, 0.70710677
    %v1411 = vmul.f32 %v947, 0.70710677
    %v1412 = vmul.f32 %v1060, 0.70710677
    %v1413 = vmul.f32 %v1173, 0.70710677
    %v1414 = vmul.f32 %v837, 0.70710677
    %v1415 = vmul.f32 %v950, 0.70710677
    %v1416 = vmul.f32 %v1063, 0.70710677
    %v1417 = vmul.f32 %v1176, 0.70710677
    %v1418 = vmul.f32 %v840, 0.70710677
    %v1419 = vmul.f32 %v953, 0.70710677
    %v1420 = vmul.f32 %v1066, 0.70710677
    %v1421 = vmul.f32 %v1179, 0.70710677
    %v1422 = vmul.f32 %v843, 0.70710677
    %v1423 = vmul.f32 %v956, 0.70710677
    %v1424 = vmul.f32 %v1069, 0.70710677
    %v1425 = vmul.f32 %v1182, 0.70710677
    %v1426 = vmul.f32 %v846, 0.70710677
    %v1427 = vmul.f32 %v959, 0.70710677
    %v1428 = vmul.f32 %v1072, 0.70710677
    %v1429 = vmul.f32 %v1185, 0.70710677
    %v1430 = vmul.f32 %v849, 0.70710677
    %v1431 = vmul.f32 %v962, 0.70710677
    %v1432 = vmul.f32 %v1075, 0.70710677
    %v1433 = vmul.f32 %v1188, 0.70710677
    %v1434 = vmul.f32 %v852, 0.70710677
    %v1435 = vmul.f32 %v965, 0.70710677
    %v1436 = vmul.f32 %v1078, 0.70710677
    %v1437 = vmul.f32 %v1191, 0.70710677
    %v1438 = vmul.f32 %v855, 0.70710677
    %v1439 = vmul.f32 %v968, 0.70710677
    %v1440 = vmul.f32 %v1081, 0.70710677
    %v1441 = vmul.f32 %v1194, 0.70710677
    %v1442 = vmul.f32 %v858, 0.70710677
    %v1443 = vmul.f32 %v971, 0.70710677
    %v1444 = vmul.f32 %v1084, 0.70710677
    %v1445 = vmul.f32 %v1197, 0.70710677
    %v1446 = vmul.f32 %v861, 0.70710677
    %v1447 = vmul.f32 %v974, 0.70710677
    %v1448 = vmul.f32 %v1087, 0.70710677
    %v1449 = vmul.f32 %v1200, 0.70710677
    %v1450 = vmul.f32 %v864, 0.70710677
    %v1451 = vmul.f32 %v977, 0.70710677
    %v1452 = vmul.f32 %v1090, 0.70710677
    %v1453 = vmul.f32 %v1203, 0.70710677
    %v1454 = vmul.f32 %v867, 0.70710677
    %v1455 = vmul.f32 %v980, 0.70710677
    %v1456 = vmul.f32 %v1093, 0.70710677
    %v1457 = vmul.f32 %v1206, 0.70710677
    %v1458 = vmul.f32 %v870, 0.70710677
    %v1459 = vmul.f32 %v983, 0.70710677
    %v1460 = vmul.f32 %v1096, 0.70710677
    %v1461 = vmul.f32 %v1209, 0.70710677
    %v1462 = vmul.f32 %v873, 0.70710677
    %v1463 = vmul.f32 %v986, 0.70710677
    %v1464 = vmul.f32 %v1099, 0.70710677
    %v1465 = vmul.f32 %v1212, 0.70710677
    %v1466 = vmul.f32 %v876, 0.70710677
    %v1467 = vmul.f32 %v989, 0.70710677
    %v1468 = vmul.f32 %v1102, 0.70710677
    %v1469 = vmul.f32 %v1215, 0.70710677
    %v1470 = vmul.f32 %v879, 0.70710677
    %v1471 = vmul.f32 %v992, 0.70710677
    %v1472 = vmul.f32 %v1105, 0.70710677
    %v1473 = vmul.f32 %v1218, 0.70710677
    %v1474 = vmul.f32 %v882, 0.70710677
    %v1475 = vmul.f32 %v995, 0.70710677
    %v1476 = vmul.f32 %v1108, 0.70710677
    %v1477 = vmul.f32 %v1221, 0.70710677
    %v1478 = vmul.f32 %v885, 0.70710677
    %v1479 = vmul.f32 %v998, 0.70710677
    %v1480 = vmul.f32 %v1111, 0.70710677
    %v1481 = vmul.f32 %v1224, 0.70710677
    %v1482 = vmul.f32 %v1354, %v1354
    %v1483 = vmin.f32 16.0, %v1482
    %v1484 = vmul.f32 %v1483, 2.1237322e-06
    %v1485 = vadd.f32 %v1484, 0.00028619796
    %v1486 = vmul.f32 %v1483, %v1485
    %v1487 = vadd.f32 %v1486, 0.0036580483
    %v1488 = vmul.f32 %v1483, %v1487
    %v1489 = vadd.f32 %v1488, 0.05243302
    %v1490 = vmul.f32 %v1483, %v1489
    %v1491 = vadd.f32 %v1490, 0.18741608
    %v1492 = vmul.f32 %v1483, %v1491
    %v1493 = vadd.f32 %v1492, 1.1283791
    %v1494 = vmul.f32 %v1354, %v1493
    %v1495 = vmul.f32 %v1483, 3.8918573e-05
    %v1496 = vadd.f32 %v1495, 0.001143296
    %v1497 = vmul.f32 %v1483, %v1496
    %v1498 = vadd.f32 %v1497, 0.014752088
    %v1499 = vmul.f32 %v1483, %v1498
    %v1500 = vadd.f32 %v1499, 0.112945676
    %v1501 = vmul.f32 %v1483, %v1500
    %v1502 = vadd.f32 %v1501, 0.4994258
    %v1503 = vmul.f32 %v1483, %v1502
    %v1504 = vadd.f32 %v1503, 1.0
    %v1505 = vrcp.pop %v1504
    %v1506 = vmul.f32 %v1504, %v1505
    %v1507 = vsub.f32 1.0, %v1506
    %v1508 = vmul.f32 %v1505, %v1507
    %v1509 = vadd.f32 %v1505, %v1508
    %vm1510 = vweird.f32 %v1504
    %vm1511 = vweird.f32 %v1505
    %vm1512 = vmor %vm1510, %vm1511
    %v1513 = vsel %vm1512, %v1505, %v1509
    %v1514 = vand.u32 2147483647, %v1504
    %vm1515 = vcmp.eq.f32.partialorder %v1514, 8.507059e+37
    %v1516 = vand.u32 %v1504, 2147483648
    %v1517 = vor.u32 1.1754944e-38, %v1516
    %v1518 = vsel %vm1515, %v1517, %v1513
    %v1519 = vmul.f32 %v1494, %v1518
    %v1520 = vmin.f32 %v1519, 1.0
    %v1521 = vmax.f32 %v1520, -1.0
    %v1522 = vmul.f32 %v1355, %v1355
    %v1523 = vmin.f32 16.0, %v1522
    %v1524 = vmul.f32 %v1523, 2.1237322e-06
    %v1525 = vadd.f32 %v1524, 0.00028619796
    %v1526 = vmul.f32 %v1523, %v1525
    %v1527 = vadd.f32 %v1526, 0.0036580483
    %v1528 = vmul.f32 %v1523, %v1527
    %v1529 = vadd.f32 %v1528, 0.05243302
    %v1530 = vmul.f32 %v1523, %v1529
    %v1531 = vadd.f32 %v1530, 0.18741608
    %v1532 = vmul.f32 %v1523, %v1531
    %v1533 = vadd.f32 %v1532, 1.1283791
    %v1534 = vmul.f32 %v1355, %v1533
    %v1535 = vmul.f32 %v1523, 3.8918573e-05
    %v1536 = vadd.f32 %v1535, 0.001143296
    %v1537 = vmul.f32 %v1523, %v1536
    %v1538 = vadd.f32 %v1537, 0.014752088
    %v1539 = vmul.f32 %v1523, %v1538
    %v1540 = vadd.f32 %v1539, 0.112945676
    %v1541 = vmul.f32 %v1523, %v1540
    %v1542 = vadd.f32 %v1541, 0.4994258
    %v1543 = vmul.f32 %v1523, %v1542
    %v1544 = vadd.f32 %v1543, 1.0
    %v1545 = vrcp.pop %v1544
    %v1546 = vmul.f32 %v1544, %v1545
    %v1547 = vsub.f32 1.0, %v1546
    %v1548 = vmul.f32 %v1545, %v1547
    %v1549 = vadd.f32 %v1545, %v1548
    %vm1550 = vweird.f32 %v1544
    %vm1551 = vweird.f32 %v1545
    %vm1552 = vmor %vm1550, %vm1551
    %v1553 = vsel %vm1552, %v1545, %v1549
    %v1554 = vand.u32 2147483647, %v1544
    %vm1555 = vcmp.eq.f32.partialorder %v1554, 8.507059e+37
    %v1556 = vand.u32 %v1544, 2147483648
    %v1557 = vor.u32 1.1754944e-38, %v1556
    %v1558 = vsel %vm1555, %v1557, %v1553
    %v1559 = vmul.f32 %v1534, %v1558
    %v1560 = vmin.f32 %v1559, 1.0
    %v1561 = vmax.f32 %v1560, -1.0
    %v1562 = vmul.f32 %v1356, %v1356
    %v1563 = vmin.f32 16.0, %v1562
    %v1564 = vmul.f32 %v1563, 2.1237322e-06
    %v1565 = vadd.f32 %v1564, 0.00028619796
    %v1566 = vmul.f32 %v1563, %v1565
    %v1567 = vadd.f32 %v1566, 0.0036580483
    %v1568 = vmul.f32 %v1563, %v1567
    %v1569 = vadd.f32 %v1568, 0.05243302
    %v1570 = vmul.f32 %v1563, %v1569
    %v1571 = vadd.f32 %v1570, 0.18741608
    %v1572 = vmul.f32 %v1563, %v1571
    %v1573 = vadd.f32 %v1572, 1.1283791
    %v1574 = vmul.f32 %v1356, %v1573
    %v1575 = vmul.f32 %v1563, 3.8918573e-05
    %v1576 = vadd.f32 %v1575, 0.001143296
    %v1577 = vmul.f32 %v1563, %v1576
    %v1578 = vadd.f32 %v1577, 0.014752088
    %v1579 = vmul.f32 %v1563, %v1578
    %v1580 = vadd.f32 %v1579, 0.112945676
    %v1581 = vmul.f32 %v1563, %v1580
    %v1582 = vadd.f32 %v1581, 0.4994258
    %v1583 = vmul.f32 %v1563, %v1582
    %v1584 = vadd.f32 %v1583, 1.0
    %v1585 = vrcp.pop %v1584
    %v1586 = vmul.f32 %v1584, %v1585
    %v1587 = vsub.f32 1.0, %v1586
    %v1588 = vmul.f32 %v1585, %v1587
    %v1589 = vadd.f32 %v1585, %v1588
    %vm1590 = vweird.f32 %v1584
    %vm1591 = vweird.f32 %v1585
    %vm1592 = vmor %vm1590, %vm1591
    %v1593 = vsel %vm1592, %v1585, %v1589
    %v1594 = vand.u32 2147483647, %v1584
    %vm1595 = vcmp.eq.f32.partialorder %v1594, 8.507059e+37
    %v1596 = vand.u32 %v1584, 2147483648
    %v1597 = vor.u32 1.1754944e-38, %v1596
    %v1598 = vsel %vm1595, %v1597, %v1593
    %v1599 = vmul.f32 %v1574, %v1598
    %v1600 = vmin.f32 %v1599, 1.0
    %v1601 = vmax.f32 %v1600, -1.0
    %v1602 = vmul.f32 %v1357, %v1357
    %v1603 = vmin.f32 16.0, %v1602
    %v1604 = vmul.f32 %v1603, 2.1237322e-06
    %v1605 = vadd.f32 %v1604, 0.00028619796
    %v1606 = vmul.f32 %v1603, %v1605
    %v1607 = vadd.f32 %v1606, 0.0036580483
    %v1608 = vmul.f32 %v1603, %v1607
    %v1609 = vadd.f32 %v1608, 0.05243302
    %v1610 = vmul.f32 %v1603, %v1609
    %v1611 = vadd.f32 %v1610, 0.18741608
    %v1612 = vmul.f32 %v1603, %v1611
    %v1613 = vadd.f32 %v1612, 1.1283791
    %v1614 = vmul.f32 %v1357, %v1613
    %v1615 = vmul.f32 %v1603, 3.8918573e-05
    %v1616 = vadd.f32 %v1615, 0.001143296
    %v1617 = vmul.f32 %v1603, %v1616
    %v1618 = vadd.f32 %v1617, 0.014752088
    %v1619 = vmul.f32 %v1603, %v1618
    %v1620 = vadd.f32 %v1619, 0.112945676
    %v1621 = vmul.f32 %v1603, %v1620
    %v1622 = vadd.f32 %v1621, 0.4994258
    %v1623 = vmul.f32 %v1603, %v1622
    %v1624 = vadd.f32 %v1623, 1.0
    %v1625 = vrcp.pop %v1624
    %v1626 = vmul.f32 %v1624, %v1625
    %v1627 = vsub.f32 1.0, %v1626
    %v1628 = vmul.f32 %v1625, %v1627
    %v1629 = vadd.f32 %v1625, %v1628
    %vm1630 = vweird.f32 %v1624
    %vm1631 = vweird.f32 %v1625
    %vm1632 = vmor %vm1630, %vm1631
    %v1633 = vsel %vm1632, %v1625, %v1629
    %v1634 = vand.u32 2147483647, %v1624
    %vm1635 = vcmp.eq.f32.partialorder %v1634, 8.507059e+37
    %v1636 = vand.u32 %v1624, 2147483648
    %v1637 = vor.u32 1.1754944e-38, %v1636
    %v1638 = vsel %vm1635, %v1637, %v1633
    %v1639 = vmul.f32 %v1614, %v1638
    %v1640 = vmin.f32 %v1639, 1.0
    %v1641 = vmax.f32 %v1640, -1.0
    %v1642 = vmul.f32 %v1358, %v1358
    %v1643 = vmin.f32 16.0, %v1642
    %v1644 = vmul.f32 %v1643, 2.1237322e-06
    %v1645 = vadd.f32 %v1644, 0.00028619796
    %v1646 = vmul.f32 %v1643, %v1645
    %v1647 = vadd.f32 %v1646, 0.0036580483
    %v1648 = vmul.f32 %v1643, %v1647
    %v1649 = vadd.f32 %v1648, 0.05243302
    %v1650 = vmul.f32 %v1643, %v1649
    %v1651 = vadd.f32 %v1650, 0.18741608
    %v1652 = vmul.f32 %v1643, %v1651
    %v1653 = vadd.f32 %v1652, 1.1283791
    %v1654 = vmul.f32 %v1358, %v1653
    %v1655 = vmul.f32 %v1643, 3.8918573e-05
    %v1656 = vadd.f32 %v1655, 0.001143296
    %v1657 = vmul.f32 %v1643, %v1656
    %v1658 = vadd.f32 %v1657, 0.014752088
    %v1659 = vmul.f32 %v1643, %v1658
    %v1660 = vadd.f32 %v1659, 0.112945676
    %v1661 = vmul.f32 %v1643, %v1660
    %v1662 = vadd.f32 %v1661, 0.4994258
    %v1663 = vmul.f32 %v1643, %v1662
    %v1664 = vadd.f32 %v1663, 1.0
    %v1665 = vrcp.pop %v1664
    %v1666 = vmul.f32 %v1664, %v1665
    %v1667 = vsub.f32 1.0, %v1666
    %v1668 = vmul.f32 %v1665, %v1667
    %v1669 = vadd.f32 %v1665, %v1668
    %vm1670 = vweird.f32 %v1664
    %vm1671 = vweird.f32 %v1665
    %vm1672 = vmor %vm1670, %vm1671
    %v1673 = vsel %vm1672, %v1665, %v1669
    %v1674 = vand.u32 2147483647, %v1664
    %vm1675 = vcmp.eq.f32.partialorder %v1674, 8.507059e+37
    %v1676 = vand.u32 %v1664, 2147483648
    %v1677 = vor.u32 1.1754944e-38, %v1676
    %v1678 = vsel %vm1675, %v1677, %v1673
    %v1679 = vmul.f32 %v1654, %v1678
    %v1680 = vmin.f32 %v1679, 1.0
    %v1681 = vmax.f32 %v1680, -1.0
    %v1682 = vmul.f32 %v1359, %v1359
    %v1683 = vmin.f32 16.0, %v1682
    %v1684 = vmul.f32 %v1683, 2.1237322e-06
    %v1685 = vadd.f32 %v1684, 0.00028619796
    %v1686 = vmul.f32 %v1683, %v1685
    %v1687 = vadd.f32 %v1686, 0.0036580483
    %v1688 = vmul.f32 %v1683, %v1687
    %v1689 = vadd.f32 %v1688, 0.05243302
    %v1690 = vmul.f32 %v1683, %v1689
    %v1691 = vadd.f32 %v1690, 0.18741608
    %v1692 = vmul.f32 %v1683, %v1691
    %v1693 = vadd.f32 %v1692, 1.1283791
    %v1694 = vmul.f32 %v1359, %v1693
    %v1695 = vmul.f32 %v1683, 3.8918573e-05
    %v1696 = vadd.f32 %v1695, 0.001143296
    %v1697 = vmul.f32 %v1683, %v1696
    %v1698 = vadd.f32 %v1697, 0.014752088
    %v1699 = vmul.f32 %v1683, %v1698
    %v1700 = vadd.f32 %v1699, 0.112945676
    %v1701 = vmul.f32 %v1683, %v1700
    %v1702 = vadd.f32 %v1701, 0.4994258
    %v1703 = vmul.f32 %v1683, %v1702
    %v1704 = vadd.f32 %v1703, 1.0
    %v1705 = vrcp.pop %v1704
    %v1706 = vmul.f32 %v1704, %v1705
    %v1707 = vsub.f32 1.0, %v1706
    %v1708 = vmul.f32 %v1705, %v1707
    %v1709 = vadd.f32 %v1705, %v1708
    %vm1710 = vweird.f32 %v1704
    %vm1711 = vweird.f32 %v1705
    %vm1712 = vmor %vm1710, %vm1711
    %v1713 = vsel %vm1712, %v1705, %v1709
    %v1714 = vand.u32 2147483647, %v1704
    %vm1715 = vcmp.eq.f32.partialorder %v1714, 8.507059e+37
    %v1716 = vand.u32 %v1704, 2147483648
    %v1717 = vor.u32 1.1754944e-38, %v1716
    %v1718 = vsel %vm1715, %v1717, %v1713
    %v1719 = vmul.f32 %v1694, %v1718
    %v1720 = vmin.f32 %v1719, 1.0
    %v1721 = vmax.f32 %v1720, -1.0
    %v1722 = vmul.f32 %v1360, %v1360
    %v1723 = vmin.f32 16.0, %v1722
    %v1724 = vmul.f32 %v1723, 2.1237322e-06
    %v1725 = vadd.f32 %v1724, 0.00028619796
    %v1726 = vmul.f32 %v1723, %v1725
    %v1727 = vadd.f32 %v1726, 0.0036580483
    %v1728 = vmul.f32 %v1723, %v1727
    %v1729 = vadd.f32 %v1728, 0.05243302
    %v1730 = vmul.f32 %v1723, %v1729
    %v1731 = vadd.f32 %v1730, 0.18741608
    %v1732 = vmul.f32 %v1723, %v1731
    %v1733 = vadd.f32 %v1732, 1.1283791
    %v1734 = vmul.f32 %v1360, %v1733
    %v1735 = vmul.f32 %v1723, 3.8918573e-05
    %v1736 = vadd.f32 %v1735, 0.001143296
    %v1737 = vmul.f32 %v1723, %v1736
    %v1738 = vadd.f32 %v1737, 0.014752088
    %v1739 = vmul.f32 %v1723, %v1738
    %v1740 = vadd.f32 %v1739, 0.112945676
    %v1741 = vmul.f32 %v1723, %v1740
    %v1742 = vadd.f32 %v1741, 0.4994258
    %v1743 = vmul.f32 %v1723, %v1742
    %v1744 = vadd.f32 %v1743, 1.0
    %v1745 = vrcp.pop %v1744
    %v1746 = vmul.f32 %v1744, %v1745
    %v1747 = vsub.f32 1.0, %v1746
    %v1748 = vmul.f32 %v1745, %v1747
    %v1749 = vadd.f32 %v1745, %v1748
    %vm1750 = vweird.f32 %v1744
    %vm1751 = vweird.f32 %v1745
    %vm1752 = vmor %vm1750, %vm1751
    %v1753 = vsel %vm1752, %v1745, %v1749
    %v1754 = vand.u32 2147483647, %v1744
    %vm1755 = vcmp.eq.f32.partialorder %v1754, 8.507059e+37
    %v1756 = vand.u32 %v1744, 2147483648
    %v1757 = vor.u32 1.1754944e-38, %v1756
    %v1758 = vsel %vm1755, %v1757, %v1753
    %v1759 = vmul.f32 %v1734, %v1758
    %v1760 = vmin.f32 %v1759, 1.0
    %v1761 = vmax.f32 %v1760, -1.0
    %v1762 = vmul.f32 %v1361, %v1361
    %v1763 = vmin.f32 16.0, %v1762
    %v1764 = vmul.f32 %v1763, 2.1237322e-06
    %v1765 = vadd.f32 %v1764, 0.00028619796
    %v1766 = vmul.f32 %v1763, %v1765
    %v1767 = vadd.f32 %v1766, 0.0036580483
    %v1768 = vmul.f32 %v1763, %v1767
    %v1769 = vadd.f32 %v1768, 0.05243302
    %v1770 = vmul.f32 %v1763, %v1769
    %v1771 = vadd.f32 %v1770, 0.18741608
    %v1772 = vmul.f32 %v1763, %v1771
    %v1773 = vadd.f32 %v1772, 1.1283791
    %v1774 = vmul.f32 %v1361, %v1773
    %v1775 = vmul.f32 %v1763, 3.8918573e-05
    %v1776 = vadd.f32 %v1775, 0.001143296
    %v1777 = vmul.f32 %v1763, %v1776
    %v1778 = vadd.f32 %v1777, 0.014752088
    %v1779 = vmul.f32 %v1763, %v1778
    %v1780 = vadd.f32 %v1779, 0.112945676
    %v1781 = vmul.f32 %v1763, %v1780
    %v1782 = vadd.f32 %v1781, 0.4994258
    %v1783 = vmul.f32 %v1763, %v1782
    %v1784 = vadd.f32 %v1783, 1.0
    %v1785 = vrcp.pop %v1784
    %v1786 = vmul.f32 %v1784, %v1785
    %v1787 = vsub.f32 1.0, %v1786
    %v1788 = vmul.f32 %v1785, %v1787
    %v1789 = vadd.f32 %v1785, %v1788
    %vm1790 = vweird.f32 %v1784
    %vm1791 = vweird.f32 %v1785
    %vm1792 = vmor %vm1790, %vm1791
    %v1793 = vsel %vm1792, %v1785, %v1789
    %v1794 = vand.u32 2147483647, %v1784
    %vm1795 = vcmp.eq.f32.partialorder %v1794, 8.507059e+37
    %v1796 = vand.u32 %v1784, 2147483648
    %v1797 = vor.u32 1.1754944e-38, %v1796
    %v1798 = vsel %vm1795, %v1797, %v1793
    %v1799 = vmul.f32 %v1774, %v1798
    %v1800 = vmin.f32 %v1799, 1.0
    %v1801 = vmax.f32 %v1800, -1.0
    %v1802 = vmul.f32 %v1362, %v1362
    %v1803 = vmin.f32 16.0, %v1802
    %v1804 = vmul.f32 %v1803, 2.1237322e-06
    %v1805 = vadd.f32 %v1804, 0.00028619796
    %v1806 = vmul.f32 %v1803, %v1805
    %v1807 = vadd.f32 %v1806, 0.0036580483
    %v1808 = vmul.f32 %v1803, %v1807
    %v1809 = vadd.f32 %v1808, 0.05243302
    %v1810 = vmul.f32 %v1803, %v1809
    %v1811 = vadd.f32 %v1810, 0.18741608
    %v1812 = vmul.f32 %v1803, %v1811
    %v1813 = vadd.f32 %v1812, 1.1283791
    %v1814 = vmul.f32 %v1362, %v1813
    %v1815 = vmul.f32 %v1803, 3.8918573e-05
    %v1816 = vadd.f32 %v1815, 0.001143296
    %v1817 = vmul.f32 %v1803, %v1816
    %v1818 = vadd.f32 %v1817, 0.014752088
    %v1819 = vmul.f32 %v1803, %v1818
    %v1820 = vadd.f32 %v1819, 0.112945676
    %v1821 = vmul.f32 %v1803, %v1820
    %v1822 = vadd.f32 %v1821, 0.4994258
    %v1823 = vmul.f32 %v1803, %v1822
    %v1824 = vadd.f32 %v1823, 1.0
    %v1825 = vrcp.pop %v1824
    %v1826 = vmul.f32 %v1824, %v1825
    %v1827 = vsub.f32 1.0, %v1826
    %v1828 = vmul.f32 %v1825, %v1827
    %v1829 = vadd.f32 %v1825, %v1828
    %vm1830 = vweird.f32 %v1824
    %vm1831 = vweird.f32 %v1825
    %vm1832 = vmor %vm1830, %vm1831
    %v1833 = vsel %vm1832, %v1825, %v1829
    %v1834 = vand.u32 2147483647, %v1824
    %vm1835 = vcmp.eq.f32.partialorder %v1834, 8.507059e+37
    %v1836 = vand.u32 %v1824, 2147483648
    %v1837 = vor.u32 1.1754944e-38, %v1836
    %v1838 = vsel %vm1835, %v1837, %v1833
    %v1839 = vmul.f32 %v1814, %v1838
    %v1840 = vmin.f32 %v1839, 1.0
    %v1841 = vmax.f32 %v1840, -1.0
    %v1842 = vmul.f32 %v1363, %v1363
    %v1843 = vmin.f32 16.0, %v1842
    %v1844 = vmul.f32 %v1843, 2.1237322e-06
    %v1845 = vadd.f32 %v1844, 0.00028619796
    %v1846 = vmul.f32 %v1843, %v1845
    %v1847 = vadd.f32 %v1846, 0.0036580483
    %v1848 = vmul.f32 %v1843, %v1847
    %v1849 = vadd.f32 %v1848, 0.05243302
    %v1850 = vmul.f32 %v1843, %v1849
    %v1851 = vadd.f32 %v1850, 0.18741608
    %v1852 = vmul.f32 %v1843, %v1851
    %v1853 = vadd.f32 %v1852, 1.1283791
    %v1854 = vmul.f32 %v1363, %v1853
    %v1855 = vmul.f32 %v1843, 3.8918573e-05
    %v1856 = vadd.f32 %v1855, 0.001143296
    %v1857 = vmul.f32 %v1843, %v1856
    %v1858 = vadd.f32 %v1857, 0.014752088
    %v1859 = vmul.f32 %v1843, %v1858
    %v1860 = vadd.f32 %v1859, 0.112945676
    %v1861 = vmul.f32 %v1843, %v1860
    %v1862 = vadd.f32 %v1861, 0.4994258
    %v1863 = vmul.f32 %v1843, %v1862
    %v1864 = vadd.f32 %v1863, 1.0
    %v1865 = vrcp.pop %v1864
    %v1866 = vmul.f32 %v1864, %v1865
    %v1867 = vsub.f32 1.0, %v1866
    %v1868 = vmul.f32 %v1865, %v1867
    %v1869 = vadd.f32 %v1865, %v1868
    %vm1870 = vweird.f32 %v1864
    %vm1871 = vweird.f32 %v1865
    %vm1872 = vmor %vm1870, %vm1871
    %v1873 = vsel %vm1872, %v1865, %v1869
    %v1874 = vand.u32 2147483647, %v1864
    %vm1875 = vcmp.eq.f32.partialorder %v1874, 8.507059e+37
    %v1876 = vand.u32 %v1864, 2147483648
    %v1877 = vor.u32 1.1754944e-38, %v1876
    %v1878 = vsel %vm1875, %v1877, %v1873
    %v1879 = vmul.f32 %v1854, %v1878
    %v1880 = vmin.f32 %v1879, 1.0
    %v1881 = vmax.f32 %v1880, -1.0
    %v1882 = vmul.f32 %v1364, %v1364
    %v1883 = vmin.f32 16.0, %v1882
    %v1884 = vmul.f32 %v1883, 2.1237322e-06
    %v1885 = vadd.f32 %v1884, 0.00028619796
    %v1886 = vmul.f32 %v1883, %v1885
    %v1887 = vadd.f32 %v1886, 0.0036580483
    %v1888 = vmul.f32 %v1883, %v1887
    %v1889 = vadd.f32 %v1888, 0.05243302
    %v1890 = vmul.f32 %v1883, %v1889
    %v1891 = vadd.f32 %v1890, 0.18741608
    %v1892 = vmul.f32 %v1883, %v1891
    %v1893 = vadd.f32 %v1892, 1.1283791
    %v1894 = vmul.f32 %v1364, %v1893
    %v1895 = vmul.f32 %v1883, 3.8918573e-05
    %v1896 = vadd.f32 %v1895, 0.001143296
    %v1897 = vmul.f32 %v1883, %v1896
    %v1898 = vadd.f32 %v1897, 0.014752088
    %v1899 = vmul.f32 %v1883, %v1898
    %v1900 = vadd.f32 %v1899, 0.112945676
    %v1901 = vmul.f32 %v1883, %v1900
    %v1902 = vadd.f32 %v1901, 0.4994258
    %v1903 = vmul.f32 %v1883, %v1902
    %v1904 = vadd.f32 %v1903, 1.0
    %v1905 = vrcp.pop %v1904
    %v1906 = vmul.f32 %v1904, %v1905
    %v1907 = vsub.f32 1.0, %v1906
    %v1908 = vmul.f32 %v1905, %v1907
    %v1909 = vadd.f32 %v1905, %v1908
    %vm1910 = vweird.f32 %v1904
    %vm1911 = vweird.f32 %v1905
    %vm1912 = vmor %vm1910, %vm1911
    %v1913 = vsel %vm1912, %v1905, %v1909
    %v1914 = vand.u32 2147483647, %v1904
    %vm1915 = vcmp.eq.f32.partialorder %v1914, 8.507059e+37
    %v1916 = vand.u32 %v1904, 2147483648
    %v1917 = vor.u32 1.1754944e-38, %v1916
    %v1918 = vsel %vm1915, %v1917, %v1913
    %v1919 = vmul.f32 %v1894, %v1918
    %v1920 = vmin.f32 %v1919, 1.0
    %v1921 = vmax.f32 %v1920, -1.0
    %v1922 = vmul.f32 %v1365, %v1365
    %v1923 = vmin.f32 16.0, %v1922
    %v1924 = vmul.f32 %v1923, 2.1237322e-06
    %v1925 = vadd.f32 %v1924, 0.00028619796
    %v1926 = vmul.f32 %v1923, %v1925
    %v1927 = vadd.f32 %v1926, 0.0036580483
    %v1928 = vmul.f32 %v1923, %v1927
    %v1929 = vadd.f32 %v1928, 0.05243302
    %v1930 = vmul.f32 %v1923, %v1929
    %v1931 = vadd.f32 %v1930, 0.18741608
    %v1932 = vmul.f32 %v1923, %v1931
    %v1933 = vadd.f32 %v1932, 1.1283791
    %v1934 = vmul.f32 %v1365, %v1933
    %v1935 = vmul.f32 %v1923, 3.8918573e-05
    %v1936 = vadd.f32 %v1935, 0.001143296
    %v1937 = vmul.f32 %v1923, %v1936
    %v1938 = vadd.f32 %v1937, 0.014752088
    %v1939 = vmul.f32 %v1923, %v1938
    %v1940 = vadd.f32 %v1939, 0.112945676
    %v1941 = vmul.f32 %v1923, %v1940
    %v1942 = vadd.f32 %v1941, 0.4994258
    %v1943 = vmul.f32 %v1923, %v1942
    %v1944 = vadd.f32 %v1943, 1.0
    %v1945 = vrcp.pop %v1944
    %v1946 = vmul.f32 %v1944, %v1945
    %v1947 = vsub.f32 1.0, %v1946
    %v1948 = vmul.f32 %v1945, %v1947
    %v1949 = vadd.f32 %v1945, %v1948
    %vm1950 = vweird.f32 %v1944
    %vm1951 = vweird.f32 %v1945
    %vm1952 = vmor %vm1950, %vm1951
    %v1953 = vsel %vm1952, %v1945, %v1949
    %v1954 = vand.u32 2147483647, %v1944
    %vm1955 = vcmp.eq.f32.partialorder %v1954, 8.507059e+37
    %v1956 = vand.u32 %v1944, 2147483648
    %v1957 = vor.u32 1.1754944e-38, %v1956
    %v1958 = vsel %vm1955, %v1957, %v1953
    %v1959 = vmul.f32 %v1934, %v1958
    %v1960 = vmin.f32 %v1959, 1.0
    %v1961 = vmax.f32 %v1960, -1.0
    %v1962 = vmul.f32 %v1366, %v1366
    %v1963 = vmin.f32 16.0, %v1962
    %v1964 = vmul.f32 %v1963, 2.1237322e-06
    %v1965 = vadd.f32 %v1964, 0.00028619796
    %v1966 = vmul.f32 %v1963, %v1965
    %v1967 = vadd.f32 %v1966, 0.0036580483
    %v1968 = vmul.f32 %v1963, %v1967
    %v1969 = vadd.f32 %v1968, 0.05243302
    %v1970 = vmul.f32 %v1963, %v1969
    %v1971 = vadd.f32 %v1970, 0.18741608
    %v1972 = vmul.f32 %v1963, %v1971
    %v1973 = vadd.f32 %v1972, 1.1283791
    %v1974 = vmul.f32 %v1366, %v1973
    %v1975 = vmul.f32 %v1963, 3.8918573e-05
    %v1976 = vadd.f32 %v1975, 0.001143296
    %v1977 = vmul.f32 %v1963, %v1976
    %v1978 = vadd.f32 %v1977, 0.014752088
    %v1979 = vmul.f32 %v1963, %v1978
    %v1980 = vadd.f32 %v1979, 0.112945676
    %v1981 = vmul.f32 %v1963, %v1980
    %v1982 = vadd.f32 %v1981, 0.4994258
    %v1983 = vmul.f32 %v1963, %v1982
    %v1984 = vadd.f32 %v1983, 1.0
    %v1985 = vrcp.pop %v1984
    %v1986 = vmul.f32 %v1984, %v1985
    %v1987 = vsub.f32 1.0, %v1986
    %v1988 = vmul.f32 %v1985, %v1987
    %v1989 = vadd.f32 %v1985, %v1988
    %vm1990 = vweird.f32 %v1984
    %vm1991 = vweird.f32 %v1985
    %vm1992 = vmor %vm1990, %vm1991
    %v1993 = vsel %vm1992, %v1985, %v1989
    %v1994 = vand.u32 2147483647, %v1984
    %vm1995 = vcmp.eq.f32.partialorder %v1994, 8.507059e+37
    %v1996 = vand.u32 %v1984, 2147483648
    %v1997 = vor.u32 1.1754944e-38, %v1996
    %v1998 = vsel %vm1995, %v1997, %v1993
    %v1999 = vmul.f32 %v1974, %v1998
    %v2000 = vmin.f32 %v1999, 1.0
    %v2001 = vmax.f32 %v2000, -1.0
    %v2002 = vmul.f32 %v1367, %v1367
    %v2003 = vmin.f32 16.0, %v2002
    %v2004 = vmul.f32 %v2003, 2.1237322e-06
    %v2005 = vadd.f32 %v2004, 0.00028619796
    %v2006 = vmul.f32 %v2003, %v2005
    %v2007 = vadd.f32 %v2006, 0.0036580483
    %v2008 = vmul.f32 %v2003, %v2007
    %v2009 = vadd.f32 %v2008, 0.05243302
    %v2010 = vmul.f32 %v2003, %v2009
    %v2011 = vadd.f32 %v2010, 0.18741608
    %v2012 = vmul.f32 %v2003, %v2011
    %v2013 = vadd.f32 %v2012, 1.1283791
    %v2014 = vmul.f32 %v1367, %v2013
    %v2015 = vmul.f32 %v2003, 3.8918573e-05
    %v2016 = vadd.f32 %v2015, 0.001143296
    %v2017 = vmul.f32 %v2003, %v2016
    %v2018 = vadd.f32 %v2017, 0.014752088
    %v2019 = vmul.f32 %v2003, %v2018
    %v2020 = vadd.f32 %v2019, 0.112945676
    %v2021 = vmul.f32 %v2003, %v2020
    %v2022 = vadd.f32 %v2021, 0.4994258
    %v2023 = vmul.f32 %v2003, %v2022
    %v2024 = vadd.f32 %v2023, 1.0
    %v2025 = vrcp.pop %v2024
    %v2026 = vmul.f32 %v2024, %v2025
    %v2027 = vsub.f32 1.0, %v2026
    %v2028 = vmul.f32 %v2025, %v2027
    %v2029 = vadd.f32 %v2025, %v2028
    %vm2030 = vweird.f32 %v2024
    %vm2031 = vweird.f32 %v2025
    %vm2032 = vmor %vm2030, %vm2031
    %v2033 = vsel %vm2032, %v2025, %v2029
    %v2034 = vand.u32 2147483647, %v2024
    %vm2035 = vcmp.eq.f32.partialorder %v2034, 8.507059e+37
    %v2036 = vand.u32 %v2024, 2147483648
    %v2037 = vor.u32 1.1754944e-38, %v2036
    %v2038 = vsel %vm2035, %v2037, %v2033
    %v2039 = vmul.f32 %v2014, %v2038
    %v2040 = vmin.f32 %v2039, 1.0
    %v2041 = vmax.f32 %v2040, -1.0
    %v2042 = vmul.f32 %v1368, %v1368
    %v2043 = vmin.f32 16.0, %v2042
    %v2044 = vmul.f32 %v2043, 2.1237322e-06
    %v2045 = vadd.f32 %v2044, 0.00028619796
    %v2046 = vmul.f32 %v2043, %v2045
    %v2047 = vadd.f32 %v2046, 0.0036580483
    %v2048 = vmul.f32 %v2043, %v2047
    %v2049 = vadd.f32 %v2048, 0.05243302
    %v2050 = vmul.f32 %v2043, %v2049
    %v2051 = vadd.f32 %v2050, 0.18741608
    %v2052 = vmul.f32 %v2043, %v2051
    %v2053 = vadd.f32 %v2052, 1.1283791
    %v2054 = vmul.f32 %v1368, %v2053
    %v2055 = vmul.f32 %v2043, 3.8918573e-05
    %v2056 = vadd.f32 %v2055, 0.001143296
    %v2057 = vmul.f32 %v2043, %v2056
    %v2058 = vadd.f32 %v2057, 0.014752088
    %v2059 = vmul.f32 %v2043, %v2058
    %v2060 = vadd.f32 %v2059, 0.112945676
    %v2061 = vmul.f32 %v2043, %v2060
    %v2062 = vadd.f32 %v2061, 0.4994258
    %v2063 = vmul.f32 %v2043, %v2062
    %v2064 = vadd.f32 %v2063, 1.0
    %v2065 = vrcp.pop %v2064
    %v2066 = vmul.f32 %v2064, %v2065
    %v2067 = vsub.f32 1.0, %v2066
    %v2068 = vmul.f32 %v2065, %v2067
    %v2069 = vadd.f32 %v2065, %v2068
    %vm2070 = vweird.f32 %v2064
    %vm2071 = vweird.f32 %v2065
    %vm2072 = vmor %vm2070, %vm2071
    %v2073 = vsel %vm2072, %v2065, %v2069
    %v2074 = vand.u32 2147483647, %v2064
    %vm2075 = vcmp.eq.f32.partialorder %v2074, 8.507059e+37
    %v2076 = vand.u32 %v2064, 2147483648
    %v2077 = vor.u32 1.1754944e-38, %v2076
    %v2078 = vsel %vm2075, %v2077, %v2073
    %v2079 = vmul.f32 %v2054, %v2078
    %v2080 = vmin.f32 %v2079, 1.0
    %v2081 = vmax.f32 %v2080, -1.0
    %v2082 = vmul.f32 %v1369, %v1369
    %v2083 = vmin.f32 16.0, %v2082
    %v2084 = vmul.f32 %v2083, 2.1237322e-06
    %v2085 = vadd.f32 %v2084, 0.00028619796
    %v2086 = vmul.f32 %v2083, %v2085
    %v2087 = vadd.f32 %v2086, 0.0036580483
    %v2088 = vmul.f32 %v2083, %v2087
    %v2089 = vadd.f32 %v2088, 0.05243302
    %v2090 = vmul.f32 %v2083, %v2089
    %v2091 = vadd.f32 %v2090, 0.18741608
    %v2092 = vmul.f32 %v2083, %v2091
    %v2093 = vadd.f32 %v2092, 1.1283791
    %v2094 = vmul.f32 %v1369, %v2093
    %v2095 = vmul.f32 %v2083, 3.8918573e-05
    %v2096 = vadd.f32 %v2095, 0.001143296
    %v2097 = vmul.f32 %v2083, %v2096
    %v2098 = vadd.f32 %v2097, 0.014752088
    %v2099 = vmul.f32 %v2083, %v2098
    %v2100 = vadd.f32 %v2099, 0.112945676
    %v2101 = vmul.f32 %v2083, %v2100
    %v2102 = vadd.f32 %v2101, 0.4994258
    %v2103 = vmul.f32 %v2083, %v2102
    %v2104 = vadd.f32 %v2103, 1.0
    %v2105 = vrcp.pop %v2104
    %v2106 = vmul.f32 %v2104, %v2105
    %v2107 = vsub.f32 1.0, %v2106
    %v2108 = vmul.f32 %v2105, %v2107
    %v2109 = vadd.f32 %v2105, %v2108
    %vm2110 = vweird.f32 %v2104
    %vm2111 = vweird.f32 %v2105
    %vm2112 = vmor %vm2110, %vm2111
    %v2113 = vsel %vm2112, %v2105, %v2109
    %v2114 = vand.u32 2147483647, %v2104
    %vm2115 = vcmp.eq.f32.partialorder %v2114, 8.507059e+37
    %v2116 = vand.u32 %v2104, 2147483648
    %v2117 = vor.u32 1.1754944e-38, %v2116
    %v2118 = vsel %vm2115, %v2117, %v2113
    %v2119 = vmul.f32 %v2094, %v2118
    %v2120 = vmin.f32 %v2119, 1.0
    %v2121 = vmax.f32 %v2120, -1.0
    %v2122 = vmul.f32 %v1370, %v1370
    %v2123 = vmin.f32 16.0, %v2122
    %v2124 = vmul.f32 %v2123, 2.1237322e-06
    %v2125 = vadd.f32 %v2124, 0.00028619796
    %v2126 = vmul.f32 %v2123, %v2125
    %v2127 = vadd.f32 %v2126, 0.0036580483
    %v2128 = vmul.f32 %v2123, %v2127
    %v2129 = vadd.f32 %v2128, 0.05243302
    %v2130 = vmul.f32 %v2123, %v2129
    %v2131 = vadd.f32 %v2130, 0.18741608
    %v2132 = vmul.f32 %v2123, %v2131
    %v2133 = vadd.f32 %v2132, 1.1283791
    %v2134 = vmul.f32 %v1370, %v2133
    %v2135 = vmul.f32 %v2123, 3.8918573e-05
    %v2136 = vadd.f32 %v2135, 0.001143296
    %v2137 = vmul.f32 %v2123, %v2136
    %v2138 = vadd.f32 %v2137, 0.014752088
    %v2139 = vmul.f32 %v2123, %v2138
    %v2140 = vadd.f32 %v2139, 0.112945676
    %v2141 = vmul.f32 %v2123, %v2140
    %v2142 = vadd.f32 %v2141, 0.4994258
    %v2143 = vmul.f32 %v2123, %v2142
    %v2144 = vadd.f32 %v2143, 1.0
    %v2145 = vrcp.pop %v2144
    %v2146 = vmul.f32 %v2144, %v2145
    %v2147 = vsub.f32 1.0, %v2146
    %v2148 = vmul.f32 %v2145, %v2147
    %v2149 = vadd.f32 %v2145, %v2148
    %vm2150 = vweird.f32 %v2144
    %vm2151 = vweird.f32 %v2145
    %vm2152 = vmor %vm2150, %vm2151
    %v2153 = vsel %vm2152, %v2145, %v2149
    %v2154 = vand.u32 2147483647, %v2144
    %vm2155 = vcmp.eq.f32.partialorder %v2154, 8.507059e+37
    %v2156 = vand.u32 %v2144, 2147483648
    %v2157 = vor.u32 1.1754944e-38, %v2156
    %v2158 = vsel %vm2155, %v2157, %v2153
    %v2159 = vmul.f32 %v2134, %v2158
    %v2160 = vmin.f32 %v2159, 1.0
    %v2161 = vmax.f32 %v2160, -1.0
    %v2162 = vmul.f32 %v1371, %v1371
    %v2163 = vmin.f32 16.0, %v2162
    %v2164 = vmul.f32 %v2163, 2.1237322e-06
    %v2165 = vadd.f32 %v2164, 0.00028619796
    %v2166 = vmul.f32 %v2163, %v2165
    %v2167 = vadd.f32 %v2166, 0.0036580483
    %v2168 = vmul.f32 %v2163, %v2167
    %v2169 = vadd.f32 %v2168, 0.05243302
    %v2170 = vmul.f32 %v2163, %v2169
    %v2171 = vadd.f32 %v2170, 0.18741608
    %v2172 = vmul.f32 %v2163, %v2171
    %v2173 = vadd.f32 %v2172, 1.1283791
    %v2174 = vmul.f32 %v1371, %v2173
    %v2175 = vmul.f32 %v2163, 3.8918573e-05
    %v2176 = vadd.f32 %v2175, 0.001143296
    %v2177 = vmul.f32 %v2163, %v2176
    %v2178 = vadd.f32 %v2177, 0.014752088
    %v2179 = vmul.f32 %v2163, %v2178
    %v2180 = vadd.f32 %v2179, 0.112945676
    %v2181 = vmul.f32 %v2163, %v2180
    %v2182 = vadd.f32 %v2181, 0.4994258
    %v2183 = vmul.f32 %v2163, %v2182
    %v2184 = vadd.f32 %v2183, 1.0
    %v2185 = vrcp.pop %v2184
    %v2186 = vmul.f32 %v2184, %v2185
    %v2187 = vsub.f32 1.0, %v2186
    %v2188 = vmul.f32 %v2185, %v2187
    %v2189 = vadd.f32 %v2185, %v2188
    %vm2190 = vweird.f32 %v2184
    %vm2191 = vweird.f32 %v2185
    %vm2192 = vmor %vm2190, %vm2191
    %v2193 = vsel %vm2192, %v2185, %v2189
    %v2194 = vand.u32 2147483647, %v2184
    %vm2195 = vcmp.eq.f32.partialorder %v2194, 8.507059e+37
    %v2196 = vand.u32 %v2184, 2147483648
    %v2197 = vor.u32 1.1754944e-38, %v2196
    %v2198 = vsel %vm2195, %v2197, %v2193
    %v2199 = vmul.f32 %v2174, %v2198
    %v2200 = vmin.f32 %v2199, 1.0
    %v2201 = vmax.f32 %v2200, -1.0
    %v2202 = vmul.f32 %v1372, %v1372
    %v2203 = vmin.f32 16.0, %v2202
    %v2204 = vmul.f32 %v2203, 2.1237322e-06
    %v2205 = vadd.f32 %v2204, 0.00028619796
    %v2206 = vmul.f32 %v2203, %v2205
    %v2207 = vadd.f32 %v2206, 0.0036580483
    %v2208 = vmul.f32 %v2203, %v2207
    %v2209 = vadd.f32 %v2208, 0.05243302
    %v2210 = vmul.f32 %v2203, %v2209
    %v2211 = vadd.f32 %v2210, 0.18741608
    %v2212 = vmul.f32 %v2203, %v2211
    %v2213 = vadd.f32 %v2212, 1.1283791
    %v2214 = vmul.f32 %v1372, %v2213
    %v2215 = vmul.f32 %v2203, 3.8918573e-05
    %v2216 = vadd.f32 %v2215, 0.001143296
    %v2217 = vmul.f32 %v2203, %v2216
    %v2218 = vadd.f32 %v2217, 0.014752088
    %v2219 = vmul.f32 %v2203, %v2218
    %v2220 = vadd.f32 %v2219, 0.112945676
    %v2221 = vmul.f32 %v2203, %v2220
    %v2222 = vadd.f32 %v2221, 0.4994258
    %v2223 = vmul.f32 %v2203, %v2222
    %v2224 = vadd.f32 %v2223, 1.0
    %v2225 = vrcp.pop %v2224
    %v2226 = vmul.f32 %v2224, %v2225
    %v2227 = vsub.f32 1.0, %v2226
    %v2228 = vmul.f32 %v2225, %v2227
    %v2229 = vadd.f32 %v2225, %v2228
    %vm2230 = vweird.f32 %v2224
    %vm2231 = vweird.f32 %v2225
    %vm2232 = vmor %vm2230, %vm2231
    %v2233 = vsel %vm2232, %v2225, %v2229
    %v2234 = vand.u32 2147483647, %v2224
    %vm2235 = vcmp.eq.f32.partialorder %v2234, 8.507059e+37
    %v2236 = vand.u32 %v2224, 2147483648
    %v2237 = vor.u32 1.1754944e-38, %v2236
    %v2238 = vsel %vm2235, %v2237, %v2233
    %v2239 = vmul.f32 %v2214, %v2238
    %v2240 = vmin.f32 %v2239, 1.0
    %v2241 = vmax.f32 %v2240, -1.0
    %v2242 = vmul.f32 %v1373, %v1373
    %v2243 = vmin.f32 16.0, %v2242
    %v2244 = vmul.f32 %v2243, 2.1237322e-06
    %v2245 = vadd.f32 %v2244, 0.00028619796
    %v2246 = vmul.f32 %v2243, %v2245
    %v2247 = vadd.f32 %v2246, 0.0036580483
    %v2248 = vmul.f32 %v2243, %v2247
    %v2249 = vadd.f32 %v2248, 0.05243302
    %v2250 = vmul.f32 %v2243, %v2249
    %v2251 = vadd.f32 %v2250, 0.18741608
    %v2252 = vmul.f32 %v2243, %v2251
    %v2253 = vadd.f32 %v2252, 1.1283791
    %v2254 = vmul.f32 %v1373, %v2253
    %v2255 = vmul.f32 %v2243, 3.8918573e-05
    %v2256 = vadd.f32 %v2255, 0.001143296
    %v2257 = vmul.f32 %v2243, %v2256
    %v2258 = vadd.f32 %v2257, 0.014752088
    %v2259 = vmul.f32 %v2243, %v2258
    %v2260 = vadd.f32 %v2259, 0.112945676
    %v2261 = vmul.f32 %v2243, %v2260
    %v2262 = vadd.f32 %v2261, 0.4994258
    %v2263 = vmul.f32 %v2243, %v2262
    %v2264 = vadd.f32 %v2263, 1.0
    %v2265 = vrcp.pop %v2264
    %v2266 = vmul.f32 %v2264, %v2265
    %v2267 = vsub.f32 1.0, %v2266
    %v2268 = vmul.f32 %v2265, %v2267
    %v2269 = vadd.f32 %v2265, %v2268
    %vm2270 = vweird.f32 %v2264
    %vm2271 = vweird.f32 %v2265
    %vm2272 = vmor %vm2270, %vm2271
    %v2273 = vsel %vm2272, %v2265, %v2269
    %v2274 = vand.u32 2147483647, %v2264
    %vm2275 = vcmp.eq.f32.partialorder %v2274, 8.507059e+37
    %v2276 = vand.u32 %v2264, 2147483648
    %v2277 = vor.u32 1.1754944e-38, %v2276
    %v2278 = vsel %vm2275, %v2277, %v2273
    %v2279 = vmul.f32 %v2254, %v2278
    %v2280 = vmin.f32 %v2279, 1.0
    %v2281 = vmax.f32 %v2280, -1.0
    %v2282 = vmul.f32 %v1374, %v1374
    %v2283 = vmin.f32 16.0, %v2282
    %v2284 = vmul.f32 %v2283, 2.1237322e-06
    %v2285 = vadd.f32 %v2284, 0.00028619796
    %v2286 = vmul.f32 %v2283, %v2285
    %v2287 = vadd.f32 %v2286, 0.0036580483
    %v2288 = vmul.f32 %v2283, %v2287
    %v2289 = vadd.f32 %v2288, 0.05243302
    %v2290 = vmul.f32 %v2283, %v2289
    %v2291 = vadd.f32 %v2290, 0.18741608
    %v2292 = vmul.f32 %v2283, %v2291
    %v2293 = vadd.f32 %v2292, 1.1283791
    %v2294 = vmul.f32 %v1374, %v2293
    %v2295 = vmul.f32 %v2283, 3.8918573e-05
    %v2296 = vadd.f32 %v2295, 0.001143296
    %v2297 = vmul.f32 %v2283, %v2296
    %v2298 = vadd.f32 %v2297, 0.014752088
    %v2299 = vmul.f32 %v2283, %v2298
    %v2300 = vadd.f32 %v2299, 0.112945676
    %v2301 = vmul.f32 %v2283, %v2300
    %v2302 = vadd.f32 %v2301, 0.4994258
    %v2303 = vmul.f32 %v2283, %v2302
    %v2304 = vadd.f32 %v2303, 1.0
    %v2305 = vrcp.pop %v2304
    %v2306 = vmul.f32 %v2304, %v2305
    %v2307 = vsub.f32 1.0, %v2306
    %v2308 = vmul.f32 %v2305, %v2307
    %v2309 = vadd.f32 %v2305, %v2308
    %vm2310 = vweird.f32 %v2304
    %vm2311 = vweird.f32 %v2305
    %vm2312 = vmor %vm2310, %vm2311
    %v2313 = vsel %vm2312, %v2305, %v2309
    %v2314 = vand.u32 2147483647, %v2304
    %vm2315 = vcmp.eq.f32.partialorder %v2314, 8.507059e+37
    %v2316 = vand.u32 %v2304, 2147483648
    %v2317 = vor.u32 1.1754944e-38, %v2316
    %v2318 = vsel %vm2315, %v2317, %v2313
    %v2319 = vmul.f32 %v2294, %v2318
    %v2320 = vmin.f32 %v2319, 1.0
    %v2321 = vmax.f32 %v2320, -1.0
    %v2322 = vmul.f32 %v1375, %v1375
    %v2323 = vmin.f32 16.0, %v2322
    %v2324 = vmul.f32 %v2323, 2.1237322e-06
    %v2325 = vadd.f32 %v2324, 0.00028619796
    %v2326 = vmul.f32 %v2323, %v2325
    %v2327 = vadd.f32 %v2326, 0.0036580483
    %v2328 = vmul.f32 %v2323, %v2327
    %v2329 = vadd.f32 %v2328, 0.05243302
    %v2330 = vmul.f32 %v2323, %v2329
    %v2331 = vadd.f32 %v2330, 0.18741608
    %v2332 = vmul.f32 %v2323, %v2331
    %v2333 = vadd.f32 %v2332, 1.1283791
    %v2334 = vmul.f32 %v1375, %v2333
    %v2335 = vmul.f32 %v2323, 3.8918573e-05
    %v2336 = vadd.f32 %v2335, 0.001143296
    %v2337 = vmul.f32 %v2323, %v2336
    %v2338 = vadd.f32 %v2337, 0.014752088
    %v2339 = vmul.f32 %v2323, %v2338
    %v2340 = vadd.f32 %v2339, 0.112945676
    %v2341 = vmul.f32 %v2323, %v2340
    %v2342 = vadd.f32 %v2341, 0.4994258
    %v2343 = vmul.f32 %v2323, %v2342
    %v2344 = vadd.f32 %v2343, 1.0
    %v2345 = vrcp.pop %v2344
    %v2346 = vmul.f32 %v2344, %v2345
    %v2347 = vsub.f32 1.0, %v2346
    %v2348 = vmul.f32 %v2345, %v2347
    %v2349 = vadd.f32 %v2345, %v2348
    %vm2350 = vweird.f32 %v2344
    %vm2351 = vweird.f32 %v2345
    %vm2352 = vmor %vm2350, %vm2351
    %v2353 = vsel %vm2352, %v2345, %v2349
    %v2354 = vand.u32 2147483647, %v2344
    %vm2355 = vcmp.eq.f32.partialorder %v2354, 8.507059e+37
    %v2356 = vand.u32 %v2344, 2147483648
    %v2357 = vor.u32 1.1754944e-38, %v2356
    %v2358 = vsel %vm2355, %v2357, %v2353
    %v2359 = vmul.f32 %v2334, %v2358
    %v2360 = vmin.f32 %v2359, 1.0
    %v2361 = vmax.f32 %v2360, -1.0
    %v2362 = vmul.f32 %v1376, %v1376
    %v2363 = vmin.f32 16.0, %v2362
    %v2364 = vmul.f32 %v2363, 2.1237322e-06
    %v2365 = vadd.f32 %v2364, 0.00028619796
    %v2366 = vmul.f32 %v2363, %v2365
    %v2367 = vadd.f32 %v2366, 0.0036580483
    %v2368 = vmul.f32 %v2363, %v2367
    %v2369 = vadd.f32 %v2368, 0.05243302
    %v2370 = vmul.f32 %v2363, %v2369
    %v2371 = vadd.f32 %v2370, 0.18741608
    %v2372 = vmul.f32 %v2363, %v2371
    %v2373 = vadd.f32 %v2372, 1.1283791
    %v2374 = vmul.f32 %v1376, %v2373
    %v2375 = vmul.f32 %v2363, 3.8918573e-05
    %v2376 = vadd.f32 %v2375, 0.001143296
    %v2377 = vmul.f32 %v2363, %v2376
    %v2378 = vadd.f32 %v2377, 0.014752088
    %v2379 = vmul.f32 %v2363, %v2378
    %v2380 = vadd.f32 %v2379, 0.112945676
    %v2381 = vmul.f32 %v2363, %v2380
    %v2382 = vadd.f32 %v2381, 0.4994258
    %v2383 = vmul.f32 %v2363, %v2382
    %v2384 = vadd.f32 %v2383, 1.0
    %v2385 = vrcp.pop %v2384
    %v2386 = vmul.f32 %v2384, %v2385
    %v2387 = vsub.f32 1.0, %v2386
    %v2388 = vmul.f32 %v2385, %v2387
    %v2389 = vadd.f32 %v2385, %v2388
    %vm2390 = vweird.f32 %v2384
    %vm2391 = vweird.f32 %v2385
    %vm2392 = vmor %vm2390, %vm2391
    %v2393 = vsel %vm2392, %v2385, %v2389
    %v2394 = vand.u32 2147483647, %v2384
    %vm2395 = vcmp.eq.f32.partialorder %v2394, 8.507059e+37
    %v2396 = vand.u32 %v2384, 2147483648
    %v2397 = vor.u32 1.1754944e-38, %v2396
    %v2398 = vsel %vm2395, %v2397, %v2393
    %v2399 = vmul.f32 %v2374, %v2398
    %v2400 = vmin.f32 %v2399, 1.0
    %v2401 = vmax.f32 %v2400, -1.0
    %v2402 = vmul.f32 %v1377, %v1377
    %v2403 = vmin.f32 16.0, %v2402
    %v2404 = vmul.f32 %v2403, 2.1237322e-06
    %v2405 = vadd.f32 %v2404, 0.00028619796
    %v2406 = vmul.f32 %v2403, %v2405
    %v2407 = vadd.f32 %v2406, 0.0036580483
    %v2408 = vmul.f32 %v2403, %v2407
    %v2409 = vadd.f32 %v2408, 0.05243302
    %v2410 = vmul.f32 %v2403, %v2409
    %v2411 = vadd.f32 %v2410, 0.18741608
    %v2412 = vmul.f32 %v2403, %v2411
    %v2413 = vadd.f32 %v2412, 1.1283791
    %v2414 = vmul.f32 %v1377, %v2413
    %v2415 = vmul.f32 %v2403, 3.8918573e-05
    %v2416 = vadd.f32 %v2415, 0.001143296
    %v2417 = vmul.f32 %v2403, %v2416
    %v2418 = vadd.f32 %v2417, 0.014752088
    %v2419 = vmul.f32 %v2403, %v2418
    %v2420 = vadd.f32 %v2419, 0.112945676
    %v2421 = vmul.f32 %v2403, %v2420
    %v2422 = vadd.f32 %v2421, 0.4994258
    %v2423 = vmul.f32 %v2403, %v2422
    %v2424 = vadd.f32 %v2423, 1.0
    %v2425 = vrcp.pop %v2424
    %v2426 = vmul.f32 %v2424, %v2425
    %v2427 = vsub.f32 1.0, %v2426
    %v2428 = vmul.f32 %v2425, %v2427
    %v2429 = vadd.f32 %v2425, %v2428
    %vm2430 = vweird.f32 %v2424
    %vm2431 = vweird.f32 %v2425
    %vm2432 = vmor %vm2430, %vm2431
    %v2433 = vsel %vm2432, %v2425, %v2429
    %v2434 = vand.u32 2147483647, %v2424
    %vm2435 = vcmp.eq.f32.partialorder %v2434, 8.507059e+37
    %v2436 = vand.u32 %v2424, 2147483648
    %v2437 = vor.u32 1.1754944e-38, %v2436
    %v2438 = vsel %vm2435, %v2437, %v2433
    %v2439 = vmul.f32 %v2414, %v2438
    %v2440 = vmin.f32 %v2439, 1.0
    %v2441 = vmax.f32 %v2440, -1.0
    %v2442 = vmul.f32 %v1378, %v1378
    %v2443 = vmin.f32 16.0, %v2442
    %v2444 = vmul.f32 %v2443, 2.1237322e-06
    %v2445 = vadd.f32 %v2444, 0.00028619796
    %v2446 = vmul.f32 %v2443, %v2445
    %v2447 = vadd.f32 %v2446, 0.0036580483
    %v2448 = vmul.f32 %v2443, %v2447
    %v2449 = vadd.f32 %v2448, 0.05243302
    %v2450 = vmul.f32 %v2443, %v2449
    %v2451 = vadd.f32 %v2450, 0.18741608
    %v2452 = vmul.f32 %v2443, %v2451
    %v2453 = vadd.f32 %v2452, 1.1283791
    %v2454 = vmul.f32 %v1378, %v2453
    %v2455 = vmul.f32 %v2443, 3.8918573e-05
    %v2456 = vadd.f32 %v2455, 0.001143296
    %v2457 = vmul.f32 %v2443, %v2456
    %v2458 = vadd.f32 %v2457, 0.014752088
    %v2459 = vmul.f32 %v2443, %v2458
    %v2460 = vadd.f32 %v2459, 0.112945676
    %v2461 = vmul.f32 %v2443, %v2460
    %v2462 = vadd.f32 %v2461, 0.4994258
    %v2463 = vmul.f32 %v2443, %v2462
    %v2464 = vadd.f32 %v2463, 1.0
    %v2465 = vrcp.pop %v2464
    %v2466 = vmul.f32 %v2464, %v2465
    %v2467 = vsub.f32 1.0, %v2466
    %v2468 = vmul.f32 %v2465, %v2467
    %v2469 = vadd.f32 %v2465, %v2468
    %vm2470 = vweird.f32 %v2464
    %vm2471 = vweird.f32 %v2465
    %vm2472 = vmor %vm2470, %vm2471
    %v2473 = vsel %vm2472, %v2465, %v2469
    %v2474 = vand.u32 2147483647, %v2464
    %vm2475 = vcmp.eq.f32.partialorder %v2474, 8.507059e+37
    %v2476 = vand.u32 %v2464, 2147483648
    %v2477 = vor.u32 1.1754944e-38, %v2476
    %v2478 = vsel %vm2475, %v2477, %v2473
    %v2479 = vmul.f32 %v2454, %v2478
    %v2480 = vmin.f32 %v2479, 1.0
    %v2481 = vmax.f32 %v2480, -1.0
    %v2482 = vmul.f32 %v1379, %v1379
    %v2483 = vmin.f32 16.0, %v2482
    %v2484 = vmul.f32 %v2483, 2.1237322e-06
    %v2485 = vadd.f32 %v2484, 0.00028619796
    %v2486 = vmul.f32 %v2483, %v2485
    %v2487 = vadd.f32 %v2486, 0.0036580483
    %v2488 = vmul.f32 %v2483, %v2487
    %v2489 = vadd.f32 %v2488, 0.05243302
    %v2490 = vmul.f32 %v2483, %v2489
    %v2491 = vadd.f32 %v2490, 0.18741608
    %v2492 = vmul.f32 %v2483, %v2491
    %v2493 = vadd.f32 %v2492, 1.1283791
    %v2494 = vmul.f32 %v1379, %v2493
    %v2495 = vmul.f32 %v2483, 3.8918573e-05
    %v2496 = vadd.f32 %v2495, 0.001143296
    %v2497 = vmul.f32 %v2483, %v2496
    %v2498 = vadd.f32 %v2497, 0.014752088
    %v2499 = vmul.f32 %v2483, %v2498
    %v2500 = vadd.f32 %v2499, 0.112945676
    %v2501 = vmul.f32 %v2483, %v2500
    %v2502 = vadd.f32 %v2501, 0.4994258
    %v2503 = vmul.f32 %v2483, %v2502
    %v2504 = vadd.f32 %v2503, 1.0
    %v2505 = vrcp.pop %v2504
    %v2506 = vmul.f32 %v2504, %v2505
    %v2507 = vsub.f32 1.0, %v2506
    %v2508 = vmul.f32 %v2505, %v2507
    %v2509 = vadd.f32 %v2505, %v2508
    %vm2510 = vweird.f32 %v2504
    %vm2511 = vweird.f32 %v2505
    %vm2512 = vmor %vm2510, %vm2511
    %v2513 = vsel %vm2512, %v2505, %v2509
    %v2514 = vand.u32 2147483647, %v2504
    %vm2515 = vcmp.eq.f32.partialorder %v2514, 8.507059e+37
    %v2516 = vand.u32 %v2504, 2147483648
    %v2517 = vor.u32 1.1754944e-38, %v2516
    %v2518 = vsel %vm2515, %v2517, %v2513
    %v2519 = vmul.f32 %v2494, %v2518
    %v2520 = vmin.f32 %v2519, 1.0
    %v2521 = vmax.f32 %v2520, -1.0
    %v2522 = vmul.f32 %v1380, %v1380
    %v2523 = vmin.f32 16.0, %v2522
    %v2524 = vmul.f32 %v2523, 2.1237322e-06
    %v2525 = vadd.f32 %v2524, 0.00028619796
    %v2526 = vmul.f32 %v2523, %v2525
    %v2527 = vadd.f32 %v2526, 0.0036580483
    %v2528 = vmul.f32 %v2523, %v2527
    %v2529 = vadd.f32 %v2528, 0.05243302
    %v2530 = vmul.f32 %v2523, %v2529
    %v2531 = vadd.f32 %v2530, 0.18741608
    %v2532 = vmul.f32 %v2523, %v2531
    %v2533 = vadd.f32 %v2532, 1.1283791
    %v2534 = vmul.f32 %v1380, %v2533
    %v2535 = vmul.f32 %v2523, 3.8918573e-05
    %v2536 = vadd.f32 %v2535, 0.001143296
    %v2537 = vmul.f32 %v2523, %v2536
    %v2538 = vadd.f32 %v2537, 0.014752088
    %v2539 = vmul.f32 %v2523, %v2538
    %v2540 = vadd.f32 %v2539, 0.112945676
    %v2541 = vmul.f32 %v2523, %v2540
    %v2542 = vadd.f32 %v2541, 0.4994258
    %v2543 = vmul.f32 %v2523, %v2542
    %v2544 = vadd.f32 %v2543, 1.0
    %v2545 = vrcp.pop %v2544
    %v2546 = vmul.f32 %v2544, %v2545
    %v2547 = vsub.f32 1.0, %v2546
    %v2548 = vmul.f32 %v2545, %v2547
    %v2549 = vadd.f32 %v2545, %v2548
    %vm2550 = vweird.f32 %v2544
    %vm2551 = vweird.f32 %v2545
    %vm2552 = vmor %vm2550, %vm2551
    %v2553 = vsel %vm2552, %v2545, %v2549
    %v2554 = vand.u32 2147483647, %v2544
    %vm2555 = vcmp.eq.f32.partialorder %v2554, 8.507059e+37
    %v2556 = vand.u32 %v2544, 2147483648
    %v2557 = vor.u32 1.1754944e-38, %v2556
    %v2558 = vsel %vm2555, %v2557, %v2553
    %v2559 = vmul.f32 %v2534, %v2558
    %v2560 = vmin.f32 %v2559, 1.0
    %v2561 = vmax.f32 %v2560, -1.0
    %v2562 = vmul.f32 %v1381, %v1381
    %v2563 = vmin.f32 16.0, %v2562
    %v2564 = vmul.f32 %v2563, 2.1237322e-06
    %v2565 = vadd.f32 %v2564, 0.00028619796
    %v2566 = vmul.f32 %v2563, %v2565
    %v2567 = vadd.f32 %v2566, 0.0036580483
    %v2568 = vmul.f32 %v2563, %v2567
    %v2569 = vadd.f32 %v2568, 0.05243302
    %v2570 = vmul.f32 %v2563, %v2569
    %v2571 = vadd.f32 %v2570, 0.18741608
    %v2572 = vmul.f32 %v2563, %v2571
    %v2573 = vadd.f32 %v2572, 1.1283791
    %v2574 = vmul.f32 %v1381, %v2573
    %v2575 = vmul.f32 %v2563, 3.8918573e-05
    %v2576 = vadd.f32 %v2575, 0.001143296
    %v2577 = vmul.f32 %v2563, %v2576
    %v2578 = vadd.f32 %v2577, 0.014752088
    %v2579 = vmul.f32 %v2563, %v2578
    %v2580 = vadd.f32 %v2579, 0.112945676
    %v2581 = vmul.f32 %v2563, %v2580
    %v2582 = vadd.f32 %v2581, 0.4994258
    %v2583 = vmul.f32 %v2563, %v2582
    %v2584 = vadd.f32 %v2583, 1.0
    %v2585 = vrcp.pop %v2584
    %v2586 = vmul.f32 %v2584, %v2585
    %v2587 = vsub.f32 1.0, %v2586
    %v2588 = vmul.f32 %v2585, %v2587
    %v2589 = vadd.f32 %v2585, %v2588
    %vm2590 = vweird.f32 %v2584
    %vm2591 = vweird.f32 %v2585
    %vm2592 = vmor %vm2590, %vm2591
    %v2593 = vsel %vm2592, %v2585, %v2589
    %v2594 = vand.u32 2147483647, %v2584
    %vm2595 = vcmp.eq.f32.partialorder %v2594, 8.507059e+37
    %v2596 = vand.u32 %v2584, 2147483648
    %v2597 = vor.u32 1.1754944e-38, %v2596
    %v2598 = vsel %vm2595, %v2597, %v2593
    %v2599 = vmul.f32 %v2574, %v2598
    %v2600 = vmin.f32 %v2599, 1.0
    %v2601 = vmax.f32 %v2600, -1.0
    %v2602 = vmul.f32 %v1382, %v1382
    %v2603 = vmin.f32 16.0, %v2602
    %v2604 = vmul.f32 %v2603, 2.1237322e-06
    %v2605 = vadd.f32 %v2604, 0.00028619796
    %v2606 = vmul.f32 %v2603, %v2605
    %v2607 = vadd.f32 %v2606, 0.0036580483
    %v2608 = vmul.f32 %v2603, %v2607
    %v2609 = vadd.f32 %v2608, 0.05243302
    %v2610 = vmul.f32 %v2603, %v2609
    %v2611 = vadd.f32 %v2610, 0.18741608
    %v2612 = vmul.f32 %v2603, %v2611
    %v2613 = vadd.f32 %v2612, 1.1283791
    %v2614 = vmul.f32 %v1382, %v2613
    %v2615 = vmul.f32 %v2603, 3.8918573e-05
    %v2616 = vadd.f32 %v2615, 0.001143296
    %v2617 = vmul.f32 %v2603, %v2616
    %v2618 = vadd.f32 %v2617, 0.014752088
    %v2619 = vmul.f32 %v2603, %v2618
    %v2620 = vadd.f32 %v2619, 0.112945676
    %v2621 = vmul.f32 %v2603, %v2620
    %v2622 = vadd.f32 %v2621, 0.4994258
    %v2623 = vmul.f32 %v2603, %v2622
    %v2624 = vadd.f32 %v2623, 1.0
    %v2625 = vrcp.pop %v2624
    %v2626 = vmul.f32 %v2624, %v2625
    %v2627 = vsub.f32 1.0, %v2626
    %v2628 = vmul.f32 %v2625, %v2627
    %v2629 = vadd.f32 %v2625, %v2628
    %vm2630 = vweird.f32 %v2624
    %vm2631 = vweird.f32 %v2625
    %vm2632 = vmor %vm2630, %vm2631
    %v2633 = vsel %vm2632, %v2625, %v2629
    %v2634 = vand.u32 2147483647, %v2624
    %vm2635 = vcmp.eq.f32.partialorder %v2634, 8.507059e+37
    %v2636 = vand.u32 %v2624, 2147483648
    %v2637 = vor.u32 1.1754944e-38, %v2636
    %v2638 = vsel %vm2635, %v2637, %v2633
    %v2639 = vmul.f32 %v2614, %v2638
    %v2640 = vmin.f32 %v2639, 1.0
    %v2641 = vmax.f32 %v2640, -1.0
    %v2642 = vmul.f32 %v1383, %v1383
    %v2643 = vmin.f32 16.0, %v2642
    %v2644 = vmul.f32 %v2643, 2.1237322e-06
    %v2645 = vadd.f32 %v2644, 0.00028619796
    %v2646 = vmul.f32 %v2643, %v2645
    %v2647 = vadd.f32 %v2646, 0.0036580483
    %v2648 = vmul.f32 %v2643, %v2647
    %v2649 = vadd.f32 %v2648, 0.05243302
    %v2650 = vmul.f32 %v2643, %v2649
    %v2651 = vadd.f32 %v2650, 0.18741608
    %v2652 = vmul.f32 %v2643, %v2651
    %v2653 = vadd.f32 %v2652, 1.1283791
    %v2654 = vmul.f32 %v1383, %v2653
    %v2655 = vmul.f32 %v2643, 3.8918573e-05
    %v2656 = vadd.f32 %v2655, 0.001143296
    %v2657 = vmul.f32 %v2643, %v2656
    %v2658 = vadd.f32 %v2657, 0.014752088
    %v2659 = vmul.f32 %v2643, %v2658
    %v2660 = vadd.f32 %v2659, 0.112945676
    %v2661 = vmul.f32 %v2643, %v2660
    %v2662 = vadd.f32 %v2661, 0.4994258
    %v2663 = vmul.f32 %v2643, %v2662
    %v2664 = vadd.f32 %v2663, 1.0
    %v2665 = vrcp.pop %v2664
    %v2666 = vmul.f32 %v2664, %v2665
    %v2667 = vsub.f32 1.0, %v2666
    %v2668 = vmul.f32 %v2665, %v2667
    %v2669 = vadd.f32 %v2665, %v2668
    %vm2670 = vweird.f32 %v2664
    %vm2671 = vweird.f32 %v2665
    %vm2672 = vmor %vm2670, %vm2671
    %v2673 = vsel %vm2672, %v2665, %v2669
    %v2674 = vand.u32 2147483647, %v2664
    %vm2675 = vcmp.eq.f32.partialorder %v2674, 8.507059e+37
    %v2676 = vand.u32 %v2664, 2147483648
    %v2677 = vor.u32 1.1754944e-38, %v2676
    %v2678 = vsel %vm2675, %v2677, %v2673
    %v2679 = vmul.f32 %v2654, %v2678
    %v2680 = vmin.f32 %v2679, 1.0
    %v2681 = vmax.f32 %v2680, -1.0
    %v2682 = vmul.f32 %v1384, %v1384
    %v2683 = vmin.f32 16.0, %v2682
    %v2684 = vmul.f32 %v2683, 2.1237322e-06
    %v2685 = vadd.f32 %v2684, 0.00028619796
    %v2686 = vmul.f32 %v2683, %v2685
    %v2687 = vadd.f32 %v2686, 0.0036580483
    %v2688 = vmul.f32 %v2683, %v2687
    %v2689 = vadd.f32 %v2688, 0.05243302
    %v2690 = vmul.f32 %v2683, %v2689
    %v2691 = vadd.f32 %v2690, 0.18741608
    %v2692 = vmul.f32 %v2683, %v2691
    %v2693 = vadd.f32 %v2692, 1.1283791
    %v2694 = vmul.f32 %v1384, %v2693
    %v2695 = vmul.f32 %v2683, 3.8918573e-05
    %v2696 = vadd.f32 %v2695, 0.001143296
    %v2697 = vmul.f32 %v2683, %v2696
    %v2698 = vadd.f32 %v2697, 0.014752088
    %v2699 = vmul.f32 %v2683, %v2698
    %v2700 = vadd.f32 %v2699, 0.112945676
    %v2701 = vmul.f32 %v2683, %v2700
    %v2702 = vadd.f32 %v2701, 0.4994258
    %v2703 = vmul.f32 %v2683, %v2702
    %v2704 = vadd.f32 %v2703, 1.0
    %v2705 = vrcp.pop %v2704
    %v2706 = vmul.f32 %v2704, %v2705
    %v2707 = vsub.f32 1.0, %v2706
    %v2708 = vmul.f32 %v2705, %v2707
    %v2709 = vadd.f32 %v2705, %v2708
    %vm2710 = vweird.f32 %v2704
    %vm2711 = vweird.f32 %v2705
    %vm2712 = vmor %vm2710, %vm2711
    %v2713 = vsel %vm2712, %v2705, %v2709
    %v2714 = vand.u32 2147483647, %v2704
    %vm2715 = vcmp.eq.f32.partialorder %v2714, 8.507059e+37
    %v2716 = vand.u32 %v2704, 2147483648
    %v2717 = vor.u32 1.1754944e-38, %v2716
    %v2718 = vsel %vm2715, %v2717, %v2713
    %v2719 = vmul.f32 %v2694, %v2718
    %v2720 = vmin.f32 %v2719, 1.0
    %v2721 = vmax.f32 %v2720, -1.0
    %v2722 = vmul.f32 %v1385, %v1385
    %v2723 = vmin.f32 16.0, %v2722
    %v2724 = vmul.f32 %v2723, 2.1237322e-06
    %v2725 = vadd.f32 %v2724, 0.00028619796
    %v2726 = vmul.f32 %v2723, %v2725
    %v2727 = vadd.f32 %v2726, 0.0036580483
    %v2728 = vmul.f32 %v2723, %v2727
    %v2729 = vadd.f32 %v2728, 0.05243302
    %v2730 = vmul.f32 %v2723, %v2729
    %v2731 = vadd.f32 %v2730, 0.18741608
    %v2732 = vmul.f32 %v2723, %v2731
    %v2733 = vadd.f32 %v2732, 1.1283791
    %v2734 = vmul.f32 %v1385, %v2733
    %v2735 = vmul.f32 %v2723, 3.8918573e-05
    %v2736 = vadd.f32 %v2735, 0.001143296
    %v2737 = vmul.f32 %v2723, %v2736
    %v2738 = vadd.f32 %v2737, 0.014752088
    %v2739 = vmul.f32 %v2723, %v2738
    %v2740 = vadd.f32 %v2739, 0.112945676
    %v2741 = vmul.f32 %v2723, %v2740
    %v2742 = vadd.f32 %v2741, 0.4994258
    %v2743 = vmul.f32 %v2723, %v2742
    %v2744 = vadd.f32 %v2743, 1.0
    %v2745 = vrcp.pop %v2744
    %v2746 = vmul.f32 %v2744, %v2745
    %v2747 = vsub.f32 1.0, %v2746
    %v2748 = vmul.f32 %v2745, %v2747
    %v2749 = vadd.f32 %v2745, %v2748
    %vm2750 = vweird.f32 %v2744
    %vm2751 = vweird.f32 %v2745
    %vm2752 = vmor %vm2750, %vm2751
    %v2753 = vsel %vm2752, %v2745, %v2749
    %v2754 = vand.u32 2147483647, %v2744
    %vm2755 = vcmp.eq.f32.partialorder %v2754, 8.507059e+37
    %v2756 = vand.u32 %v2744, 2147483648
    %v2757 = vor.u32 1.1754944e-38, %v2756
    %v2758 = vsel %vm2755, %v2757, %v2753
    %v2759 = vmul.f32 %v2734, %v2758
    %v2760 = vmin.f32 %v2759, 1.0
    %v2761 = vmax.f32 %v2760, -1.0
    %v2762 = vmul.f32 %v1386, %v1386
    %v2763 = vmin.f32 16.0, %v2762
    %v2764 = vmul.f32 %v2763, 2.1237322e-06
    %v2765 = vadd.f32 %v2764, 0.00028619796
    %v2766 = vmul.f32 %v2763, %v2765
    %v2767 = vadd.f32 %v2766, 0.0036580483
    %v2768 = vmul.f32 %v2763, %v2767
    %v2769 = vadd.f32 %v2768, 0.05243302
    %v2770 = vmul.f32 %v2763, %v2769
    %v2771 = vadd.f32 %v2770, 0.18741608
    %v2772 = vmul.f32 %v2763, %v2771
    %v2773 = vadd.f32 %v2772, 1.1283791
    %v2774 = vmul.f32 %v1386, %v2773
    %v2775 = vmul.f32 %v2763, 3.8918573e-05
    %v2776 = vadd.f32 %v2775, 0.001143296
    %v2777 = vmul.f32 %v2763, %v2776
    %v2778 = vadd.f32 %v2777, 0.014752088
    %v2779 = vmul.f32 %v2763, %v2778
    %v2780 = vadd.f32 %v2779, 0.112945676
    %v2781 = vmul.f32 %v2763, %v2780
    %v2782 = vadd.f32 %v2781, 0.4994258
    %v2783 = vmul.f32 %v2763, %v2782
    %v2784 = vadd.f32 %v2783, 1.0
    %v2785 = vrcp.pop %v2784
    %v2786 = vmul.f32 %v2784, %v2785
    %v2787 = vsub.f32 1.0, %v2786
    %v2788 = vmul.f32 %v2785, %v2787
    %v2789 = vadd.f32 %v2785, %v2788
    %vm2790 = vweird.f32 %v2784
    %vm2791 = vweird.f32 %v2785
    %vm2792 = vmor %vm2790, %vm2791
    %v2793 = vsel %vm2792, %v2785, %v2789
    %v2794 = vand.u32 2147483647, %v2784
    %vm2795 = vcmp.eq.f32.partialorder %v2794, 8.507059e+37
    %v2796 = vand.u32 %v2784, 2147483648
    %v2797 = vor.u32 1.1754944e-38, %v2796
    %v2798 = vsel %vm2795, %v2797, %v2793
    %v2799 = vmul.f32 %v2774, %v2798
    %v2800 = vmin.f32 %v2799, 1.0
    %v2801 = vmax.f32 %v2800, -1.0
    %v2802 = vmul.f32 %v1387, %v1387
    %v2803 = vmin.f32 16.0, %v2802
    %v2804 = vmul.f32 %v2803, 2.1237322e-06
    %v2805 = vadd.f32 %v2804, 0.00028619796
    %v2806 = vmul.f32 %v2803, %v2805
    %v2807 = vadd.f32 %v2806, 0.0036580483
    %v2808 = vmul.f32 %v2803, %v2807
    %v2809 = vadd.f32 %v2808, 0.05243302
    %v2810 = vmul.f32 %v2803, %v2809
    %v2811 = vadd.f32 %v2810, 0.18741608
    %v2812 = vmul.f32 %v2803, %v2811
    %v2813 = vadd.f32 %v2812, 1.1283791
    %v2814 = vmul.f32 %v1387, %v2813
    %v2815 = vmul.f32 %v2803, 3.8918573e-05
    %v2816 = vadd.f32 %v2815, 0.001143296
    %v2817 = vmul.f32 %v2803, %v2816
    %v2818 = vadd.f32 %v2817, 0.014752088
    %v2819 = vmul.f32 %v2803, %v2818
    %v2820 = vadd.f32 %v2819, 0.112945676
    %v2821 = vmul.f32 %v2803, %v2820
    %v2822 = vadd.f32 %v2821, 0.4994258
    %v2823 = vmul.f32 %v2803, %v2822
    %v2824 = vadd.f32 %v2823, 1.0
    %v2825 = vrcp.pop %v2824
    %v2826 = vmul.f32 %v2824, %v2825
    %v2827 = vsub.f32 1.0, %v2826
    %v2828 = vmul.f32 %v2825, %v2827
    %v2829 = vadd.f32 %v2825, %v2828
    %vm2830 = vweird.f32 %v2824
    %vm2831 = vweird.f32 %v2825
    %vm2832 = vmor %vm2830, %vm2831
    %v2833 = vsel %vm2832, %v2825, %v2829
    %v2834 = vand.u32 2147483647, %v2824
    %vm2835 = vcmp.eq.f32.partialorder %v2834, 8.507059e+37
    %v2836 = vand.u32 %v2824, 2147483648
    %v2837 = vor.u32 1.1754944e-38, %v2836
    %v2838 = vsel %vm2835, %v2837, %v2833
    %v2839 = vmul.f32 %v2814, %v2838
    %v2840 = vmin.f32 %v2839, 1.0
    %v2841 = vmax.f32 %v2840, -1.0
    %v2842 = vmul.f32 %v1388, %v1388
    %v2843 = vmin.f32 16.0, %v2842
    %v2844 = vmul.f32 %v2843, 2.1237322e-06
    %v2845 = vadd.f32 %v2844, 0.00028619796
    %v2846 = vmul.f32 %v2843, %v2845
    %v2847 = vadd.f32 %v2846, 0.0036580483
    %v2848 = vmul.f32 %v2843, %v2847
    %v2849 = vadd.f32 %v2848, 0.05243302
    %v2850 = vmul.f32 %v2843, %v2849
    %v2851 = vadd.f32 %v2850, 0.18741608
    %v2852 = vmul.f32 %v2843, %v2851
    %v2853 = vadd.f32 %v2852, 1.1283791
    %v2854 = vmul.f32 %v1388, %v2853
    %v2855 = vmul.f32 %v2843, 3.8918573e-05
    %v2856 = vadd.f32 %v2855, 0.001143296
    %v2857 = vmul.f32 %v2843, %v2856
    %v2858 = vadd.f32 %v2857, 0.014752088
    %v2859 = vmul.f32 %v2843, %v2858
    %v2860 = vadd.f32 %v2859, 0.112945676
    %v2861 = vmul.f32 %v2843, %v2860
    %v2862 = vadd.f32 %v2861, 0.4994258
    %v2863 = vmul.f32 %v2843, %v2862
    %v2864 = vadd.f32 %v2863, 1.0
    %v2865 = vrcp.pop %v2864
    %v2866 = vmul.f32 %v2864, %v2865
    %v2867 = vsub.f32 1.0, %v2866
    %v2868 = vmul.f32 %v2865, %v2867
    %v2869 = vadd.f32 %v2865, %v2868
    %vm2870 = vweird.f32 %v2864
    %vm2871 = vweird.f32 %v2865
    %vm2872 = vmor %vm2870, %vm2871
    %v2873 = vsel %vm2872, %v2865, %v2869
    %v2874 = vand.u32 2147483647, %v2864
    %vm2875 = vcmp.eq.f32.partialorder %v2874, 8.507059e+37
    %v2876 = vand.u32 %v2864, 2147483648
    %v2877 = vor.u32 1.1754944e-38, %v2876
    %v2878 = vsel %vm2875, %v2877, %v2873
    %v2879 = vmul.f32 %v2854, %v2878
    %v2880 = vmin.f32 %v2879, 1.0
    %v2881 = vmax.f32 %v2880, -1.0
    %v2882 = vmul.f32 %v1389, %v1389
    %v2883 = vmin.f32 16.0, %v2882
    %v2884 = vmul.f32 %v2883, 2.1237322e-06
    %v2885 = vadd.f32 %v2884, 0.00028619796
    %v2886 = vmul.f32 %v2883, %v2885
    %v2887 = vadd.f32 %v2886, 0.0036580483
    %v2888 = vmul.f32 %v2883, %v2887
    %v2889 = vadd.f32 %v2888, 0.05243302
    %v2890 = vmul.f32 %v2883, %v2889
    %v2891 = vadd.f32 %v2890, 0.18741608
    %v2892 = vmul.f32 %v2883, %v2891
    %v2893 = vadd.f32 %v2892, 1.1283791
    %v2894 = vmul.f32 %v1389, %v2893
    %v2895 = vmul.f32 %v2883, 3.8918573e-05
    %v2896 = vadd.f32 %v2895, 0.001143296
    %v2897 = vmul.f32 %v2883, %v2896
    %v2898 = vadd.f32 %v2897, 0.014752088
    %v2899 = vmul.f32 %v2883, %v2898
    %v2900 = vadd.f32 %v2899, 0.112945676
    %v2901 = vmul.f32 %v2883, %v2900
    %v2902 = vadd.f32 %v2901, 0.4994258
    %v2903 = vmul.f32 %v2883, %v2902
    %v2904 = vadd.f32 %v2903, 1.0
    %v2905 = vrcp.pop %v2904
    %v2906 = vmul.f32 %v2904, %v2905
    %v2907 = vsub.f32 1.0, %v2906
    %v2908 = vmul.f32 %v2905, %v2907
    %v2909 = vadd.f32 %v2905, %v2908
    %vm2910 = vweird.f32 %v2904
    %vm2911 = vweird.f32 %v2905
    %vm2912 = vmor %vm2910, %vm2911
    %v2913 = vsel %vm2912, %v2905, %v2909
    %v2914 = vand.u32 2147483647, %v2904
    %vm2915 = vcmp.eq.f32.partialorder %v2914, 8.507059e+37
    %v2916 = vand.u32 %v2904, 2147483648
    %v2917 = vor.u32 1.1754944e-38, %v2916
    %v2918 = vsel %vm2915, %v2917, %v2913
    %v2919 = vmul.f32 %v2894, %v2918
    %v2920 = vmin.f32 %v2919, 1.0
    %v2921 = vmax.f32 %v2920, -1.0
    %v2922 = vmul.f32 %v1390, %v1390
    %v2923 = vmin.f32 16.0, %v2922
    %v2924 = vmul.f32 %v2923, 2.1237322e-06
    %v2925 = vadd.f32 %v2924, 0.00028619796
    %v2926 = vmul.f32 %v2923, %v2925
    %v2927 = vadd.f32 %v2926, 0.0036580483
    %v2928 = vmul.f32 %v2923, %v2927
    %v2929 = vadd.f32 %v2928, 0.05243302
    %v2930 = vmul.f32 %v2923, %v2929
    %v2931 = vadd.f32 %v2930, 0.18741608
    %v2932 = vmul.f32 %v2923, %v2931
    %v2933 = vadd.f32 %v2932, 1.1283791
    %v2934 = vmul.f32 %v1390, %v2933
    %v2935 = vmul.f32 %v2923, 3.8918573e-05
    %v2936 = vadd.f32 %v2935, 0.001143296
    %v2937 = vmul.f32 %v2923, %v2936
    %v2938 = vadd.f32 %v2937, 0.014752088
    %v2939 = vmul.f32 %v2923, %v2938
    %v2940 = vadd.f32 %v2939, 0.112945676
    %v2941 = vmul.f32 %v2923, %v2940
    %v2942 = vadd.f32 %v2941, 0.4994258
    %v2943 = vmul.f32 %v2923, %v2942
    %v2944 = vadd.f32 %v2943, 1.0
    %v2945 = vrcp.pop %v2944
    %v2946 = vmul.f32 %v2944, %v2945
    %v2947 = vsub.f32 1.0, %v2946
    %v2948 = vmul.f32 %v2945, %v2947
    %v2949 = vadd.f32 %v2945, %v2948
    %vm2950 = vweird.f32 %v2944
    %vm2951 = vweird.f32 %v2945
    %vm2952 = vmor %vm2950, %vm2951
    %v2953 = vsel %vm2952, %v2945, %v2949
    %v2954 = vand.u32 2147483647, %v2944
    %vm2955 = vcmp.eq.f32.partialorder %v2954, 8.507059e+37
    %v2956 = vand.u32 %v2944, 2147483648
    %v2957 = vor.u32 1.1754944e-38, %v2956
    %v2958 = vsel %vm2955, %v2957, %v2953
    %v2959 = vmul.f32 %v2934, %v2958
    %v2960 = vmin.f32 %v2959, 1.0
    %v2961 = vmax.f32 %v2960, -1.0
    %v2962 = vmul.f32 %v1391, %v1391
    %v2963 = vmin.f32 16.0, %v2962
    %v2964 = vmul.f32 %v2963, 2.1237322e-06
    %v2965 = vadd.f32 %v2964, 0.00028619796
    %v2966 = vmul.f32 %v2963, %v2965
    %v2967 = vadd.f32 %v2966, 0.0036580483
    %v2968 = vmul.f32 %v2963, %v2967
    %v2969 = vadd.f32 %v2968, 0.05243302
    %v2970 = vmul.f32 %v2963, %v2969
    %v2971 = vadd.f32 %v2970, 0.18741608
    %v2972 = vmul.f32 %v2963, %v2971
    %v2973 = vadd.f32 %v2972, 1.1283791
    %v2974 = vmul.f32 %v1391, %v2973
    %v2975 = vmul.f32 %v2963, 3.8918573e-05
    %v2976 = vadd.f32 %v2975, 0.001143296
    %v2977 = vmul.f32 %v2963, %v2976
    %v2978 = vadd.f32 %v2977, 0.014752088
    %v2979 = vmul.f32 %v2963, %v2978
    %v2980 = vadd.f32 %v2979, 0.112945676
    %v2981 = vmul.f32 %v2963, %v2980
    %v2982 = vadd.f32 %v2981, 0.4994258
    %v2983 = vmul.f32 %v2963, %v2982
    %v2984 = vadd.f32 %v2983, 1.0
    %v2985 = vrcp.pop %v2984
    %v2986 = vmul.f32 %v2984, %v2985
    %v2987 = vsub.f32 1.0, %v2986
    %v2988 = vmul.f32 %v2985, %v2987
    %v2989 = vadd.f32 %v2985, %v2988
    %vm2990 = vweird.f32 %v2984
    %vm2991 = vweird.f32 %v2985
    %vm2992 = vmor %vm2990, %vm2991
    %v2993 = vsel %vm2992, %v2985, %v2989
    %v2994 = vand.u32 2147483647, %v2984
    %vm2995 = vcmp.eq.f32.partialorder %v2994, 8.507059e+37
    %v2996 = vand.u32 %v2984, 2147483648
    %v2997 = vor.u32 1.1754944e-38, %v2996
    %v2998 = vsel %vm2995, %v2997, %v2993
    %v2999 = vmul.f32 %v2974, %v2998
    %v3000 = vmin.f32 %v2999, 1.0
    %v3001 = vmax.f32 %v3000, -1.0
    %v3002 = vmul.f32 %v1392, %v1392
    %v3003 = vmin.f32 16.0, %v3002
    %v3004 = vmul.f32 %v3003, 2.1237322e-06
    %v3005 = vadd.f32 %v3004, 0.00028619796
    %v3006 = vmul.f32 %v3003, %v3005
    %v3007 = vadd.f32 %v3006, 0.0036580483
    %v3008 = vmul.f32 %v3003, %v3007
    %v3009 = vadd.f32 %v3008, 0.05243302
    %v3010 = vmul.f32 %v3003, %v3009
    %v3011 = vadd.f32 %v3010, 0.18741608
    %v3012 = vmul.f32 %v3003, %v3011
    %v3013 = vadd.f32 %v3012, 1.1283791
    %v3014 = vmul.f32 %v1392, %v3013
    %v3015 = vmul.f32 %v3003, 3.8918573e-05
    %v3016 = vadd.f32 %v3015, 0.001143296
    %v3017 = vmul.f32 %v3003, %v3016
    %v3018 = vadd.f32 %v3017, 0.014752088
    %v3019 = vmul.f32 %v3003, %v3018
    %v3020 = vadd.f32 %v3019, 0.112945676
    %v3021 = vmul.f32 %v3003, %v3020
    %v3022 = vadd.f32 %v3021, 0.4994258
    %v3023 = vmul.f32 %v3003, %v3022
    %v3024 = vadd.f32 %v3023, 1.0
    %v3025 = vrcp.pop %v3024
    %v3026 = vmul.f32 %v3024, %v3025
    %v3027 = vsub.f32 1.0, %v3026
    %v3028 = vmul.f32 %v3025, %v3027
    %v3029 = vadd.f32 %v3025, %v3028
    %vm3030 = vweird.f32 %v3024
    %vm3031 = vweird.f32 %v3025
    %vm3032 = vmor %vm3030, %vm3031
    %v3033 = vsel %vm3032, %v3025, %v3029
    %v3034 = vand.u32 2147483647, %v3024
    %vm3035 = vcmp.eq.f32.partialorder %v3034, 8.507059e+37
    %v3036 = vand.u32 %v3024, 2147483648
    %v3037 = vor.u32 1.1754944e-38, %v3036
    %v3038 = vsel %vm3035, %v3037, %v3033
    %v3039 = vmul.f32 %v3014, %v3038
    %v3040 = vmin.f32 %v3039, 1.0
    %v3041 = vmax.f32 %v3040, -1.0
    %v3042 = vmul.f32 %v1393, %v1393
    %v3043 = vmin.f32 16.0, %v3042
    %v3044 = vmul.f32 %v3043, 2.1237322e-06
    %v3045 = vadd.f32 %v3044, 0.00028619796
    %v3046 = vmul.f32 %v3043, %v3045
    %v3047 = vadd.f32 %v3046, 0.0036580483
    %v3048 = vmul.f32 %v3043, %v3047
    %v3049 = vadd.f32 %v3048, 0.05243302
    %v3050 = vmul.f32 %v3043, %v3049
    %v3051 = vadd.f32 %v3050, 0.18741608
    %v3052 = vmul.f32 %v3043, %v3051
    %v3053 = vadd.f32 %v3052, 1.1283791
    %v3054 = vmul.f32 %v1393, %v3053
    %v3055 = vmul.f32 %v3043, 3.8918573e-05
    %v3056 = vadd.f32 %v3055, 0.001143296
    %v3057 = vmul.f32 %v3043, %v3056
    %v3058 = vadd.f32 %v3057, 0.014752088
    %v3059 = vmul.f32 %v3043, %v3058
    %v3060 = vadd.f32 %v3059, 0.112945676
    %v3061 = vmul.f32 %v3043, %v3060
    %v3062 = vadd.f32 %v3061, 0.4994258
    %v3063 = vmul.f32 %v3043, %v3062
    %v3064 = vadd.f32 %v3063, 1.0
    %v3065 = vrcp.pop %v3064
    %v3066 = vmul.f32 %v3064, %v3065
    %v3067 = vsub.f32 1.0, %v3066
    %v3068 = vmul.f32 %v3065, %v3067
    %v3069 = vadd.f32 %v3065, %v3068
    %vm3070 = vweird.f32 %v3064
    %vm3071 = vweird.f32 %v3065
    %vm3072 = vmor %vm3070, %vm3071
    %v3073 = vsel %vm3072, %v3065, %v3069
    %v3074 = vand.u32 2147483647, %v3064
    %vm3075 = vcmp.eq.f32.partialorder %v3074, 8.507059e+37
    %v3076 = vand.u32 %v3064, 2147483648
    %v3077 = vor.u32 1.1754944e-38, %v3076
    %v3078 = vsel %vm3075, %v3077, %v3073
    %v3079 = vmul.f32 %v3054, %v3078
    %v3080 = vmin.f32 %v3079, 1.0
    %v3081 = vmax.f32 %v3080, -1.0
    %v3082 = vmul.f32 %v1394, %v1394
    %v3083 = vmin.f32 16.0, %v3082
    %v3084 = vmul.f32 %v3083, 2.1237322e-06
    %v3085 = vadd.f32 %v3084, 0.00028619796
    %v3086 = vmul.f32 %v3083, %v3085
    %v3087 = vadd.f32 %v3086, 0.0036580483
    %v3088 = vmul.f32 %v3083, %v3087
    %v3089 = vadd.f32 %v3088, 0.05243302
    %v3090 = vmul.f32 %v3083, %v3089
    %v3091 = vadd.f32 %v3090, 0.18741608
    %v3092 = vmul.f32 %v3083, %v3091
    %v3093 = vadd.f32 %v3092, 1.1283791
    %v3094 = vmul.f32 %v1394, %v3093
    %v3095 = vmul.f32 %v3083, 3.8918573e-05
    %v3096 = vadd.f32 %v3095, 0.001143296
    %v3097 = vmul.f32 %v3083, %v3096
    %v3098 = vadd.f32 %v3097, 0.014752088
    %v3099 = vmul.f32 %v3083, %v3098
    %v3100 = vadd.f32 %v3099, 0.112945676
    %v3101 = vmul.f32 %v3083, %v3100
    %v3102 = vadd.f32 %v3101, 0.4994258
    %v3103 = vmul.f32 %v3083, %v3102
    %v3104 = vadd.f32 %v3103, 1.0
    %v3105 = vrcp.pop %v3104
    %v3106 = vmul.f32 %v3104, %v3105
    %v3107 = vsub.f32 1.0, %v3106
    %v3108 = vmul.f32 %v3105, %v3107
    %v3109 = vadd.f32 %v3105, %v3108
    %vm3110 = vweird.f32 %v3104
    %vm3111 = vweird.f32 %v3105
    %vm3112 = vmor %vm3110, %vm3111
    %v3113 = vsel %vm3112, %v3105, %v3109
    %v3114 = vand.u32 2147483647, %v3104
    %vm3115 = vcmp.eq.f32.partialorder %v3114, 8.507059e+37
    %v3116 = vand.u32 %v3104, 2147483648
    %v3117 = vor.u32 1.1754944e-38, %v3116
    %v3118 = vsel %vm3115, %v3117, %v3113
    %v3119 = vmul.f32 %v3094, %v3118
    %v3120 = vmin.f32 %v3119, 1.0
    %v3121 = vmax.f32 %v3120, -1.0
    %v3122 = vmul.f32 %v1395, %v1395
    %v3123 = vmin.f32 16.0, %v3122
    %v3124 = vmul.f32 %v3123, 2.1237322e-06
    %v3125 = vadd.f32 %v3124, 0.00028619796
    %v3126 = vmul.f32 %v3123, %v3125
    %v3127 = vadd.f32 %v3126, 0.0036580483
    %v3128 = vmul.f32 %v3123, %v3127
    %v3129 = vadd.f32 %v3128, 0.05243302
    %v3130 = vmul.f32 %v3123, %v3129
    %v3131 = vadd.f32 %v3130, 0.18741608
    %v3132 = vmul.f32 %v3123, %v3131
    %v3133 = vadd.f32 %v3132, 1.1283791
    %v3134 = vmul.f32 %v1395, %v3133
    %v3135 = vmul.f32 %v3123, 3.8918573e-05
    %v3136 = vadd.f32 %v3135, 0.001143296
    %v3137 = vmul.f32 %v3123, %v3136
    %v3138 = vadd.f32 %v3137, 0.014752088
    %v3139 = vmul.f32 %v3123, %v3138
    %v3140 = vadd.f32 %v3139, 0.112945676
    %v3141 = vmul.f32 %v3123, %v3140
    %v3142 = vadd.f32 %v3141, 0.4994258
    %v3143 = vmul.f32 %v3123, %v3142
    %v3144 = vadd.f32 %v3143, 1.0
    %v3145 = vrcp.pop %v3144
    %v3146 = vmul.f32 %v3144, %v3145
    %v3147 = vsub.f32 1.0, %v3146
    %v3148 = vmul.f32 %v3145, %v3147
    %v3149 = vadd.f32 %v3145, %v3148
    %vm3150 = vweird.f32 %v3144
    %vm3151 = vweird.f32 %v3145
    %vm3152 = vmor %vm3150, %vm3151
    %v3153 = vsel %vm3152, %v3145, %v3149
    %v3154 = vand.u32 2147483647, %v3144
    %vm3155 = vcmp.eq.f32.partialorder %v3154, 8.507059e+37
    %v3156 = vand.u32 %v3144, 2147483648
    %v3157 = vor.u32 1.1754944e-38, %v3156
    %v3158 = vsel %vm3155, %v3157, %v3153
    %v3159 = vmul.f32 %v3134, %v3158
    %v3160 = vmin.f32 %v3159, 1.0
    %v3161 = vmax.f32 %v3160, -1.0
    %v3162 = vmul.f32 %v1396, %v1396
    %v3163 = vmin.f32 16.0, %v3162
    %v3164 = vmul.f32 %v3163, 2.1237322e-06
    %v3165 = vadd.f32 %v3164, 0.00028619796
    %v3166 = vmul.f32 %v3163, %v3165
    %v3167 = vadd.f32 %v3166, 0.0036580483
    %v3168 = vmul.f32 %v3163, %v3167
    %v3169 = vadd.f32 %v3168, 0.05243302
    %v3170 = vmul.f32 %v3163, %v3169
    %v3171 = vadd.f32 %v3170, 0.18741608
    %v3172 = vmul.f32 %v3163, %v3171
    %v3173 = vadd.f32 %v3172, 1.1283791
    %v3174 = vmul.f32 %v1396, %v3173
    %v3175 = vmul.f32 %v3163, 3.8918573e-05
    %v3176 = vadd.f32 %v3175, 0.001143296
    %v3177 = vmul.f32 %v3163, %v3176
    %v3178 = vadd.f32 %v3177, 0.014752088
    %v3179 = vmul.f32 %v3163, %v3178
    %v3180 = vadd.f32 %v3179, 0.112945676
    %v3181 = vmul.f32 %v3163, %v3180
    %v3182 = vadd.f32 %v3181, 0.4994258
    %v3183 = vmul.f32 %v3163, %v3182
    %v3184 = vadd.f32 %v3183, 1.0
    %v3185 = vrcp.pop %v3184
    %v3186 = vmul.f32 %v3184, %v3185
    %v3187 = vsub.f32 1.0, %v3186
    %v3188 = vmul.f32 %v3185, %v3187
    %v3189 = vadd.f32 %v3185, %v3188
    %vm3190 = vweird.f32 %v3184
    %vm3191 = vweird.f32 %v3185
    %vm3192 = vmor %vm3190, %vm3191
    %v3193 = vsel %vm3192, %v3185, %v3189
    %v3194 = vand.u32 2147483647, %v3184
    %vm3195 = vcmp.eq.f32.partialorder %v3194, 8.507059e+37
    %v3196 = vand.u32 %v3184, 2147483648
    %v3197 = vor.u32 1.1754944e-38, %v3196
    %v3198 = vsel %vm3195, %v3197, %v3193
    %v3199 = vmul.f32 %v3174, %v3198
    %v3200 = vmin.f32 %v3199, 1.0
    %v3201 = vmax.f32 %v3200, -1.0
    %v3202 = vmul.f32 %v1397, %v1397
    %v3203 = vmin.f32 16.0, %v3202
    %v3204 = vmul.f32 %v3203, 2.1237322e-06
    %v3205 = vadd.f32 %v3204, 0.00028619796
    %v3206 = vmul.f32 %v3203, %v3205
    %v3207 = vadd.f32 %v3206, 0.0036580483
    %v3208 = vmul.f32 %v3203, %v3207
    %v3209 = vadd.f32 %v3208, 0.05243302
    %v3210 = vmul.f32 %v3203, %v3209
    %v3211 = vadd.f32 %v3210, 0.18741608
    %v3212 = vmul.f32 %v3203, %v3211
    %v3213 = vadd.f32 %v3212, 1.1283791
    %v3214 = vmul.f32 %v1397, %v3213
    %v3215 = vmul.f32 %v3203, 3.8918573e-05
    %v3216 = vadd.f32 %v3215, 0.001143296
    %v3217 = vmul.f32 %v3203, %v3216
    %v3218 = vadd.f32 %v3217, 0.014752088
    %v3219 = vmul.f32 %v3203, %v3218
    %v3220 = vadd.f32 %v3219, 0.112945676
    %v3221 = vmul.f32 %v3203, %v3220
    %v3222 = vadd.f32 %v3221, 0.4994258
    %v3223 = vmul.f32 %v3203, %v3222
    %v3224 = vadd.f32 %v3223, 1.0
    %v3225 = vrcp.pop %v3224
    %v3226 = vmul.f32 %v3224, %v3225
    %v3227 = vsub.f32 1.0, %v3226
    %v3228 = vmul.f32 %v3225, %v3227
    %v3229 = vadd.f32 %v3225, %v3228
    %vm3230 = vweird.f32 %v3224
    %vm3231 = vweird.f32 %v3225
    %vm3232 = vmor %vm3230, %vm3231
    %v3233 = vsel %vm3232, %v3225, %v3229
    %v3234 = vand.u32 2147483647, %v3224
    %vm3235 = vcmp.eq.f32.partialorder %v3234, 8.507059e+37
    %v3236 = vand.u32 %v3224, 2147483648
    %v3237 = vor.u32 1.1754944e-38, %v3236
    %v3238 = vsel %vm3235, %v3237, %v3233
    %v3239 = vmul.f32 %v3214, %v3238
    %v3240 = vmin.f32 %v3239, 1.0
    %v3241 = vmax.f32 %v3240, -1.0
    %v3242 = vmul.f32 %v1398, %v1398
    %v3243 = vmin.f32 16.0, %v3242
    %v3244 = vmul.f32 %v3243, 2.1237322e-06
    %v3245 = vadd.f32 %v3244, 0.00028619796
    %v3246 = vmul.f32 %v3243, %v3245
    %v3247 = vadd.f32 %v3246, 0.0036580483
    %v3248 = vmul.f32 %v3243, %v3247
    %v3249 = vadd.f32 %v3248, 0.05243302
    %v3250 = vmul.f32 %v3243, %v3249
    %v3251 = vadd.f32 %v3250, 0.18741608
    %v3252 = vmul.f32 %v3243, %v3251
    %v3253 = vadd.f32 %v3252, 1.1283791
    %v3254 = vmul.f32 %v1398, %v3253
    %v3255 = vmul.f32 %v3243, 3.8918573e-05
    %v3256 = vadd.f32 %v3255, 0.001143296
    %v3257 = vmul.f32 %v3243, %v3256
    %v3258 = vadd.f32 %v3257, 0.014752088
    %v3259 = vmul.f32 %v3243, %v3258
    %v3260 = vadd.f32 %v3259, 0.112945676
    %v3261 = vmul.f32 %v3243, %v3260
    %v3262 = vadd.f32 %v3261, 0.4994258
    %v3263 = vmul.f32 %v3243, %v3262
    %v3264 = vadd.f32 %v3263, 1.0
    %v3265 = vrcp.pop %v3264
    %v3266 = vmul.f32 %v3264, %v3265
    %v3267 = vsub.f32 1.0, %v3266
    %v3268 = vmul.f32 %v3265, %v3267
    %v3269 = vadd.f32 %v3265, %v3268
    %vm3270 = vweird.f32 %v3264
    %vm3271 = vweird.f32 %v3265
    %vm3272 = vmor %vm3270, %vm3271
    %v3273 = vsel %vm3272, %v3265, %v3269
    %v3274 = vand.u32 2147483647, %v3264
    %vm3275 = vcmp.eq.f32.partialorder %v3274, 8.507059e+37
    %v3276 = vand.u32 %v3264, 2147483648
    %v3277 = vor.u32 1.1754944e-38, %v3276
    %v3278 = vsel %vm3275, %v3277, %v3273
    %v3279 = vmul.f32 %v3254, %v3278
    %v3280 = vmin.f32 %v3279, 1.0
    %v3281 = vmax.f32 %v3280, -1.0
    %v3282 = vmul.f32 %v1399, %v1399
    %v3283 = vmin.f32 16.0, %v3282
    %v3284 = vmul.f32 %v3283, 2.1237322e-06
    %v3285 = vadd.f32 %v3284, 0.00028619796
    %v3286 = vmul.f32 %v3283, %v3285
    %v3287 = vadd.f32 %v3286, 0.0036580483
    %v3288 = vmul.f32 %v3283, %v3287
    %v3289 = vadd.f32 %v3288, 0.05243302
    %v3290 = vmul.f32 %v3283, %v3289
    %v3291 = vadd.f32 %v3290, 0.18741608
    %v3292 = vmul.f32 %v3283, %v3291
    %v3293 = vadd.f32 %v3292, 1.1283791
    %v3294 = vmul.f32 %v1399, %v3293
    %v3295 = vmul.f32 %v3283, 3.8918573e-05
    %v3296 = vadd.f32 %v3295, 0.001143296
    %v3297 = vmul.f32 %v3283, %v3296
    %v3298 = vadd.f32 %v3297, 0.014752088
    %v3299 = vmul.f32 %v3283, %v3298
    %v3300 = vadd.f32 %v3299, 0.112945676
    %v3301 = vmul.f32 %v3283, %v3300
    %v3302 = vadd.f32 %v3301, 0.4994258
    %v3303 = vmul.f32 %v3283, %v3302
    %v3304 = vadd.f32 %v3303, 1.0
    %v3305 = vrcp.pop %v3304
    %v3306 = vmul.f32 %v3304, %v3305
    %v3307 = vsub.f32 1.0, %v3306
    %v3308 = vmul.f32 %v3305, %v3307
    %v3309 = vadd.f32 %v3305, %v3308
    %vm3310 = vweird.f32 %v3304
    %vm3311 = vweird.f32 %v3305
    %vm3312 = vmor %vm3310, %vm3311
    %v3313 = vsel %vm3312, %v3305, %v3309
    %v3314 = vand.u32 2147483647, %v3304
    %vm3315 = vcmp.eq.f32.partialorder %v3314, 8.507059e+37
    %v3316 = vand.u32 %v3304, 2147483648
    %v3317 = vor.u32 1.1754944e-38, %v3316
    %v3318 = vsel %vm3315, %v3317, %v3313
    %v3319 = vmul.f32 %v3294, %v3318
    %v3320 = vmin.f32 %v3319, 1.0
    %v3321 = vmax.f32 %v3320, -1.0
    %v3322 = vmul.f32 %v1400, %v1400
    %v3323 = vmin.f32 16.0, %v3322
    %v3324 = vmul.f32 %v3323, 2.1237322e-06
    %v3325 = vadd.f32 %v3324, 0.00028619796
    %v3326 = vmul.f32 %v3323, %v3325
    %v3327 = vadd.f32 %v3326, 0.0036580483
    %v3328 = vmul.f32 %v3323, %v3327
    %v3329 = vadd.f32 %v3328, 0.05243302
    %v3330 = vmul.f32 %v3323, %v3329
    %v3331 = vadd.f32 %v3330, 0.18741608
    %v3332 = vmul.f32 %v3323, %v3331
    %v3333 = vadd.f32 %v3332, 1.1283791
    %v3334 = vmul.f32 %v1400, %v3333
    %v3335 = vmul.f32 %v3323, 3.8918573e-05
    %v3336 = vadd.f32 %v3335, 0.001143296
    %v3337 = vmul.f32 %v3323, %v3336
    %v3338 = vadd.f32 %v3337, 0.014752088
    %v3339 = vmul.f32 %v3323, %v3338
    %v3340 = vadd.f32 %v3339, 0.112945676
    %v3341 = vmul.f32 %v3323, %v3340
    %v3342 = vadd.f32 %v3341, 0.4994258
    %v3343 = vmul.f32 %v3323, %v3342
    %v3344 = vadd.f32 %v3343, 1.0
    %v3345 = vrcp.pop %v3344
    %v3346 = vmul.f32 %v3344, %v3345
    %v3347 = vsub.f32 1.0, %v3346
    %v3348 = vmul.f32 %v3345, %v3347
    %v3349 = vadd.f32 %v3345, %v3348
    %vm3350 = vweird.f32 %v3344
    %vm3351 = vweird.f32 %v3345
    %vm3352 = vmor %vm3350, %vm3351
    %v3353 = vsel %vm3352, %v3345, %v3349
    %v3354 = vand.u32 2147483647, %v3344
    %vm3355 = vcmp.eq.f32.partialorder %v3354, 8.507059e+37
    %v3356 = vand.u32 %v3344, 2147483648
    %v3357 = vor.u32 1.1754944e-38, %v3356
    %v3358 = vsel %vm3355, %v3357, %v3353
    %v3359 = vmul.f32 %v3334, %v3358
    %v3360 = vmin.f32 %v3359, 1.0
    %v3361 = vmax.f32 %v3360, -1.0
    %v3362 = vmul.f32 %v1401, %v1401
    %v3363 = vmin.f32 16.0, %v3362
    %v3364 = vmul.f32 %v3363, 2.1237322e-06
    %v3365 = vadd.f32 %v3364, 0.00028619796
    %v3366 = vmul.f32 %v3363, %v3365
    %v3367 = vadd.f32 %v3366, 0.0036580483
    %v3368 = vmul.f32 %v3363, %v3367
    %v3369 = vadd.f32 %v3368, 0.05243302
    %v3370 = vmul.f32 %v3363, %v3369
    %v3371 = vadd.f32 %v3370, 0.18741608
    %v3372 = vmul.f32 %v3363, %v3371
    %v3373 = vadd.f32 %v3372, 1.1283791
    %v3374 = vmul.f32 %v1401, %v3373
    %v3375 = vmul.f32 %v3363, 3.8918573e-05
    %v3376 = vadd.f32 %v3375, 0.001143296
    %v3377 = vmul.f32 %v3363, %v3376
    %v3378 = vadd.f32 %v3377, 0.014752088
    %v3379 = vmul.f32 %v3363, %v3378
    %v3380 = vadd.f32 %v3379, 0.112945676
    %v3381 = vmul.f32 %v3363, %v3380
    %v3382 = vadd.f32 %v3381, 0.4994258
    %v3383 = vmul.f32 %v3363, %v3382
    %v3384 = vadd.f32 %v3383, 1.0
    %v3385 = vrcp.pop %v3384
    %v3386 = vmul.f32 %v3384, %v3385
    %v3387 = vsub.f32 1.0, %v3386
    %v3388 = vmul.f32 %v3385, %v3387
    %v3389 = vadd.f32 %v3385, %v3388
    %vm3390 = vweird.f32 %v3384
    %vm3391 = vweird.f32 %v3385
    %vm3392 = vmor %vm3390, %vm3391
    %v3393 = vsel %vm3392, %v3385, %v3389
    %v3394 = vand.u32 2147483647, %v3384
    %vm3395 = vcmp.eq.f32.partialorder %v3394, 8.507059e+37
    %v3396 = vand.u32 %v3384, 2147483648
    %v3397 = vor.u32 1.1754944e-38, %v3396
    %v3398 = vsel %vm3395, %v3397, %v3393
    %v3399 = vmul.f32 %v3374, %v3398
    %v3400 = vmin.f32 %v3399, 1.0
    %v3401 = vmax.f32 %v3400, -1.0
    %v3402 = vmul.f32 %v1402, %v1402
    %v3403 = vmin.f32 16.0, %v3402
    %v3404 = vmul.f32 %v3403, 2.1237322e-06
    %v3405 = vadd.f32 %v3404, 0.00028619796
    %v3406 = vmul.f32 %v3403, %v3405
    %v3407 = vadd.f32 %v3406, 0.0036580483
    %v3408 = vmul.f32 %v3403, %v3407
    %v3409 = vadd.f32 %v3408, 0.05243302
    %v3410 = vmul.f32 %v3403, %v3409
    %v3411 = vadd.f32 %v3410, 0.18741608
    %v3412 = vmul.f32 %v3403, %v3411
    %v3413 = vadd.f32 %v3412, 1.1283791
    %v3414 = vmul.f32 %v1402, %v3413
    %v3415 = vmul.f32 %v3403, 3.8918573e-05
    %v3416 = vadd.f32 %v3415, 0.001143296
    %v3417 = vmul.f32 %v3403, %v3416
    %v3418 = vadd.f32 %v3417, 0.014752088
    %v3419 = vmul.f32 %v3403, %v3418
    %v3420 = vadd.f32 %v3419, 0.112945676
    %v3421 = vmul.f32 %v3403, %v3420
    %v3422 = vadd.f32 %v3421, 0.4994258
    %v3423 = vmul.f32 %v3403, %v3422
    %v3424 = vadd.f32 %v3423, 1.0
    %v3425 = vrcp.pop %v3424
    %v3426 = vmul.f32 %v3424, %v3425
    %v3427 = vsub.f32 1.0, %v3426
    %v3428 = vmul.f32 %v3425, %v3427
    %v3429 = vadd.f32 %v3425, %v3428
    %vm3430 = vweird.f32 %v3424
    %vm3431 = vweird.f32 %v3425
    %vm3432 = vmor %vm3430, %vm3431
    %v3433 = vsel %vm3432, %v3425, %v3429
    %v3434 = vand.u32 2147483647, %v3424
    %vm3435 = vcmp.eq.f32.partialorder %v3434, 8.507059e+37
    %v3436 = vand.u32 %v3424, 2147483648
    %v3437 = vor.u32 1.1754944e-38, %v3436
    %v3438 = vsel %vm3435, %v3437, %v3433
    %v3439 = vmul.f32 %v3414, %v3438
    %v3440 = vmin.f32 %v3439, 1.0
    %v3441 = vmax.f32 %v3440, -1.0
    %v3442 = vmul.f32 %v1403, %v1403
    %v3443 = vmin.f32 16.0, %v3442
    %v3444 = vmul.f32 %v3443, 2.1237322e-06
    %v3445 = vadd.f32 %v3444, 0.00028619796
    %v3446 = vmul.f32 %v3443, %v3445
    %v3447 = vadd.f32 %v3446, 0.0036580483
    %v3448 = vmul.f32 %v3443, %v3447
    %v3449 = vadd.f32 %v3448, 0.05243302
    %v3450 = vmul.f32 %v3443, %v3449
    %v3451 = vadd.f32 %v3450, 0.18741608
    %v3452 = vmul.f32 %v3443, %v3451
    %v3453 = vadd.f32 %v3452, 1.1283791
    %v3454 = vmul.f32 %v1403, %v3453
    %v3455 = vmul.f32 %v3443, 3.8918573e-05
    %v3456 = vadd.f32 %v3455, 0.001143296
    %v3457 = vmul.f32 %v3443, %v3456
    %v3458 = vadd.f32 %v3457, 0.014752088
    %v3459 = vmul.f32 %v3443, %v3458
    %v3460 = vadd.f32 %v3459, 0.112945676
    %v3461 = vmul.f32 %v3443, %v3460
    %v3462 = vadd.f32 %v3461, 0.4994258
    %v3463 = vmul.f32 %v3443, %v3462
    %v3464 = vadd.f32 %v3463, 1.0
    %v3465 = vrcp.pop %v3464
    %v3466 = vmul.f32 %v3464, %v3465
    %v3467 = vsub.f32 1.0, %v3466
    %v3468 = vmul.f32 %v3465, %v3467
    %v3469 = vadd.f32 %v3465, %v3468
    %vm3470 = vweird.f32 %v3464
    %vm3471 = vweird.f32 %v3465
    %vm3472 = vmor %vm3470, %vm3471
    %v3473 = vsel %vm3472, %v3465, %v3469
    %v3474 = vand.u32 2147483647, %v3464
    %vm3475 = vcmp.eq.f32.partialorder %v3474, 8.507059e+37
    %v3476 = vand.u32 %v3464, 2147483648
    %v3477 = vor.u32 1.1754944e-38, %v3476
    %v3478 = vsel %vm3475, %v3477, %v3473
    %v3479 = vmul.f32 %v3454, %v3478
    %v3480 = vmin.f32 %v3479, 1.0
    %v3481 = vmax.f32 %v3480, -1.0
    %v3482 = vmul.f32 %v1404, %v1404
    %v3483 = vmin.f32 16.0, %v3482
    %v3484 = vmul.f32 %v3483, 2.1237322e-06
    %v3485 = vadd.f32 %v3484, 0.00028619796
    %v3486 = vmul.f32 %v3483, %v3485
    %v3487 = vadd.f32 %v3486, 0.0036580483
    %v3488 = vmul.f32 %v3483, %v3487
    %v3489 = vadd.f32 %v3488, 0.05243302
    %v3490 = vmul.f32 %v3483, %v3489
    %v3491 = vadd.f32 %v3490, 0.18741608
    %v3492 = vmul.f32 %v3483, %v3491
    %v3493 = vadd.f32 %v3492, 1.1283791
    %v3494 = vmul.f32 %v1404, %v3493
    %v3495 = vmul.f32 %v3483, 3.8918573e-05
    %v3496 = vadd.f32 %v3495, 0.001143296
    %v3497 = vmul.f32 %v3483, %v3496
    %v3498 = vadd.f32 %v3497, 0.014752088
    %v3499 = vmul.f32 %v3483, %v3498
    %v3500 = vadd.f32 %v3499, 0.112945676
    %v3501 = vmul.f32 %v3483, %v3500
    %v3502 = vadd.f32 %v3501, 0.4994258
    %v3503 = vmul.f32 %v3483, %v3502
    %v3504 = vadd.f32 %v3503, 1.0
    %v3505 = vrcp.pop %v3504
    %v3506 = vmul.f32 %v3504, %v3505
    %v3507 = vsub.f32 1.0, %v3506
    %v3508 = vmul.f32 %v3505, %v3507
    %v3509 = vadd.f32 %v3505, %v3508
    %vm3510 = vweird.f32 %v3504
    %vm3511 = vweird.f32 %v3505
    %vm3512 = vmor %vm3510, %vm3511
    %v3513 = vsel %vm3512, %v3505, %v3509
    %v3514 = vand.u32 2147483647, %v3504
    %vm3515 = vcmp.eq.f32.partialorder %v3514, 8.507059e+37
    %v3516 = vand.u32 %v3504, 2147483648
    %v3517 = vor.u32 1.1754944e-38, %v3516
    %v3518 = vsel %vm3515, %v3517, %v3513
    %v3519 = vmul.f32 %v3494, %v3518
    %v3520 = vmin.f32 %v3519, 1.0
    %v3521 = vmax.f32 %v3520, -1.0
    %v3522 = vmul.f32 %v1405, %v1405
    %v3523 = vmin.f32 16.0, %v3522
    %v3524 = vmul.f32 %v3523, 2.1237322e-06
    %v3525 = vadd.f32 %v3524, 0.00028619796
    %v3526 = vmul.f32 %v3523, %v3525
    %v3527 = vadd.f32 %v3526, 0.0036580483
    %v3528 = vmul.f32 %v3523, %v3527
    %v3529 = vadd.f32 %v3528, 0.05243302
    %v3530 = vmul.f32 %v3523, %v3529
    %v3531 = vadd.f32 %v3530, 0.18741608
    %v3532 = vmul.f32 %v3523, %v3531
    %v3533 = vadd.f32 %v3532, 1.1283791
    %v3534 = vmul.f32 %v1405, %v3533
    %v3535 = vmul.f32 %v3523, 3.8918573e-05
    %v3536 = vadd.f32 %v3535, 0.001143296
    %v3537 = vmul.f32 %v3523, %v3536
    %v3538 = vadd.f32 %v3537, 0.014752088
    %v3539 = vmul.f32 %v3523, %v3538
    %v3540 = vadd.f32 %v3539, 0.112945676
    %v3541 = vmul.f32 %v3523, %v3540
    %v3542 = vadd.f32 %v3541, 0.4994258
    %v3543 = vmul.f32 %v3523, %v3542
    %v3544 = vadd.f32 %v3543, 1.0
    %v3545 = vrcp.pop %v3544
    %v3546 = vmul.f32 %v3544, %v3545
    %v3547 = vsub.f32 1.0, %v3546
    %v3548 = vmul.f32 %v3545, %v3547
    %v3549 = vadd.f32 %v3545, %v3548
    %vm3550 = vweird.f32 %v3544
    %vm3551 = vweird.f32 %v3545
    %vm3552 = vmor %vm3550, %vm3551
    %v3553 = vsel %vm3552, %v3545, %v3549
    %v3554 = vand.u32 2147483647, %v3544
    %vm3555 = vcmp.eq.f32.partialorder %v3554, 8.507059e+37
    %v3556 = vand.u32 %v3544, 2147483648
    %v3557 = vor.u32 1.1754944e-38, %v3556
    %v3558 = vsel %vm3555, %v3557, %v3553
    %v3559 = vmul.f32 %v3534, %v3558
    %v3560 = vmin.f32 %v3559, 1.0
    %v3561 = vmax.f32 %v3560, -1.0
    %v3562 = vmul.f32 %v1406, %v1406
    %v3563 = vmin.f32 16.0, %v3562
    %v3564 = vmul.f32 %v3563, 2.1237322e-06
    %v3565 = vadd.f32 %v3564, 0.00028619796
    %v3566 = vmul.f32 %v3563, %v3565
    %v3567 = vadd.f32 %v3566, 0.0036580483
    %v3568 = vmul.f32 %v3563, %v3567
    %v3569 = vadd.f32 %v3568, 0.05243302
    %v3570 = vmul.f32 %v3563, %v3569
    %v3571 = vadd.f32 %v3570, 0.18741608
    %v3572 = vmul.f32 %v3563, %v3571
    %v3573 = vadd.f32 %v3572, 1.1283791
    %v3574 = vmul.f32 %v1406, %v3573
    %v3575 = vmul.f32 %v3563, 3.8918573e-05
    %v3576 = vadd.f32 %v3575, 0.001143296
    %v3577 = vmul.f32 %v3563, %v3576
    %v3578 = vadd.f32 %v3577, 0.014752088
    %v3579 = vmul.f32 %v3563, %v3578
    %v3580 = vadd.f32 %v3579, 0.112945676
    %v3581 = vmul.f32 %v3563, %v3580
    %v3582 = vadd.f32 %v3581, 0.4994258
    %v3583 = vmul.f32 %v3563, %v3582
    %v3584 = vadd.f32 %v3583, 1.0
    %v3585 = vrcp.pop %v3584
    %v3586 = vmul.f32 %v3584, %v3585
    %v3587 = vsub.f32 1.0, %v3586
    %v3588 = vmul.f32 %v3585, %v3587
    %v3589 = vadd.f32 %v3585, %v3588
    %vm3590 = vweird.f32 %v3584
    %vm3591 = vweird.f32 %v3585
    %vm3592 = vmor %vm3590, %vm3591
    %v3593 = vsel %vm3592, %v3585, %v3589
    %v3594 = vand.u32 2147483647, %v3584
    %vm3595 = vcmp.eq.f32.partialorder %v3594, 8.507059e+37
    %v3596 = vand.u32 %v3584, 2147483648
    %v3597 = vor.u32 1.1754944e-38, %v3596
    %v3598 = vsel %vm3595, %v3597, %v3593
    %v3599 = vmul.f32 %v3574, %v3598
    %v3600 = vmin.f32 %v3599, 1.0
    %v3601 = vmax.f32 %v3600, -1.0
    %v3602 = vmul.f32 %v1407, %v1407
    %v3603 = vmin.f32 16.0, %v3602
    %v3604 = vmul.f32 %v3603, 2.1237322e-06
    %v3605 = vadd.f32 %v3604, 0.00028619796
    %v3606 = vmul.f32 %v3603, %v3605
    %v3607 = vadd.f32 %v3606, 0.0036580483
    %v3608 = vmul.f32 %v3603, %v3607
    %v3609 = vadd.f32 %v3608, 0.05243302
    %v3610 = vmul.f32 %v3603, %v3609
    %v3611 = vadd.f32 %v3610, 0.18741608
    %v3612 = vmul.f32 %v3603, %v3611
    %v3613 = vadd.f32 %v3612, 1.1283791
    %v3614 = vmul.f32 %v1407, %v3613
    %v3615 = vmul.f32 %v3603, 3.8918573e-05
    %v3616 = vadd.f32 %v3615, 0.001143296
    %v3617 = vmul.f32 %v3603, %v3616
    %v3618 = vadd.f32 %v3617, 0.014752088
    %v3619 = vmul.f32 %v3603, %v3618
    %v3620 = vadd.f32 %v3619, 0.112945676
    %v3621 = vmul.f32 %v3603, %v3620
    %v3622 = vadd.f32 %v3621, 0.4994258
    %v3623 = vmul.f32 %v3603, %v3622
    %v3624 = vadd.f32 %v3623, 1.0
    %v3625 = vrcp.pop %v3624
    %v3626 = vmul.f32 %v3624, %v3625
    %v3627 = vsub.f32 1.0, %v3626
    %v3628 = vmul.f32 %v3625, %v3627
    %v3629 = vadd.f32 %v3625, %v3628
    %vm3630 = vweird.f32 %v3624
    %vm3631 = vweird.f32 %v3625
    %vm3632 = vmor %vm3630, %vm3631
    %v3633 = vsel %vm3632, %v3625, %v3629
    %v3634 = vand.u32 2147483647, %v3624
    %vm3635 = vcmp.eq.f32.partialorder %v3634, 8.507059e+37
    %v3636 = vand.u32 %v3624, 2147483648
    %v3637 = vor.u32 1.1754944e-38, %v3636
    %v3638 = vsel %vm3635, %v3637, %v3633
    %v3639 = vmul.f32 %v3614, %v3638
    %v3640 = vmin.f32 %v3639, 1.0
    %v3641 = vmax.f32 %v3640, -1.0
    %v3642 = vmul.f32 %v1408, %v1408
    %v3643 = vmin.f32 16.0, %v3642
    %v3644 = vmul.f32 %v3643, 2.1237322e-06
    %v3645 = vadd.f32 %v3644, 0.00028619796
    %v3646 = vmul.f32 %v3643, %v3645
    %v3647 = vadd.f32 %v3646, 0.0036580483
    %v3648 = vmul.f32 %v3643, %v3647
    %v3649 = vadd.f32 %v3648, 0.05243302
    %v3650 = vmul.f32 %v3643, %v3649
    %v3651 = vadd.f32 %v3650, 0.18741608
    %v3652 = vmul.f32 %v3643, %v3651
    %v3653 = vadd.f32 %v3652, 1.1283791
    %v3654 = vmul.f32 %v1408, %v3653
    %v3655 = vmul.f32 %v3643, 3.8918573e-05
    %v3656 = vadd.f32 %v3655, 0.001143296
    %v3657 = vmul.f32 %v3643, %v3656
    %v3658 = vadd.f32 %v3657, 0.014752088
    %v3659 = vmul.f32 %v3643, %v3658
    %v3660 = vadd.f32 %v3659, 0.112945676
    %v3661 = vmul.f32 %v3643, %v3660
    %v3662 = vadd.f32 %v3661, 0.4994258
    %v3663 = vmul.f32 %v3643, %v3662
    %v3664 = vadd.f32 %v3663, 1.0
    %v3665 = vrcp.pop %v3664
    %v3666 = vmul.f32 %v3664, %v3665
    %v3667 = vsub.f32 1.0, %v3666
    %v3668 = vmul.f32 %v3665, %v3667
    %v3669 = vadd.f32 %v3665, %v3668
    %vm3670 = vweird.f32 %v3664
    %vm3671 = vweird.f32 %v3665
    %vm3672 = vmor %vm3670, %vm3671
    %v3673 = vsel %vm3672, %v3665, %v3669
    %v3674 = vand.u32 2147483647, %v3664
    %vm3675 = vcmp.eq.f32.partialorder %v3674, 8.507059e+37
    %v3676 = vand.u32 %v3664, 2147483648
    %v3677 = vor.u32 1.1754944e-38, %v3676
    %v3678 = vsel %vm3675, %v3677, %v3673
    %v3679 = vmul.f32 %v3654, %v3678
    %v3680 = vmin.f32 %v3679, 1.0
    %v3681 = vmax.f32 %v3680, -1.0
    %v3682 = vmul.f32 %v1409, %v1409
    %v3683 = vmin.f32 16.0, %v3682
    %v3684 = vmul.f32 %v3683, 2.1237322e-06
    %v3685 = vadd.f32 %v3684, 0.00028619796
    %v3686 = vmul.f32 %v3683, %v3685
    %v3687 = vadd.f32 %v3686, 0.0036580483
    %v3688 = vmul.f32 %v3683, %v3687
    %v3689 = vadd.f32 %v3688, 0.05243302
    %v3690 = vmul.f32 %v3683, %v3689
    %v3691 = vadd.f32 %v3690, 0.18741608
    %v3692 = vmul.f32 %v3683, %v3691
    %v3693 = vadd.f32 %v3692, 1.1283791
    %v3694 = vmul.f32 %v1409, %v3693
    %v3695 = vmul.f32 %v3683, 3.8918573e-05
    %v3696 = vadd.f32 %v3695, 0.001143296
    %v3697 = vmul.f32 %v3683, %v3696
    %v3698 = vadd.f32 %v3697, 0.014752088
    %v3699 = vmul.f32 %v3683, %v3698
    %v3700 = vadd.f32 %v3699, 0.112945676
    %v3701 = vmul.f32 %v3683, %v3700
    %v3702 = vadd.f32 %v3701, 0.4994258
    %v3703 = vmul.f32 %v3683, %v3702
    %v3704 = vadd.f32 %v3703, 1.0
    %v3705 = vrcp.pop %v3704
    %v3706 = vmul.f32 %v3704, %v3705
    %v3707 = vsub.f32 1.0, %v3706
    %v3708 = vmul.f32 %v3705, %v3707
    %v3709 = vadd.f32 %v3705, %v3708
    %vm3710 = vweird.f32 %v3704
    %vm3711 = vweird.f32 %v3705
    %vm3712 = vmor %vm3710, %vm3711
    %v3713 = vsel %vm3712, %v3705, %v3709
    %v3714 = vand.u32 2147483647, %v3704
    %vm3715 = vcmp.eq.f32.partialorder %v3714, 8.507059e+37
    %v3716 = vand.u32 %v3704, 2147483648
    %v3717 = vor.u32 1.1754944e-38, %v3716
    %v3718 = vsel %vm3715, %v3717, %v3713
    %v3719 = vmul.f32 %v3694, %v3718
    %v3720 = vmin.f32 %v3719, 1.0
    %v3721 = vmax.f32 %v3720, -1.0
    %v3722 = vmul.f32 %v1410, %v1410
    %v3723 = vmin.f32 16.0, %v3722
    %v3724 = vmul.f32 %v3723, 2.1237322e-06
    %v3725 = vadd.f32 %v3724, 0.00028619796
    %v3726 = vmul.f32 %v3723, %v3725
    %v3727 = vadd.f32 %v3726, 0.0036580483
    %v3728 = vmul.f32 %v3723, %v3727
    %v3729 = vadd.f32 %v3728, 0.05243302
    %v3730 = vmul.f32 %v3723, %v3729
    %v3731 = vadd.f32 %v3730, 0.18741608
    %v3732 = vmul.f32 %v3723, %v3731
    %v3733 = vadd.f32 %v3732, 1.1283791
    %v3734 = vmul.f32 %v1410, %v3733
    %v3735 = vmul.f32 %v3723, 3.8918573e-05
    %v3736 = vadd.f32 %v3735, 0.001143296
    %v3737 = vmul.f32 %v3723, %v3736
    %v3738 = vadd.f32 %v3737, 0.014752088
    %v3739 = vmul.f32 %v3723, %v3738
    %v3740 = vadd.f32 %v3739, 0.112945676
    %v3741 = vmul.f32 %v3723, %v3740
    %v3742 = vadd.f32 %v3741, 0.4994258
    %v3743 = vmul.f32 %v3723, %v3742
    %v3744 = vadd.f32 %v3743, 1.0
    %v3745 = vrcp.pop %v3744
    %v3746 = vmul.f32 %v3744, %v3745
    %v3747 = vsub.f32 1.0, %v3746
    %v3748 = vmul.f32 %v3745, %v3747
    %v3749 = vadd.f32 %v3745, %v3748
    %vm3750 = vweird.f32 %v3744
    %vm3751 = vweird.f32 %v3745
    %vm3752 = vmor %vm3750, %vm3751
    %v3753 = vsel %vm3752, %v3745, %v3749
    %v3754 = vand.u32 2147483647, %v3744
    %vm3755 = vcmp.eq.f32.partialorder %v3754, 8.507059e+37
    %v3756 = vand.u32 %v3744, 2147483648
    %v3757 = vor.u32 1.1754944e-38, %v3756
    %v3758 = vsel %vm3755, %v3757, %v3753
    %v3759 = vmul.f32 %v3734, %v3758
    %v3760 = vmin.f32 %v3759, 1.0
    %v3761 = vmax.f32 %v3760, -1.0
    %v3762 = vmul.f32 %v1411, %v1411
    %v3763 = vmin.f32 16.0, %v3762
    %v3764 = vmul.f32 %v3763, 2.1237322e-06
    %v3765 = vadd.f32 %v3764, 0.00028619796
    %v3766 = vmul.f32 %v3763, %v3765
    %v3767 = vadd.f32 %v3766, 0.0036580483
    %v3768 = vmul.f32 %v3763, %v3767
    %v3769 = vadd.f32 %v3768, 0.05243302
    %v3770 = vmul.f32 %v3763, %v3769
    %v3771 = vadd.f32 %v3770, 0.18741608
    %v3772 = vmul.f32 %v3763, %v3771
    %v3773 = vadd.f32 %v3772, 1.1283791
    %v3774 = vmul.f32 %v1411, %v3773
    %v3775 = vmul.f32 %v3763, 3.8918573e-05
    %v3776 = vadd.f32 %v3775, 0.001143296
    %v3777 = vmul.f32 %v3763, %v3776
    %v3778 = vadd.f32 %v3777, 0.014752088
    %v3779 = vmul.f32 %v3763, %v3778
    %v3780 = vadd.f32 %v3779, 0.112945676
    %v3781 = vmul.f32 %v3763, %v3780
    %v3782 = vadd.f32 %v3781, 0.4994258
    %v3783 = vmul.f32 %v3763, %v3782
    %v3784 = vadd.f32 %v3783, 1.0
    %v3785 = vrcp.pop %v3784
    %v3786 = vmul.f32 %v3784, %v3785
    %v3787 = vsub.f32 1.0, %v3786
    %v3788 = vmul.f32 %v3785, %v3787
    %v3789 = vadd.f32 %v3785, %v3788
    %vm3790 = vweird.f32 %v3784
    %vm3791 = vweird.f32 %v3785
    %vm3792 = vmor %vm3790, %vm3791
    %v3793 = vsel %vm3792, %v3785, %v3789
    %v3794 = vand.u32 2147483647, %v3784
    %vm3795 = vcmp.eq.f32.partialorder %v3794, 8.507059e+37
    %v3796 = vand.u32 %v3784, 2147483648
    %v3797 = vor.u32 1.1754944e-38, %v3796
    %v3798 = vsel %vm3795, %v3797, %v3793
    %v3799 = vmul.f32 %v3774, %v3798
    %v3800 = vmin.f32 %v3799, 1.0
    %v3801 = vmax.f32 %v3800, -1.0
    %v3802 = vmul.f32 %v1412, %v1412
    %v3803 = vmin.f32 16.0, %v3802
    %v3804 = vmul.f32 %v3803, 2.1237322e-06
    %v3805 = vadd.f32 %v3804, 0.00028619796
    %v3806 = vmul.f32 %v3803, %v3805
    %v3807 = vadd.f32 %v3806, 0.0036580483
    %v3808 = vmul.f32 %v3803, %v3807
    %v3809 = vadd.f32 %v3808, 0.05243302
    %v3810 = vmul.f32 %v3803, %v3809
    %v3811 = vadd.f32 %v3810, 0.18741608
    %v3812 = vmul.f32 %v3803, %v3811
    %v3813 = vadd.f32 %v3812, 1.1283791
    %v3814 = vmul.f32 %v1412, %v3813
    %v3815 = vmul.f32 %v3803, 3.8918573e-05
    %v3816 = vadd.f32 %v3815, 0.001143296
    %v3817 = vmul.f32 %v3803, %v3816
    %v3818 = vadd.f32 %v3817, 0.014752088
    %v3819 = vmul.f32 %v3803, %v3818
    %v3820 = vadd.f32 %v3819, 0.112945676
    %v3821 = vmul.f32 %v3803, %v3820
    %v3822 = vadd.f32 %v3821, 0.4994258
    %v3823 = vmul.f32 %v3803, %v3822
    %v3824 = vadd.f32 %v3823, 1.0
    %v3825 = vrcp.pop %v3824
    %v3826 = vmul.f32 %v3824, %v3825
    %v3827 = vsub.f32 1.0, %v3826
    %v3828 = vmul.f32 %v3825, %v3827
    %v3829 = vadd.f32 %v3825, %v3828
    %vm3830 = vweird.f32 %v3824
    %vm3831 = vweird.f32 %v3825
    %vm3832 = vmor %vm3830, %vm3831
    %v3833 = vsel %vm3832, %v3825, %v3829
    %v3834 = vand.u32 2147483647, %v3824
    %vm3835 = vcmp.eq.f32.partialorder %v3834, 8.507059e+37
    %v3836 = vand.u32 %v3824, 2147483648
    %v3837 = vor.u32 1.1754944e-38, %v3836
    %v3838 = vsel %vm3835, %v3837, %v3833
    %v3839 = vmul.f32 %v3814, %v3838
    %v3840 = vmin.f32 %v3839, 1.0
    %v3841 = vmax.f32 %v3840, -1.0
    %v3842 = vmul.f32 %v1413, %v1413
    %v3843 = vmin.f32 16.0, %v3842
    %v3844 = vmul.f32 %v3843, 2.1237322e-06
    %v3845 = vadd.f32 %v3844, 0.00028619796
    %v3846 = vmul.f32 %v3843, %v3845
    %v3847 = vadd.f32 %v3846, 0.0036580483
    %v3848 = vmul.f32 %v3843, %v3847
    %v3849 = vadd.f32 %v3848, 0.05243302
    %v3850 = vmul.f32 %v3843, %v3849
    %v3851 = vadd.f32 %v3850, 0.18741608
    %v3852 = vmul.f32 %v3843, %v3851
    %v3853 = vadd.f32 %v3852, 1.1283791
    %v3854 = vmul.f32 %v1413, %v3853
    %v3855 = vmul.f32 %v3843, 3.8918573e-05
    %v3856 = vadd.f32 %v3855, 0.001143296
    %v3857 = vmul.f32 %v3843, %v3856
    %v3858 = vadd.f32 %v3857, 0.014752088
    %v3859 = vmul.f32 %v3843, %v3858
    %v3860 = vadd.f32 %v3859, 0.112945676
    %v3861 = vmul.f32 %v3843, %v3860
    %v3862 = vadd.f32 %v3861, 0.4994258
    %v3863 = vmul.f32 %v3843, %v3862
    %v3864 = vadd.f32 %v3863, 1.0
    %v3865 = vrcp.pop %v3864
    %v3866 = vmul.f32 %v3864, %v3865
    %v3867 = vsub.f32 1.0, %v3866
    %v3868 = vmul.f32 %v3865, %v3867
    %v3869 = vadd.f32 %v3865, %v3868
    %vm3870 = vweird.f32 %v3864
    %vm3871 = vweird.f32 %v3865
    %vm3872 = vmor %vm3870, %vm3871
    %v3873 = vsel %vm3872, %v3865, %v3869
    %v3874 = vand.u32 2147483647, %v3864
    %vm3875 = vcmp.eq.f32.partialorder %v3874, 8.507059e+37
    %v3876 = vand.u32 %v3864, 2147483648
    %v3877 = vor.u32 1.1754944e-38, %v3876
    %v3878 = vsel %vm3875, %v3877, %v3873
    %v3879 = vmul.f32 %v3854, %v3878
    %v3880 = vmin.f32 %v3879, 1.0
    %v3881 = vmax.f32 %v3880, -1.0
    %v3882 = vmul.f32 %v1414, %v1414
    %v3883 = vmin.f32 16.0, %v3882
    %v3884 = vmul.f32 %v3883, 2.1237322e-06
    %v3885 = vadd.f32 %v3884, 0.00028619796
    %v3886 = vmul.f32 %v3883, %v3885
    %v3887 = vadd.f32 %v3886, 0.0036580483
    %v3888 = vmul.f32 %v3883, %v3887
    %v3889 = vadd.f32 %v3888, 0.05243302
    %v3890 = vmul.f32 %v3883, %v3889
    %v3891 = vadd.f32 %v3890, 0.18741608
    %v3892 = vmul.f32 %v3883, %v3891
    %v3893 = vadd.f32 %v3892, 1.1283791
    %v3894 = vmul.f32 %v1414, %v3893
    %v3895 = vmul.f32 %v3883, 3.8918573e-05
    %v3896 = vadd.f32 %v3895, 0.001143296
    %v3897 = vmul.f32 %v3883, %v3896
    %v3898 = vadd.f32 %v3897, 0.014752088
    %v3899 = vmul.f32 %v3883, %v3898
    %v3900 = vadd.f32 %v3899, 0.112945676
    %v3901 = vmul.f32 %v3883, %v3900
    %v3902 = vadd.f32 %v3901, 0.4994258
    %v3903 = vmul.f32 %v3883, %v3902
    %v3904 = vadd.f32 %v3903, 1.0
    %v3905 = vrcp.pop %v3904
    %v3906 = vmul.f32 %v3904, %v3905
    %v3907 = vsub.f32 1.0, %v3906
    %v3908 = vmul.f32 %v3905, %v3907
    %v3909 = vadd.f32 %v3905, %v3908
    %vm3910 = vweird.f32 %v3904
    %vm3911 = vweird.f32 %v3905
    %vm3912 = vmor %vm3910, %vm3911
    %v3913 = vsel %vm3912, %v3905, %v3909
    %v3914 = vand.u32 2147483647, %v3904
    %vm3915 = vcmp.eq.f32.partialorder %v3914, 8.507059e+37
    %v3916 = vand.u32 %v3904, 2147483648
    %v3917 = vor.u32 1.1754944e-38, %v3916
    %v3918 = vsel %vm3915, %v3917, %v3913
    %v3919 = vmul.f32 %v3894, %v3918
    %v3920 = vmin.f32 %v3919, 1.0
    %v3921 = vmax.f32 %v3920, -1.0
    %v3922 = vmul.f32 %v1415, %v1415
    %v3923 = vmin.f32 16.0, %v3922
    %v3924 = vmul.f32 %v3923, 2.1237322e-06
    %v3925 = vadd.f32 %v3924, 0.00028619796
    %v3926 = vmul.f32 %v3923, %v3925
    %v3927 = vadd.f32 %v3926, 0.0036580483
    %v3928 = vmul.f32 %v3923, %v3927
    %v3929 = vadd.f32 %v3928, 0.05243302
    %v3930 = vmul.f32 %v3923, %v3929
    %v3931 = vadd.f32 %v3930, 0.18741608
    %v3932 = vmul.f32 %v3923, %v3931
    %v3933 = vadd.f32 %v3932, 1.1283791
    %v3934 = vmul.f32 %v1415, %v3933
    %v3935 = vmul.f32 %v3923, 3.8918573e-05
    %v3936 = vadd.f32 %v3935, 0.001143296
    %v3937 = vmul.f32 %v3923, %v3936
    %v3938 = vadd.f32 %v3937, 0.014752088
    %v3939 = vmul.f32 %v3923, %v3938
    %v3940 = vadd.f32 %v3939, 0.112945676
    %v3941 = vmul.f32 %v3923, %v3940
    %v3942 = vadd.f32 %v3941, 0.4994258
    %v3943 = vmul.f32 %v3923, %v3942
    %v3944 = vadd.f32 %v3943, 1.0
    %v3945 = vrcp.pop %v3944
    %v3946 = vmul.f32 %v3944, %v3945
    %v3947 = vsub.f32 1.0, %v3946
    %v3948 = vmul.f32 %v3945, %v3947
    %v3949 = vadd.f32 %v3945, %v3948
    %vm3950 = vweird.f32 %v3944
    %vm3951 = vweird.f32 %v3945
    %vm3952 = vmor %vm3950, %vm3951
    %v3953 = vsel %vm3952, %v3945, %v3949
    %v3954 = vand.u32 2147483647, %v3944
    %vm3955 = vcmp.eq.f32.partialorder %v3954, 8.507059e+37
    %v3956 = vand.u32 %v3944, 2147483648
    %v3957 = vor.u32 1.1754944e-38, %v3956
    %v3958 = vsel %vm3955, %v3957, %v3953
    %v3959 = vmul.f32 %v3934, %v3958
    %v3960 = vmin.f32 %v3959, 1.0
    %v3961 = vmax.f32 %v3960, -1.0
    %v3962 = vmul.f32 %v1416, %v1416
    %v3963 = vmin.f32 16.0, %v3962
    %v3964 = vmul.f32 %v3963, 2.1237322e-06
    %v3965 = vadd.f32 %v3964, 0.00028619796
    %v3966 = vmul.f32 %v3963, %v3965
    %v3967 = vadd.f32 %v3966, 0.0036580483
    %v3968 = vmul.f32 %v3963, %v3967
    %v3969 = vadd.f32 %v3968, 0.05243302
    %v3970 = vmul.f32 %v3963, %v3969
    %v3971 = vadd.f32 %v3970, 0.18741608
    %v3972 = vmul.f32 %v3963, %v3971
    %v3973 = vadd.f32 %v3972, 1.1283791
    %v3974 = vmul.f32 %v1416, %v3973
    %v3975 = vmul.f32 %v3963, 3.8918573e-05
    %v3976 = vadd.f32 %v3975, 0.001143296
    %v3977 = vmul.f32 %v3963, %v3976
    %v3978 = vadd.f32 %v3977, 0.014752088
    %v3979 = vmul.f32 %v3963, %v3978
    %v3980 = vadd.f32 %v3979, 0.112945676
    %v3981 = vmul.f32 %v3963, %v3980
    %v3982 = vadd.f32 %v3981, 0.4994258
    %v3983 = vmul.f32 %v3963, %v3982
    %v3984 = vadd.f32 %v3983, 1.0
    %v3985 = vrcp.pop %v3984
    %v3986 = vmul.f32 %v3984, %v3985
    %v3987 = vsub.f32 1.0, %v3986
    %v3988 = vmul.f32 %v3985, %v3987
    %v3989 = vadd.f32 %v3985, %v3988
    %vm3990 = vweird.f32 %v3984
    %vm3991 = vweird.f32 %v3985
    %vm3992 = vmor %vm3990, %vm3991
    %v3993 = vsel %vm3992, %v3985, %v3989
    %v3994 = vand.u32 2147483647, %v3984
    %vm3995 = vcmp.eq.f32.partialorder %v3994, 8.507059e+37
    %v3996 = vand.u32 %v3984, 2147483648
    %v3997 = vor.u32 1.1754944e-38, %v3996
    %v3998 = vsel %vm3995, %v3997, %v3993
    %v3999 = vmul.f32 %v3974, %v3998
    %v4000 = vmin.f32 %v3999, 1.0
    %v4001 = vmax.f32 %v4000, -1.0
    %v4002 = vmul.f32 %v1417, %v1417
    %v4003 = vmin.f32 16.0, %v4002
    %v4004 = vmul.f32 %v4003, 2.1237322e-06
    %v4005 = vadd.f32 %v4004, 0.00028619796
    %v4006 = vmul.f32 %v4003, %v4005
    %v4007 = vadd.f32 %v4006, 0.0036580483
    %v4008 = vmul.f32 %v4003, %v4007
    %v4009 = vadd.f32 %v4008, 0.05243302
    %v4010 = vmul.f32 %v4003, %v4009
    %v4011 = vadd.f32 %v4010, 0.18741608
    %v4012 = vmul.f32 %v4003, %v4011
    %v4013 = vadd.f32 %v4012, 1.1283791
    %v4014 = vmul.f32 %v1417, %v4013
    %v4015 = vmul.f32 %v4003, 3.8918573e-05
    %v4016 = vadd.f32 %v4015, 0.001143296
    %v4017 = vmul.f32 %v4003, %v4016
    %v4018 = vadd.f32 %v4017, 0.014752088
    %v4019 = vmul.f32 %v4003, %v4018
    %v4020 = vadd.f32 %v4019, 0.112945676
    %v4021 = vmul.f32 %v4003, %v4020
    %v4022 = vadd.f32 %v4021, 0.4994258
    %v4023 = vmul.f32 %v4003, %v4022
    %v4024 = vadd.f32 %v4023, 1.0
    %v4025 = vrcp.pop %v4024
    %v4026 = vmul.f32 %v4024, %v4025
    %v4027 = vsub.f32 1.0, %v4026
    %v4028 = vmul.f32 %v4025, %v4027
    %v4029 = vadd.f32 %v4025, %v4028
    %vm4030 = vweird.f32 %v4024
    %vm4031 = vweird.f32 %v4025
    %vm4032 = vmor %vm4030, %vm4031
    %v4033 = vsel %vm4032, %v4025, %v4029
    %v4034 = vand.u32 2147483647, %v4024
    %vm4035 = vcmp.eq.f32.partialorder %v4034, 8.507059e+37
    %v4036 = vand.u32 %v4024, 2147483648
    %v4037 = vor.u32 1.1754944e-38, %v4036
    %v4038 = vsel %vm4035, %v4037, %v4033
    %v4039 = vmul.f32 %v4014, %v4038
    %v4040 = vmin.f32 %v4039, 1.0
    %v4041 = vmax.f32 %v4040, -1.0
    %v4042 = vmul.f32 %v1418, %v1418
    %v4043 = vmin.f32 16.0, %v4042
    %v4044 = vmul.f32 %v4043, 2.1237322e-06
    %v4045 = vadd.f32 %v4044, 0.00028619796
    %v4046 = vmul.f32 %v4043, %v4045
    %v4047 = vadd.f32 %v4046, 0.0036580483
    %v4048 = vmul.f32 %v4043, %v4047
    %v4049 = vadd.f32 %v4048, 0.05243302
    %v4050 = vmul.f32 %v4043, %v4049
    %v4051 = vadd.f32 %v4050, 0.18741608
    %v4052 = vmul.f32 %v4043, %v4051
    %v4053 = vadd.f32 %v4052, 1.1283791
    %v4054 = vmul.f32 %v1418, %v4053
    %v4055 = vmul.f32 %v4043, 3.8918573e-05
    %v4056 = vadd.f32 %v4055, 0.001143296
    %v4057 = vmul.f32 %v4043, %v4056
    %v4058 = vadd.f32 %v4057, 0.014752088
    %v4059 = vmul.f32 %v4043, %v4058
    %v4060 = vadd.f32 %v4059, 0.112945676
    %v4061 = vmul.f32 %v4043, %v4060
    %v4062 = vadd.f32 %v4061, 0.4994258
    %v4063 = vmul.f32 %v4043, %v4062
    %v4064 = vadd.f32 %v4063, 1.0
    %v4065 = vrcp.pop %v4064
    %v4066 = vmul.f32 %v4064, %v4065
    %v4067 = vsub.f32 1.0, %v4066
    %v4068 = vmul.f32 %v4065, %v4067
    %v4069 = vadd.f32 %v4065, %v4068
    %vm4070 = vweird.f32 %v4064
    %vm4071 = vweird.f32 %v4065
    %vm4072 = vmor %vm4070, %vm4071
    %v4073 = vsel %vm4072, %v4065, %v4069
    %v4074 = vand.u32 2147483647, %v4064
    %vm4075 = vcmp.eq.f32.partialorder %v4074, 8.507059e+37
    %v4076 = vand.u32 %v4064, 2147483648
    %v4077 = vor.u32 1.1754944e-38, %v4076
    %v4078 = vsel %vm4075, %v4077, %v4073
    %v4079 = vmul.f32 %v4054, %v4078
    %v4080 = vmin.f32 %v4079, 1.0
    %v4081 = vmax.f32 %v4080, -1.0
    %v4082 = vmul.f32 %v1419, %v1419
    %v4083 = vmin.f32 16.0, %v4082
    %v4084 = vmul.f32 %v4083, 2.1237322e-06
    %v4085 = vadd.f32 %v4084, 0.00028619796
    %v4086 = vmul.f32 %v4083, %v4085
    %v4087 = vadd.f32 %v4086, 0.0036580483
    %v4088 = vmul.f32 %v4083, %v4087
    %v4089 = vadd.f32 %v4088, 0.05243302
    %v4090 = vmul.f32 %v4083, %v4089
    %v4091 = vadd.f32 %v4090, 0.18741608
    %v4092 = vmul.f32 %v4083, %v4091
    %v4093 = vadd.f32 %v4092, 1.1283791
    %v4094 = vmul.f32 %v1419, %v4093
    %v4095 = vmul.f32 %v4083, 3.8918573e-05
    %v4096 = vadd.f32 %v4095, 0.001143296
    %v4097 = vmul.f32 %v4083, %v4096
    %v4098 = vadd.f32 %v4097, 0.014752088
    %v4099 = vmul.f32 %v4083, %v4098
    %v4100 = vadd.f32 %v4099, 0.112945676
    %v4101 = vmul.f32 %v4083, %v4100
    %v4102 = vadd.f32 %v4101, 0.4994258
    %v4103 = vmul.f32 %v4083, %v4102
    %v4104 = vadd.f32 %v4103, 1.0
    %v4105 = vrcp.pop %v4104
    %v4106 = vmul.f32 %v4104, %v4105
    %v4107 = vsub.f32 1.0, %v4106
    %v4108 = vmul.f32 %v4105, %v4107
    %v4109 = vadd.f32 %v4105, %v4108
    %vm4110 = vweird.f32 %v4104
    %vm4111 = vweird.f32 %v4105
    %vm4112 = vmor %vm4110, %vm4111
    %v4113 = vsel %vm4112, %v4105, %v4109
    %v4114 = vand.u32 2147483647, %v4104
    %vm4115 = vcmp.eq.f32.partialorder %v4114, 8.507059e+37
    %v4116 = vand.u32 %v4104, 2147483648
    %v4117 = vor.u32 1.1754944e-38, %v4116
    %v4118 = vsel %vm4115, %v4117, %v4113
    %v4119 = vmul.f32 %v4094, %v4118
    %v4120 = vmin.f32 %v4119, 1.0
    %v4121 = vmax.f32 %v4120, -1.0
    %v4122 = vmul.f32 %v1420, %v1420
    %v4123 = vmin.f32 16.0, %v4122
    %v4124 = vmul.f32 %v4123, 2.1237322e-06
    %v4125 = vadd.f32 %v4124, 0.00028619796
    %v4126 = vmul.f32 %v4123, %v4125
    %v4127 = vadd.f32 %v4126, 0.0036580483
    %v4128 = vmul.f32 %v4123, %v4127
    %v4129 = vadd.f32 %v4128, 0.05243302
    %v4130 = vmul.f32 %v4123, %v4129
    %v4131 = vadd.f32 %v4130, 0.18741608
    %v4132 = vmul.f32 %v4123, %v4131
    %v4133 = vadd.f32 %v4132, 1.1283791
    %v4134 = vmul.f32 %v1420, %v4133
    %v4135 = vmul.f32 %v4123, 3.8918573e-05
    %v4136 = vadd.f32 %v4135, 0.001143296
    %v4137 = vmul.f32 %v4123, %v4136
    %v4138 = vadd.f32 %v4137, 0.014752088
    %v4139 = vmul.f32 %v4123, %v4138
    %v4140 = vadd.f32 %v4139, 0.112945676
    %v4141 = vmul.f32 %v4123, %v4140
    %v4142 = vadd.f32 %v4141, 0.4994258
    %v4143 = vmul.f32 %v4123, %v4142
    %v4144 = vadd.f32 %v4143, 1.0
    %v4145 = vrcp.pop %v4144
    %v4146 = vmul.f32 %v4144, %v4145
    %v4147 = vsub.f32 1.0, %v4146
    %v4148 = vmul.f32 %v4145, %v4147
    %v4149 = vadd.f32 %v4145, %v4148
    %vm4150 = vweird.f32 %v4144
    %vm4151 = vweird.f32 %v4145
    %vm4152 = vmor %vm4150, %vm4151
    %v4153 = vsel %vm4152, %v4145, %v4149
    %v4154 = vand.u32 2147483647, %v4144
    %vm4155 = vcmp.eq.f32.partialorder %v4154, 8.507059e+37
    %v4156 = vand.u32 %v4144, 2147483648
    %v4157 = vor.u32 1.1754944e-38, %v4156
    %v4158 = vsel %vm4155, %v4157, %v4153
    %v4159 = vmul.f32 %v4134, %v4158
    %v4160 = vmin.f32 %v4159, 1.0
    %v4161 = vmax.f32 %v4160, -1.0
    %v4162 = vmul.f32 %v1421, %v1421
    %v4163 = vmin.f32 16.0, %v4162
    %v4164 = vmul.f32 %v4163, 2.1237322e-06
    %v4165 = vadd.f32 %v4164, 0.00028619796
    %v4166 = vmul.f32 %v4163, %v4165
    %v4167 = vadd.f32 %v4166, 0.0036580483
    %v4168 = vmul.f32 %v4163, %v4167
    %v4169 = vadd.f32 %v4168, 0.05243302
    %v4170 = vmul.f32 %v4163, %v4169
    %v4171 = vadd.f32 %v4170, 0.18741608
    %v4172 = vmul.f32 %v4163, %v4171
    %v4173 = vadd.f32 %v4172, 1.1283791
    %v4174 = vmul.f32 %v1421, %v4173
    %v4175 = vmul.f32 %v4163, 3.8918573e-05
    %v4176 = vadd.f32 %v4175, 0.001143296
    %v4177 = vmul.f32 %v4163, %v4176
    %v4178 = vadd.f32 %v4177, 0.014752088
    %v4179 = vmul.f32 %v4163, %v4178
    %v4180 = vadd.f32 %v4179, 0.112945676
    %v4181 = vmul.f32 %v4163, %v4180
    %v4182 = vadd.f32 %v4181, 0.4994258
    %v4183 = vmul.f32 %v4163, %v4182
    %v4184 = vadd.f32 %v4183, 1.0
    %v4185 = vrcp.pop %v4184
    %v4186 = vmul.f32 %v4184, %v4185
    %v4187 = vsub.f32 1.0, %v4186
    %v4188 = vmul.f32 %v4185, %v4187
    %v4189 = vadd.f32 %v4185, %v4188
    %vm4190 = vweird.f32 %v4184
    %vm4191 = vweird.f32 %v4185
    %vm4192 = vmor %vm4190, %vm4191
    %v4193 = vsel %vm4192, %v4185, %v4189
    %v4194 = vand.u32 2147483647, %v4184
    %vm4195 = vcmp.eq.f32.partialorder %v4194, 8.507059e+37
    %v4196 = vand.u32 %v4184, 2147483648
    %v4197 = vor.u32 1.1754944e-38, %v4196
    %v4198 = vsel %vm4195, %v4197, %v4193
    %v4199 = vmul.f32 %v4174, %v4198
    %v4200 = vmin.f32 %v4199, 1.0
    %v4201 = vmax.f32 %v4200, -1.0
    %v4202 = vmul.f32 %v1422, %v1422
    %v4203 = vmin.f32 16.0, %v4202
    %v4204 = vmul.f32 %v4203, 2.1237322e-06
    %v4205 = vadd.f32 %v4204, 0.00028619796
    %v4206 = vmul.f32 %v4203, %v4205
    %v4207 = vadd.f32 %v4206, 0.0036580483
    %v4208 = vmul.f32 %v4203, %v4207
    %v4209 = vadd.f32 %v4208, 0.05243302
    %v4210 = vmul.f32 %v4203, %v4209
    %v4211 = vadd.f32 %v4210, 0.18741608
    %v4212 = vmul.f32 %v4203, %v4211
    %v4213 = vadd.f32 %v4212, 1.1283791
    %v4214 = vmul.f32 %v1422, %v4213
    %v4215 = vmul.f32 %v4203, 3.8918573e-05
    %v4216 = vadd.f32 %v4215, 0.001143296
    %v4217 = vmul.f32 %v4203, %v4216
    %v4218 = vadd.f32 %v4217, 0.014752088
    %v4219 = vmul.f32 %v4203, %v4218
    %v4220 = vadd.f32 %v4219, 0.112945676
    %v4221 = vmul.f32 %v4203, %v4220
    %v4222 = vadd.f32 %v4221, 0.4994258
    %v4223 = vmul.f32 %v4203, %v4222
    %v4224 = vadd.f32 %v4223, 1.0
    %v4225 = vrcp.pop %v4224
    %v4226 = vmul.f32 %v4224, %v4225
    %v4227 = vsub.f32 1.0, %v4226
    %v4228 = vmul.f32 %v4225, %v4227
    %v4229 = vadd.f32 %v4225, %v4228
    %vm4230 = vweird.f32 %v4224
    %vm4231 = vweird.f32 %v4225
    %vm4232 = vmor %vm4230, %vm4231
    %v4233 = vsel %vm4232, %v4225, %v4229
    %v4234 = vand.u32 2147483647, %v4224
    %vm4235 = vcmp.eq.f32.partialorder %v4234, 8.507059e+37
    %v4236 = vand.u32 %v4224, 2147483648
    %v4237 = vor.u32 1.1754944e-38, %v4236
    %v4238 = vsel %vm4235, %v4237, %v4233
    %v4239 = vmul.f32 %v4214, %v4238
    %v4240 = vmin.f32 %v4239, 1.0
    %v4241 = vmax.f32 %v4240, -1.0
    %v4242 = vmul.f32 %v1423, %v1423
    %v4243 = vmin.f32 16.0, %v4242
    %v4244 = vmul.f32 %v4243, 2.1237322e-06
    %v4245 = vadd.f32 %v4244, 0.00028619796
    %v4246 = vmul.f32 %v4243, %v4245
    %v4247 = vadd.f32 %v4246, 0.0036580483
    %v4248 = vmul.f32 %v4243, %v4247
    %v4249 = vadd.f32 %v4248, 0.05243302
    %v4250 = vmul.f32 %v4243, %v4249
    %v4251 = vadd.f32 %v4250, 0.18741608
    %v4252 = vmul.f32 %v4243, %v4251
    %v4253 = vadd.f32 %v4252, 1.1283791
    %v4254 = vmul.f32 %v1423, %v4253
    %v4255 = vmul.f32 %v4243, 3.8918573e-05
    %v4256 = vadd.f32 %v4255, 0.001143296
    %v4257 = vmul.f32 %v4243, %v4256
    %v4258 = vadd.f32 %v4257, 0.014752088
    %v4259 = vmul.f32 %v4243, %v4258
    %v4260 = vadd.f32 %v4259, 0.112945676
    %v4261 = vmul.f32 %v4243, %v4260
    %v4262 = vadd.f32 %v4261, 0.4994258
    %v4263 = vmul.f32 %v4243, %v4262
    %v4264 = vadd.f32 %v4263, 1.0
    %v4265 = vrcp.pop %v4264
    %v4266 = vmul.f32 %v4264, %v4265
    %v4267 = vsub.f32 1.0, %v4266
    %v4268 = vmul.f32 %v4265, %v4267
    %v4269 = vadd.f32 %v4265, %v4268
    %vm4270 = vweird.f32 %v4264
    %vm4271 = vweird.f32 %v4265
    %vm4272 = vmor %vm4270, %vm4271
    %v4273 = vsel %vm4272, %v4265, %v4269
    %v4274 = vand.u32 2147483647, %v4264
    %vm4275 = vcmp.eq.f32.partialorder %v4274, 8.507059e+37
    %v4276 = vand.u32 %v4264, 2147483648
    %v4277 = vor.u32 1.1754944e-38, %v4276
    %v4278 = vsel %vm4275, %v4277, %v4273
    %v4279 = vmul.f32 %v4254, %v4278
    %v4280 = vmin.f32 %v4279, 1.0
    %v4281 = vmax.f32 %v4280, -1.0
    %v4282 = vmul.f32 %v1424, %v1424
    %v4283 = vmin.f32 16.0, %v4282
    %v4284 = vmul.f32 %v4283, 2.1237322e-06
    %v4285 = vadd.f32 %v4284, 0.00028619796
    %v4286 = vmul.f32 %v4283, %v4285
    %v4287 = vadd.f32 %v4286, 0.0036580483
    %v4288 = vmul.f32 %v4283, %v4287
    %v4289 = vadd.f32 %v4288, 0.05243302
    %v4290 = vmul.f32 %v4283, %v4289
    %v4291 = vadd.f32 %v4290, 0.18741608
    %v4292 = vmul.f32 %v4283, %v4291
    %v4293 = vadd.f32 %v4292, 1.1283791
    %v4294 = vmul.f32 %v1424, %v4293
    %v4295 = vmul.f32 %v4283, 3.8918573e-05
    %v4296 = vadd.f32 %v4295, 0.001143296
    %v4297 = vmul.f32 %v4283, %v4296
    %v4298 = vadd.f32 %v4297, 0.014752088
    %v4299 = vmul.f32 %v4283, %v4298
    %v4300 = vadd.f32 %v4299, 0.112945676
    %v4301 = vmul.f32 %v4283, %v4300
    %v4302 = vadd.f32 %v4301, 0.4994258
    %v4303 = vmul.f32 %v4283, %v4302
    %v4304 = vadd.f32 %v4303, 1.0
    %v4305 = vrcp.pop %v4304
    %v4306 = vmul.f32 %v4304, %v4305
    %v4307 = vsub.f32 1.0, %v4306
    %v4308 = vmul.f32 %v4305, %v4307
    %v4309 = vadd.f32 %v4305, %v4308
    %vm4310 = vweird.f32 %v4304
    %vm4311 = vweird.f32 %v4305
    %vm4312 = vmor %vm4310, %vm4311
    %v4313 = vsel %vm4312, %v4305, %v4309
    %v4314 = vand.u32 2147483647, %v4304
    %vm4315 = vcmp.eq.f32.partialorder %v4314, 8.507059e+37
    %v4316 = vand.u32 %v4304, 2147483648
    %v4317 = vor.u32 1.1754944e-38, %v4316
    %v4318 = vsel %vm4315, %v4317, %v4313
    %v4319 = vmul.f32 %v4294, %v4318
    %v4320 = vmin.f32 %v4319, 1.0
    %v4321 = vmax.f32 %v4320, -1.0
    %v4322 = vmul.f32 %v1425, %v1425
    %v4323 = vmin.f32 16.0, %v4322
    %v4324 = vmul.f32 %v4323, 2.1237322e-06
    %v4325 = vadd.f32 %v4324, 0.00028619796
    %v4326 = vmul.f32 %v4323, %v4325
    %v4327 = vadd.f32 %v4326, 0.0036580483
    %v4328 = vmul.f32 %v4323, %v4327
    %v4329 = vadd.f32 %v4328, 0.05243302
    %v4330 = vmul.f32 %v4323, %v4329
    %v4331 = vadd.f32 %v4330, 0.18741608
    %v4332 = vmul.f32 %v4323, %v4331
    %v4333 = vadd.f32 %v4332, 1.1283791
    %v4334 = vmul.f32 %v1425, %v4333
    %v4335 = vmul.f32 %v4323, 3.8918573e-05
    %v4336 = vadd.f32 %v4335, 0.001143296
    %v4337 = vmul.f32 %v4323, %v4336
    %v4338 = vadd.f32 %v4337, 0.014752088
    %v4339 = vmul.f32 %v4323, %v4338
    %v4340 = vadd.f32 %v4339, 0.112945676
    %v4341 = vmul.f32 %v4323, %v4340
    %v4342 = vadd.f32 %v4341, 0.4994258
    %v4343 = vmul.f32 %v4323, %v4342
    %v4344 = vadd.f32 %v4343, 1.0
    %v4345 = vrcp.pop %v4344
    %v4346 = vmul.f32 %v4344, %v4345
    %v4347 = vsub.f32 1.0, %v4346
    %v4348 = vmul.f32 %v4345, %v4347
    %v4349 = vadd.f32 %v4345, %v4348
    %vm4350 = vweird.f32 %v4344
    %vm4351 = vweird.f32 %v4345
    %vm4352 = vmor %vm4350, %vm4351
    %v4353 = vsel %vm4352, %v4345, %v4349
    %v4354 = vand.u32 2147483647, %v4344
    %vm4355 = vcmp.eq.f32.partialorder %v4354, 8.507059e+37
    %v4356 = vand.u32 %v4344, 2147483648
    %v4357 = vor.u32 1.1754944e-38, %v4356
    %v4358 = vsel %vm4355, %v4357, %v4353
    %v4359 = vmul.f32 %v4334, %v4358
    %v4360 = vmin.f32 %v4359, 1.0
    %v4361 = vmax.f32 %v4360, -1.0
    %v4362 = vmul.f32 %v1426, %v1426
    %v4363 = vmin.f32 16.0, %v4362
    %v4364 = vmul.f32 %v4363, 2.1237322e-06
    %v4365 = vadd.f32 %v4364, 0.00028619796
    %v4366 = vmul.f32 %v4363, %v4365
    %v4367 = vadd.f32 %v4366, 0.0036580483
    %v4368 = vmul.f32 %v4363, %v4367
    %v4369 = vadd.f32 %v4368, 0.05243302
    %v4370 = vmul.f32 %v4363, %v4369
    %v4371 = vadd.f32 %v4370, 0.18741608
    %v4372 = vmul.f32 %v4363, %v4371
    %v4373 = vadd.f32 %v4372, 1.1283791
    %v4374 = vmul.f32 %v1426, %v4373
    %v4375 = vmul.f32 %v4363, 3.8918573e-05
    %v4376 = vadd.f32 %v4375, 0.001143296
    %v4377 = vmul.f32 %v4363, %v4376
    %v4378 = vadd.f32 %v4377, 0.014752088
    %v4379 = vmul.f32 %v4363, %v4378
    %v4380 = vadd.f32 %v4379, 0.112945676
    %v4381 = vmul.f32 %v4363, %v4380
    %v4382 = vadd.f32 %v4381, 0.4994258
    %v4383 = vmul.f32 %v4363, %v4382
    %v4384 = vadd.f32 %v4383, 1.0
    %v4385 = vrcp.pop %v4384
    %v4386 = vmul.f32 %v4384, %v4385
    %v4387 = vsub.f32 1.0, %v4386
    %v4388 = vmul.f32 %v4385, %v4387
    %v4389 = vadd.f32 %v4385, %v4388
    %vm4390 = vweird.f32 %v4384
    %vm4391 = vweird.f32 %v4385
    %vm4392 = vmor %vm4390, %vm4391
    %v4393 = vsel %vm4392, %v4385, %v4389
    %v4394 = vand.u32 2147483647, %v4384
    %vm4395 = vcmp.eq.f32.partialorder %v4394, 8.507059e+37
    %v4396 = vand.u32 %v4384, 2147483648
    %v4397 = vor.u32 1.1754944e-38, %v4396
    %v4398 = vsel %vm4395, %v4397, %v4393
    %v4399 = vmul.f32 %v4374, %v4398
    %v4400 = vmin.f32 %v4399, 1.0
    %v4401 = vmax.f32 %v4400, -1.0
    %v4402 = vmul.f32 %v1427, %v1427
    %v4403 = vmin.f32 16.0, %v4402
    %v4404 = vmul.f32 %v4403, 2.1237322e-06
    %v4405 = vadd.f32 %v4404, 0.00028619796
    %v4406 = vmul.f32 %v4403, %v4405
    %v4407 = vadd.f32 %v4406, 0.0036580483
    %v4408 = vmul.f32 %v4403, %v4407
    %v4409 = vadd.f32 %v4408, 0.05243302
    %v4410 = vmul.f32 %v4403, %v4409
    %v4411 = vadd.f32 %v4410, 0.18741608
    %v4412 = vmul.f32 %v4403, %v4411
    %v4413 = vadd.f32 %v4412, 1.1283791
    %v4414 = vmul.f32 %v1427, %v4413
    %v4415 = vmul.f32 %v4403, 3.8918573e-05
    %v4416 = vadd.f32 %v4415, 0.001143296
    %v4417 = vmul.f32 %v4403, %v4416
    %v4418 = vadd.f32 %v4417, 0.014752088
    %v4419 = vmul.f32 %v4403, %v4418
    %v4420 = vadd.f32 %v4419, 0.112945676
    %v4421 = vmul.f32 %v4403, %v4420
    %v4422 = vadd.f32 %v4421, 0.4994258
    %v4423 = vmul.f32 %v4403, %v4422
    %v4424 = vadd.f32 %v4423, 1.0
    %v4425 = vrcp.pop %v4424
    %v4426 = vmul.f32 %v4424, %v4425
    %v4427 = vsub.f32 1.0, %v4426
    %v4428 = vmul.f32 %v4425, %v4427
    %v4429 = vadd.f32 %v4425, %v4428
    %vm4430 = vweird.f32 %v4424
    %vm4431 = vweird.f32 %v4425
    %vm4432 = vmor %vm4430, %vm4431
    %v4433 = vsel %vm4432, %v4425, %v4429
    %v4434 = vand.u32 2147483647, %v4424
    %vm4435 = vcmp.eq.f32.partialorder %v4434, 8.507059e+37
    %v4436 = vand.u32 %v4424, 2147483648
    %v4437 = vor.u32 1.1754944e-38, %v4436
    %v4438 = vsel %vm4435, %v4437, %v4433
    %v4439 = vmul.f32 %v4414, %v4438
    %v4440 = vmin.f32 %v4439, 1.0
    %v4441 = vmax.f32 %v4440, -1.0
    %v4442 = vmul.f32 %v1428, %v1428
    %v4443 = vmin.f32 16.0, %v4442
    %v4444 = vmul.f32 %v4443, 2.1237322e-06
    %v4445 = vadd.f32 %v4444, 0.00028619796
    %v4446 = vmul.f32 %v4443, %v4445
    %v4447 = vadd.f32 %v4446, 0.0036580483
    %v4448 = vmul.f32 %v4443, %v4447
    %v4449 = vadd.f32 %v4448, 0.05243302
    %v4450 = vmul.f32 %v4443, %v4449
    %v4451 = vadd.f32 %v4450, 0.18741608
    %v4452 = vmul.f32 %v4443, %v4451
    %v4453 = vadd.f32 %v4452, 1.1283791
    %v4454 = vmul.f32 %v1428, %v4453
    %v4455 = vmul.f32 %v4443, 3.8918573e-05
    %v4456 = vadd.f32 %v4455, 0.001143296
    %v4457 = vmul.f32 %v4443, %v4456
    %v4458 = vadd.f32 %v4457, 0.014752088
    %v4459 = vmul.f32 %v4443, %v4458
    %v4460 = vadd.f32 %v4459, 0.112945676
    %v4461 = vmul.f32 %v4443, %v4460
    %v4462 = vadd.f32 %v4461, 0.4994258
    %v4463 = vmul.f32 %v4443, %v4462
    %v4464 = vadd.f32 %v4463, 1.0
    %v4465 = vrcp.pop %v4464
    %v4466 = vmul.f32 %v4464, %v4465
    %v4467 = vsub.f32 1.0, %v4466
    %v4468 = vmul.f32 %v4465, %v4467
    %v4469 = vadd.f32 %v4465, %v4468
    %vm4470 = vweird.f32 %v4464
    %vm4471 = vweird.f32 %v4465
    %vm4472 = vmor %vm4470, %vm4471
    %v4473 = vsel %vm4472, %v4465, %v4469
    %v4474 = vand.u32 2147483647, %v4464
    %vm4475 = vcmp.eq.f32.partialorder %v4474, 8.507059e+37
    %v4476 = vand.u32 %v4464, 2147483648
    %v4477 = vor.u32 1.1754944e-38, %v4476
    %v4478 = vsel %vm4475, %v4477, %v4473
    %v4479 = vmul.f32 %v4454, %v4478
    %v4480 = vmin.f32 %v4479, 1.0
    %v4481 = vmax.f32 %v4480, -1.0
    %v4482 = vmul.f32 %v1429, %v1429
    %v4483 = vmin.f32 16.0, %v4482
    %v4484 = vmul.f32 %v4483, 2.1237322e-06
    %v4485 = vadd.f32 %v4484, 0.00028619796
    %v4486 = vmul.f32 %v4483, %v4485
    %v4487 = vadd.f32 %v4486, 0.0036580483
    %v4488 = vmul.f32 %v4483, %v4487
    %v4489 = vadd.f32 %v4488, 0.05243302
    %v4490 = vmul.f32 %v4483, %v4489
    %v4491 = vadd.f32 %v4490, 0.18741608
    %v4492 = vmul.f32 %v4483, %v4491
    %v4493 = vadd.f32 %v4492, 1.1283791
    %v4494 = vmul.f32 %v1429, %v4493
    %v4495 = vmul.f32 %v4483, 3.8918573e-05
    %v4496 = vadd.f32 %v4495, 0.001143296
    %v4497 = vmul.f32 %v4483, %v4496
    %v4498 = vadd.f32 %v4497, 0.014752088
    %v4499 = vmul.f32 %v4483, %v4498
    %v4500 = vadd.f32 %v4499, 0.112945676
    %v4501 = vmul.f32 %v4483, %v4500
    %v4502 = vadd.f32 %v4501, 0.4994258
    %v4503 = vmul.f32 %v4483, %v4502
    %v4504 = vadd.f32 %v4503, 1.0
    %v4505 = vrcp.pop %v4504
    %v4506 = vmul.f32 %v4504, %v4505
    %v4507 = vsub.f32 1.0, %v4506
    %v4508 = vmul.f32 %v4505, %v4507
    %v4509 = vadd.f32 %v4505, %v4508
    %vm4510 = vweird.f32 %v4504
    %vm4511 = vweird.f32 %v4505
    %vm4512 = vmor %vm4510, %vm4511
    %v4513 = vsel %vm4512, %v4505, %v4509
    %v4514 = vand.u32 2147483647, %v4504
    %vm4515 = vcmp.eq.f32.partialorder %v4514, 8.507059e+37
    %v4516 = vand.u32 %v4504, 2147483648
    %v4517 = vor.u32 1.1754944e-38, %v4516
    %v4518 = vsel %vm4515, %v4517, %v4513
    %v4519 = vmul.f32 %v4494, %v4518
    %v4520 = vmin.f32 %v4519, 1.0
    %v4521 = vmax.f32 %v4520, -1.0
    %v4522 = vmul.f32 %v1430, %v1430
    %v4523 = vmin.f32 16.0, %v4522
    %v4524 = vmul.f32 %v4523, 2.1237322e-06
    %v4525 = vadd.f32 %v4524, 0.00028619796
    %v4526 = vmul.f32 %v4523, %v4525
    %v4527 = vadd.f32 %v4526, 0.0036580483
    %v4528 = vmul.f32 %v4523, %v4527
    %v4529 = vadd.f32 %v4528, 0.05243302
    %v4530 = vmul.f32 %v4523, %v4529
    %v4531 = vadd.f32 %v4530, 0.18741608
    %v4532 = vmul.f32 %v4523, %v4531
    %v4533 = vadd.f32 %v4532, 1.1283791
    %v4534 = vmul.f32 %v1430, %v4533
    %v4535 = vmul.f32 %v4523, 3.8918573e-05
    %v4536 = vadd.f32 %v4535, 0.001143296
    %v4537 = vmul.f32 %v4523, %v4536
    %v4538 = vadd.f32 %v4537, 0.014752088
    %v4539 = vmul.f32 %v4523, %v4538
    %v4540 = vadd.f32 %v4539, 0.112945676
    %v4541 = vmul.f32 %v4523, %v4540
    %v4542 = vadd.f32 %v4541, 0.4994258
    %v4543 = vmul.f32 %v4523, %v4542
    %v4544 = vadd.f32 %v4543, 1.0
    %v4545 = vrcp.pop %v4544
    %v4546 = vmul.f32 %v4544, %v4545
    %v4547 = vsub.f32 1.0, %v4546
    %v4548 = vmul.f32 %v4545, %v4547
    %v4549 = vadd.f32 %v4545, %v4548
    %vm4550 = vweird.f32 %v4544
    %vm4551 = vweird.f32 %v4545
    %vm4552 = vmor %vm4550, %vm4551
    %v4553 = vsel %vm4552, %v4545, %v4549
    %v4554 = vand.u32 2147483647, %v4544
    %vm4555 = vcmp.eq.f32.partialorder %v4554, 8.507059e+37
    %v4556 = vand.u32 %v4544, 2147483648
    %v4557 = vor.u32 1.1754944e-38, %v4556
    %v4558 = vsel %vm4555, %v4557, %v4553
    %v4559 = vmul.f32 %v4534, %v4558
    %v4560 = vmin.f32 %v4559, 1.0
    %v4561 = vmax.f32 %v4560, -1.0
    %v4562 = vmul.f32 %v1431, %v1431
    %v4563 = vmin.f32 16.0, %v4562
    %v4564 = vmul.f32 %v4563, 2.1237322e-06
    %v4565 = vadd.f32 %v4564, 0.00028619796
    %v4566 = vmul.f32 %v4563, %v4565
    %v4567 = vadd.f32 %v4566, 0.0036580483
    %v4568 = vmul.f32 %v4563, %v4567
    %v4569 = vadd.f32 %v4568, 0.05243302
    %v4570 = vmul.f32 %v4563, %v4569
    %v4571 = vadd.f32 %v4570, 0.18741608
    %v4572 = vmul.f32 %v4563, %v4571
    %v4573 = vadd.f32 %v4572, 1.1283791
    %v4574 = vmul.f32 %v1431, %v4573
    %v4575 = vmul.f32 %v4563, 3.8918573e-05
    %v4576 = vadd.f32 %v4575, 0.001143296
    %v4577 = vmul.f32 %v4563, %v4576
    %v4578 = vadd.f32 %v4577, 0.014752088
    %v4579 = vmul.f32 %v4563, %v4578
    %v4580 = vadd.f32 %v4579, 0.112945676
    %v4581 = vmul.f32 %v4563, %v4580
    %v4582 = vadd.f32 %v4581, 0.4994258
    %v4583 = vmul.f32 %v4563, %v4582
    %v4584 = vadd.f32 %v4583, 1.0
    %v4585 = vrcp.pop %v4584
    %v4586 = vmul.f32 %v4584, %v4585
    %v4587 = vsub.f32 1.0, %v4586
    %v4588 = vmul.f32 %v4585, %v4587
    %v4589 = vadd.f32 %v4585, %v4588
    %vm4590 = vweird.f32 %v4584
    %vm4591 = vweird.f32 %v4585
    %vm4592 = vmor %vm4590, %vm4591
    %v4593 = vsel %vm4592, %v4585, %v4589
    %v4594 = vand.u32 2147483647, %v4584
    %vm4595 = vcmp.eq.f32.partialorder %v4594, 8.507059e+37
    %v4596 = vand.u32 %v4584, 2147483648
    %v4597 = vor.u32 1.1754944e-38, %v4596
    %v4598 = vsel %vm4595, %v4597, %v4593
    %v4599 = vmul.f32 %v4574, %v4598
    %v4600 = vmin.f32 %v4599, 1.0
    %v4601 = vmax.f32 %v4600, -1.0
    %v4602 = vmul.f32 %v1432, %v1432
    %v4603 = vmin.f32 16.0, %v4602
    %v4604 = vmul.f32 %v4603, 2.1237322e-06
    %v4605 = vadd.f32 %v4604, 0.00028619796
    %v4606 = vmul.f32 %v4603, %v4605
    %v4607 = vadd.f32 %v4606, 0.0036580483
    %v4608 = vmul.f32 %v4603, %v4607
    %v4609 = vadd.f32 %v4608, 0.05243302
    %v4610 = vmul.f32 %v4603, %v4609
    %v4611 = vadd.f32 %v4610, 0.18741608
    %v4612 = vmul.f32 %v4603, %v4611
    %v4613 = vadd.f32 %v4612, 1.1283791
    %v4614 = vmul.f32 %v1432, %v4613
    %v4615 = vmul.f32 %v4603, 3.8918573e-05
    %v4616 = vadd.f32 %v4615, 0.001143296
    %v4617 = vmul.f32 %v4603, %v4616
    %v4618 = vadd.f32 %v4617, 0.014752088
    %v4619 = vmul.f32 %v4603, %v4618
    %v4620 = vadd.f32 %v4619, 0.112945676
    %v4621 = vmul.f32 %v4603, %v4620
    %v4622 = vadd.f32 %v4621, 0.4994258
    %v4623 = vmul.f32 %v4603, %v4622
    %v4624 = vadd.f32 %v4623, 1.0
    %v4625 = vrcp.pop %v4624
    %v4626 = vmul.f32 %v4624, %v4625
    %v4627 = vsub.f32 1.0, %v4626
    %v4628 = vmul.f32 %v4625, %v4627
    %v4629 = vadd.f32 %v4625, %v4628
    %vm4630 = vweird.f32 %v4624
    %vm4631 = vweird.f32 %v4625
    %vm4632 = vmor %vm4630, %vm4631
    %v4633 = vsel %vm4632, %v4625, %v4629
    %v4634 = vand.u32 2147483647, %v4624
    %vm4635 = vcmp.eq.f32.partialorder %v4634, 8.507059e+37
    %v4636 = vand.u32 %v4624, 2147483648
    %v4637 = vor.u32 1.1754944e-38, %v4636
    %v4638 = vsel %vm4635, %v4637, %v4633
    %v4639 = vmul.f32 %v4614, %v4638
    %v4640 = vmin.f32 %v4639, 1.0
    %v4641 = vmax.f32 %v4640, -1.0
    %v4642 = vmul.f32 %v1433, %v1433
    %v4643 = vmin.f32 16.0, %v4642
    %v4644 = vmul.f32 %v4643, 2.1237322e-06
    %v4645 = vadd.f32 %v4644, 0.00028619796
    %v4646 = vmul.f32 %v4643, %v4645
    %v4647 = vadd.f32 %v4646, 0.0036580483
    %v4648 = vmul.f32 %v4643, %v4647
    %v4649 = vadd.f32 %v4648, 0.05243302
    %v4650 = vmul.f32 %v4643, %v4649
    %v4651 = vadd.f32 %v4650, 0.18741608
    %v4652 = vmul.f32 %v4643, %v4651
    %v4653 = vadd.f32 %v4652, 1.1283791
    %v4654 = vmul.f32 %v1433, %v4653
    %v4655 = vmul.f32 %v4643, 3.8918573e-05
    %v4656 = vadd.f32 %v4655, 0.001143296
    %v4657 = vmul.f32 %v4643, %v4656
    %v4658 = vadd.f32 %v4657, 0.014752088
    %v4659 = vmul.f32 %v4643, %v4658
    %v4660 = vadd.f32 %v4659, 0.112945676
    %v4661 = vmul.f32 %v4643, %v4660
    %v4662 = vadd.f32 %v4661, 0.4994258
    %v4663 = vmul.f32 %v4643, %v4662
    %v4664 = vadd.f32 %v4663, 1.0
    %v4665 = vrcp.pop %v4664
    %v4666 = vmul.f32 %v4664, %v4665
    %v4667 = vsub.f32 1.0, %v4666
    %v4668 = vmul.f32 %v4665, %v4667
    %v4669 = vadd.f32 %v4665, %v4668
    %vm4670 = vweird.f32 %v4664
    %vm4671 = vweird.f32 %v4665
    %vm4672 = vmor %vm4670, %vm4671
    %v4673 = vsel %vm4672, %v4665, %v4669
    %v4674 = vand.u32 2147483647, %v4664
    %vm4675 = vcmp.eq.f32.partialorder %v4674, 8.507059e+37
    %v4676 = vand.u32 %v4664, 2147483648
    %v4677 = vor.u32 1.1754944e-38, %v4676
    %v4678 = vsel %vm4675, %v4677, %v4673
    %v4679 = vmul.f32 %v4654, %v4678
    %v4680 = vmin.f32 %v4679, 1.0
    %v4681 = vmax.f32 %v4680, -1.0
    %v4682 = vmul.f32 %v1434, %v1434
    %v4683 = vmin.f32 16.0, %v4682
    %v4684 = vmul.f32 %v4683, 2.1237322e-06
    %v4685 = vadd.f32 %v4684, 0.00028619796
    %v4686 = vmul.f32 %v4683, %v4685
    %v4687 = vadd.f32 %v4686, 0.0036580483
    %v4688 = vmul.f32 %v4683, %v4687
    %v4689 = vadd.f32 %v4688, 0.05243302
    %v4690 = vmul.f32 %v4683, %v4689
    %v4691 = vadd.f32 %v4690, 0.18741608
    %v4692 = vmul.f32 %v4683, %v4691
    %v4693 = vadd.f32 %v4692, 1.1283791
    %v4694 = vmul.f32 %v1434, %v4693
    %v4695 = vmul.f32 %v4683, 3.8918573e-05
    %v4696 = vadd.f32 %v4695, 0.001143296
    %v4697 = vmul.f32 %v4683, %v4696
    %v4698 = vadd.f32 %v4697, 0.014752088
    %v4699 = vmul.f32 %v4683, %v4698
    %v4700 = vadd.f32 %v4699, 0.112945676
    %v4701 = vmul.f32 %v4683, %v4700
    %v4702 = vadd.f32 %v4701, 0.4994258
    %v4703 = vmul.f32 %v4683, %v4702
    %v4704 = vadd.f32 %v4703, 1.0
    %v4705 = vrcp.pop %v4704
    %v4706 = vmul.f32 %v4704, %v4705
    %v4707 = vsub.f32 1.0, %v4706
    %v4708 = vmul.f32 %v4705, %v4707
    %v4709 = vadd.f32 %v4705, %v4708
    %vm4710 = vweird.f32 %v4704
    %vm4711 = vweird.f32 %v4705
    %vm4712 = vmor %vm4710, %vm4711
    %v4713 = vsel %vm4712, %v4705, %v4709
    %v4714 = vand.u32 2147483647, %v4704
    %vm4715 = vcmp.eq.f32.partialorder %v4714, 8.507059e+37
    %v4716 = vand.u32 %v4704, 2147483648
    %v4717 = vor.u32 1.1754944e-38, %v4716
    %v4718 = vsel %vm4715, %v4717, %v4713
    %v4719 = vmul.f32 %v4694, %v4718
    %v4720 = vmin.f32 %v4719, 1.0
    %v4721 = vmax.f32 %v4720, -1.0
    %v4722 = vmul.f32 %v1435, %v1435
    %v4723 = vmin.f32 16.0, %v4722
    %v4724 = vmul.f32 %v4723, 2.1237322e-06
    %v4725 = vadd.f32 %v4724, 0.00028619796
    %v4726 = vmul.f32 %v4723, %v4725
    %v4727 = vadd.f32 %v4726, 0.0036580483
    %v4728 = vmul.f32 %v4723, %v4727
    %v4729 = vadd.f32 %v4728, 0.05243302
    %v4730 = vmul.f32 %v4723, %v4729
    %v4731 = vadd.f32 %v4730, 0.18741608
    %v4732 = vmul.f32 %v4723, %v4731
    %v4733 = vadd.f32 %v4732, 1.1283791
    %v4734 = vmul.f32 %v1435, %v4733
    %v4735 = vmul.f32 %v4723, 3.8918573e-05
    %v4736 = vadd.f32 %v4735, 0.001143296
    %v4737 = vmul.f32 %v4723, %v4736
    %v4738 = vadd.f32 %v4737, 0.014752088
    %v4739 = vmul.f32 %v4723, %v4738
    %v4740 = vadd.f32 %v4739, 0.112945676
    %v4741 = vmul.f32 %v4723, %v4740
    %v4742 = vadd.f32 %v4741, 0.4994258
    %v4743 = vmul.f32 %v4723, %v4742
    %v4744 = vadd.f32 %v4743, 1.0
    %v4745 = vrcp.pop %v4744
    %v4746 = vmul.f32 %v4744, %v4745
    %v4747 = vsub.f32 1.0, %v4746
    %v4748 = vmul.f32 %v4745, %v4747
    %v4749 = vadd.f32 %v4745, %v4748
    %vm4750 = vweird.f32 %v4744
    %vm4751 = vweird.f32 %v4745
    %vm4752 = vmor %vm4750, %vm4751
    %v4753 = vsel %vm4752, %v4745, %v4749
    %v4754 = vand.u32 2147483647, %v4744
    %vm4755 = vcmp.eq.f32.partialorder %v4754, 8.507059e+37
    %v4756 = vand.u32 %v4744, 2147483648
    %v4757 = vor.u32 1.1754944e-38, %v4756
    %v4758 = vsel %vm4755, %v4757, %v4753
    %v4759 = vmul.f32 %v4734, %v4758
    %v4760 = vmin.f32 %v4759, 1.0
    %v4761 = vmax.f32 %v4760, -1.0
    %v4762 = vmul.f32 %v1436, %v1436
    %v4763 = vmin.f32 16.0, %v4762
    %v4764 = vmul.f32 %v4763, 2.1237322e-06
    %v4765 = vadd.f32 %v4764, 0.00028619796
    %v4766 = vmul.f32 %v4763, %v4765
    %v4767 = vadd.f32 %v4766, 0.0036580483
    %v4768 = vmul.f32 %v4763, %v4767
    %v4769 = vadd.f32 %v4768, 0.05243302
    %v4770 = vmul.f32 %v4763, %v4769
    %v4771 = vadd.f32 %v4770, 0.18741608
    %v4772 = vmul.f32 %v4763, %v4771
    %v4773 = vadd.f32 %v4772, 1.1283791
    %v4774 = vmul.f32 %v1436, %v4773
    %v4775 = vmul.f32 %v4763, 3.8918573e-05
    %v4776 = vadd.f32 %v4775, 0.001143296
    %v4777 = vmul.f32 %v4763, %v4776
    %v4778 = vadd.f32 %v4777, 0.014752088
    %v4779 = vmul.f32 %v4763, %v4778
    %v4780 = vadd.f32 %v4779, 0.112945676
    %v4781 = vmul.f32 %v4763, %v4780
    %v4782 = vadd.f32 %v4781, 0.4994258
    %v4783 = vmul.f32 %v4763, %v4782
    %v4784 = vadd.f32 %v4783, 1.0
    %v4785 = vrcp.pop %v4784
    %v4786 = vmul.f32 %v4784, %v4785
    %v4787 = vsub.f32 1.0, %v4786
    %v4788 = vmul.f32 %v4785, %v4787
    %v4789 = vadd.f32 %v4785, %v4788
    %vm4790 = vweird.f32 %v4784
    %vm4791 = vweird.f32 %v4785
    %vm4792 = vmor %vm4790, %vm4791
    %v4793 = vsel %vm4792, %v4785, %v4789
    %v4794 = vand.u32 2147483647, %v4784
    %vm4795 = vcmp.eq.f32.partialorder %v4794, 8.507059e+37
    %v4796 = vand.u32 %v4784, 2147483648
    %v4797 = vor.u32 1.1754944e-38, %v4796
    %v4798 = vsel %vm4795, %v4797, %v4793
    %v4799 = vmul.f32 %v4774, %v4798
    %v4800 = vmin.f32 %v4799, 1.0
    %v4801 = vmax.f32 %v4800, -1.0
    %v4802 = vmul.f32 %v1437, %v1437
    %v4803 = vmin.f32 16.0, %v4802
    %v4804 = vmul.f32 %v4803, 2.1237322e-06
    %v4805 = vadd.f32 %v4804, 0.00028619796
    %v4806 = vmul.f32 %v4803, %v4805
    %v4807 = vadd.f32 %v4806, 0.0036580483
    %v4808 = vmul.f32 %v4803, %v4807
    %v4809 = vadd.f32 %v4808, 0.05243302
    %v4810 = vmul.f32 %v4803, %v4809
    %v4811 = vadd.f32 %v4810, 0.18741608
    %v4812 = vmul.f32 %v4803, %v4811
    %v4813 = vadd.f32 %v4812, 1.1283791
    %v4814 = vmul.f32 %v1437, %v4813
    %v4815 = vmul.f32 %v4803, 3.8918573e-05
    %v4816 = vadd.f32 %v4815, 0.001143296
    %v4817 = vmul.f32 %v4803, %v4816
    %v4818 = vadd.f32 %v4817, 0.014752088
    %v4819 = vmul.f32 %v4803, %v4818
    %v4820 = vadd.f32 %v4819, 0.112945676
    %v4821 = vmul.f32 %v4803, %v4820
    %v4822 = vadd.f32 %v4821, 0.4994258
    %v4823 = vmul.f32 %v4803, %v4822
    %v4824 = vadd.f32 %v4823, 1.0
    %v4825 = vrcp.pop %v4824
    %v4826 = vmul.f32 %v4824, %v4825
    %v4827 = vsub.f32 1.0, %v4826
    %v4828 = vmul.f32 %v4825, %v4827
    %v4829 = vadd.f32 %v4825, %v4828
    %vm4830 = vweird.f32 %v4824
    %vm4831 = vweird.f32 %v4825
    %vm4832 = vmor %vm4830, %vm4831
    %v4833 = vsel %vm4832, %v4825, %v4829
    %v4834 = vand.u32 2147483647, %v4824
    %vm4835 = vcmp.eq.f32.partialorder %v4834, 8.507059e+37
    %v4836 = vand.u32 %v4824, 2147483648
    %v4837 = vor.u32 1.1754944e-38, %v4836
    %v4838 = vsel %vm4835, %v4837, %v4833
    %v4839 = vmul.f32 %v4814, %v4838
    %v4840 = vmin.f32 %v4839, 1.0
    %v4841 = vmax.f32 %v4840, -1.0
    %v4842 = vmul.f32 %v1438, %v1438
    %v4843 = vmin.f32 16.0, %v4842
    %v4844 = vmul.f32 %v4843, 2.1237322e-06
    %v4845 = vadd.f32 %v4844, 0.00028619796
    %v4846 = vmul.f32 %v4843, %v4845
    %v4847 = vadd.f32 %v4846, 0.0036580483
    %v4848 = vmul.f32 %v4843, %v4847
    %v4849 = vadd.f32 %v4848, 0.05243302
    %v4850 = vmul.f32 %v4843, %v4849
    %v4851 = vadd.f32 %v4850, 0.18741608
    %v4852 = vmul.f32 %v4843, %v4851
    %v4853 = vadd.f32 %v4852, 1.1283791
    %v4854 = vmul.f32 %v1438, %v4853
    %v4855 = vmul.f32 %v4843, 3.8918573e-05
    %v4856 = vadd.f32 %v4855, 0.001143296
    %v4857 = vmul.f32 %v4843, %v4856
    %v4858 = vadd.f32 %v4857, 0.014752088
    %v4859 = vmul.f32 %v4843, %v4858
    %v4860 = vadd.f32 %v4859, 0.112945676
    %v4861 = vmul.f32 %v4843, %v4860
    %v4862 = vadd.f32 %v4861, 0.4994258
    %v4863 = vmul.f32 %v4843, %v4862
    %v4864 = vadd.f32 %v4863, 1.0
    %v4865 = vrcp.pop %v4864
    %v4866 = vmul.f32 %v4864, %v4865
    %v4867 = vsub.f32 1.0, %v4866
    %v4868 = vmul.f32 %v4865, %v4867
    %v4869 = vadd.f32 %v4865, %v4868
    %vm4870 = vweird.f32 %v4864
    %vm4871 = vweird.f32 %v4865
    %vm4872 = vmor %vm4870, %vm4871
    %v4873 = vsel %vm4872, %v4865, %v4869
    %v4874 = vand.u32 2147483647, %v4864
    %vm4875 = vcmp.eq.f32.partialorder %v4874, 8.507059e+37
    %v4876 = vand.u32 %v4864, 2147483648
    %v4877 = vor.u32 1.1754944e-38, %v4876
    %v4878 = vsel %vm4875, %v4877, %v4873
    %v4879 = vmul.f32 %v4854, %v4878
    %v4880 = vmin.f32 %v4879, 1.0
    %v4881 = vmax.f32 %v4880, -1.0
    %v4882 = vmul.f32 %v1439, %v1439
    %v4883 = vmin.f32 16.0, %v4882
    %v4884 = vmul.f32 %v4883, 2.1237322e-06
    %v4885 = vadd.f32 %v4884, 0.00028619796
    %v4886 = vmul.f32 %v4883, %v4885
    %v4887 = vadd.f32 %v4886, 0.0036580483
    %v4888 = vmul.f32 %v4883, %v4887
    %v4889 = vadd.f32 %v4888, 0.05243302
    %v4890 = vmul.f32 %v4883, %v4889
    %v4891 = vadd.f32 %v4890, 0.18741608
    %v4892 = vmul.f32 %v4883, %v4891
    %v4893 = vadd.f32 %v4892, 1.1283791
    %v4894 = vmul.f32 %v1439, %v4893
    %v4895 = vmul.f32 %v4883, 3.8918573e-05
    %v4896 = vadd.f32 %v4895, 0.001143296
    %v4897 = vmul.f32 %v4883, %v4896
    %v4898 = vadd.f32 %v4897, 0.014752088
    %v4899 = vmul.f32 %v4883, %v4898
    %v4900 = vadd.f32 %v4899, 0.112945676
    %v4901 = vmul.f32 %v4883, %v4900
    %v4902 = vadd.f32 %v4901, 0.4994258
    %v4903 = vmul.f32 %v4883, %v4902
    %v4904 = vadd.f32 %v4903, 1.0
    %v4905 = vrcp.pop %v4904
    %v4906 = vmul.f32 %v4904, %v4905
    %v4907 = vsub.f32 1.0, %v4906
    %v4908 = vmul.f32 %v4905, %v4907
    %v4909 = vadd.f32 %v4905, %v4908
    %vm4910 = vweird.f32 %v4904
    %vm4911 = vweird.f32 %v4905
    %vm4912 = vmor %vm4910, %vm4911
    %v4913 = vsel %vm4912, %v4905, %v4909
    %v4914 = vand.u32 2147483647, %v4904
    %vm4915 = vcmp.eq.f32.partialorder %v4914, 8.507059e+37
    %v4916 = vand.u32 %v4904, 2147483648
    %v4917 = vor.u32 1.1754944e-38, %v4916
    %v4918 = vsel %vm4915, %v4917, %v4913
    %v4919 = vmul.f32 %v4894, %v4918
    %v4920 = vmin.f32 %v4919, 1.0
    %v4921 = vmax.f32 %v4920, -1.0
    %v4922 = vmul.f32 %v1440, %v1440
    %v4923 = vmin.f32 16.0, %v4922
    %v4924 = vmul.f32 %v4923, 2.1237322e-06
    %v4925 = vadd.f32 %v4924, 0.00028619796
    %v4926 = vmul.f32 %v4923, %v4925
    %v4927 = vadd.f32 %v4926, 0.0036580483
    %v4928 = vmul.f32 %v4923, %v4927
    %v4929 = vadd.f32 %v4928, 0.05243302
    %v4930 = vmul.f32 %v4923, %v4929
    %v4931 = vadd.f32 %v4930, 0.18741608
    %v4932 = vmul.f32 %v4923, %v4931
    %v4933 = vadd.f32 %v4932, 1.1283791
    %v4934 = vmul.f32 %v1440, %v4933
    %v4935 = vmul.f32 %v4923, 3.8918573e-05
    %v4936 = vadd.f32 %v4935, 0.001143296
    %v4937 = vmul.f32 %v4923, %v4936
    %v4938 = vadd.f32 %v4937, 0.014752088
    %v4939 = vmul.f32 %v4923, %v4938
    %v4940 = vadd.f32 %v4939, 0.112945676
    %v4941 = vmul.f32 %v4923, %v4940
    %v4942 = vadd.f32 %v4941, 0.4994258
    %v4943 = vmul.f32 %v4923, %v4942
    %v4944 = vadd.f32 %v4943, 1.0
    %v4945 = vrcp.pop %v4944
    %v4946 = vmul.f32 %v4944, %v4945
    %v4947 = vsub.f32 1.0, %v4946
    %v4948 = vmul.f32 %v4945, %v4947
    %v4949 = vadd.f32 %v4945, %v4948
    %vm4950 = vweird.f32 %v4944
    %vm4951 = vweird.f32 %v4945
    %vm4952 = vmor %vm4950, %vm4951
    %v4953 = vsel %vm4952, %v4945, %v4949
    %v4954 = vand.u32 2147483647, %v4944
    %vm4955 = vcmp.eq.f32.partialorder %v4954, 8.507059e+37
    %v4956 = vand.u32 %v4944, 2147483648
    %v4957 = vor.u32 1.1754944e-38, %v4956
    %v4958 = vsel %vm4955, %v4957, %v4953
    %v4959 = vmul.f32 %v4934, %v4958
    %v4960 = vmin.f32 %v4959, 1.0
    %v4961 = vmax.f32 %v4960, -1.0
    %v4962 = vmul.f32 %v1441, %v1441
    %v4963 = vmin.f32 16.0, %v4962
    %v4964 = vmul.f32 %v4963, 2.1237322e-06
    %v4965 = vadd.f32 %v4964, 0.00028619796
    %v4966 = vmul.f32 %v4963, %v4965
    %v4967 = vadd.f32 %v4966, 0.0036580483
    %v4968 = vmul.f32 %v4963, %v4967
    %v4969 = vadd.f32 %v4968, 0.05243302
    %v4970 = vmul.f32 %v4963, %v4969
    %v4971 = vadd.f32 %v4970, 0.18741608
    %v4972 = vmul.f32 %v4963, %v4971
    %v4973 = vadd.f32 %v4972, 1.1283791
    %v4974 = vmul.f32 %v1441, %v4973
    %v4975 = vmul.f32 %v4963, 3.8918573e-05
    %v4976 = vadd.f32 %v4975, 0.001143296
    %v4977 = vmul.f32 %v4963, %v4976
    %v4978 = vadd.f32 %v4977, 0.014752088
    %v4979 = vmul.f32 %v4963, %v4978
    %v4980 = vadd.f32 %v4979, 0.112945676
    %v4981 = vmul.f32 %v4963, %v4980
    %v4982 = vadd.f32 %v4981, 0.4994258
    %v4983 = vmul.f32 %v4963, %v4982
    %v4984 = vadd.f32 %v4983, 1.0
    %v4985 = vrcp.pop %v4984
    %v4986 = vmul.f32 %v4984, %v4985
    %v4987 = vsub.f32 1.0, %v4986
    %v4988 = vmul.f32 %v4985, %v4987
    %v4989 = vadd.f32 %v4985, %v4988
    %vm4990 = vweird.f32 %v4984
    %vm4991 = vweird.f32 %v4985
    %vm4992 = vmor %vm4990, %vm4991
    %v4993 = vsel %vm4992, %v4985, %v4989
    %v4994 = vand.u32 2147483647, %v4984
    %vm4995 = vcmp.eq.f32.partialorder %v4994, 8.507059e+37
    %v4996 = vand.u32 %v4984, 2147483648
    %v4997 = vor.u32 1.1754944e-38, %v4996
    %v4998 = vsel %vm4995, %v4997, %v4993
    %v4999 = vmul.f32 %v4974, %v4998
    %v5000 = vmin.f32 %v4999, 1.0
    %v5001 = vmax.f32 %v5000, -1.0
    %v5002 = vmul.f32 %v1442, %v1442
    %v5003 = vmin.f32 16.0, %v5002
    %v5004 = vmul.f32 %v5003, 2.1237322e-06
    %v5005 = vadd.f32 %v5004, 0.00028619796
    %v5006 = vmul.f32 %v5003, %v5005
    %v5007 = vadd.f32 %v5006, 0.0036580483
    %v5008 = vmul.f32 %v5003, %v5007
    %v5009 = vadd.f32 %v5008, 0.05243302
    %v5010 = vmul.f32 %v5003, %v5009
    %v5011 = vadd.f32 %v5010, 0.18741608
    %v5012 = vmul.f32 %v5003, %v5011
    %v5013 = vadd.f32 %v5012, 1.1283791
    %v5014 = vmul.f32 %v1442, %v5013
    %v5015 = vmul.f32 %v5003, 3.8918573e-05
    %v5016 = vadd.f32 %v5015, 0.001143296
    %v5017 = vmul.f32 %v5003, %v5016
    %v5018 = vadd.f32 %v5017, 0.014752088
    %v5019 = vmul.f32 %v5003, %v5018
    %v5020 = vadd.f32 %v5019, 0.112945676
    %v5021 = vmul.f32 %v5003, %v5020
    %v5022 = vadd.f32 %v5021, 0.4994258
    %v5023 = vmul.f32 %v5003, %v5022
    %v5024 = vadd.f32 %v5023, 1.0
    %v5025 = vrcp.pop %v5024
    %v5026 = vmul.f32 %v5024, %v5025
    %v5027 = vsub.f32 1.0, %v5026
    %v5028 = vmul.f32 %v5025, %v5027
    %v5029 = vadd.f32 %v5025, %v5028
    %vm5030 = vweird.f32 %v5024
    %vm5031 = vweird.f32 %v5025
    %vm5032 = vmor %vm5030, %vm5031
    %v5033 = vsel %vm5032, %v5025, %v5029
    %v5034 = vand.u32 2147483647, %v5024
    %vm5035 = vcmp.eq.f32.partialorder %v5034, 8.507059e+37
    %v5036 = vand.u32 %v5024, 2147483648
    %v5037 = vor.u32 1.1754944e-38, %v5036
    %v5038 = vsel %vm5035, %v5037, %v5033
    %v5039 = vmul.f32 %v5014, %v5038
    %v5040 = vmin.f32 %v5039, 1.0
    %v5041 = vmax.f32 %v5040, -1.0
    %v5042 = vmul.f32 %v1443, %v1443
    %v5043 = vmin.f32 16.0, %v5042
    %v5044 = vmul.f32 %v5043, 2.1237322e-06
    %v5045 = vadd.f32 %v5044, 0.00028619796
    %v5046 = vmul.f32 %v5043, %v5045
    %v5047 = vadd.f32 %v5046, 0.0036580483
    %v5048 = vmul.f32 %v5043, %v5047
    %v5049 = vadd.f32 %v5048, 0.05243302
    %v5050 = vmul.f32 %v5043, %v5049
    %v5051 = vadd.f32 %v5050, 0.18741608
    %v5052 = vmul.f32 %v5043, %v5051
    %v5053 = vadd.f32 %v5052, 1.1283791
    %v5054 = vmul.f32 %v1443, %v5053
    %v5055 = vmul.f32 %v5043, 3.8918573e-05
    %v5056 = vadd.f32 %v5055, 0.001143296
    %v5057 = vmul.f32 %v5043, %v5056
    %v5058 = vadd.f32 %v5057, 0.014752088
    %v5059 = vmul.f32 %v5043, %v5058
    %v5060 = vadd.f32 %v5059, 0.112945676
    %v5061 = vmul.f32 %v5043, %v5060
    %v5062 = vadd.f32 %v5061, 0.4994258
    %v5063 = vmul.f32 %v5043, %v5062
    %v5064 = vadd.f32 %v5063, 1.0
    %v5065 = vrcp.pop %v5064
    %v5066 = vmul.f32 %v5064, %v5065
    %v5067 = vsub.f32 1.0, %v5066
    %v5068 = vmul.f32 %v5065, %v5067
    %v5069 = vadd.f32 %v5065, %v5068
    %vm5070 = vweird.f32 %v5064
    %vm5071 = vweird.f32 %v5065
    %vm5072 = vmor %vm5070, %vm5071
    %v5073 = vsel %vm5072, %v5065, %v5069
    %v5074 = vand.u32 2147483647, %v5064
    %vm5075 = vcmp.eq.f32.partialorder %v5074, 8.507059e+37
    %v5076 = vand.u32 %v5064, 2147483648
    %v5077 = vor.u32 1.1754944e-38, %v5076
    %v5078 = vsel %vm5075, %v5077, %v5073
    %v5079 = vmul.f32 %v5054, %v5078
    %v5080 = vmin.f32 %v5079, 1.0
    %v5081 = vmax.f32 %v5080, -1.0
    %v5082 = vmul.f32 %v1444, %v1444
    %v5083 = vmin.f32 16.0, %v5082
    %v5084 = vmul.f32 %v5083, 2.1237322e-06
    %v5085 = vadd.f32 %v5084, 0.00028619796
    %v5086 = vmul.f32 %v5083, %v5085
    %v5087 = vadd.f32 %v5086, 0.0036580483
    %v5088 = vmul.f32 %v5083, %v5087
    %v5089 = vadd.f32 %v5088, 0.05243302
    %v5090 = vmul.f32 %v5083, %v5089
    %v5091 = vadd.f32 %v5090, 0.18741608
    %v5092 = vmul.f32 %v5083, %v5091
    %v5093 = vadd.f32 %v5092, 1.1283791
    %v5094 = vmul.f32 %v1444, %v5093
    %v5095 = vmul.f32 %v5083, 3.8918573e-05
    %v5096 = vadd.f32 %v5095, 0.001143296
    %v5097 = vmul.f32 %v5083, %v5096
    %v5098 = vadd.f32 %v5097, 0.014752088
    %v5099 = vmul.f32 %v5083, %v5098
    %v5100 = vadd.f32 %v5099, 0.112945676
    %v5101 = vmul.f32 %v5083, %v5100
    %v5102 = vadd.f32 %v5101, 0.4994258
    %v5103 = vmul.f32 %v5083, %v5102
    %v5104 = vadd.f32 %v5103, 1.0
    %v5105 = vrcp.pop %v5104
    %v5106 = vmul.f32 %v5104, %v5105
    %v5107 = vsub.f32 1.0, %v5106
    %v5108 = vmul.f32 %v5105, %v5107
    %v5109 = vadd.f32 %v5105, %v5108
    %vm5110 = vweird.f32 %v5104
    %vm5111 = vweird.f32 %v5105
    %vm5112 = vmor %vm5110, %vm5111
    %v5113 = vsel %vm5112, %v5105, %v5109
    %v5114 = vand.u32 2147483647, %v5104
    %vm5115 = vcmp.eq.f32.partialorder %v5114, 8.507059e+37
    %v5116 = vand.u32 %v5104, 2147483648
    %v5117 = vor.u32 1.1754944e-38, %v5116
    %v5118 = vsel %vm5115, %v5117, %v5113
    %v5119 = vmul.f32 %v5094, %v5118
    %v5120 = vmin.f32 %v5119, 1.0
    %v5121 = vmax.f32 %v5120, -1.0
    %v5122 = vmul.f32 %v1445, %v1445
    %v5123 = vmin.f32 16.0, %v5122
    %v5124 = vmul.f32 %v5123, 2.1237322e-06
    %v5125 = vadd.f32 %v5124, 0.00028619796
    %v5126 = vmul.f32 %v5123, %v5125
    %v5127 = vadd.f32 %v5126, 0.0036580483
    %v5128 = vmul.f32 %v5123, %v5127
    %v5129 = vadd.f32 %v5128, 0.05243302
    %v5130 = vmul.f32 %v5123, %v5129
    %v5131 = vadd.f32 %v5130, 0.18741608
    %v5132 = vmul.f32 %v5123, %v5131
    %v5133 = vadd.f32 %v5132, 1.1283791
    %v5134 = vmul.f32 %v1445, %v5133
    %v5135 = vmul.f32 %v5123, 3.8918573e-05
    %v5136 = vadd.f32 %v5135, 0.001143296
    %v5137 = vmul.f32 %v5123, %v5136
    %v5138 = vadd.f32 %v5137, 0.014752088
    %v5139 = vmul.f32 %v5123, %v5138
    %v5140 = vadd.f32 %v5139, 0.112945676
    %v5141 = vmul.f32 %v5123, %v5140
    %v5142 = vadd.f32 %v5141, 0.4994258
    %v5143 = vmul.f32 %v5123, %v5142
    %v5144 = vadd.f32 %v5143, 1.0
    %v5145 = vrcp.pop %v5144
    %v5146 = vmul.f32 %v5144, %v5145
    %v5147 = vsub.f32 1.0, %v5146
    %v5148 = vmul.f32 %v5145, %v5147
    %v5149 = vadd.f32 %v5145, %v5148
    %vm5150 = vweird.f32 %v5144
    %vm5151 = vweird.f32 %v5145
    %vm5152 = vmor %vm5150, %vm5151
    %v5153 = vsel %vm5152, %v5145, %v5149
    %v5154 = vand.u32 2147483647, %v5144
    %vm5155 = vcmp.eq.f32.partialorder %v5154, 8.507059e+37
    %v5156 = vand.u32 %v5144, 2147483648
    %v5157 = vor.u32 1.1754944e-38, %v5156
    %v5158 = vsel %vm5155, %v5157, %v5153
    %v5159 = vmul.f32 %v5134, %v5158
    %v5160 = vmin.f32 %v5159, 1.0
    %v5161 = vmax.f32 %v5160, -1.0
    %v5162 = vmul.f32 %v1446, %v1446
    %v5163 = vmin.f32 16.0, %v5162
    %v5164 = vmul.f32 %v5163, 2.1237322e-06
    %v5165 = vadd.f32 %v5164, 0.00028619796
    %v5166 = vmul.f32 %v5163, %v5165
    %v5167 = vadd.f32 %v5166, 0.0036580483
    %v5168 = vmul.f32 %v5163, %v5167
    %v5169 = vadd.f32 %v5168, 0.05243302
    %v5170 = vmul.f32 %v5163, %v5169
    %v5171 = vadd.f32 %v5170, 0.18741608
    %v5172 = vmul.f32 %v5163, %v5171
    %v5173 = vadd.f32 %v5172, 1.1283791
    %v5174 = vmul.f32 %v1446, %v5173
    %v5175 = vmul.f32 %v5163, 3.8918573e-05
    %v5176 = vadd.f32 %v5175, 0.001143296
    %v5177 = vmul.f32 %v5163, %v5176
    %v5178 = vadd.f32 %v5177, 0.014752088
    %v5179 = vmul.f32 %v5163, %v5178
    %v5180 = vadd.f32 %v5179, 0.112945676
    %v5181 = vmul.f32 %v5163, %v5180
    %v5182 = vadd.f32 %v5181, 0.4994258
    %v5183 = vmul.f32 %v5163, %v5182
    %v5184 = vadd.f32 %v5183, 1.0
    %v5185 = vrcp.pop %v5184
    %v5186 = vmul.f32 %v5184, %v5185
    %v5187 = vsub.f32 1.0, %v5186
    %v5188 = vmul.f32 %v5185, %v5187
    %v5189 = vadd.f32 %v5185, %v5188
    %vm5190 = vweird.f32 %v5184
    %vm5191 = vweird.f32 %v5185
    %vm5192 = vmor %vm5190, %vm5191
    %v5193 = vsel %vm5192, %v5185, %v5189
    %v5194 = vand.u32 2147483647, %v5184
    %vm5195 = vcmp.eq.f32.partialorder %v5194, 8.507059e+37
    %v5196 = vand.u32 %v5184, 2147483648
    %v5197 = vor.u32 1.1754944e-38, %v5196
    %v5198 = vsel %vm5195, %v5197, %v5193
    %v5199 = vmul.f32 %v5174, %v5198
    %v5200 = vmin.f32 %v5199, 1.0
    %v5201 = vmax.f32 %v5200, -1.0
    %v5202 = vmul.f32 %v1447, %v1447
    %v5203 = vmin.f32 16.0, %v5202
    %v5204 = vmul.f32 %v5203, 2.1237322e-06
    %v5205 = vadd.f32 %v5204, 0.00028619796
    %v5206 = vmul.f32 %v5203, %v5205
    %v5207 = vadd.f32 %v5206, 0.0036580483
    %v5208 = vmul.f32 %v5203, %v5207
    %v5209 = vadd.f32 %v5208, 0.05243302
    %v5210 = vmul.f32 %v5203, %v5209
    %v5211 = vadd.f32 %v5210, 0.18741608
    %v5212 = vmul.f32 %v5203, %v5211
    %v5213 = vadd.f32 %v5212, 1.1283791
    %v5214 = vmul.f32 %v1447, %v5213
    %v5215 = vmul.f32 %v5203, 3.8918573e-05
    %v5216 = vadd.f32 %v5215, 0.001143296
    %v5217 = vmul.f32 %v5203, %v5216
    %v5218 = vadd.f32 %v5217, 0.014752088
    %v5219 = vmul.f32 %v5203, %v5218
    %v5220 = vadd.f32 %v5219, 0.112945676
    %v5221 = vmul.f32 %v5203, %v5220
    %v5222 = vadd.f32 %v5221, 0.4994258
    %v5223 = vmul.f32 %v5203, %v5222
    %v5224 = vadd.f32 %v5223, 1.0
    %v5225 = vrcp.pop %v5224
    %v5226 = vmul.f32 %v5224, %v5225
    %v5227 = vsub.f32 1.0, %v5226
    %v5228 = vmul.f32 %v5225, %v5227
    %v5229 = vadd.f32 %v5225, %v5228
    %vm5230 = vweird.f32 %v5224
    %vm5231 = vweird.f32 %v5225
    %vm5232 = vmor %vm5230, %vm5231
    %v5233 = vsel %vm5232, %v5225, %v5229
    %v5234 = vand.u32 2147483647, %v5224
    %vm5235 = vcmp.eq.f32.partialorder %v5234, 8.507059e+37
    %v5236 = vand.u32 %v5224, 2147483648
    %v5237 = vor.u32 1.1754944e-38, %v5236
    %v5238 = vsel %vm5235, %v5237, %v5233
    %v5239 = vmul.f32 %v5214, %v5238
    %v5240 = vmin.f32 %v5239, 1.0
    %v5241 = vmax.f32 %v5240, -1.0
    %v5242 = vmul.f32 %v1448, %v1448
    %v5243 = vmin.f32 16.0, %v5242
    %v5244 = vmul.f32 %v5243, 2.1237322e-06
    %v5245 = vadd.f32 %v5244, 0.00028619796
    %v5246 = vmul.f32 %v5243, %v5245
    %v5247 = vadd.f32 %v5246, 0.0036580483
    %v5248 = vmul.f32 %v5243, %v5247
    %v5249 = vadd.f32 %v5248, 0.05243302
    %v5250 = vmul.f32 %v5243, %v5249
    %v5251 = vadd.f32 %v5250, 0.18741608
    %v5252 = vmul.f32 %v5243, %v5251
    %v5253 = vadd.f32 %v5252, 1.1283791
    %v5254 = vmul.f32 %v1448, %v5253
    %v5255 = vmul.f32 %v5243, 3.8918573e-05
    %v5256 = vadd.f32 %v5255, 0.001143296
    %v5257 = vmul.f32 %v5243, %v5256
    %v5258 = vadd.f32 %v5257, 0.014752088
    %v5259 = vmul.f32 %v5243, %v5258
    %v5260 = vadd.f32 %v5259, 0.112945676
    %v5261 = vmul.f32 %v5243, %v5260
    %v5262 = vadd.f32 %v5261, 0.4994258
    %v5263 = vmul.f32 %v5243, %v5262
    %v5264 = vadd.f32 %v5263, 1.0
    %v5265 = vrcp.pop %v5264
    %v5266 = vmul.f32 %v5264, %v5265
    %v5267 = vsub.f32 1.0, %v5266
    %v5268 = vmul.f32 %v5265, %v5267
    %v5269 = vadd.f32 %v5265, %v5268
    %vm5270 = vweird.f32 %v5264
    %vm5271 = vweird.f32 %v5265
    %vm5272 = vmor %vm5270, %vm5271
    %v5273 = vsel %vm5272, %v5265, %v5269
    %v5274 = vand.u32 2147483647, %v5264
    %vm5275 = vcmp.eq.f32.partialorder %v5274, 8.507059e+37
    %v5276 = vand.u32 %v5264, 2147483648
    %v5277 = vor.u32 1.1754944e-38, %v5276
    %v5278 = vsel %vm5275, %v5277, %v5273
    %v5279 = vmul.f32 %v5254, %v5278
    %v5280 = vmin.f32 %v5279, 1.0
    %v5281 = vmax.f32 %v5280, -1.0
    %v5282 = vmul.f32 %v1449, %v1449
    %v5283 = vmin.f32 16.0, %v5282
    %v5284 = vmul.f32 %v5283, 2.1237322e-06
    %v5285 = vadd.f32 %v5284, 0.00028619796
    %v5286 = vmul.f32 %v5283, %v5285
    %v5287 = vadd.f32 %v5286, 0.0036580483
    %v5288 = vmul.f32 %v5283, %v5287
    %v5289 = vadd.f32 %v5288, 0.05243302
    %v5290 = vmul.f32 %v5283, %v5289
    %v5291 = vadd.f32 %v5290, 0.18741608
    %v5292 = vmul.f32 %v5283, %v5291
    %v5293 = vadd.f32 %v5292, 1.1283791
    %v5294 = vmul.f32 %v1449, %v5293
    %v5295 = vmul.f32 %v5283, 3.8918573e-05
    %v5296 = vadd.f32 %v5295, 0.001143296
    %v5297 = vmul.f32 %v5283, %v5296
    %v5298 = vadd.f32 %v5297, 0.014752088
    %v5299 = vmul.f32 %v5283, %v5298
    %v5300 = vadd.f32 %v5299, 0.112945676
    %v5301 = vmul.f32 %v5283, %v5300
    %v5302 = vadd.f32 %v5301, 0.4994258
    %v5303 = vmul.f32 %v5283, %v5302
    %v5304 = vadd.f32 %v5303, 1.0
    %v5305 = vrcp.pop %v5304
    %v5306 = vmul.f32 %v5304, %v5305
    %v5307 = vsub.f32 1.0, %v5306
    %v5308 = vmul.f32 %v5305, %v5307
    %v5309 = vadd.f32 %v5305, %v5308
    %vm5310 = vweird.f32 %v5304
    %vm5311 = vweird.f32 %v5305
    %vm5312 = vmor %vm5310, %vm5311
    %v5313 = vsel %vm5312, %v5305, %v5309
    %v5314 = vand.u32 2147483647, %v5304
    %vm5315 = vcmp.eq.f32.partialorder %v5314, 8.507059e+37
    %v5316 = vand.u32 %v5304, 2147483648
    %v5317 = vor.u32 1.1754944e-38, %v5316
    %v5318 = vsel %vm5315, %v5317, %v5313
    %v5319 = vmul.f32 %v5294, %v5318
    %v5320 = vmin.f32 %v5319, 1.0
    %v5321 = vmax.f32 %v5320, -1.0
    %v5322 = vmul.f32 %v1450, %v1450
    %v5323 = vmin.f32 16.0, %v5322
    %v5324 = vmul.f32 %v5323, 2.1237322e-06
    %v5325 = vadd.f32 %v5324, 0.00028619796
    %v5326 = vmul.f32 %v5323, %v5325
    %v5327 = vadd.f32 %v5326, 0.0036580483
    %v5328 = vmul.f32 %v5323, %v5327
    %v5329 = vadd.f32 %v5328, 0.05243302
    %v5330 = vmul.f32 %v5323, %v5329
    %v5331 = vadd.f32 %v5330, 0.18741608
    %v5332 = vmul.f32 %v5323, %v5331
    %v5333 = vadd.f32 %v5332, 1.1283791
    %v5334 = vmul.f32 %v1450, %v5333
    %v5335 = vmul.f32 %v5323, 3.8918573e-05
    %v5336 = vadd.f32 %v5335, 0.001143296
    %v5337 = vmul.f32 %v5323, %v5336
    %v5338 = vadd.f32 %v5337, 0.014752088
    %v5339 = vmul.f32 %v5323, %v5338
    %v5340 = vadd.f32 %v5339, 0.112945676
    %v5341 = vmul.f32 %v5323, %v5340
    %v5342 = vadd.f32 %v5341, 0.4994258
    %v5343 = vmul.f32 %v5323, %v5342
    %v5344 = vadd.f32 %v5343, 1.0
    %v5345 = vrcp.pop %v5344
    %v5346 = vmul.f32 %v5344, %v5345
    %v5347 = vsub.f32 1.0, %v5346
    %v5348 = vmul.f32 %v5345, %v5347
    %v5349 = vadd.f32 %v5345, %v5348
    %vm5350 = vweird.f32 %v5344
    %vm5351 = vweird.f32 %v5345
    %vm5352 = vmor %vm5350, %vm5351
    %v5353 = vsel %vm5352, %v5345, %v5349
    %v5354 = vand.u32 2147483647, %v5344
    %vm5355 = vcmp.eq.f32.partialorder %v5354, 8.507059e+37
    %v5356 = vand.u32 %v5344, 2147483648
    %v5357 = vor.u32 1.1754944e-38, %v5356
    %v5358 = vsel %vm5355, %v5357, %v5353
    %v5359 = vmul.f32 %v5334, %v5358
    %v5360 = vmin.f32 %v5359, 1.0
    %v5361 = vmax.f32 %v5360, -1.0
    %v5362 = vmul.f32 %v1451, %v1451
    %v5363 = vmin.f32 16.0, %v5362
    %v5364 = vmul.f32 %v5363, 2.1237322e-06
    %v5365 = vadd.f32 %v5364, 0.00028619796
    %v5366 = vmul.f32 %v5363, %v5365
    %v5367 = vadd.f32 %v5366, 0.0036580483
    %v5368 = vmul.f32 %v5363, %v5367
    %v5369 = vadd.f32 %v5368, 0.05243302
    %v5370 = vmul.f32 %v5363, %v5369
    %v5371 = vadd.f32 %v5370, 0.18741608
    %v5372 = vmul.f32 %v5363, %v5371
    %v5373 = vadd.f32 %v5372, 1.1283791
    %v5374 = vmul.f32 %v1451, %v5373
    %v5375 = vmul.f32 %v5363, 3.8918573e-05
    %v5376 = vadd.f32 %v5375, 0.001143296
    %v5377 = vmul.f32 %v5363, %v5376
    %v5378 = vadd.f32 %v5377, 0.014752088
    %v5379 = vmul.f32 %v5363, %v5378
    %v5380 = vadd.f32 %v5379, 0.112945676
    %v5381 = vmul.f32 %v5363, %v5380
    %v5382 = vadd.f32 %v5381, 0.4994258
    %v5383 = vmul.f32 %v5363, %v5382
    %v5384 = vadd.f32 %v5383, 1.0
    %v5385 = vrcp.pop %v5384
    %v5386 = vmul.f32 %v5384, %v5385
    %v5387 = vsub.f32 1.0, %v5386
    %v5388 = vmul.f32 %v5385, %v5387
    %v5389 = vadd.f32 %v5385, %v5388
    %vm5390 = vweird.f32 %v5384
    %vm5391 = vweird.f32 %v5385
    %vm5392 = vmor %vm5390, %vm5391
    %v5393 = vsel %vm5392, %v5385, %v5389
    %v5394 = vand.u32 2147483647, %v5384
    %vm5395 = vcmp.eq.f32.partialorder %v5394, 8.507059e+37
    %v5396 = vand.u32 %v5384, 2147483648
    %v5397 = vor.u32 1.1754944e-38, %v5396
    %v5398 = vsel %vm5395, %v5397, %v5393
    %v5399 = vmul.f32 %v5374, %v5398
    %v5400 = vmin.f32 %v5399, 1.0
    %v5401 = vmax.f32 %v5400, -1.0
    %v5402 = vmul.f32 %v1452, %v1452
    %v5403 = vmin.f32 16.0, %v5402
    %v5404 = vmul.f32 %v5403, 2.1237322e-06
    %v5405 = vadd.f32 %v5404, 0.00028619796
    %v5406 = vmul.f32 %v5403, %v5405
    %v5407 = vadd.f32 %v5406, 0.0036580483
    %v5408 = vmul.f32 %v5403, %v5407
    %v5409 = vadd.f32 %v5408, 0.05243302
    %v5410 = vmul.f32 %v5403, %v5409
    %v5411 = vadd.f32 %v5410, 0.18741608
    %v5412 = vmul.f32 %v5403, %v5411
    %v5413 = vadd.f32 %v5412, 1.1283791
    %v5414 = vmul.f32 %v1452, %v5413
    %v5415 = vmul.f32 %v5403, 3.8918573e-05
    %v5416 = vadd.f32 %v5415, 0.001143296
    %v5417 = vmul.f32 %v5403, %v5416
    %v5418 = vadd.f32 %v5417, 0.014752088
    %v5419 = vmul.f32 %v5403, %v5418
    %v5420 = vadd.f32 %v5419, 0.112945676
    %v5421 = vmul.f32 %v5403, %v5420
    %v5422 = vadd.f32 %v5421, 0.4994258
    %v5423 = vmul.f32 %v5403, %v5422
    %v5424 = vadd.f32 %v5423, 1.0
    %v5425 = vrcp.pop %v5424
    %v5426 = vmul.f32 %v5424, %v5425
    %v5427 = vsub.f32 1.0, %v5426
    %v5428 = vmul.f32 %v5425, %v5427
    %v5429 = vadd.f32 %v5425, %v5428
    %vm5430 = vweird.f32 %v5424
    %vm5431 = vweird.f32 %v5425
    %vm5432 = vmor %vm5430, %vm5431
    %v5433 = vsel %vm5432, %v5425, %v5429
    %v5434 = vand.u32 2147483647, %v5424
    %vm5435 = vcmp.eq.f32.partialorder %v5434, 8.507059e+37
    %v5436 = vand.u32 %v5424, 2147483648
    %v5437 = vor.u32 1.1754944e-38, %v5436
    %v5438 = vsel %vm5435, %v5437, %v5433
    %v5439 = vmul.f32 %v5414, %v5438
    %v5440 = vmin.f32 %v5439, 1.0
    %v5441 = vmax.f32 %v5440, -1.0
    %v5442 = vmul.f32 %v1453, %v1453
    %v5443 = vmin.f32 16.0, %v5442
    %v5444 = vmul.f32 %v5443, 2.1237322e-06
    %v5445 = vadd.f32 %v5444, 0.00028619796
    %v5446 = vmul.f32 %v5443, %v5445
    %v5447 = vadd.f32 %v5446, 0.0036580483
    %v5448 = vmul.f32 %v5443, %v5447
    %v5449 = vadd.f32 %v5448, 0.05243302
    %v5450 = vmul.f32 %v5443, %v5449
    %v5451 = vadd.f32 %v5450, 0.18741608
    %v5452 = vmul.f32 %v5443, %v5451
    %v5453 = vadd.f32 %v5452, 1.1283791
    %v5454 = vmul.f32 %v1453, %v5453
    %v5455 = vmul.f32 %v5443, 3.8918573e-05
    %v5456 = vadd.f32 %v5455, 0.001143296
    %v5457 = vmul.f32 %v5443, %v5456
    %v5458 = vadd.f32 %v5457, 0.014752088
    %v5459 = vmul.f32 %v5443, %v5458
    %v5460 = vadd.f32 %v5459, 0.112945676
    %v5461 = vmul.f32 %v5443, %v5460
    %v5462 = vadd.f32 %v5461, 0.4994258
    %v5463 = vmul.f32 %v5443, %v5462
    %v5464 = vadd.f32 %v5463, 1.0
    %v5465 = vrcp.pop %v5464
    %v5466 = vmul.f32 %v5464, %v5465
    %v5467 = vsub.f32 1.0, %v5466
    %v5468 = vmul.f32 %v5465, %v5467
    %v5469 = vadd.f32 %v5465, %v5468
    %vm5470 = vweird.f32 %v5464
    %vm5471 = vweird.f32 %v5465
    %vm5472 = vmor %vm5470, %vm5471
    %v5473 = vsel %vm5472, %v5465, %v5469
    %v5474 = vand.u32 2147483647, %v5464
    %vm5475 = vcmp.eq.f32.partialorder %v5474, 8.507059e+37
    %v5476 = vand.u32 %v5464, 2147483648
    %v5477 = vor.u32 1.1754944e-38, %v5476
    %v5478 = vsel %vm5475, %v5477, %v5473
    %v5479 = vmul.f32 %v5454, %v5478
    %v5480 = vmin.f32 %v5479, 1.0
    %v5481 = vmax.f32 %v5480, -1.0
    %v5482 = vmul.f32 %v1454, %v1454
    %v5483 = vmin.f32 16.0, %v5482
    %v5484 = vmul.f32 %v5483, 2.1237322e-06
    %v5485 = vadd.f32 %v5484, 0.00028619796
    %v5486 = vmul.f32 %v5483, %v5485
    %v5487 = vadd.f32 %v5486, 0.0036580483
    %v5488 = vmul.f32 %v5483, %v5487
    %v5489 = vadd.f32 %v5488, 0.05243302
    %v5490 = vmul.f32 %v5483, %v5489
    %v5491 = vadd.f32 %v5490, 0.18741608
    %v5492 = vmul.f32 %v5483, %v5491
    %v5493 = vadd.f32 %v5492, 1.1283791
    %v5494 = vmul.f32 %v1454, %v5493
    %v5495 = vmul.f32 %v5483, 3.8918573e-05
    %v5496 = vadd.f32 %v5495, 0.001143296
    %v5497 = vmul.f32 %v5483, %v5496
    %v5498 = vadd.f32 %v5497, 0.014752088
    %v5499 = vmul.f32 %v5483, %v5498
    %v5500 = vadd.f32 %v5499, 0.112945676
    %v5501 = vmul.f32 %v5483, %v5500
    %v5502 = vadd.f32 %v5501, 0.4994258
    %v5503 = vmul.f32 %v5483, %v5502
    %v5504 = vadd.f32 %v5503, 1.0
    %v5505 = vrcp.pop %v5504
    %v5506 = vmul.f32 %v5504, %v5505
    %v5507 = vsub.f32 1.0, %v5506
    %v5508 = vmul.f32 %v5505, %v5507
    %v5509 = vadd.f32 %v5505, %v5508
    %vm5510 = vweird.f32 %v5504
    %vm5511 = vweird.f32 %v5505
    %vm5512 = vmor %vm5510, %vm5511
    %v5513 = vsel %vm5512, %v5505, %v5509
    %v5514 = vand.u32 2147483647, %v5504
    %vm5515 = vcmp.eq.f32.partialorder %v5514, 8.507059e+37
    %v5516 = vand.u32 %v5504, 2147483648
    %v5517 = vor.u32 1.1754944e-38, %v5516
    %v5518 = vsel %vm5515, %v5517, %v5513
    %v5519 = vmul.f32 %v5494, %v5518
    %v5520 = vmin.f32 %v5519, 1.0
    %v5521 = vmax.f32 %v5520, -1.0
    %v5522 = vmul.f32 %v1455, %v1455
    %v5523 = vmin.f32 16.0, %v5522
    %v5524 = vmul.f32 %v5523, 2.1237322e-06
    %v5525 = vadd.f32 %v5524, 0.00028619796
    %v5526 = vmul.f32 %v5523, %v5525
    %v5527 = vadd.f32 %v5526, 0.0036580483
    %v5528 = vmul.f32 %v5523, %v5527
    %v5529 = vadd.f32 %v5528, 0.05243302
    %v5530 = vmul.f32 %v5523, %v5529
    %v5531 = vadd.f32 %v5530, 0.18741608
    %v5532 = vmul.f32 %v5523, %v5531
    %v5533 = vadd.f32 %v5532, 1.1283791
    %v5534 = vmul.f32 %v1455, %v5533
    %v5535 = vmul.f32 %v5523, 3.8918573e-05
    %v5536 = vadd.f32 %v5535, 0.001143296
    %v5537 = vmul.f32 %v5523, %v5536
    %v5538 = vadd.f32 %v5537, 0.014752088
    %v5539 = vmul.f32 %v5523, %v5538
    %v5540 = vadd.f32 %v5539, 0.112945676
    %v5541 = vmul.f32 %v5523, %v5540
    %v5542 = vadd.f32 %v5541, 0.4994258
    %v5543 = vmul.f32 %v5523, %v5542
    %v5544 = vadd.f32 %v5543, 1.0
    %v5545 = vrcp.pop %v5544
    %v5546 = vmul.f32 %v5544, %v5545
    %v5547 = vsub.f32 1.0, %v5546
    %v5548 = vmul.f32 %v5545, %v5547
    %v5549 = vadd.f32 %v5545, %v5548
    %vm5550 = vweird.f32 %v5544
    %vm5551 = vweird.f32 %v5545
    %vm5552 = vmor %vm5550, %vm5551
    %v5553 = vsel %vm5552, %v5545, %v5549
    %v5554 = vand.u32 2147483647, %v5544
    %vm5555 = vcmp.eq.f32.partialorder %v5554, 8.507059e+37
    %v5556 = vand.u32 %v5544, 2147483648
    %v5557 = vor.u32 1.1754944e-38, %v5556
    %v5558 = vsel %vm5555, %v5557, %v5553
    %v5559 = vmul.f32 %v5534, %v5558
    %v5560 = vmin.f32 %v5559, 1.0
    %v5561 = vmax.f32 %v5560, -1.0
    %v5562 = vmul.f32 %v1456, %v1456
    %v5563 = vmin.f32 16.0, %v5562
    %v5564 = vmul.f32 %v5563, 2.1237322e-06
    %v5565 = vadd.f32 %v5564, 0.00028619796
    %v5566 = vmul.f32 %v5563, %v5565
    %v5567 = vadd.f32 %v5566, 0.0036580483
    %v5568 = vmul.f32 %v5563, %v5567
    %v5569 = vadd.f32 %v5568, 0.05243302
    %v5570 = vmul.f32 %v5563, %v5569
    %v5571 = vadd.f32 %v5570, 0.18741608
    %v5572 = vmul.f32 %v5563, %v5571
    %v5573 = vadd.f32 %v5572, 1.1283791
    %v5574 = vmul.f32 %v1456, %v5573
    %v5575 = vmul.f32 %v5563, 3.8918573e-05
    %v5576 = vadd.f32 %v5575, 0.001143296
    %v5577 = vmul.f32 %v5563, %v5576
    %v5578 = vadd.f32 %v5577, 0.014752088
    %v5579 = vmul.f32 %v5563, %v5578
    %v5580 = vadd.f32 %v5579, 0.112945676
    %v5581 = vmul.f32 %v5563, %v5580
    %v5582 = vadd.f32 %v5581, 0.4994258
    %v5583 = vmul.f32 %v5563, %v5582
    %v5584 = vadd.f32 %v5583, 1.0
    %v5585 = vrcp.pop %v5584
    %v5586 = vmul.f32 %v5584, %v5585
    %v5587 = vsub.f32 1.0, %v5586
    %v5588 = vmul.f32 %v5585, %v5587
    %v5589 = vadd.f32 %v5585, %v5588
    %vm5590 = vweird.f32 %v5584
    %vm5591 = vweird.f32 %v5585
    %vm5592 = vmor %vm5590, %vm5591
    %v5593 = vsel %vm5592, %v5585, %v5589
    %v5594 = vand.u32 2147483647, %v5584
    %vm5595 = vcmp.eq.f32.partialorder %v5594, 8.507059e+37
    %v5596 = vand.u32 %v5584, 2147483648
    %v5597 = vor.u32 1.1754944e-38, %v5596
    %v5598 = vsel %vm5595, %v5597, %v5593
    %v5599 = vmul.f32 %v5574, %v5598
    %v5600 = vmin.f32 %v5599, 1.0
    %v5601 = vmax.f32 %v5600, -1.0
    %v5602 = vmul.f32 %v1457, %v1457
    %v5603 = vmin.f32 16.0, %v5602
    %v5604 = vmul.f32 %v5603, 2.1237322e-06
    %v5605 = vadd.f32 %v5604, 0.00028619796
    %v5606 = vmul.f32 %v5603, %v5605
    %v5607 = vadd.f32 %v5606, 0.0036580483
    %v5608 = vmul.f32 %v5603, %v5607
    %v5609 = vadd.f32 %v5608, 0.05243302
    %v5610 = vmul.f32 %v5603, %v5609
    %v5611 = vadd.f32 %v5610, 0.18741608
    %v5612 = vmul.f32 %v5603, %v5611
    %v5613 = vadd.f32 %v5612, 1.1283791
    %v5614 = vmul.f32 %v1457, %v5613
    %v5615 = vmul.f32 %v5603, 3.8918573e-05
    %v5616 = vadd.f32 %v5615, 0.001143296
    %v5617 = vmul.f32 %v5603, %v5616
    %v5618 = vadd.f32 %v5617, 0.014752088
    %v5619 = vmul.f32 %v5603, %v5618
    %v5620 = vadd.f32 %v5619, 0.112945676
    %v5621 = vmul.f32 %v5603, %v5620
    %v5622 = vadd.f32 %v5621, 0.4994258
    %v5623 = vmul.f32 %v5603, %v5622
    %v5624 = vadd.f32 %v5623, 1.0
    %v5625 = vrcp.pop %v5624
    %v5626 = vmul.f32 %v5624, %v5625
    %v5627 = vsub.f32 1.0, %v5626
    %v5628 = vmul.f32 %v5625, %v5627
    %v5629 = vadd.f32 %v5625, %v5628
    %vm5630 = vweird.f32 %v5624
    %vm5631 = vweird.f32 %v5625
    %vm5632 = vmor %vm5630, %vm5631
    %v5633 = vsel %vm5632, %v5625, %v5629
    %v5634 = vand.u32 2147483647, %v5624
    %vm5635 = vcmp.eq.f32.partialorder %v5634, 8.507059e+37
    %v5636 = vand.u32 %v5624, 2147483648
    %v5637 = vor.u32 1.1754944e-38, %v5636
    %v5638 = vsel %vm5635, %v5637, %v5633
    %v5639 = vmul.f32 %v5614, %v5638
    %v5640 = vmin.f32 %v5639, 1.0
    %v5641 = vmax.f32 %v5640, -1.0
    %v5642 = vmul.f32 %v1458, %v1458
    %v5643 = vmin.f32 16.0, %v5642
    %v5644 = vmul.f32 %v5643, 2.1237322e-06
    %v5645 = vadd.f32 %v5644, 0.00028619796
    %v5646 = vmul.f32 %v5643, %v5645
    %v5647 = vadd.f32 %v5646, 0.0036580483
    %v5648 = vmul.f32 %v5643, %v5647
    %v5649 = vadd.f32 %v5648, 0.05243302
    %v5650 = vmul.f32 %v5643, %v5649
    %v5651 = vadd.f32 %v5650, 0.18741608
    %v5652 = vmul.f32 %v5643, %v5651
    %v5653 = vadd.f32 %v5652, 1.1283791
    %v5654 = vmul.f32 %v1458, %v5653
    %v5655 = vmul.f32 %v5643, 3.8918573e-05
    %v5656 = vadd.f32 %v5655, 0.001143296
    %v5657 = vmul.f32 %v5643, %v5656
    %v5658 = vadd.f32 %v5657, 0.014752088
    %v5659 = vmul.f32 %v5643, %v5658
    %v5660 = vadd.f32 %v5659, 0.112945676
    %v5661 = vmul.f32 %v5643, %v5660
    %v5662 = vadd.f32 %v5661, 0.4994258
    %v5663 = vmul.f32 %v5643, %v5662
    %v5664 = vadd.f32 %v5663, 1.0
    %v5665 = vrcp.pop %v5664
    %v5666 = vmul.f32 %v5664, %v5665
    %v5667 = vsub.f32 1.0, %v5666
    %v5668 = vmul.f32 %v5665, %v5667
    %v5669 = vadd.f32 %v5665, %v5668
    %vm5670 = vweird.f32 %v5664
    %vm5671 = vweird.f32 %v5665
    %vm5672 = vmor %vm5670, %vm5671
    %v5673 = vsel %vm5672, %v5665, %v5669
    %v5674 = vand.u32 2147483647, %v5664
    %vm5675 = vcmp.eq.f32.partialorder %v5674, 8.507059e+37
    %v5676 = vand.u32 %v5664, 2147483648
    %v5677 = vor.u32 1.1754944e-38, %v5676
    %v5678 = vsel %vm5675, %v5677, %v5673
    %v5679 = vmul.f32 %v5654, %v5678
    %v5680 = vmin.f32 %v5679, 1.0
    %v5681 = vmax.f32 %v5680, -1.0
    %v5682 = vmul.f32 %v1459, %v1459
    %v5683 = vmin.f32 16.0, %v5682
    %v5684 = vmul.f32 %v5683, 2.1237322e-06
    %v5685 = vadd.f32 %v5684, 0.00028619796
    %v5686 = vmul.f32 %v5683, %v5685
    %v5687 = vadd.f32 %v5686, 0.0036580483
    %v5688 = vmul.f32 %v5683, %v5687
    %v5689 = vadd.f32 %v5688, 0.05243302
    %v5690 = vmul.f32 %v5683, %v5689
    %v5691 = vadd.f32 %v5690, 0.18741608
    %v5692 = vmul.f32 %v5683, %v5691
    %v5693 = vadd.f32 %v5692, 1.1283791
    %v5694 = vmul.f32 %v1459, %v5693
    %v5695 = vmul.f32 %v5683, 3.8918573e-05
    %v5696 = vadd.f32 %v5695, 0.001143296
    %v5697 = vmul.f32 %v5683, %v5696
    %v5698 = vadd.f32 %v5697, 0.014752088
    %v5699 = vmul.f32 %v5683, %v5698
    %v5700 = vadd.f32 %v5699, 0.112945676
    %v5701 = vmul.f32 %v5683, %v5700
    %v5702 = vadd.f32 %v5701, 0.4994258
    %v5703 = vmul.f32 %v5683, %v5702
    %v5704 = vadd.f32 %v5703, 1.0
    %v5705 = vrcp.pop %v5704
    %v5706 = vmul.f32 %v5704, %v5705
    %v5707 = vsub.f32 1.0, %v5706
    %v5708 = vmul.f32 %v5705, %v5707
    %v5709 = vadd.f32 %v5705, %v5708
    %vm5710 = vweird.f32 %v5704
    %vm5711 = vweird.f32 %v5705
    %vm5712 = vmor %vm5710, %vm5711
    %v5713 = vsel %vm5712, %v5705, %v5709
    %v5714 = vand.u32 2147483647, %v5704
    %vm5715 = vcmp.eq.f32.partialorder %v5714, 8.507059e+37
    %v5716 = vand.u32 %v5704, 2147483648
    %v5717 = vor.u32 1.1754944e-38, %v5716
    %v5718 = vsel %vm5715, %v5717, %v5713
    %v5719 = vmul.f32 %v5694, %v5718
    %v5720 = vmin.f32 %v5719, 1.0
    %v5721 = vmax.f32 %v5720, -1.0
    %v5722 = vmul.f32 %v1460, %v1460
    %v5723 = vmin.f32 16.0, %v5722
    %v5724 = vmul.f32 %v5723, 2.1237322e-06
    %v5725 = vadd.f32 %v5724, 0.00028619796
    %v5726 = vmul.f32 %v5723, %v5725
    %v5727 = vadd.f32 %v5726, 0.0036580483
    %v5728 = vmul.f32 %v5723, %v5727
    %v5729 = vadd.f32 %v5728, 0.05243302
    %v5730 = vmul.f32 %v5723, %v5729
    %v5731 = vadd.f32 %v5730, 0.18741608
    %v5732 = vmul.f32 %v5723, %v5731
    %v5733 = vadd.f32 %v5732, 1.1283791
    %v5734 = vmul.f32 %v1460, %v5733
    %v5735 = vmul.f32 %v5723, 3.8918573e-05
    %v5736 = vadd.f32 %v5735, 0.001143296
    %v5737 = vmul.f32 %v5723, %v5736
    %v5738 = vadd.f32 %v5737, 0.014752088
    %v5739 = vmul.f32 %v5723, %v5738
    %v5740 = vadd.f32 %v5739, 0.112945676
    %v5741 = vmul.f32 %v5723, %v5740
    %v5742 = vadd.f32 %v5741, 0.4994258
    %v5743 = vmul.f32 %v5723, %v5742
    %v5744 = vadd.f32 %v5743, 1.0
    %v5745 = vrcp.pop %v5744
    %v5746 = vmul.f32 %v5744, %v5745
    %v5747 = vsub.f32 1.0, %v5746
    %v5748 = vmul.f32 %v5745, %v5747
    %v5749 = vadd.f32 %v5745, %v5748
    %vm5750 = vweird.f32 %v5744
    %vm5751 = vweird.f32 %v5745
    %vm5752 = vmor %vm5750, %vm5751
    %v5753 = vsel %vm5752, %v5745, %v5749
    %v5754 = vand.u32 2147483647, %v5744
    %vm5755 = vcmp.eq.f32.partialorder %v5754, 8.507059e+37
    %v5756 = vand.u32 %v5744, 2147483648
    %v5757 = vor.u32 1.1754944e-38, %v5756
    %v5758 = vsel %vm5755, %v5757, %v5753
    %v5759 = vmul.f32 %v5734, %v5758
    %v5760 = vmin.f32 %v5759, 1.0
    %v5761 = vmax.f32 %v5760, -1.0
    %v5762 = vmul.f32 %v1461, %v1461
    %v5763 = vmin.f32 16.0, %v5762
    %v5764 = vmul.f32 %v5763, 2.1237322e-06
    %v5765 = vadd.f32 %v5764, 0.00028619796
    %v5766 = vmul.f32 %v5763, %v5765
    %v5767 = vadd.f32 %v5766, 0.0036580483
    %v5768 = vmul.f32 %v5763, %v5767
    %v5769 = vadd.f32 %v5768, 0.05243302
    %v5770 = vmul.f32 %v5763, %v5769
    %v5771 = vadd.f32 %v5770, 0.18741608
    %v5772 = vmul.f32 %v5763, %v5771
    %v5773 = vadd.f32 %v5772, 1.1283791
    %v5774 = vmul.f32 %v1461, %v5773
    %v5775 = vmul.f32 %v5763, 3.8918573e-05
    %v5776 = vadd.f32 %v5775, 0.001143296
    %v5777 = vmul.f32 %v5763, %v5776
    %v5778 = vadd.f32 %v5777, 0.014752088
    %v5779 = vmul.f32 %v5763, %v5778
    %v5780 = vadd.f32 %v5779, 0.112945676
    %v5781 = vmul.f32 %v5763, %v5780
    %v5782 = vadd.f32 %v5781, 0.4994258
    %v5783 = vmul.f32 %v5763, %v5782
    %v5784 = vadd.f32 %v5783, 1.0
    %v5785 = vrcp.pop %v5784
    %v5786 = vmul.f32 %v5784, %v5785
    %v5787 = vsub.f32 1.0, %v5786
    %v5788 = vmul.f32 %v5785, %v5787
    %v5789 = vadd.f32 %v5785, %v5788
    %vm5790 = vweird.f32 %v5784
    %vm5791 = vweird.f32 %v5785
    %vm5792 = vmor %vm5790, %vm5791
    %v5793 = vsel %vm5792, %v5785, %v5789
    %v5794 = vand.u32 2147483647, %v5784
    %vm5795 = vcmp.eq.f32.partialorder %v5794, 8.507059e+37
    %v5796 = vand.u32 %v5784, 2147483648
    %v5797 = vor.u32 1.1754944e-38, %v5796
    %v5798 = vsel %vm5795, %v5797, %v5793
    %v5799 = vmul.f32 %v5774, %v5798
    %v5800 = vmin.f32 %v5799, 1.0
    %v5801 = vmax.f32 %v5800, -1.0
    %v5802 = vmul.f32 %v1462, %v1462
    %v5803 = vmin.f32 16.0, %v5802
    %v5804 = vmul.f32 %v5803, 2.1237322e-06
    %v5805 = vadd.f32 %v5804, 0.00028619796
    %v5806 = vmul.f32 %v5803, %v5805
    %v5807 = vadd.f32 %v5806, 0.0036580483
    %v5808 = vmul.f32 %v5803, %v5807
    %v5809 = vadd.f32 %v5808, 0.05243302
    %v5810 = vmul.f32 %v5803, %v5809
    %v5811 = vadd.f32 %v5810, 0.18741608
    %v5812 = vmul.f32 %v5803, %v5811
    %v5813 = vadd.f32 %v5812, 1.1283791
    %v5814 = vmul.f32 %v1462, %v5813
    %v5815 = vmul.f32 %v5803, 3.8918573e-05
    %v5816 = vadd.f32 %v5815, 0.001143296
    %v5817 = vmul.f32 %v5803, %v5816
    %v5818 = vadd.f32 %v5817, 0.014752088
    %v5819 = vmul.f32 %v5803, %v5818
    %v5820 = vadd.f32 %v5819, 0.112945676
    %v5821 = vmul.f32 %v5803, %v5820
    %v5822 = vadd.f32 %v5821, 0.4994258
    %v5823 = vmul.f32 %v5803, %v5822
    %v5824 = vadd.f32 %v5823, 1.0
    %v5825 = vrcp.pop %v5824
    %v5826 = vmul.f32 %v5824, %v5825
    %v5827 = vsub.f32 1.0, %v5826
    %v5828 = vmul.f32 %v5825, %v5827
    %v5829 = vadd.f32 %v5825, %v5828
    %vm5830 = vweird.f32 %v5824
    %vm5831 = vweird.f32 %v5825
    %vm5832 = vmor %vm5830, %vm5831
    %v5833 = vsel %vm5832, %v5825, %v5829
    %v5834 = vand.u32 2147483647, %v5824
    %vm5835 = vcmp.eq.f32.partialorder %v5834, 8.507059e+37
    %v5836 = vand.u32 %v5824, 2147483648
    %v5837 = vor.u32 1.1754944e-38, %v5836
    %v5838 = vsel %vm5835, %v5837, %v5833
    %v5839 = vmul.f32 %v5814, %v5838
    %v5840 = vmin.f32 %v5839, 1.0
    %v5841 = vmax.f32 %v5840, -1.0
    %v5842 = vmul.f32 %v1463, %v1463
    %v5843 = vmin.f32 16.0, %v5842
    %v5844 = vmul.f32 %v5843, 2.1237322e-06
    %v5845 = vadd.f32 %v5844, 0.00028619796
    %v5846 = vmul.f32 %v5843, %v5845
    %v5847 = vadd.f32 %v5846, 0.0036580483
    %v5848 = vmul.f32 %v5843, %v5847
    %v5849 = vadd.f32 %v5848, 0.05243302
    %v5850 = vmul.f32 %v5843, %v5849
    %v5851 = vadd.f32 %v5850, 0.18741608
    %v5852 = vmul.f32 %v5843, %v5851
    %v5853 = vadd.f32 %v5852, 1.1283791
    %v5854 = vmul.f32 %v1463, %v5853
    %v5855 = vmul.f32 %v5843, 3.8918573e-05
    %v5856 = vadd.f32 %v5855, 0.001143296
    %v5857 = vmul.f32 %v5843, %v5856
    %v5858 = vadd.f32 %v5857, 0.014752088
    %v5859 = vmul.f32 %v5843, %v5858
    %v5860 = vadd.f32 %v5859, 0.112945676
    %v5861 = vmul.f32 %v5843, %v5860
    %v5862 = vadd.f32 %v5861, 0.4994258
    %v5863 = vmul.f32 %v5843, %v5862
    %v5864 = vadd.f32 %v5863, 1.0
    %v5865 = vrcp.pop %v5864
    %v5866 = vmul.f32 %v5864, %v5865
    %v5867 = vsub.f32 1.0, %v5866
    %v5868 = vmul.f32 %v5865, %v5867
    %v5869 = vadd.f32 %v5865, %v5868
    %vm5870 = vweird.f32 %v5864
    %vm5871 = vweird.f32 %v5865
    %vm5872 = vmor %vm5870, %vm5871
    %v5873 = vsel %vm5872, %v5865, %v5869
    %v5874 = vand.u32 2147483647, %v5864
    %vm5875 = vcmp.eq.f32.partialorder %v5874, 8.507059e+37
    %v5876 = vand.u32 %v5864, 2147483648
    %v5877 = vor.u32 1.1754944e-38, %v5876
    %v5878 = vsel %vm5875, %v5877, %v5873
    %v5879 = vmul.f32 %v5854, %v5878
    %v5880 = vmin.f32 %v5879, 1.0
    %v5881 = vmax.f32 %v5880, -1.0
    %v5882 = vmul.f32 %v1464, %v1464
    %v5883 = vmin.f32 16.0, %v5882
    %v5884 = vmul.f32 %v5883, 2.1237322e-06
    %v5885 = vadd.f32 %v5884, 0.00028619796
    %v5886 = vmul.f32 %v5883, %v5885
    %v5887 = vadd.f32 %v5886, 0.0036580483
    %v5888 = vmul.f32 %v5883, %v5887
    %v5889 = vadd.f32 %v5888, 0.05243302
    %v5890 = vmul.f32 %v5883, %v5889
    %v5891 = vadd.f32 %v5890, 0.18741608
    %v5892 = vmul.f32 %v5883, %v5891
    %v5893 = vadd.f32 %v5892, 1.1283791
    %v5894 = vmul.f32 %v1464, %v5893
    %v5895 = vmul.f32 %v5883, 3.8918573e-05
    %v5896 = vadd.f32 %v5895, 0.001143296
    %v5897 = vmul.f32 %v5883, %v5896
    %v5898 = vadd.f32 %v5897, 0.014752088
    %v5899 = vmul.f32 %v5883, %v5898
    %v5900 = vadd.f32 %v5899, 0.112945676
    %v5901 = vmul.f32 %v5883, %v5900
    %v5902 = vadd.f32 %v5901, 0.4994258
    %v5903 = vmul.f32 %v5883, %v5902
    %v5904 = vadd.f32 %v5903, 1.0
    %v5905 = vrcp.pop %v5904
    %v5906 = vmul.f32 %v5904, %v5905
    %v5907 = vsub.f32 1.0, %v5906
    %v5908 = vmul.f32 %v5905, %v5907
    %v5909 = vadd.f32 %v5905, %v5908
    %vm5910 = vweird.f32 %v5904
    %vm5911 = vweird.f32 %v5905
    %vm5912 = vmor %vm5910, %vm5911
    %v5913 = vsel %vm5912, %v5905, %v5909
    %v5914 = vand.u32 2147483647, %v5904
    %vm5915 = vcmp.eq.f32.partialorder %v5914, 8.507059e+37
    %v5916 = vand.u32 %v5904, 2147483648
    %v5917 = vor.u32 1.1754944e-38, %v5916
    %v5918 = vsel %vm5915, %v5917, %v5913
    %v5919 = vmul.f32 %v5894, %v5918
    %v5920 = vmin.f32 %v5919, 1.0
    %v5921 = vmax.f32 %v5920, -1.0
    %v5922 = vmul.f32 %v1465, %v1465
    %v5923 = vmin.f32 16.0, %v5922
    %v5924 = vmul.f32 %v5923, 2.1237322e-06
    %v5925 = vadd.f32 %v5924, 0.00028619796
    %v5926 = vmul.f32 %v5923, %v5925
    %v5927 = vadd.f32 %v5926, 0.0036580483
    %v5928 = vmul.f32 %v5923, %v5927
    %v5929 = vadd.f32 %v5928, 0.05243302
    %v5930 = vmul.f32 %v5923, %v5929
    %v5931 = vadd.f32 %v5930, 0.18741608
    %v5932 = vmul.f32 %v5923, %v5931
    %v5933 = vadd.f32 %v5932, 1.1283791
    %v5934 = vmul.f32 %v1465, %v5933
    %v5935 = vmul.f32 %v5923, 3.8918573e-05
    %v5936 = vadd.f32 %v5935, 0.001143296
    %v5937 = vmul.f32 %v5923, %v5936
    %v5938 = vadd.f32 %v5937, 0.014752088
    %v5939 = vmul.f32 %v5923, %v5938
    %v5940 = vadd.f32 %v5939, 0.112945676
    %v5941 = vmul.f32 %v5923, %v5940
    %v5942 = vadd.f32 %v5941, 0.4994258
    %v5943 = vmul.f32 %v5923, %v5942
    %v5944 = vadd.f32 %v5943, 1.0
    %v5945 = vrcp.pop %v5944
    %v5946 = vmul.f32 %v5944, %v5945
    %v5947 = vsub.f32 1.0, %v5946
    %v5948 = vmul.f32 %v5945, %v5947
    %v5949 = vadd.f32 %v5945, %v5948
    %vm5950 = vweird.f32 %v5944
    %vm5951 = vweird.f32 %v5945
    %vm5952 = vmor %vm5950, %vm5951
    %v5953 = vsel %vm5952, %v5945, %v5949
    %v5954 = vand.u32 2147483647, %v5944
    %vm5955 = vcmp.eq.f32.partialorder %v5954, 8.507059e+37
    %v5956 = vand.u32 %v5944, 2147483648
    %v5957 = vor.u32 1.1754944e-38, %v5956
    %v5958 = vsel %vm5955, %v5957, %v5953
    %v5959 = vmul.f32 %v5934, %v5958
    %v5960 = vmin.f32 %v5959, 1.0
    %v5961 = vmax.f32 %v5960, -1.0
    %v5962 = vmul.f32 %v1466, %v1466
    %v5963 = vmin.f32 16.0, %v5962
    %v5964 = vmul.f32 %v5963, 2.1237322e-06
    %v5965 = vadd.f32 %v5964, 0.00028619796
    %v5966 = vmul.f32 %v5963, %v5965
    %v5967 = vadd.f32 %v5966, 0.0036580483
    %v5968 = vmul.f32 %v5963, %v5967
    %v5969 = vadd.f32 %v5968, 0.05243302
    %v5970 = vmul.f32 %v5963, %v5969
    %v5971 = vadd.f32 %v5970, 0.18741608
    %v5972 = vmul.f32 %v5963, %v5971
    %v5973 = vadd.f32 %v5972, 1.1283791
    %v5974 = vmul.f32 %v1466, %v5973
    %v5975 = vmul.f32 %v5963, 3.8918573e-05
    %v5976 = vadd.f32 %v5975, 0.001143296
    %v5977 = vmul.f32 %v5963, %v5976
    %v5978 = vadd.f32 %v5977, 0.014752088
    %v5979 = vmul.f32 %v5963, %v5978
    %v5980 = vadd.f32 %v5979, 0.112945676
    %v5981 = vmul.f32 %v5963, %v5980
    %v5982 = vadd.f32 %v5981, 0.4994258
    %v5983 = vmul.f32 %v5963, %v5982
    %v5984 = vadd.f32 %v5983, 1.0
    %v5985 = vrcp.pop %v5984
    %v5986 = vmul.f32 %v5984, %v5985
    %v5987 = vsub.f32 1.0, %v5986
    %v5988 = vmul.f32 %v5985, %v5987
    %v5989 = vadd.f32 %v5985, %v5988
    %vm5990 = vweird.f32 %v5984
    %vm5991 = vweird.f32 %v5985
    %vm5992 = vmor %vm5990, %vm5991
    %v5993 = vsel %vm5992, %v5985, %v5989
    %v5994 = vand.u32 2147483647, %v5984
    %vm5995 = vcmp.eq.f32.partialorder %v5994, 8.507059e+37
    %v5996 = vand.u32 %v5984, 2147483648
    %v5997 = vor.u32 1.1754944e-38, %v5996
    %v5998 = vsel %vm5995, %v5997, %v5993
    %v5999 = vmul.f32 %v5974, %v5998
    %v6000 = vmin.f32 %v5999, 1.0
    %v6001 = vmax.f32 %v6000, -1.0
    %v6002 = vmul.f32 %v1467, %v1467
    %v6003 = vmin.f32 16.0, %v6002
    %v6004 = vmul.f32 %v6003, 2.1237322e-06
    %v6005 = vadd.f32 %v6004, 0.00028619796
    %v6006 = vmul.f32 %v6003, %v6005
    %v6007 = vadd.f32 %v6006, 0.0036580483
    %v6008 = vmul.f32 %v6003, %v6007
    %v6009 = vadd.f32 %v6008, 0.05243302
    %v6010 = vmul.f32 %v6003, %v6009
    %v6011 = vadd.f32 %v6010, 0.18741608
    %v6012 = vmul.f32 %v6003, %v6011
    %v6013 = vadd.f32 %v6012, 1.1283791
    %v6014 = vmul.f32 %v1467, %v6013
    %v6015 = vmul.f32 %v6003, 3.8918573e-05
    %v6016 = vadd.f32 %v6015, 0.001143296
    %v6017 = vmul.f32 %v6003, %v6016
    %v6018 = vadd.f32 %v6017, 0.014752088
    %v6019 = vmul.f32 %v6003, %v6018
    %v6020 = vadd.f32 %v6019, 0.112945676
    %v6021 = vmul.f32 %v6003, %v6020
    %v6022 = vadd.f32 %v6021, 0.4994258
    %v6023 = vmul.f32 %v6003, %v6022
    %v6024 = vadd.f32 %v6023, 1.0
    %v6025 = vrcp.pop %v6024
    %v6026 = vmul.f32 %v6024, %v6025
    %v6027 = vsub.f32 1.0, %v6026
    %v6028 = vmul.f32 %v6025, %v6027
    %v6029 = vadd.f32 %v6025, %v6028
    %vm6030 = vweird.f32 %v6024
    %vm6031 = vweird.f32 %v6025
    %vm6032 = vmor %vm6030, %vm6031
    %v6033 = vsel %vm6032, %v6025, %v6029
    %v6034 = vand.u32 2147483647, %v6024
    %vm6035 = vcmp.eq.f32.partialorder %v6034, 8.507059e+37
    %v6036 = vand.u32 %v6024, 2147483648
    %v6037 = vor.u32 1.1754944e-38, %v6036
    %v6038 = vsel %vm6035, %v6037, %v6033
    %v6039 = vmul.f32 %v6014, %v6038
    %v6040 = vmin.f32 %v6039, 1.0
    %v6041 = vmax.f32 %v6040, -1.0
    %v6042 = vmul.f32 %v1468, %v1468
    %v6043 = vmin.f32 16.0, %v6042
    %v6044 = vmul.f32 %v6043, 2.1237322e-06
    %v6045 = vadd.f32 %v6044, 0.00028619796
    %v6046 = vmul.f32 %v6043, %v6045
    %v6047 = vadd.f32 %v6046, 0.0036580483
    %v6048 = vmul.f32 %v6043, %v6047
    %v6049 = vadd.f32 %v6048, 0.05243302
    %v6050 = vmul.f32 %v6043, %v6049
    %v6051 = vadd.f32 %v6050, 0.18741608
    %v6052 = vmul.f32 %v6043, %v6051
    %v6053 = vadd.f32 %v6052, 1.1283791
    %v6054 = vmul.f32 %v1468, %v6053
    %v6055 = vmul.f32 %v6043, 3.8918573e-05
    %v6056 = vadd.f32 %v6055, 0.001143296
    %v6057 = vmul.f32 %v6043, %v6056
    %v6058 = vadd.f32 %v6057, 0.014752088
    %v6059 = vmul.f32 %v6043, %v6058
    %v6060 = vadd.f32 %v6059, 0.112945676
    %v6061 = vmul.f32 %v6043, %v6060
    %v6062 = vadd.f32 %v6061, 0.4994258
    %v6063 = vmul.f32 %v6043, %v6062
    %v6064 = vadd.f32 %v6063, 1.0
    %v6065 = vrcp.pop %v6064
    %v6066 = vmul.f32 %v6064, %v6065
    %v6067 = vsub.f32 1.0, %v6066
    %v6068 = vmul.f32 %v6065, %v6067
    %v6069 = vadd.f32 %v6065, %v6068
    %vm6070 = vweird.f32 %v6064
    %vm6071 = vweird.f32 %v6065
    %vm6072 = vmor %vm6070, %vm6071
    %v6073 = vsel %vm6072, %v6065, %v6069
    %v6074 = vand.u32 2147483647, %v6064
    %vm6075 = vcmp.eq.f32.partialorder %v6074, 8.507059e+37
    %v6076 = vand.u32 %v6064, 2147483648
    %v6077 = vor.u32 1.1754944e-38, %v6076
    %v6078 = vsel %vm6075, %v6077, %v6073
    %v6079 = vmul.f32 %v6054, %v6078
    %v6080 = vmin.f32 %v6079, 1.0
    %v6081 = vmax.f32 %v6080, -1.0
    %v6082 = vmul.f32 %v1469, %v1469
    %v6083 = vmin.f32 16.0, %v6082
    %v6084 = vmul.f32 %v6083, 2.1237322e-06
    %v6085 = vadd.f32 %v6084, 0.00028619796
    %v6086 = vmul.f32 %v6083, %v6085
    %v6087 = vadd.f32 %v6086, 0.0036580483
    %v6088 = vmul.f32 %v6083, %v6087
    %v6089 = vadd.f32 %v6088, 0.05243302
    %v6090 = vmul.f32 %v6083, %v6089
    %v6091 = vadd.f32 %v6090, 0.18741608
    %v6092 = vmul.f32 %v6083, %v6091
    %v6093 = vadd.f32 %v6092, 1.1283791
    %v6094 = vmul.f32 %v1469, %v6093
    %v6095 = vmul.f32 %v6083, 3.8918573e-05
    %v6096 = vadd.f32 %v6095, 0.001143296
    %v6097 = vmul.f32 %v6083, %v6096
    %v6098 = vadd.f32 %v6097, 0.014752088
    %v6099 = vmul.f32 %v6083, %v6098
    %v6100 = vadd.f32 %v6099, 0.112945676
    %v6101 = vmul.f32 %v6083, %v6100
    %v6102 = vadd.f32 %v6101, 0.4994258
    %v6103 = vmul.f32 %v6083, %v6102
    %v6104 = vadd.f32 %v6103, 1.0
    %v6105 = vrcp.pop %v6104
    %v6106 = vmul.f32 %v6104, %v6105
    %v6107 = vsub.f32 1.0, %v6106
    %v6108 = vmul.f32 %v6105, %v6107
    %v6109 = vadd.f32 %v6105, %v6108
    %vm6110 = vweird.f32 %v6104
    %vm6111 = vweird.f32 %v6105
    %vm6112 = vmor %vm6110, %vm6111
    %v6113 = vsel %vm6112, %v6105, %v6109
    %v6114 = vand.u32 2147483647, %v6104
    %vm6115 = vcmp.eq.f32.partialorder %v6114, 8.507059e+37
    %v6116 = vand.u32 %v6104, 2147483648
    %v6117 = vor.u32 1.1754944e-38, %v6116
    %v6118 = vsel %vm6115, %v6117, %v6113
    %v6119 = vmul.f32 %v6094, %v6118
    %v6120 = vmin.f32 %v6119, 1.0
    %v6121 = vmax.f32 %v6120, -1.0
    %v6122 = vmul.f32 %v1470, %v1470
    %v6123 = vmin.f32 16.0, %v6122
    %v6124 = vmul.f32 %v6123, 2.1237322e-06
    %v6125 = vadd.f32 %v6124, 0.00028619796
    %v6126 = vmul.f32 %v6123, %v6125
    %v6127 = vadd.f32 %v6126, 0.0036580483
    %v6128 = vmul.f32 %v6123, %v6127
    %v6129 = vadd.f32 %v6128, 0.05243302
    %v6130 = vmul.f32 %v6123, %v6129
    %v6131 = vadd.f32 %v6130, 0.18741608
    %v6132 = vmul.f32 %v6123, %v6131
    %v6133 = vadd.f32 %v6132, 1.1283791
    %v6134 = vmul.f32 %v1470, %v6133
    %v6135 = vmul.f32 %v6123, 3.8918573e-05
    %v6136 = vadd.f32 %v6135, 0.001143296
    %v6137 = vmul.f32 %v6123, %v6136
    %v6138 = vadd.f32 %v6137, 0.014752088
    %v6139 = vmul.f32 %v6123, %v6138
    %v6140 = vadd.f32 %v6139, 0.112945676
    %v6141 = vmul.f32 %v6123, %v6140
    %v6142 = vadd.f32 %v6141, 0.4994258
    %v6143 = vmul.f32 %v6123, %v6142
    %v6144 = vadd.f32 %v6143, 1.0
    %v6145 = vrcp.pop %v6144
    %v6146 = vmul.f32 %v6144, %v6145
    %v6147 = vsub.f32 1.0, %v6146
    %v6148 = vmul.f32 %v6145, %v6147
    %v6149 = vadd.f32 %v6145, %v6148
    %vm6150 = vweird.f32 %v6144
    %vm6151 = vweird.f32 %v6145
    %vm6152 = vmor %vm6150, %vm6151
    %v6153 = vsel %vm6152, %v6145, %v6149
    %v6154 = vand.u32 2147483647, %v6144
    %vm6155 = vcmp.eq.f32.partialorder %v6154, 8.507059e+37
    %v6156 = vand.u32 %v6144, 2147483648
    %v6157 = vor.u32 1.1754944e-38, %v6156
    %v6158 = vsel %vm6155, %v6157, %v6153
    %v6159 = vmul.f32 %v6134, %v6158
    %v6160 = vmin.f32 %v6159, 1.0
    %v6161 = vmax.f32 %v6160, -1.0
    %v6162 = vmul.f32 %v1471, %v1471
    %v6163 = vmin.f32 16.0, %v6162
    %v6164 = vmul.f32 %v6163, 2.1237322e-06
    %v6165 = vadd.f32 %v6164, 0.00028619796
    %v6166 = vmul.f32 %v6163, %v6165
    %v6167 = vadd.f32 %v6166, 0.0036580483
    %v6168 = vmul.f32 %v6163, %v6167
    %v6169 = vadd.f32 %v6168, 0.05243302
    %v6170 = vmul.f32 %v6163, %v6169
    %v6171 = vadd.f32 %v6170, 0.18741608
    %v6172 = vmul.f32 %v6163, %v6171
    %v6173 = vadd.f32 %v6172, 1.1283791
    %v6174 = vmul.f32 %v1471, %v6173
    %v6175 = vmul.f32 %v6163, 3.8918573e-05
    %v6176 = vadd.f32 %v6175, 0.001143296
    %v6177 = vmul.f32 %v6163, %v6176
    %v6178 = vadd.f32 %v6177, 0.014752088
    %v6179 = vmul.f32 %v6163, %v6178
    %v6180 = vadd.f32 %v6179, 0.112945676
    %v6181 = vmul.f32 %v6163, %v6180
    %v6182 = vadd.f32 %v6181, 0.4994258
    %v6183 = vmul.f32 %v6163, %v6182
    %v6184 = vadd.f32 %v6183, 1.0
    %v6185 = vrcp.pop %v6184
    %v6186 = vmul.f32 %v6184, %v6185
    %v6187 = vsub.f32 1.0, %v6186
    %v6188 = vmul.f32 %v6185, %v6187
    %v6189 = vadd.f32 %v6185, %v6188
    %vm6190 = vweird.f32 %v6184
    %vm6191 = vweird.f32 %v6185
    %vm6192 = vmor %vm6190, %vm6191
    %v6193 = vsel %vm6192, %v6185, %v6189
    %v6194 = vand.u32 2147483647, %v6184
    %vm6195 = vcmp.eq.f32.partialorder %v6194, 8.507059e+37
    %v6196 = vand.u32 %v6184, 2147483648
    %v6197 = vor.u32 1.1754944e-38, %v6196
    %v6198 = vsel %vm6195, %v6197, %v6193
    %v6199 = vmul.f32 %v6174, %v6198
    %v6200 = vmin.f32 %v6199, 1.0
    %v6201 = vmax.f32 %v6200, -1.0
    %v6202 = vmul.f32 %v1472, %v1472
    %v6203 = vmin.f32 16.0, %v6202
    %v6204 = vmul.f32 %v6203, 2.1237322e-06
    %v6205 = vadd.f32 %v6204, 0.00028619796
    %v6206 = vmul.f32 %v6203, %v6205
    %v6207 = vadd.f32 %v6206, 0.0036580483
    %v6208 = vmul.f32 %v6203, %v6207
    %v6209 = vadd.f32 %v6208, 0.05243302
    %v6210 = vmul.f32 %v6203, %v6209
    %v6211 = vadd.f32 %v6210, 0.18741608
    %v6212 = vmul.f32 %v6203, %v6211
    %v6213 = vadd.f32 %v6212, 1.1283791
    %v6214 = vmul.f32 %v1472, %v6213
    %v6215 = vmul.f32 %v6203, 3.8918573e-05
    %v6216 = vadd.f32 %v6215, 0.001143296
    %v6217 = vmul.f32 %v6203, %v6216
    %v6218 = vadd.f32 %v6217, 0.014752088
    %v6219 = vmul.f32 %v6203, %v6218
    %v6220 = vadd.f32 %v6219, 0.112945676
    %v6221 = vmul.f32 %v6203, %v6220
    %v6222 = vadd.f32 %v6221, 0.4994258
    %v6223 = vmul.f32 %v6203, %v6222
    %v6224 = vadd.f32 %v6223, 1.0
    %v6225 = vrcp.pop %v6224
    %v6226 = vmul.f32 %v6224, %v6225
    %v6227 = vsub.f32 1.0, %v6226
    %v6228 = vmul.f32 %v6225, %v6227
    %v6229 = vadd.f32 %v6225, %v6228
    %vm6230 = vweird.f32 %v6224
    %vm6231 = vweird.f32 %v6225
    %vm6232 = vmor %vm6230, %vm6231
    %v6233 = vsel %vm6232, %v6225, %v6229
    %v6234 = vand.u32 2147483647, %v6224
    %vm6235 = vcmp.eq.f32.partialorder %v6234, 8.507059e+37
    %v6236 = vand.u32 %v6224, 2147483648
    %v6237 = vor.u32 1.1754944e-38, %v6236
    %v6238 = vsel %vm6235, %v6237, %v6233
    %v6239 = vmul.f32 %v6214, %v6238
    %v6240 = vmin.f32 %v6239, 1.0
    %v6241 = vmax.f32 %v6240, -1.0
    %v6242 = vmul.f32 %v1473, %v1473
    %v6243 = vmin.f32 16.0, %v6242
    %v6244 = vmul.f32 %v6243, 2.1237322e-06
    %v6245 = vadd.f32 %v6244, 0.00028619796
    %v6246 = vmul.f32 %v6243, %v6245
    %v6247 = vadd.f32 %v6246, 0.0036580483
    %v6248 = vmul.f32 %v6243, %v6247
    %v6249 = vadd.f32 %v6248, 0.05243302
    %v6250 = vmul.f32 %v6243, %v6249
    %v6251 = vadd.f32 %v6250, 0.18741608
    %v6252 = vmul.f32 %v6243, %v6251
    %v6253 = vadd.f32 %v6252, 1.1283791
    %v6254 = vmul.f32 %v1473, %v6253
    %v6255 = vmul.f32 %v6243, 3.8918573e-05
    %v6256 = vadd.f32 %v6255, 0.001143296
    %v6257 = vmul.f32 %v6243, %v6256
    %v6258 = vadd.f32 %v6257, 0.014752088
    %v6259 = vmul.f32 %v6243, %v6258
    %v6260 = vadd.f32 %v6259, 0.112945676
    %v6261 = vmul.f32 %v6243, %v6260
    %v6262 = vadd.f32 %v6261, 0.4994258
    %v6263 = vmul.f32 %v6243, %v6262
    %v6264 = vadd.f32 %v6263, 1.0
    %v6265 = vrcp.pop %v6264
    %v6266 = vmul.f32 %v6264, %v6265
    %v6267 = vsub.f32 1.0, %v6266
    %v6268 = vmul.f32 %v6265, %v6267
    %v6269 = vadd.f32 %v6265, %v6268
    %vm6270 = vweird.f32 %v6264
    %vm6271 = vweird.f32 %v6265
    %vm6272 = vmor %vm6270, %vm6271
    %v6273 = vsel %vm6272, %v6265, %v6269
    %v6274 = vand.u32 2147483647, %v6264
    %vm6275 = vcmp.eq.f32.partialorder %v6274, 8.507059e+37
    %v6276 = vand.u32 %v6264, 2147483648
    %v6277 = vor.u32 1.1754944e-38, %v6276
    %v6278 = vsel %vm6275, %v6277, %v6273
    %v6279 = vmul.f32 %v6254, %v6278
    %v6280 = vmin.f32 %v6279, 1.0
    %v6281 = vmax.f32 %v6280, -1.0
    %v6282 = vmul.f32 %v1474, %v1474
    %v6283 = vmin.f32 16.0, %v6282
    %v6284 = vmul.f32 %v6283, 2.1237322e-06
    %v6285 = vadd.f32 %v6284, 0.00028619796
    %v6286 = vmul.f32 %v6283, %v6285
    %v6287 = vadd.f32 %v6286, 0.0036580483
    %v6288 = vmul.f32 %v6283, %v6287
    %v6289 = vadd.f32 %v6288, 0.05243302
    %v6290 = vmul.f32 %v6283, %v6289
    %v6291 = vadd.f32 %v6290, 0.18741608
    %v6292 = vmul.f32 %v6283, %v6291
    %v6293 = vadd.f32 %v6292, 1.1283791
    %v6294 = vmul.f32 %v1474, %v6293
    %v6295 = vmul.f32 %v6283, 3.8918573e-05
    %v6296 = vadd.f32 %v6295, 0.001143296
    %v6297 = vmul.f32 %v6283, %v6296
    %v6298 = vadd.f32 %v6297, 0.014752088
    %v6299 = vmul.f32 %v6283, %v6298
    %v6300 = vadd.f32 %v6299, 0.112945676
    %v6301 = vmul.f32 %v6283, %v6300
    %v6302 = vadd.f32 %v6301, 0.4994258
    %v6303 = vmul.f32 %v6283, %v6302
    %v6304 = vadd.f32 %v6303, 1.0
    %v6305 = vrcp.pop %v6304
    %v6306 = vmul.f32 %v6304, %v6305
    %v6307 = vsub.f32 1.0, %v6306
    %v6308 = vmul.f32 %v6305, %v6307
    %v6309 = vadd.f32 %v6305, %v6308
    %vm6310 = vweird.f32 %v6304
    %vm6311 = vweird.f32 %v6305
    %vm6312 = vmor %vm6310, %vm6311
    %v6313 = vsel %vm6312, %v6305, %v6309
    %v6314 = vand.u32 2147483647, %v6304
    %vm6315 = vcmp.eq.f32.partialorder %v6314, 8.507059e+37
    %v6316 = vand.u32 %v6304, 2147483648
    %v6317 = vor.u32 1.1754944e-38, %v6316
    %v6318 = vsel %vm6315, %v6317, %v6313
    %v6319 = vmul.f32 %v6294, %v6318
    %v6320 = vmin.f32 %v6319, 1.0
    %v6321 = vmax.f32 %v6320, -1.0
    %v6322 = vmul.f32 %v1475, %v1475
    %v6323 = vmin.f32 16.0, %v6322
    %v6324 = vmul.f32 %v6323, 2.1237322e-06
    %v6325 = vadd.f32 %v6324, 0.00028619796
    %v6326 = vmul.f32 %v6323, %v6325
    %v6327 = vadd.f32 %v6326, 0.0036580483
    %v6328 = vmul.f32 %v6323, %v6327
    %v6329 = vadd.f32 %v6328, 0.05243302
    %v6330 = vmul.f32 %v6323, %v6329
    %v6331 = vadd.f32 %v6330, 0.18741608
    %v6332 = vmul.f32 %v6323, %v6331
    %v6333 = vadd.f32 %v6332, 1.1283791
    %v6334 = vmul.f32 %v1475, %v6333
    %v6335 = vmul.f32 %v6323, 3.8918573e-05
    %v6336 = vadd.f32 %v6335, 0.001143296
    %v6337 = vmul.f32 %v6323, %v6336
    %v6338 = vadd.f32 %v6337, 0.014752088
    %v6339 = vmul.f32 %v6323, %v6338
    %v6340 = vadd.f32 %v6339, 0.112945676
    %v6341 = vmul.f32 %v6323, %v6340
    %v6342 = vadd.f32 %v6341, 0.4994258
    %v6343 = vmul.f32 %v6323, %v6342
    %v6344 = vadd.f32 %v6343, 1.0
    %v6345 = vrcp.pop %v6344
    %v6346 = vmul.f32 %v6344, %v6345
    %v6347 = vsub.f32 1.0, %v6346
    %v6348 = vmul.f32 %v6345, %v6347
    %v6349 = vadd.f32 %v6345, %v6348
    %vm6350 = vweird.f32 %v6344
    %vm6351 = vweird.f32 %v6345
    %vm6352 = vmor %vm6350, %vm6351
    %v6353 = vsel %vm6352, %v6345, %v6349
    %v6354 = vand.u32 2147483647, %v6344
    %vm6355 = vcmp.eq.f32.partialorder %v6354, 8.507059e+37
    %v6356 = vand.u32 %v6344, 2147483648
    %v6357 = vor.u32 1.1754944e-38, %v6356
    %v6358 = vsel %vm6355, %v6357, %v6353
    %v6359 = vmul.f32 %v6334, %v6358
    %v6360 = vmin.f32 %v6359, 1.0
    %v6361 = vmax.f32 %v6360, -1.0
    %v6362 = vmul.f32 %v1476, %v1476
    %v6363 = vmin.f32 16.0, %v6362
    %v6364 = vmul.f32 %v6363, 2.1237322e-06
    %v6365 = vadd.f32 %v6364, 0.00028619796
    %v6366 = vmul.f32 %v6363, %v6365
    %v6367 = vadd.f32 %v6366, 0.0036580483
    %v6368 = vmul.f32 %v6363, %v6367
    %v6369 = vadd.f32 %v6368, 0.05243302
    %v6370 = vmul.f32 %v6363, %v6369
    %v6371 = vadd.f32 %v6370, 0.18741608
    %v6372 = vmul.f32 %v6363, %v6371
    %v6373 = vadd.f32 %v6372, 1.1283791
    %v6374 = vmul.f32 %v1476, %v6373
    %v6375 = vmul.f32 %v6363, 3.8918573e-05
    %v6376 = vadd.f32 %v6375, 0.001143296
    %v6377 = vmul.f32 %v6363, %v6376
    %v6378 = vadd.f32 %v6377, 0.014752088
    %v6379 = vmul.f32 %v6363, %v6378
    %v6380 = vadd.f32 %v6379, 0.112945676
    %v6381 = vmul.f32 %v6363, %v6380
    %v6382 = vadd.f32 %v6381, 0.4994258
    %v6383 = vmul.f32 %v6363, %v6382
    %v6384 = vadd.f32 %v6383, 1.0
    %v6385 = vrcp.pop %v6384
    %v6386 = vmul.f32 %v6384, %v6385
    %v6387 = vsub.f32 1.0, %v6386
    %v6388 = vmul.f32 %v6385, %v6387
    %v6389 = vadd.f32 %v6385, %v6388
    %vm6390 = vweird.f32 %v6384
    %vm6391 = vweird.f32 %v6385
    %vm6392 = vmor %vm6390, %vm6391
    %v6393 = vsel %vm6392, %v6385, %v6389
    %v6394 = vand.u32 2147483647, %v6384
    %vm6395 = vcmp.eq.f32.partialorder %v6394, 8.507059e+37
    %v6396 = vand.u32 %v6384, 2147483648
    %v6397 = vor.u32 1.1754944e-38, %v6396
    %v6398 = vsel %vm6395, %v6397, %v6393
    %v6399 = vmul.f32 %v6374, %v6398
    %v6400 = vmin.f32 %v6399, 1.0
    %v6401 = vmax.f32 %v6400, -1.0
    %v6402 = vmul.f32 %v1477, %v1477
    %v6403 = vmin.f32 16.0, %v6402
    %v6404 = vmul.f32 %v6403, 2.1237322e-06
    %v6405 = vadd.f32 %v6404, 0.00028619796
    %v6406 = vmul.f32 %v6403, %v6405
    %v6407 = vadd.f32 %v6406, 0.0036580483
    %v6408 = vmul.f32 %v6403, %v6407
    %v6409 = vadd.f32 %v6408, 0.05243302
    %v6410 = vmul.f32 %v6403, %v6409
    %v6411 = vadd.f32 %v6410, 0.18741608
    %v6412 = vmul.f32 %v6403, %v6411
    %v6413 = vadd.f32 %v6412, 1.1283791
    %v6414 = vmul.f32 %v1477, %v6413
    %v6415 = vmul.f32 %v6403, 3.8918573e-05
    %v6416 = vadd.f32 %v6415, 0.001143296
    %v6417 = vmul.f32 %v6403, %v6416
    %v6418 = vadd.f32 %v6417, 0.014752088
    %v6419 = vmul.f32 %v6403, %v6418
    %v6420 = vadd.f32 %v6419, 0.112945676
    %v6421 = vmul.f32 %v6403, %v6420
    %v6422 = vadd.f32 %v6421, 0.4994258
    %v6423 = vmul.f32 %v6403, %v6422
    %v6424 = vadd.f32 %v6423, 1.0
    %v6425 = vrcp.pop %v6424
    %v6426 = vmul.f32 %v6424, %v6425
    %v6427 = vsub.f32 1.0, %v6426
    %v6428 = vmul.f32 %v6425, %v6427
    %v6429 = vadd.f32 %v6425, %v6428
    %vm6430 = vweird.f32 %v6424
    %vm6431 = vweird.f32 %v6425
    %vm6432 = vmor %vm6430, %vm6431
    %v6433 = vsel %vm6432, %v6425, %v6429
    %v6434 = vand.u32 2147483647, %v6424
    %vm6435 = vcmp.eq.f32.partialorder %v6434, 8.507059e+37
    %v6436 = vand.u32 %v6424, 2147483648
    %v6437 = vor.u32 1.1754944e-38, %v6436
    %v6438 = vsel %vm6435, %v6437, %v6433
    %v6439 = vmul.f32 %v6414, %v6438
    %v6440 = vmin.f32 %v6439, 1.0
    %v6441 = vmax.f32 %v6440, -1.0
    %v6442 = vmul.f32 %v1478, %v1478
    %v6443 = vmin.f32 16.0, %v6442
    %v6444 = vmul.f32 %v6443, 2.1237322e-06
    %v6445 = vadd.f32 %v6444, 0.00028619796
    %v6446 = vmul.f32 %v6443, %v6445
    %v6447 = vadd.f32 %v6446, 0.0036580483
    %v6448 = vmul.f32 %v6443, %v6447
    %v6449 = vadd.f32 %v6448, 0.05243302
    %v6450 = vmul.f32 %v6443, %v6449
    %v6451 = vadd.f32 %v6450, 0.18741608
    %v6452 = vmul.f32 %v6443, %v6451
    %v6453 = vadd.f32 %v6452, 1.1283791
    %v6454 = vmul.f32 %v1478, %v6453
    %v6455 = vmul.f32 %v6443, 3.8918573e-05
    %v6456 = vadd.f32 %v6455, 0.001143296
    %v6457 = vmul.f32 %v6443, %v6456
    %v6458 = vadd.f32 %v6457, 0.014752088
    %v6459 = vmul.f32 %v6443, %v6458
    %v6460 = vadd.f32 %v6459, 0.112945676
    %v6461 = vmul.f32 %v6443, %v6460
    %v6462 = vadd.f32 %v6461, 0.4994258
    %v6463 = vmul.f32 %v6443, %v6462
    %v6464 = vadd.f32 %v6463, 1.0
    %v6465 = vrcp.pop %v6464
    %v6466 = vmul.f32 %v6464, %v6465
    %v6467 = vsub.f32 1.0, %v6466
    %v6468 = vmul.f32 %v6465, %v6467
    %v6469 = vadd.f32 %v6465, %v6468
    %vm6470 = vweird.f32 %v6464
    %vm6471 = vweird.f32 %v6465
    %vm6472 = vmor %vm6470, %vm6471
    %v6473 = vsel %vm6472, %v6465, %v6469
    %v6474 = vand.u32 2147483647, %v6464
    %vm6475 = vcmp.eq.f32.partialorder %v6474, 8.507059e+37
    %v6476 = vand.u32 %v6464, 2147483648
    %v6477 = vor.u32 1.1754944e-38, %v6476
    %v6478 = vsel %vm6475, %v6477, %v6473
    %v6479 = vmul.f32 %v6454, %v6478
    %v6480 = vmin.f32 %v6479, 1.0
    %v6481 = vmax.f32 %v6480, -1.0
    %v6482 = vmul.f32 %v1479, %v1479
    %v6483 = vmin.f32 16.0, %v6482
    %v6484 = vmul.f32 %v6483, 2.1237322e-06
    %v6485 = vadd.f32 %v6484, 0.00028619796
    %v6486 = vmul.f32 %v6483, %v6485
    %v6487 = vadd.f32 %v6486, 0.0036580483
    %v6488 = vmul.f32 %v6483, %v6487
    %v6489 = vadd.f32 %v6488, 0.05243302
    %v6490 = vmul.f32 %v6483, %v6489
    %v6491 = vadd.f32 %v6490, 0.18741608
    %v6492 = vmul.f32 %v6483, %v6491
    %v6493 = vadd.f32 %v6492, 1.1283791
    %v6494 = vmul.f32 %v1479, %v6493
    %v6495 = vmul.f32 %v6483, 3.8918573e-05
    %v6496 = vadd.f32 %v6495, 0.001143296
    %v6497 = vmul.f32 %v6483, %v6496
    %v6498 = vadd.f32 %v6497, 0.014752088
    %v6499 = vmul.f32 %v6483, %v6498
    %v6500 = vadd.f32 %v6499, 0.112945676
    %v6501 = vmul.f32 %v6483, %v6500
    %v6502 = vadd.f32 %v6501, 0.4994258
    %v6503 = vmul.f32 %v6483, %v6502
    %v6504 = vadd.f32 %v6503, 1.0
    %v6505 = vrcp.pop %v6504
    %v6506 = vmul.f32 %v6504, %v6505
    %v6507 = vsub.f32 1.0, %v6506
    %v6508 = vmul.f32 %v6505, %v6507
    %v6509 = vadd.f32 %v6505, %v6508
    %vm6510 = vweird.f32 %v6504
    %vm6511 = vweird.f32 %v6505
    %vm6512 = vmor %vm6510, %vm6511
    %v6513 = vsel %vm6512, %v6505, %v6509
    %v6514 = vand.u32 2147483647, %v6504
    %vm6515 = vcmp.eq.f32.partialorder %v6514, 8.507059e+37
    %v6516 = vand.u32 %v6504, 2147483648
    %v6517 = vor.u32 1.1754944e-38, %v6516
    %v6518 = vsel %vm6515, %v6517, %v6513
    %v6519 = vmul.f32 %v6494, %v6518
    %v6520 = vmin.f32 %v6519, 1.0
    %v6521 = vmax.f32 %v6520, -1.0
    %v6522 = vmul.f32 %v1480, %v1480
    %v6523 = vmin.f32 16.0, %v6522
    %v6524 = vmul.f32 %v6523, 2.1237322e-06
    %v6525 = vadd.f32 %v6524, 0.00028619796
    %v6526 = vmul.f32 %v6523, %v6525
    %v6527 = vadd.f32 %v6526, 0.0036580483
    %v6528 = vmul.f32 %v6523, %v6527
    %v6529 = vadd.f32 %v6528, 0.05243302
    %v6530 = vmul.f32 %v6523, %v6529
    %v6531 = vadd.f32 %v6530, 0.18741608
    %v6532 = vmul.f32 %v6523, %v6531
    %v6533 = vadd.f32 %v6532, 1.1283791
    %v6534 = vmul.f32 %v1480, %v6533
    %v6535 = vmul.f32 %v6523, 3.8918573e-05
    %v6536 = vadd.f32 %v6535, 0.001143296
    %v6537 = vmul.f32 %v6523, %v6536
    %v6538 = vadd.f32 %v6537, 0.014752088
    %v6539 = vmul.f32 %v6523, %v6538
    %v6540 = vadd.f32 %v6539, 0.112945676
    %v6541 = vmul.f32 %v6523, %v6540
    %v6542 = vadd.f32 %v6541, 0.4994258
    %v6543 = vmul.f32 %v6523, %v6542
    %v6544 = vadd.f32 %v6543, 1.0
    %v6545 = vrcp.pop %v6544
    %v6546 = vmul.f32 %v6544, %v6545
    %v6547 = vsub.f32 1.0, %v6546
    %v6548 = vmul.f32 %v6545, %v6547
    %v6549 = vadd.f32 %v6545, %v6548
    %vm6550 = vweird.f32 %v6544
    %vm6551 = vweird.f32 %v6545
    %vm6552 = vmor %vm6550, %vm6551
    %v6553 = vsel %vm6552, %v6545, %v6549
    %v6554 = vand.u32 2147483647, %v6544
    %vm6555 = vcmp.eq.f32.partialorder %v6554, 8.507059e+37
    %v6556 = vand.u32 %v6544, 2147483648
    %v6557 = vor.u32 1.1754944e-38, %v6556
    %v6558 = vsel %vm6555, %v6557, %v6553
    %v6559 = vmul.f32 %v6534, %v6558
    %v6560 = vmin.f32 %v6559, 1.0
    %v6561 = vmax.f32 %v6560, -1.0
    %v6562 = vmul.f32 %v1481, %v1481
    %v6563 = vmin.f32 16.0, %v6562
    %v6564 = vmul.f32 %v6563, 2.1237322e-06
    %v6565 = vadd.f32 %v6564, 0.00028619796
    %v6566 = vmul.f32 %v6563, %v6565
    %v6567 = vadd.f32 %v6566, 0.0036580483
    %v6568 = vmul.f32 %v6563, %v6567
    %v6569 = vadd.f32 %v6568, 0.05243302
    %v6570 = vmul.f32 %v6563, %v6569
    %v6571 = vadd.f32 %v6570, 0.18741608
    %v6572 = vmul.f32 %v6563, %v6571
    %v6573 = vadd.f32 %v6572, 1.1283791
    %v6574 = vmul.f32 %v1481, %v6573
    %v6575 = vmul.f32 %v6563, 3.8918573e-05
    %v6576 = vadd.f32 %v6575, 0.001143296
    %v6577 = vmul.f32 %v6563, %v6576
    %v6578 = vadd.f32 %v6577, 0.014752088
    %v6579 = vmul.f32 %v6563, %v6578
    %v6580 = vadd.f32 %v6579, 0.112945676
    %v6581 = vmul.f32 %v6563, %v6580
    %v6582 = vadd.f32 %v6581, 0.4994258
    %v6583 = vmul.f32 %v6563, %v6582
    %v6584 = vadd.f32 %v6583, 1.0
    %v6585 = vrcp.pop %v6584
    %v6586 = vmul.f32 %v6584, %v6585
    %v6587 = vsub.f32 1.0, %v6586
    %v6588 = vmul.f32 %v6585, %v6587
    %v6589 = vadd.f32 %v6585, %v6588
    %vm6590 = vweird.f32 %v6584
    %vm6591 = vweird.f32 %v6585
    %vm6592 = vmor %vm6590, %vm6591
    %v6593 = vsel %vm6592, %v6585, %v6589
    %v6594 = vand.u32 2147483647, %v6584
    %vm6595 = vcmp.eq.f32.partialorder %v6594, 8.507059e+37
    %v6596 = vand.u32 %v6584, 2147483648
    %v6597 = vor.u32 1.1754944e-38, %v6596
    %v6598 = vsel %vm6595, %v6597, %v6593
    %v6599 = vmul.f32 %v6574, %v6598
    %v6600 = vmin.f32 %v6599, 1.0
    %v6601 = vmax.f32 %v6600, -1.0
    %v6602 = vadd.f32 %v1521, 1.0
    %v6603 = vadd.f32 %v1561, 1.0
    %v6604 = vadd.f32 %v1601, 1.0
    %v6605 = vadd.f32 %v1641, 1.0
    %v6606 = vadd.f32 %v1681, 1.0
    %v6607 = vadd.f32 %v1721, 1.0
    %v6608 = vadd.f32 %v1761, 1.0
    %v6609 = vadd.f32 %v1801, 1.0
    %v6610 = vadd.f32 %v1841, 1.0
    %v6611 = vadd.f32 %v1881, 1.0
    %v6612 = vadd.f32 %v1921, 1.0
    %v6613 = vadd.f32 %v1961, 1.0
    %v6614 = vadd.f32 %v2001, 1.0
    %v6615 = vadd.f32 %v2041, 1.0
    %v6616 = vadd.f32 %v2081, 1.0
    %v6617 = vadd.f32 %v2121, 1.0
    %v6618 = vadd.f32 %v2161, 1.0
    %v6619 = vadd.f32 %v2201, 1.0
    %v6620 = vadd.f32 %v2241, 1.0
    %v6621 = vadd.f32 %v2281, 1.0
    %v6622 = vadd.f32 %v2321, 1.0
    %v6623 = vadd.f32 %v2361, 1.0
    %v6624 = vadd.f32 %v2401, 1.0
    %v6625 = vadd.f32 %v2441, 1.0
    %v6626 = vadd.f32 %v2481, 1.0
    %v6627 = vadd.f32 %v2521, 1.0
    %v6628 = vadd.f32 %v2561, 1.0
    %v6629 = vadd.f32 %v2601, 1.0
    %v6630 = vadd.f32 %v2641, 1.0
    %v6631 = vadd.f32 %v2681, 1.0
    %v6632 = vadd.f32 %v2721, 1.0
    %v6633 = vadd.f32 %v2761, 1.0
    %v6634 = vadd.f32 %v2801, 1.0
    %v6635 = vadd.f32 %v2841, 1.0
    %v6636 = vadd.f32 %v2881, 1.0
    %v6637 = vadd.f32 %v2921, 1.0
    %v6638 = vadd.f32 %v2961, 1.0
    %v6639 = vadd.f32 %v3001, 1.0
    %v6640 = vadd.f32 %v3041, 1.0
    %v6641 = vadd.f32 %v3081, 1.0
    %v6642 = vadd.f32 %v3121, 1.0
    %v6643 = vadd.f32 %v3161, 1.0
    %v6644 = vadd.f32 %v3201, 1.0
    %v6645 = vadd.f32 %v3241, 1.0
    %v6646 = vadd.f32 %v3281, 1.0
    %v6647 = vadd.f32 %v3321, 1.0
    %v6648 = vadd.f32 %v3361, 1.0
    %v6649 = vadd.f32 %v3401, 1.0
    %v6650 = vadd.f32 %v3441, 1.0
    %v6651 = vadd.f32 %v3481, 1.0
    %v6652 = vadd.f32 %v3521, 1.0
    %v6653 = vadd.f32 %v3561, 1.0
    %v6654 = vadd.f32 %v3601, 1.0
    %v6655 = vadd.f32 %v3641, 1.0
    %v6656 = vadd.f32 %v3681, 1.0
    %v6657 = vadd.f32 %v3721, 1.0
    %v6658 = vadd.f32 %v3761, 1.0
    %v6659 = vadd.f32 %v3801, 1.0
    %v6660 = vadd.f32 %v3841, 1.0
    %v6661 = vadd.f32 %v3881, 1.0
    %v6662 = vadd.f32 %v3921, 1.0
    %v6663 = vadd.f32 %v3961, 1.0
    %v6664 = vadd.f32 %v4001, 1.0
    %v6665 = vadd.f32 %v4041, 1.0
    %v6666 = vadd.f32 %v4081, 1.0
    %v6667 = vadd.f32 %v4121, 1.0
    %v6668 = vadd.f32 %v4161, 1.0
    %v6669 = vadd.f32 %v4201, 1.0
    %v6670 = vadd.f32 %v4241, 1.0
    %v6671 = vadd.f32 %v4281, 1.0
    %v6672 = vadd.f32 %v4321, 1.0
    %v6673 = vadd.f32 %v4361, 1.0
    %v6674 = vadd.f32 %v4401, 1.0
    %v6675 = vadd.f32 %v4441, 1.0
    %v6676 = vadd.f32 %v4481, 1.0
    %v6677 = vadd.f32 %v4521, 1.0
    %v6678 = vadd.f32 %v4561, 1.0
    %v6679 = vadd.f32 %v4601, 1.0
    %v6680 = vadd.f32 %v4641, 1.0
    %v6681 = vadd.f32 %v4681, 1.0
    %v6682 = vadd.f32 %v4721, 1.0
    %v6683 = vadd.f32 %v4761, 1.0
    %v6684 = vadd.f32 %v4801, 1.0
    %v6685 = vadd.f32 %v4841, 1.0
    %v6686 = vadd.f32 %v4881, 1.0
    %v6687 = vadd.f32 %v4921, 1.0
    %v6688 = vadd.f32 %v4961, 1.0
    %v6689 = vadd.f32 %v5001, 1.0
    %v6690 = vadd.f32 %v5041, 1.0
    %v6691 = vadd.f32 %v5081, 1.0
    %v6692 = vadd.f32 %v5121, 1.0
    %v6693 = vadd.f32 %v5161, 1.0
    %v6694 = vadd.f32 %v5201, 1.0
    %v6695 = vadd.f32 %v5241, 1.0
    %v6696 = vadd.f32 %v5281, 1.0
    %v6697 = vadd.f32 %v5321, 1.0
    %v6698 = vadd.f32 %v5361, 1.0
    %v6699 = vadd.f32 %v5401, 1.0
    %v6700 = vadd.f32 %v5441, 1.0
    %v6701 = vadd.f32 %v5481, 1.0
    %v6702 = vadd.f32 %v5521, 1.0
    %v6703 = vadd.f32 %v5561, 1.0
    %v6704 = vadd.f32 %v5601, 1.0
    %v6705 = vadd.f32 %v5641, 1.0
    %v6706 = vadd.f32 %v5681, 1.0
    %v6707 = vadd.f32 %v5721, 1.0
    %v6708 = vadd.f32 %v5761, 1.0
    %v6709 = vadd.f32 %v5801, 1.0
    %v6710 = vadd.f32 %v5841, 1.0
    %v6711 = vadd.f32 %v5881, 1.0
    %v6712 = vadd.f32 %v5921, 1.0
    %v6713 = vadd.f32 %v5961, 1.0
    %v6714 = vadd.f32 %v6001, 1.0
    %v6715 = vadd.f32 %v6041, 1.0
    %v6716 = vadd.f32 %v6081, 1.0
    %v6717 = vadd.f32 %v6121, 1.0
    %v6718 = vadd.f32 %v6161, 1.0
    %v6719 = vadd.f32 %v6201, 1.0
    %v6720 = vadd.f32 %v6241, 1.0
    %v6721 = vadd.f32 %v6281, 1.0
    %v6722 = vadd.f32 %v6321, 1.0
    %v6723 = vadd.f32 %v6361, 1.0
    %v6724 = vadd.f32 %v6401, 1.0
    %v6725 = vadd.f32 %v6441, 1.0
    %v6726 = vadd.f32 %v6481, 1.0
    %v6727 = vadd.f32 %v6521, 1.0
    %v6728 = vadd.f32 %v6561, 1.0
    %v6729 = vadd.f32 %v6601, 1.0
    %v6730 = vmul.f32 %v1226, %v6602
    %v6731 = vmul.f32 %v1227, %v6603
    %v6732 = vmul.f32 %v1228, %v6604
    %v6733 = vmul.f32 %v1229, %v6605
    %v6734 = vmul.f32 %v1230, %v6606
    %v6735 = vmul.f32 %v1231, %v6607
    %v6736 = vmul.f32 %v1232, %v6608
    %v6737 = vmul.f32 %v1233, %v6609
    %v6738 = vmul.f32 %v1234, %v6610
    %v6739 = vmul.f32 %v1235, %v6611
    %v6740 = vmul.f32 %v1236, %v6612
    %v6741 = vmul.f32 %v1237, %v6613
    %v6742 = vmul.f32 %v1238, %v6614
    %v6743 = vmul.f32 %v1239, %v6615
    %v6744 = vmul.f32 %v1240, %v6616
    %v6745 = vmul.f32 %v1241, %v6617
    %v6746 = vmul.f32 %v1242, %v6618
    %v6747 = vmul.f32 %v1243, %v6619
    %v6748 = vmul.f32 %v1244, %v6620
    %v6749 = vmul.f32 %v1245, %v6621
    %v6750 = vmul.f32 %v1246, %v6622
    %v6751 = vmul.f32 %v1247, %v6623
    %v6752 = vmul.f32 %v1248, %v6624
    %v6753 = vmul.f32 %v1249, %v6625
    %v6754 = vmul.f32 %v1250, %v6626
    %v6755 = vmul.f32 %v1251, %v6627
    %v6756 = vmul.f32 %v1252, %v6628
    %v6757 = vmul.f32 %v1253, %v6629
    %v6758 = vmul.f32 %v1254, %v6630
    %v6759 = vmul.f32 %v1255, %v6631
    %v6760 = vmul.f32 %v1256, %v6632
    %v6761 = vmul.f32 %v1257, %v6633
    %v6762 = vmul.f32 %v1258, %v6634
    %v6763 = vmul.f32 %v1259, %v6635
    %v6764 = vmul.f32 %v1260, %v6636
    %v6765 = vmul.f32 %v1261, %v6637
    %v6766 = vmul.f32 %v1262, %v6638
    %v6767 = vmul.f32 %v1263, %v6639
    %v6768 = vmul.f32 %v1264, %v6640
    %v6769 = vmul.f32 %v1265, %v6641
    %v6770 = vmul.f32 %v1266, %v6642
    %v6771 = vmul.f32 %v1267, %v6643
    %v6772 = vmul.f32 %v1268, %v6644
    %v6773 = vmul.f32 %v1269, %v6645
    %v6774 = vmul.f32 %v1270, %v6646
    %v6775 = vmul.f32 %v1271, %v6647
    %v6776 = vmul.f32 %v1272, %v6648
    %v6777 = vmul.f32 %v1273, %v6649
    %v6778 = vmul.f32 %v1274, %v6650
    %v6779 = vmul.f32 %v1275, %v6651
    %v6780 = vmul.f32 %v1276, %v6652
    %v6781 = vmul.f32 %v1277, %v6653
    %v6782 = vmul.f32 %v1278, %v6654
    %v6783 = vmul.f32 %v1279, %v6655
    %v6784 = vmul.f32 %v1280, %v6656
    %v6785 = vmul.f32 %v1281, %v6657
    %v6786 = vmul.f32 %v1282, %v6658
    %v6787 = vmul.f32 %v1283, %v6659
    %v6788 = vmul.f32 %v1284, %v6660
    %v6789 = vmul.f32 %v1285, %v6661
    %v6790 = vmul.f32 %v1286, %v6662
    %v6791 = vmul.f32 %v1287, %v6663
    %v6792 = vmul.f32 %v1288, %v6664
    %v6793 = vmul.f32 %v1289, %v6665
    %v6794 = vmul.f32 %v1290, %v6666
    %v6795 = vmul.f32 %v1291, %v6667
    %v6796 = vmul.f32 %v1292, %v6668
    %v6797 = vmul.f32 %v1293, %v6669
    %v6798 = vmul.f32 %v1294, %v6670
    %v6799 = vmul.f32 %v1295, %v6671
    %v6800 = vmul.f32 %v1296, %v6672
    %v6801 = vmul.f32 %v1297, %v6673
    %v6802 = vmul.f32 %v1298, %v6674
    %v6803 = vmul.f32 %v1299, %v6675
    %v6804 = vmul.f32 %v1300, %v6676
    %v6805 = vmul.f32 %v1301, %v6677
    %v6806 = vmul.f32 %v1302, %v6678
    %v6807 = vmul.f32 %v1303, %v6679
    %v6808 = vmul.f32 %v1304, %v6680
    %v6809 = vmul.f32 %v1305, %v6681
    %v6810 = vmul.f32 %v1306, %v6682
    %v6811 = vmul.f32 %v1307, %v6683
    %v6812 = vmul.f32 %v1308, %v6684
    %v6813 = vmul.f32 %v1309, %v6685
    %v6814 = vmul.f32 %v1310, %v6686
    %v6815 = vmul.f32 %v1311, %v6687
    %v6816 = vmul.f32 %v1312, %v6688
    %v6817 = vmul.f32 %v1313, %v6689
    %v6818 = vmul.f32 %v1314, %v6690
    %v6819 = vmul.f32 %v1315, %v6691
    %v6820 = vmul.f32 %v1316, %v6692
    %v6821 = vmul.f32 %v1317, %v6693
    %v6822 = vmul.f32 %v1318, %v6694
    %v6823 = vmul.f32 %v1319, %v6695
    %v6824 = vmul.f32 %v1320, %v6696
    %v6825 = vmul.f32 %v1321, %v6697
    %v6826 = vmul.f32 %v1322, %v6698
    %v6827 = vmul.f32 %v1323, %v6699
    %v6828 = vmul.f32 %v1324, %v6700
    %v6829 = vmul.f32 %v1325, %v6701
    %v6830 = vmul.f32 %v1326, %v6702
    %v6831 = vmul.f32 %v1327, %v6703
    %v6832 = vmul.f32 %v1328, %v6704
    %v6833 = vmul.f32 %v1329, %v6705
    %v6834 = vmul.f32 %v1330, %v6706
    %v6835 = vmul.f32 %v1331, %v6707
    %v6836 = vmul.f32 %v1332, %v6708
    %v6837 = vmul.f32 %v1333, %v6709
    %v6838 = vmul.f32 %v1334, %v6710
    %v6839 = vmul.f32 %v1335, %v6711
    %v6840 = vmul.f32 %v1336, %v6712
    %v6841 = vmul.f32 %v1337, %v6713
    %v6842 = vmul.f32 %v1338, %v6714
    %v6843 = vmul.f32 %v1339, %v6715
    %v6844 = vmul.f32 %v1340, %v6716
    %v6845 = vmul.f32 %v1341, %v6717
    %v6846 = vmul.f32 %v1342, %v6718
    %v6847 = vmul.f32 %v1343, %v6719
    %v6848 = vmul.f32 %v1344, %v6720
    %v6849 = vmul.f32 %v1345, %v6721
    %v6850 = vmul.f32 %v1346, %v6722
    %v6851 = vmul.f32 %v1347, %v6723
    %v6852 = vmul.f32 %v1348, %v6724
    %v6853 = vmul.f32 %v1349, %v6725
    %v6854 = vmul.f32 %v1350, %v6726
    %v6855 = vmul.f32 %v1351, %v6727
    %v6856 = vmul.f32 %v1352, %v6728
    %v6857 = vmul.f32 %v1353, %v6729
    %v6858 = vld [vmem:[%s3] sm:$0xff]
    %v6859 = vld [vmem:[%s3 + $0x8] sm:$0xff]
    %v6860 = vld [vmem:[%s3 + $0x10] sm:$0xff]
    %v6861 = vld [vmem:[%s3 + $0x18] sm:$0xff]
    %v6862 = vld [vmem:[%s3 + $0x20] sm:$0xff]
    %v6863 = vld [vmem:[%s3 + $0x28] sm:$0xff]
    %v6864 = vld [vmem:[%s3 + $0x30] sm:$0xff]
    %v6865 = vld [vmem:[%s3 + $0x38] sm:$0xff]
    %v6866 = vld [vmem:[%s3 + $0x40] sm:$0xff]
    %v6867 = vld [vmem:[%s3 + $0x48] sm:$0xff]
    %v6868 = vld [vmem:[%s3 + $0x50] sm:$0xff]
    %v6869 = vld [vmem:[%s3 + $0x58] sm:$0xff]
    %v6870 = vld [vmem:[%s3 + $0x60] sm:$0xff]
    %v6871 = vld [vmem:[%s3 + $0x68] sm:$0xff]
    %v6872 = vld [vmem:[%s3 + $0x70] sm:$0xff]
    %v6873 = vld [vmem:[%s3 + $0x78] sm:$0xff]
    %v6874 = vld [vmem:[%s3 + $0x80] sm:$0xff]
    %v6875 = vld [vmem:[%s3 + $0x88] sm:$0xff]
    %v6876 = vld [vmem:[%s3 + $0x90] sm:$0xff]
    %v6877 = vld [vmem:[%s3 + $0x98] sm:$0xff]
    %v6878 = vld [vmem:[%s3 + $0xa0] sm:$0xff]
    %v6879 = vld [vmem:[%s3 + $0xa8] sm:$0xff]
    %v6880 = vld [vmem:[%s3 + $0xb0] sm:$0xff]
    %v6881 = vld [vmem:[%s3 + $0xb8] sm:$0xff]
    %v6882 = vld [vmem:[%s3 + $0xc0] sm:$0xff]
    %v6883 = vld [vmem:[%s3 + $0xc8] sm:$0xff]
    %v6884 = vld [vmem:[%s3 + $0xd0] sm:$0xff]
    %v6885 = vld [vmem:[%s3 + $0xd8] sm:$0xff]
    %v6886 = vld [vmem:[%s3 + $0xe0] sm:$0xff]
    %v6887 = vld [vmem:[%s3 + $0xe8] sm:$0xff]
    %v6888 = vld [vmem:[%s3 + $0xf0] sm:$0xff]
    %v6889 = vld [vmem:[%s3 + $0xf8] sm:$0xff]
    %v6890 = vld [vmem:[%s3 + $0x100] sm:$0xff]
    %v6891 = vld [vmem:[%s3 + $0x108] sm:$0xff]
    %v6892 = vld [vmem:[%s3 + $0x110] sm:$0xff]
    %v6893 = vld [vmem:[%s3 + $0x118] sm:$0xff]
    %v6894 = vld [vmem:[%s3 + $0x120] sm:$0xff]
    %v6895 = vld [vmem:[%s3 + $0x128] sm:$0xff]
    %v6896 = vld [vmem:[%s3 + $0x130] sm:$0xff]
    %v6897 = vld [vmem:[%s3 + $0x138] sm:$0xff]
    %v6898 = vld [vmem:[%s3 + $0x140] sm:$0xff]
    %v6899 = vld [vmem:[%s3 + $0x148] sm:$0xff]
    %v6900 = vld [vmem:[%s3 + $0x150] sm:$0xff]
    %v6901 = vld [vmem:[%s3 + $0x158] sm:$0xff]
    %v6902 = vld [vmem:[%s3 + $0x160] sm:$0xff]
    %v6903 = vld [vmem:[%s3 + $0x168] sm:$0xff]
    %v6904 = vld [vmem:[%s3 + $0x170] sm:$0xff]
    %v6905 = vld [vmem:[%s3 + $0x178] sm:$0xff]
    %v6906 = vld [vmem:[%s3 + $0x180] sm:$0xff]
    %v6907 = vld [vmem:[%s3 + $0x188] sm:$0xff]
    %v6908 = vld [vmem:[%s3 + $0x190] sm:$0xff]
    %v6909 = vld [vmem:[%s3 + $0x198] sm:$0xff]
    %v6910 = vld [vmem:[%s3 + $0x1a0] sm:$0xff]
    %v6911 = vld [vmem:[%s3 + $0x1a8] sm:$0xff]
    %v6912 = vld [vmem:[%s3 + $0x1b0] sm:$0xff]
    %v6913 = vld [vmem:[%s3 + $0x1b8] sm:$0xff]
    %v6914 = vld [vmem:[%s3 + $0x1c0] sm:$0xff]
    %v6915 = vld [vmem:[%s3 + $0x1c8] sm:$0xff]
    %v6916 = vld [vmem:[%s3 + $0x1d0] sm:$0xff]
    %v6917 = vld [vmem:[%s3 + $0x1d8] sm:$0xff]
    %v6918 = vld [vmem:[%s3 + $0x1e0] sm:$0xff]
    %v6919 = vld [vmem:[%s3 + $0x1e8] sm:$0xff]
    %v6920 = vld [vmem:[%s3 + $0x1f0] sm:$0xff]
    %v6921 = vld [vmem:[%s3 + $0x1f8] sm:$0xff]
    %v6922 = vld [vmem:[%s4] sm:$0x1]
    %v6924 = vperm.slane %v6922, 0
    %6926 = vmatpush.msra.mxu0 %v6873
    %6927 = vmatpush.msra.mxu0 %v6872
    %6928 = vmatpush.msra.mxu0 %v6871
    %6929 = vmatpush.msra.mxu0 %v6870
    %6930 = vmatpush.msra.mxu0 %v6869
    %6931 = vmatpush.msra.mxu0 %v6868
    %6932 = vmatpush.msra.mxu0 %v6867
    %6933 = vmatpush.msra.mxu0 %v6866
    %6934 = vmatpush.msra.mxu0 %v6865
    %6935 = vmatpush.msra.mxu0 %v6864
    %6936 = vmatpush.msra.mxu0 %v6863
    %6937 = vmatpush.msra.mxu0 %v6862
    %6938 = vmatpush.msra.mxu0 %v6861
    %6939 = vmatpush.msra.mxu0 %v6860
    %6940 = vmatpush.msra.mxu0 %v6859
    %6941 = vmatpush.msra.mxu0 %v6858
    %6942 = vmatmul.f32.gmra.mxu0 %v6730
    %v6943 = vpop.f32.mrf.mxu0
    %v6944 = vadd.f32 %v6924, %v6943
    %6945 = vmatmul.f32.gmra.mxu0 %v6734
    %v6946 = vpop.f32.mrf.mxu0
    %v6947 = vadd.f32 %v6924, %v6946
    %6948 = vmatmul.f32.gmra.mxu0 %v6738
    %v6949 = vpop.f32.mrf.mxu0
    %v6950 = vadd.f32 %v6924, %v6949
    %6951 = vmatmul.f32.gmra.mxu0 %v6742
    %v6952 = vpop.f32.mrf.mxu0
    %v6953 = vadd.f32 %v6924, %v6952
    %6954 = vmatmul.f32.gmra.mxu0 %v6746
    %v6955 = vpop.f32.mrf.mxu0
    %v6956 = vadd.f32 %v6924, %v6955
    %6957 = vmatmul.f32.gmra.mxu0 %v6750
    %v6958 = vpop.f32.mrf.mxu0
    %v6959 = vadd.f32 %v6924, %v6958
    %6960 = vmatmul.f32.gmra.mxu0 %v6754
    %v6961 = vpop.f32.mrf.mxu0
    %v6962 = vadd.f32 %v6924, %v6961
    %6963 = vmatmul.f32.gmra.mxu0 %v6758
    %v6964 = vpop.f32.mrf.mxu0
    %v6965 = vadd.f32 %v6924, %v6964
    %6966 = vmatmul.f32.gmra.mxu0 %v6762
    %v6967 = vpop.f32.mrf.mxu0
    %v6968 = vadd.f32 %v6924, %v6967
    %6969 = vmatmul.f32.gmra.mxu0 %v6766
    %v6970 = vpop.f32.mrf.mxu0
    %v6971 = vadd.f32 %v6924, %v6970
    %6972 = vmatmul.f32.gmra.mxu0 %v6770
    %v6973 = vpop.f32.mrf.mxu0
    %v6974 = vadd.f32 %v6924, %v6973
    %6975 = vmatmul.f32.gmra.mxu0 %v6774
    %v6976 = vpop.f32.mrf.mxu0
    %v6977 = vadd.f32 %v6924, %v6976
    %6978 = vmatmul.f32.gmra.mxu0 %v6778
    %v6979 = vpop.f32.mrf.mxu0
    %v6980 = vadd.f32 %v6924, %v6979
    %6981 = vmatmul.f32.gmra.mxu0 %v6782
    %v6982 = vpop.f32.mrf.mxu0
    %v6983 = vadd.f32 %v6924, %v6982
    %6984 = vmatmul.f32.gmra.mxu0 %v6786
    %v6985 = vpop.f32.mrf.mxu0
    %v6986 = vadd.f32 %v6924, %v6985
    %6987 = vmatmul.f32.gmra.mxu0 %v6790
    %v6988 = vpop.f32.mrf.mxu0
    %v6989 = vadd.f32 %v6924, %v6988
    %6990 = vmatmul.f32.gmra.mxu0 %v6794
    %v6991 = vpop.f32.mrf.mxu0
    %v6992 = vadd.f32 %v6924, %v6991
    %6993 = vmatmul.f32.gmra.mxu0 %v6798
    %v6994 = vpop.f32.mrf.mxu0
    %v6995 = vadd.f32 %v6924, %v6994
    %6996 = vmatmul.f32.gmra.mxu0 %v6802
    %v6997 = vpop.f32.mrf.mxu0
    %v6998 = vadd.f32 %v6924, %v6997
    %6999 = vmatmul.f32.gmra.mxu0 %v6806
    %v7000 = vpop.f32.mrf.mxu0
    %v7001 = vadd.f32 %v6924, %v7000
    %7002 = vmatmul.f32.gmra.mxu0 %v6810
    %v7003 = vpop.f32.mrf.mxu0
    %v7004 = vadd.f32 %v6924, %v7003
    %7005 = vmatmul.f32.gmra.mxu0 %v6814
    %v7006 = vpop.f32.mrf.mxu0
    %v7007 = vadd.f32 %v6924, %v7006
    %7008 = vmatmul.f32.gmra.mxu0 %v6818
    %v7009 = vpop.f32.mrf.mxu0
    %v7010 = vadd.f32 %v6924, %v7009
    %7011 = vmatmul.f32.gmra.mxu0 %v6822
    %v7012 = vpop.f32.mrf.mxu0
    %v7013 = vadd.f32 %v6924, %v7012
    %7014 = vmatmul.f32.gmra.mxu0 %v6826
    %v7015 = vpop.f32.mrf.mxu0
    %v7016 = vadd.f32 %v6924, %v7015
    %7017 = vmatmul.f32.gmra.mxu0 %v6830
    %v7018 = vpop.f32.mrf.mxu0
    %v7019 = vadd.f32 %v6924, %v7018
    %7020 = vmatmul.f32.gmra.mxu0 %v6834
    %v7021 = vpop.f32.mrf.mxu0
    %v7022 = vadd.f32 %v6924, %v7021
    %7023 = vmatmul.f32.gmra.mxu0 %v6838
    %v7024 = vpop.f32.mrf.mxu0
    %v7025 = vadd.f32 %v6924, %v7024
    %7026 = vmatmul.f32.gmra.mxu0 %v6842
    %v7027 = vpop.f32.mrf.mxu0
    %v7028 = vadd.f32 %v6924, %v7027
    %7029 = vmatmul.f32.gmra.mxu0 %v6846
    %v7030 = vpop.f32.mrf.mxu0
    %v7031 = vadd.f32 %v6924, %v7030
    %7032 = vmatmul.f32.gmra.mxu0 %v6850
    %v7033 = vpop.f32.mrf.mxu0
    %v7034 = vadd.f32 %v6924, %v7033
    %7035 = vmatmul.f32.gmra.mxu0 %v6854
    %v7036 = vpop.f32.mrf.mxu0
    %v7037 = vadd.f32 %v6924, %v7036
    %7038 = vdwg.mxu0
    %7039 = vmatpush.msra.mxu0 %v6889
    %7040 = vmatpush.msra.mxu0 %v6888
    %7041 = vmatpush.msra.mxu0 %v6887
    %7042 = vmatpush.msra.mxu0 %v6886
    %7043 = vmatpush.msra.mxu0 %v6885
    %7044 = vmatpush.msra.mxu0 %v6884
    %7045 = vmatpush.msra.mxu0 %v6883
    %7046 = vmatpush.msra.mxu0 %v6882
    %7047 = vmatpush.msra.mxu0 %v6881
    %7048 = vmatpush.msra.mxu0 %v6880
    %7049 = vmatpush.msra.mxu0 %v6879
    %7050 = vmatpush.msra.mxu0 %v6878
    %7051 = vmatpush.msra.mxu0 %v6877
    %7052 = vmatpush.msra.mxu0 %v6876
    %7053 = vmatpush.msra.mxu0 %v6875
    %7054 = vmatpush.msra.mxu0 %v6874
    %7055 = vmatmul.f32.gmra.mxu0 %v6731
    %v7056 = vpop.f32.mrf.mxu0
    %v7057 = vadd.f32 %v6944, %v7056
    %7058 = vmatmul.f32.gmra.mxu0 %v6735
    %v7059 = vpop.f32.mrf.mxu0
    %v7060 = vadd.f32 %v6947, %v7059
    %7061 = vmatmul.f32.gmra.mxu0 %v6739
    %v7062 = vpop.f32.mrf.mxu0
    %v7063 = vadd.f32 %v6950, %v7062
    %7064 = vmatmul.f32.gmra.mxu0 %v6743
    %v7065 = vpop.f32.mrf.mxu0
    %v7066 = vadd.f32 %v6953, %v7065
    %7067 = vmatmul.f32.gmra.mxu0 %v6747
    %v7068 = vpop.f32.mrf.mxu0
    %v7069 = vadd.f32 %v6956, %v7068
    %7070 = vmatmul.f32.gmra.mxu0 %v6751
    %v7071 = vpop.f32.mrf.mxu0
    %v7072 = vadd.f32 %v6959, %v7071
    %7073 = vmatmul.f32.gmra.mxu0 %v6755
    %v7074 = vpop.f32.mrf.mxu0
    %v7075 = vadd.f32 %v6962, %v7074
    %7076 = vmatmul.f32.gmra.mxu0 %v6759
    %v7077 = vpop.f32.mrf.mxu0
    %v7078 = vadd.f32 %v6965, %v7077
    %7079 = vmatmul.f32.gmra.mxu0 %v6763
    %v7080 = vpop.f32.mrf.mxu0
    %v7081 = vadd.f32 %v6968, %v7080
    %7082 = vmatmul.f32.gmra.mxu0 %v6767
    %v7083 = vpop.f32.mrf.mxu0
    %v7084 = vadd.f32 %v6971, %v7083
    %7085 = vmatmul.f32.gmra.mxu0 %v6771
    %v7086 = vpop.f32.mrf.mxu0
    %v7087 = vadd.f32 %v6974, %v7086
    %7088 = vmatmul.f32.gmra.mxu0 %v6775
    %v7089 = vpop.f32.mrf.mxu0
    %v7090 = vadd.f32 %v6977, %v7089
    %7091 = vmatmul.f32.gmra.mxu0 %v6779
    %v7092 = vpop.f32.mrf.mxu0
    %v7093 = vadd.f32 %v6980, %v7092
    %7094 = vmatmul.f32.gmra.mxu0 %v6783
    %v7095 = vpop.f32.mrf.mxu0
    %v7096 = vadd.f32 %v6983, %v7095
    %7097 = vmatmul.f32.gmra.mxu0 %v6787
    %v7098 = vpop.f32.mrf.mxu0
    %v7099 = vadd.f32 %v6986, %v7098
    %7100 = vmatmul.f32.gmra.mxu0 %v6791
    %v7101 = vpop.f32.mrf.mxu0
    %v7102 = vadd.f32 %v6989, %v7101
    %7103 = vmatmul.f32.gmra.mxu0 %v6795
    %v7104 = vpop.f32.mrf.mxu0
    %v7105 = vadd.f32 %v6992, %v7104
    %7106 = vmatmul.f32.gmra.mxu0 %v6799
    %v7107 = vpop.f32.mrf.mxu0
    %v7108 = vadd.f32 %v6995, %v7107
    %7109 = vmatmul.f32.gmra.mxu0 %v6803
    %v7110 = vpop.f32.mrf.mxu0
    %v7111 = vadd.f32 %v6998, %v7110
    %7112 = vmatmul.f32.gmra.mxu0 %v6807
    %v7113 = vpop.f32.mrf.mxu0
    %v7114 = vadd.f32 %v7001, %v7113
    %7115 = vmatmul.f32.gmra.mxu0 %v6811
    %v7116 = vpop.f32.mrf.mxu0
    %v7117 = vadd.f32 %v7004, %v7116
    %7118 = vmatmul.f32.gmra.mxu0 %v6815
    %v7119 = vpop.f32.mrf.mxu0
    %v7120 = vadd.f32 %v7007, %v7119
    %7121 = vmatmul.f32.gmra.mxu0 %v6819
    %v7122 = vpop.f32.mrf.mxu0
    %v7123 = vadd.f32 %v7010, %v7122
    %7124 = vmatmul.f32.gmra.mxu0 %v6823
    %v7125 = vpop.f32.mrf.mxu0
    %v7126 = vadd.f32 %v7013, %v7125
    %7127 = vmatmul.f32.gmra.mxu0 %v6827
    %v7128 = vpop.f32.mrf.mxu0
    %v7129 = vadd.f32 %v7016, %v7128
    %7130 = vmatmul.f32.gmra.mxu0 %v6831
    %v7131 = vpop.f32.mrf.mxu0
    %v7132 = vadd.f32 %v7019, %v7131
    %7133 = vmatmul.f32.gmra.mxu0 %v6835
    %v7134 = vpop.f32.mrf.mxu0
    %v7135 = vadd.f32 %v7022, %v7134
    %7136 = vmatmul.f32.gmra.mxu0 %v6839
    %v7137 = vpop.f32.mrf.mxu0
    %v7138 = vadd.f32 %v7025, %v7137
    %7139 = vmatmul.f32.gmra.mxu0 %v6843
    %v7140 = vpop.f32.mrf.mxu0
    %v7141 = vadd.f32 %v7028, %v7140
    %7142 = vmatmul.f32.gmra.mxu0 %v6847
    %v7143 = vpop.f32.mrf.mxu0
    %v7144 = vadd.f32 %v7031, %v7143
    %7145 = vmatmul.f32.gmra.mxu0 %v6851
    %v7146 = vpop.f32.mrf.mxu0
    %v7147 = vadd.f32 %v7034, %v7146
    %7148 = vmatmul.f32.gmra.mxu0 %v6855
    %v7149 = vpop.f32.mrf.mxu0
    %v7150 = vadd.f32 %v7037, %v7149
    %7151 = vdwg.mxu0
    %7152 = vmatpush.msra.mxu0 %v6905
    %7153 = vmatpush.msra.mxu0 %v6904
    %7154 = vmatpush.msra.mxu0 %v6903
    %7155 = vmatpush.msra.mxu0 %v6902
    %7156 = vmatpush.msra.mxu0 %v6901
    %7157 = vmatpush.msra.mxu0 %v6900
    %7158 = vmatpush.msra.mxu0 %v6899
    %7159 = vmatpush.msra.mxu0 %v6898
    %7160 = vmatpush.msra.mxu0 %v6897
    %7161 = vmatpush.msra.mxu0 %v6896
    %7162 = vmatpush.msra.mxu0 %v6895
    %7163 = vmatpush.msra.mxu0 %v6894
    %7164 = vmatpush.msra.mxu0 %v6893
    %7165 = vmatpush.msra.mxu0 %v6892
    %7166 = vmatpush.msra.mxu0 %v6891
    %7167 = vmatpush.msra.mxu0 %v6890
    %7168 = vmatmul.f32.gmra.mxu0 %v6732
    %v7169 = vpop.f32.mrf.mxu0
    %v7170 = vadd.f32 %v7057, %v7169
    %7171 = vmatmul.f32.gmra.mxu0 %v6736
    %v7172 = vpop.f32.mrf.mxu0
    %v7173 = vadd.f32 %v7060, %v7172
    %7174 = vmatmul.f32.gmra.mxu0 %v6740
    %v7175 = vpop.f32.mrf.mxu0
    %v7176 = vadd.f32 %v7063, %v7175
    %7177 = vmatmul.f32.gmra.mxu0 %v6744
    %v7178 = vpop.f32.mrf.mxu0
    %v7179 = vadd.f32 %v7066, %v7178
    %7180 = vmatmul.f32.gmra.mxu0 %v6748
    %v7181 = vpop.f32.mrf.mxu0
    %v7182 = vadd.f32 %v7069, %v7181
    %7183 = vmatmul.f32.gmra.mxu0 %v6752
    %v7184 = vpop.f32.mrf.mxu0
    %v7185 = vadd.f32 %v7072, %v7184
    %7186 = vmatmul.f32.gmra.mxu0 %v6756
    %v7187 = vpop.f32.mrf.mxu0
    %v7188 = vadd.f32 %v7075, %v7187
    %7189 = vmatmul.f32.gmra.mxu0 %v6760
    %v7190 = vpop.f32.mrf.mxu0
    %v7191 = vadd.f32 %v7078, %v7190
    %7192 = vmatmul.f32.gmra.mxu0 %v6764
    %v7193 = vpop.f32.mrf.mxu0
    %v7194 = vadd.f32 %v7081, %v7193
    %7195 = vmatmul.f32.gmra.mxu0 %v6768
    %v7196 = vpop.f32.mrf.mxu0
    %v7197 = vadd.f32 %v7084, %v7196
    %7198 = vmatmul.f32.gmra.mxu0 %v6772
    %v7199 = vpop.f32.mrf.mxu0
    %v7200 = vadd.f32 %v7087, %v7199
    %7201 = vmatmul.f32.gmra.mxu0 %v6776
    %v7202 = vpop.f32.mrf.mxu0
    %v7203 = vadd.f32 %v7090, %v7202
    %7204 = vmatmul.f32.gmra.mxu0 %v6780
    %v7205 = vpop.f32.mrf.mxu0
    %v7206 = vadd.f32 %v7093, %v7205
    %7207 = vmatmul.f32.gmra.mxu0 %v6784
    %v7208 = vpop.f32.mrf.mxu0
    %v7209 = vadd.f32 %v7096, %v7208
    %7210 = vmatmul.f32.gmra.mxu0 %v6788
    %v7211 = vpop.f32.mrf.mxu0
    %v7212 = vadd.f32 %v7099, %v7211
    %7213 = vmatmul.f32.gmra.mxu0 %v6792
    %v7214 = vpop.f32.mrf.mxu0
    %v7215 = vadd.f32 %v7102, %v7214
    %7216 = vmatmul.f32.gmra.mxu0 %v6796
    %v7217 = vpop.f32.mrf.mxu0
    %v7218 = vadd.f32 %v7105, %v7217
    %7219 = vmatmul.f32.gmra.mxu0 %v6800
    %v7220 = vpop.f32.mrf.mxu0
    %v7221 = vadd.f32 %v7108, %v7220
    %7222 = vmatmul.f32.gmra.mxu0 %v6804
    %v7223 = vpop.f32.mrf.mxu0
    %v7224 = vadd.f32 %v7111, %v7223
    %7225 = vmatmul.f32.gmra.mxu0 %v6808
    %v7226 = vpop.f32.mrf.mxu0
    %v7227 = vadd.f32 %v7114, %v7226
    %7228 = vmatmul.f32.gmra.mxu0 %v6812
    %v7229 = vpop.f32.mrf.mxu0
    %v7230 = vadd.f32 %v7117, %v7229
    %7231 = vmatmul.f32.gmra.mxu0 %v6816
    %v7232 = vpop.f32.mrf.mxu0
    %v7233 = vadd.f32 %v7120, %v7232
    %7234 = vmatmul.f32.gmra.mxu0 %v6820
    %v7235 = vpop.f32.mrf.mxu0
    %v7236 = vadd.f32 %v7123, %v7235
    %7237 = vmatmul.f32.gmra.mxu0 %v6824
    %v7238 = vpop.f32.mrf.mxu0
    %v7239 = vadd.f32 %v7126, %v7238
    %7240 = vmatmul.f32.gmra.mxu0 %v6828
    %v7241 = vpop.f32.mrf.mxu0
    %v7242 = vadd.f32 %v7129, %v7241
    %7243 = vmatmul.f32.gmra.mxu0 %v6832
    %v7244 = vpop.f32.mrf.mxu0
    %v7245 = vadd.f32 %v7132, %v7244
    %7246 = vmatmul.f32.gmra.mxu0 %v6836
    %v7247 = vpop.f32.mrf.mxu0
    %v7248 = vadd.f32 %v7135, %v7247
    %7249 = vmatmul.f32.gmra.mxu0 %v6840
    %v7250 = vpop.f32.mrf.mxu0
    %v7251 = vadd.f32 %v7138, %v7250
    %7252 = vmatmul.f32.gmra.mxu0 %v6844
    %v7253 = vpop.f32.mrf.mxu0
    %v7254 = vadd.f32 %v7141, %v7253
    %7255 = vmatmul.f32.gmra.mxu0 %v6848
    %v7256 = vpop.f32.mrf.mxu0
    %v7257 = vadd.f32 %v7144, %v7256
    %7258 = vmatmul.f32.gmra.mxu0 %v6852
    %v7259 = vpop.f32.mrf.mxu0
    %v7260 = vadd.f32 %v7147, %v7259
    %7261 = vmatmul.f32.gmra.mxu0 %v6856
    %v7262 = vpop.f32.mrf.mxu0
    %v7263 = vadd.f32 %v7150, %v7262
    %7264 = vdwg.mxu0
    %7265 = vmatpush.msra.mxu0 %v6921
    %7266 = vmatpush.msra.mxu0 %v6920
    %7267 = vmatpush.msra.mxu0 %v6919
    %7268 = vmatpush.msra.mxu0 %v6918
    %7269 = vmatpush.msra.mxu0 %v6917
    %7270 = vmatpush.msra.mxu0 %v6916
    %7271 = vmatpush.msra.mxu0 %v6915
    %7272 = vmatpush.msra.mxu0 %v6914
    %7273 = vmatpush.msra.mxu0 %v6913
    %7274 = vmatpush.msra.mxu0 %v6912
    %7275 = vmatpush.msra.mxu0 %v6911
    %7276 = vmatpush.msra.mxu0 %v6910
    %7277 = vmatpush.msra.mxu0 %v6909
    %7278 = vmatpush.msra.mxu0 %v6908
    %7279 = vmatpush.msra.mxu0 %v6907
    %7280 = vmatpush.msra.mxu0 %v6906
    %7281 = vmatmul.f32.gmra.mxu0 %v6733
    %v7282 = vpop.f32.mrf.mxu0
    %v7283 = vadd.f32 %v7170, %v7282
    %7284 = vmatmul.f32.gmra.mxu0 %v6737
    %v7285 = vpop.f32.mrf.mxu0
    %v7286 = vadd.f32 %v7173, %v7285
    %7287 = vmatmul.f32.gmra.mxu0 %v6741
    %v7288 = vpop.f32.mrf.mxu0
    %v7289 = vadd.f32 %v7176, %v7288
    %7290 = vmatmul.f32.gmra.mxu0 %v6745
    %v7291 = vpop.f32.mrf.mxu0
    %v7292 = vadd.f32 %v7179, %v7291
    %7293 = vmatmul.f32.gmra.mxu0 %v6749
    %v7294 = vpop.f32.mrf.mxu0
    %v7295 = vadd.f32 %v7182, %v7294
    %7296 = vmatmul.f32.gmra.mxu0 %v6753
    %v7297 = vpop.f32.mrf.mxu0
    %v7298 = vadd.f32 %v7185, %v7297
    %7299 = vmatmul.f32.gmra.mxu0 %v6757
    %v7300 = vpop.f32.mrf.mxu0
    %v7301 = vadd.f32 %v7188, %v7300
    %7302 = vmatmul.f32.gmra.mxu0 %v6761
    %v7303 = vpop.f32.mrf.mxu0
    %v7304 = vadd.f32 %v7191, %v7303
    %7305 = vmatmul.f32.gmra.mxu0 %v6765
    %v7306 = vpop.f32.mrf.mxu0
    %v7307 = vadd.f32 %v7194, %v7306
    %7308 = vmatmul.f32.gmra.mxu0 %v6769
    %v7309 = vpop.f32.mrf.mxu0
    %v7310 = vadd.f32 %v7197, %v7309
    %7311 = vmatmul.f32.gmra.mxu0 %v6773
    %v7312 = vpop.f32.mrf.mxu0
    %v7313 = vadd.f32 %v7200, %v7312
    %7314 = vmatmul.f32.gmra.mxu0 %v6777
    %v7315 = vpop.f32.mrf.mxu0
    %v7316 = vadd.f32 %v7203, %v7315
    %7317 = vmatmul.f32.gmra.mxu0 %v6781
    %v7318 = vpop.f32.mrf.mxu0
    %v7319 = vadd.f32 %v7206, %v7318
    %7320 = vmatmul.f32.gmra.mxu0 %v6785
    %v7321 = vpop.f32.mrf.mxu0
    %v7322 = vadd.f32 %v7209, %v7321
    %7323 = vmatmul.f32.gmra.mxu0 %v6789
    %v7324 = vpop.f32.mrf.mxu0
    %v7325 = vadd.f32 %v7212, %v7324
    %7326 = vmatmul.f32.gmra.mxu0 %v6793
    %v7327 = vpop.f32.mrf.mxu0
    %v7328 = vadd.f32 %v7215, %v7327
    %7329 = vmatmul.f32.gmra.mxu0 %v6797
    %v7330 = vpop.f32.mrf.mxu0
    %v7331 = vadd.f32 %v7218, %v7330
    %7332 = vmatmul.f32.gmra.mxu0 %v6801
    %v7333 = vpop.f32.mrf.mxu0
    %v7334 = vadd.f32 %v7221, %v7333
    %7335 = vmatmul.f32.gmra.mxu0 %v6805
    %v7336 = vpop.f32.mrf.mxu0
    %v7337 = vadd.f32 %v7224, %v7336
    %7338 = vmatmul.f32.gmra.mxu0 %v6809
    %v7339 = vpop.f32.mrf.mxu0
    %v7340 = vadd.f32 %v7227, %v7339
    %7341 = vmatmul.f32.gmra.mxu0 %v6813
    %v7342 = vpop.f32.mrf.mxu0
    %v7343 = vadd.f32 %v7230, %v7342
    %7344 = vmatmul.f32.gmra.mxu0 %v6817
    %v7345 = vpop.f32.mrf.mxu0
    %v7346 = vadd.f32 %v7233, %v7345
    %7347 = vmatmul.f32.gmra.mxu0 %v6821
    %v7348 = vpop.f32.mrf.mxu0
    %v7349 = vadd.f32 %v7236, %v7348
    %7350 = vmatmul.f32.gmra.mxu0 %v6825
    %v7351 = vpop.f32.mrf.mxu0
    %v7352 = vadd.f32 %v7239, %v7351
    %7353 = vmatmul.f32.gmra.mxu0 %v6829
    %v7354 = vpop.f32.mrf.mxu0
    %v7355 = vadd.f32 %v7242, %v7354
    %7356 = vmatmul.f32.gmra.mxu0 %v6833
    %v7357 = vpop.f32.mrf.mxu0
    %v7358 = vadd.f32 %v7245, %v7357
    %7359 = vmatmul.f32.gmra.mxu0 %v6837
    %v7360 = vpop.f32.mrf.mxu0
    %v7361 = vadd.f32 %v7248, %v7360
    %7362 = vmatmul.f32.gmra.mxu0 %v6841
    %v7363 = vpop.f32.mrf.mxu0
    %v7364 = vadd.f32 %v7251, %v7363
    %7365 = vmatmul.f32.gmra.mxu0 %v6845
    %v7366 = vpop.f32.mrf.mxu0
    %v7367 = vadd.f32 %v7254, %v7366
    %7368 = vmatmul.f32.gmra.mxu0 %v6849
    %v7369 = vpop.f32.mrf.mxu0
    %v7370 = vadd.f32 %v7257, %v7369
    %7371 = vmatmul.f32.gmra.mxu0 %v6853
    %v7372 = vpop.f32.mrf.mxu0
    %v7373 = vadd.f32 %v7260, %v7372
    %7374 = vmatmul.f32.gmra.mxu0 %v6857
    %v7375 = vpop.f32.mrf.mxu0
    %v7376 = vadd.f32 %v7263, %v7375
    %7377 = vdwg.mxu0
    %7378 = vst [vmem:[#allocation2] sm:$0xff] %v7283
    %7379 = vst [vmem:[#allocation2 + $0x8] sm:$0xff] %v7286
    %7380 = vst [vmem:[#allocation2 + $0x10] sm:$0xff] %v7289
    %7381 = vst [vmem:[#allocation2 + $0x18] sm:$0xff] %v7292
    %7382 = vst [vmem:[#allocation2 + $0x20] sm:$0xff] %v7295
    %7383 = vst [vmem:[#allocation2 + $0x28] sm:$0xff] %v7298
    %7384 = vst [vmem:[#allocation2 + $0x30] sm:$0xff] %v7301
    %7385 = vst [vmem:[#allocation2 + $0x38] sm:$0xff] %v7304
    %7386 = vst [vmem:[#allocation2 + $0x40] sm:$0xff] %v7307
    %7387 = vst [vmem:[#allocation2 + $0x48] sm:$0xff] %v7310
    %7388 = vst [vmem:[#allocation2 + $0x50] sm:$0xff] %v7313
    %7389 = vst [vmem:[#allocation2 + $0x58] sm:$0xff] %v7316
    %7390 = vst [vmem:[#allocation2 + $0x60] sm:$0xff] %v7319
    %7391 = vst [vmem:[#allocation2 + $0x68] sm:$0xff] %v7322
    %7392 = vst [vmem:[#allocation2 + $0x70] sm:$0xff] %v7325
    %7393 = vst [vmem:[#allocation2 + $0x78] sm:$0xff] %v7328
    %7394 = vst [vmem:[#allocation2 + $0x80] sm:$0xff] %v7331
    %7395 = vst [vmem:[#allocation2 + $0x88] sm:$0xff] %v7334
    %7396 = vst [vmem:[#allocation2 + $0x90] sm:$0xff] %v7337
    %7397 = vst [vmem:[#allocation2 + $0x98] sm:$0xff] %v7340
    %7398 = vst [vmem:[#allocation2 + $0xa0] sm:$0xff] %v7343
    %7399 = vst [vmem:[#allocation2 + $0xa8] sm:$0xff] %v7346
    %7400 = vst [vmem:[#allocation2 + $0xb0] sm:$0xff] %v7349
    %7401 = vst [vmem:[#allocation2 + $0xb8] sm:$0xff] %v7352
    %7402 = vst [vmem:[#allocation2 + $0xc0] sm:$0xff] %v7355
    %7403 = vst [vmem:[#allocation2 + $0xc8] sm:$0xff] %v7358
    %7404 = vst [vmem:[#allocation2 + $0xd0] sm:$0xff] %v7361
    %7405 = vst [vmem:[#allocation2 + $0xd8] sm:$0xff] %v7364
    %7406 = vst [vmem:[#allocation2 + $0xe0] sm:$0xff] %v7367
    %7407 = vst [vmem:[#allocation2 + $0xe8] sm:$0xff] %v7370
    %7408 = vst [vmem:[#allocation2 + $0xf0] sm:$0xff] %v7373
    %7409 = vst [vmem:[#allocation2 + $0xf8] sm:$0xff] %v7376
    // Predicated region
    $region22: #{layernorm_mlp.1} parent=1 // pred_check
      _
    $region23: #{layernorm_mlp.1} parent=1 // pred_check_branch
      %7411 = sbr.rel (0) target = $region25
    $region24: #{layernorm_mlp.1} parent=1 // pred_region
      %7413 = vsyncadd [#allocation3], 0
      %s7414 = sshll.u32 [#allocation2], 4
      %s7415 = int_to_ptr.vmem [resolvable:$true] %s7414
      %s7416 = sshll.u32 %s5, 4
      %s7417 = int_to_ptr.hbm [resolvable:$true] %s7416
      %7422 = dma.vmem_to_hbm [thread:$0]  %s7415, 4096, %s7417, [#allocation3], 128, 128, 8
    $region25: #{layernorm_mlp.1} parent=1 // pred_fallthru
      _
    // Predicated region
    $region26: #{layernorm_mlp.1} parent=1 // pred_check
      _
    $region27: #{layernorm_mlp.1} parent=1 // pred_check_branch
      %7424 = sbr.rel (0) target = $region29
    $region28: #{layernorm_mlp.1} parent=1 // pred_region
      %7426 = dma.done [#allocation3], 4096
    $region29: #{layernorm_mlp.1} parent=1 // pred_fallthru
      _
    %7427 = vsyncpa [#allocation3], 1

</llo_original>
